<compile_context>
chip_gen: v7x
topology: tpu7x:2x2x1
jax: 0.10.0
libtpu: 0.0.40
codegen_flags: <defaults>
</compile_context>

<pallas_src>
import functools
import math

import jax
import jax.numpy as jnp
from jax.experimental import pallas as pl
from jax.experimental.pallas import tpu as pltpu


# --------------------------------------------------------------------------
# Pallas kernel: fused per-pixel MSA over CAVs + cls/reg 1x1 conv heads.
# Layout is channels-first: blocks are (1, L, C, tHW); C sits on sublanes and
# the spatial tile tHW on lanes (lane-dense output).
# --------------------------------------------------------------------------
def _msa_heads_kernel(rl_ref,                               # scalar-prefetch (B,) i32
                      x_ref,                                # (1, L, C, tHW)  bf16
                      wq_ref, wkv_ref, wo_ref, wh_ref,      # bf16 weights
                      bq_ref, bkv_ref, bo_ref, bh_ref,      # f32 biases (·, 1)
                      o_ref):                               # (1, Aout, tHW) f32
    b = pl.program_id(0)
    L = x_ref.shape[1]
    C = x_ref.shape[2]
    tHW = x_ref.shape[3]
    n_heads = 2
    dh = C // n_heads

    # ---- projections (bf16 MXU matmuls, f32 accumulation) ----
    x_ego = x_ref[0, 0]                                     # (C, tHW) — ego CAV = query
    q = (jnp.dot(wq_ref[...], x_ego, preferred_element_type=jnp.float32)
         + bq_ref[...])                                     # (C, tHW)

    # Fused K/V: one (2C, C) @ (C, tHW) matmul per CAV (static unroll, L small).
    # TODO(synk): optionally gate per-CAV work on record_len (pl.when) to skip
    #             padded rows entirely when compute-bound.
    kv = [jnp.dot(wkv_ref[...], x_ref[0, l], preferred_element_type=jnp.float32)
          + bkv_ref[...] for l in range(L)]                 # each (2C, tHW)

    # validity mask from record_len (padded CAVs get -inf scores)
    rl = rl_ref[b]
    valid = jax.lax.broadcasted_iota(jnp.int32, (L, tHW), 0) < rl
    scale = 1.0 / math.sqrt(float(dh))

    head_outs = []
    for h in range(n_heads):                                # static loop: 2 heads
        qh = q[h * dh:(h + 1) * dh, :]                      # (dh, tHW)

        # scores: per-pixel dot over dh — sublane reduce (VPU adds), not XLU lanes
        rows = [jnp.sum(qh * kv[l][h * dh:(h + 1) * dh, :], axis=0, keepdims=True)
                for l in range(L)]
        scores = jnp.concatenate(rows, axis=0) * scale      # (L, tHW)
        scores = jnp.where(valid, scores, -1e30)

        m = jnp.max(scores, axis=0, keepdims=True)          # (1, tHW)
        e = jnp.exp(scores - m)
        denom = jnp.sum(e, axis=0, keepdims=True)
        attn = e * pl.reciprocal(denom, approx=True)        # EUP slot — ~free

        acc = jnp.zeros((dh, tHW), jnp.float32)
        for l in range(L):
            vh_l = kv[l][C + h * dh:C + (h + 1) * dh, :]    # (dh, tHW)
            acc = acc + attn[l:l + 1, :] * vh_l
        head_outs.append(acc)                               # (dh, tHW)

    fused = jnp.concatenate(head_outs, axis=0).astype(jnp.bfloat16)   # (C, tHW)
    proj = (jnp.dot(wo_ref[...], fused, preferred_element_type=jnp.float32)
            + bo_ref[...])                                  # (C, tHW)

    # fused cls_head + reg_head (1x1 convs == one (Aout, C) matmul)
    head = (jnp.dot(wh_ref[...], proj.astype(jnp.bfloat16),
                    preferred_element_type=jnp.float32)
            + bh_ref[...])                                  # (Aout, tHW)
    o_ref[0] = head.astype(o_ref.dtype)


def msa_fuse_heads(x_cf, record_len, params, tile_hw):
    """x_cf: (B, L, C, HW_pad) bf16; record_len: (B,) i32 -> (B, Aout, HW_pad) f32."""
    B, L, C, HWp = x_cf.shape
    Aout = params["wh_t"].shape[0]
    n_t = HWp // tile_hw

    grid_spec = pltpu.PrefetchScalarGridSpec(
        num_scalar_prefetch=1,
        grid=(B, n_t),
        in_specs=[
            pl.BlockSpec((1, L, C, tile_hw), lambda b, t, rl: (b, 0, 0, t)),
            pl.BlockSpec((C, C),             lambda b, t, rl: (0, 0)),
            pl.BlockSpec((2 * C, C),         lambda b, t, rl: (0, 0)),
            pl.BlockSpec((C, C),             lambda b, t, rl: (0, 0)),
            pl.BlockSpec((Aout, C),          lambda b, t, rl: (0, 0)),
            pl.BlockSpec((C, 1),             lambda b, t, rl: (0, 0)),
            pl.BlockSpec((2 * C, 1),         lambda b, t, rl: (0, 0)),
            pl.BlockSpec((C, 1),             lambda b, t, rl: (0, 0)),
            pl.BlockSpec((Aout, 1),          lambda b, t, rl: (0, 0)),
        ],
        out_specs=pl.BlockSpec((1, Aout, tile_hw), lambda b, t, rl: (b, 0, t)),
    )
    return pl.pallas_call(
        _msa_heads_kernel,
        out_shape=jax.ShapeDtypeStruct((B, Aout, HWp), jnp.float32),
        grid_spec=grid_spec,
        compiler_params=pltpu.CompilerParams(
            # both axes are embarrassingly parallel -> shards across v7x's 2 TCs
            dimension_semantics=("parallel", "parallel"),
            vmem_limit_bytes=48 * 1024 * 1024,
        ),
    )(record_len, x_cf,
      params["wq_t"], params["wkv_t"], params["wo_t"], params["wh_t"],
      params["bq"], params["bkv"], params["bo"], params["bh"])


# --------------------------------------------------------------------------
# Plain-JAX glue reproducing the visible parts of the PyTorch forward.
# --------------------------------------------------------------------------
def regroup(sp_nchw, record_len_list, max_cav):
    """sp_nchw: (N, C, H, W) -> (B, max_cav, C, H, W), mask (B, max_cav)."""
    B = len(record_len_list)
    C, H, W = sp_nchw.shape[1:]
    out = jnp.zeros((B, max_cav, C, H, W), sp_nchw.dtype)
    mask = jnp.zeros((B, max_cav), jnp.float32)
    idx = 0
    for b, n in enumerate(record_len_list):
        out = out.at[b, :n].set(sp_nchw[idx:idx + n])
        mask = mask.at[b, :n].set(1.0)
        idx += n
    return out, mask


def pickup(encode_feature_2, record_len_list):
    """Take the ego (first) CAV feature of every record_len group."""
    ego_idx = [0]
    acc = 0
    for n in record_len_list[:-1]:
        acc += n
        ego_idx.append(acc)
    return encode_feature_2[jnp.asarray(ego_idx, jnp.int32)]


def _round_up(x, m):
    return ((x + m - 1) // m) * m


def _pick_spatial_tile(hw, target=512):
    # Lane (last) dim of the x block must be a multiple of 128.  512 spatial
    # positions keeps the per-step VMEM footprint well under the v7x 64 MiB
    # budget while still giving ~85% of HBM roofline; v5e/v6e could use larger.
    if hw <= target:
        return _round_up(hw, 128)
    return target  # target is a multiple of 128


@functools.partial(jax.jit,
                   static_argnames=("record_len_list", "max_cav", "anchor_number"))
def pillarnet_fkd_forward(sp2d, encode_feature_2, prior_encoding, params,
                          record_len_list, max_cav, anchor_number):
    del prior_encoding  # the reference concats it into a regroup_feature that is
    #                     never consumed downstream (dead code) — dropped here.
    record_len = jnp.asarray(record_len_list, jnp.int32)
    N, C, H, W = sp2d.shape
    B = len(record_len_list)
    HW = H * W

    # ---- pickup: ego feature of batch_dict['encode_feature'][2] ----
    middle_feature = pickup(encode_feature_2, record_len_list)      # (B, 128, H2, W2)

    # ---- regroup once; feed the kernel channels-first (free reshape, no
    #      NCHW->NHWC transpose), cast to bf16 at the boundary ----
    x_grp, _mask = regroup(sp2d, record_len_list, max_cav)          # (B, L, C, H, W)
    x_cf = x_grp.reshape(B, max_cav, C, HW).astype(jnp.bfloat16)

    tile_hw = _pick_spatial_tile(HW)
    HW_pad = _round_up(HW, tile_hw)
    if HW_pad != HW:
        x_cf = jnp.pad(x_cf, ((0, 0), (0, 0), (0, 0), (0, HW_pad - HW)))

    kparams = {
        "wq_t": params["wq_t"].astype(jnp.bfloat16),
        "wkv_t": params["wkv_t"].astype(jnp.bfloat16),
        "wo_t": params["wo_t"].astype(jnp.bfloat16),
        "wh_t": params["wh_t"].astype(jnp.bfloat16),
        "bq": params["bq"], "bkv": params["bkv"],
        "bo": params["bo"], "bh": params["bh"],
    }

    # ---- fused MSA-over-CAVs + cls/reg 1x1 heads (single Pallas kernel) ----
    head_out = msa_fuse_heads(x_cf, record_len, kparams, tile_hw)   # (B, 8A, HW_pad)
    head_out = head_out[:, :, :HW].reshape(B, -1, H, W)             # already NCHW
    psm = head_out[:, :anchor_number]
    rm = head_out[:, anchor_number:]
    return middle_feature, {"psm": psm, "rm": rm}


# --------------------------------------------------------------------------
# Deterministic parameter / input construction and smoke test.
# --------------------------------------------------------------------------
def init_params(key, C, anchor_number):
    ks = jax.random.split(key, 4)
    s = 0.02
    a_out = anchor_number + 7 * anchor_number                       # cls + reg fused
    return {
        "wq_t": s * jax.random.normal(ks[0], (C, C), jnp.float32),      # Wq^T
        "wkv_t": s * jax.random.normal(ks[1], (2 * C, C), jnp.float32),  # [Wk;Wv]^T
        "wo_t": s * jax.random.normal(ks[2], (C, C), jnp.float32),      # Wo^T
        "wh_t": s * jax.random.normal(ks[3], (a_out, C), jnp.float32),  # [cls;reg]^T
        "bq": jnp.zeros((C, 1), jnp.float32),
        "bkv": jnp.zeros((2 * C, 1), jnp.float32),
        "bo": jnp.zeros((C, 1), jnp.float32),
        "bh": 0.01 * jnp.ones((a_out, 1), jnp.float32),
    }


if __name__ == "__main__":
    key = jax.random.PRNGKey(0)
    k_feat, k_enc, k_prior, k_param = jax.random.split(key, 4)

    # small, module-consistent shapes
    max_cav = 5
    anchor_number = 2
    record_len_list = (3, 2)          # B = 2 samples, N = 5 total CAVs
    N = sum(record_len_list)
    B = len(record_len_list)
    C, H, W = 256, 16, 16

    sp2d = jax.random.normal(k_feat, (N, C, H, W), jnp.float32)
    encode_feature_2 = jax.random.normal(k_enc, (N, 128, 8, 8), jnp.float32)
    prior_encoding = jax.random.normal(k_prior, (B, max_cav, 3), jnp.float32)
    params = init_params(k_param, C, anchor_number)

    middle_feature, output_dict = pillarnet_fkd_forward(
        sp2d, encode_feature_2, prior_encoding, params,
        record_len_list=record_len_list, max_cav=max_cav,
        anchor_number=anchor_number)

    jax.block_until_ready(middle_feature)
    jax.block_until_ready(output_dict["psm"])
    jax.block_until_ready(output_dict["rm"])

    assert middle_feature.shape == (B, 128, 8, 8)
    assert output_dict["psm"].shape == (B, anchor_number, H, W)
    assert output_dict["rm"].shape == (B, 7 * anchor_number, H, W)
    assert bool(jnp.all(jnp.isfinite(output_dict["psm"])))
    assert bool(jnp.all(jnp.isfinite(output_dict["rm"])))
    print("KERNEL_OK")
</pallas_src>

<mosaic_0001>
module attributes {stable_mosaic.version = 11 : i64} {
  func.func @_msa_heads_kernel(%arg0: i32, %arg1: i32, %arg2: memref<2xi32, #tpu.memory_space<smem>>, %arg3: memref<1x5x256x256xbf16, #tpu.memory_space<vmem>>, %arg4: memref<256x256xbf16, #tpu.memory_space<vmem>>, %arg5: memref<512x256xbf16, #tpu.memory_space<vmem>>, %arg6: memref<256x256xbf16, #tpu.memory_space<vmem>>, %arg7: memref<16x256xbf16, #tpu.memory_space<vmem>>, %arg8: memref<256x1xf32, #tpu.memory_space<vmem>>, %arg9: memref<512x1xf32, #tpu.memory_space<vmem>>, %arg10: memref<256x1xf32, #tpu.memory_space<vmem>>, %arg11: memref<16x1xf32, #tpu.memory_space<vmem>>, %arg12: memref<1x16x256xf32, #tpu.memory_space<vmem>>) attributes {dimension_semantics = [#tpu.dimension_semantics<parallel>, #tpu.dimension_semantics<parallel>], iteration_bounds = array<i64: 2, 1>, scalar_prefetch = 1 : i64, scratch_operands = 0 : i64, tpu.core_type = #tpu.core_type<tc>, window_params = [{transform_indices = @transform_0, window_bounds = array<i64: 1, 5, 256, 256>}, {pipeline_mode = #tpu.pipeline_mode<synchronous>, transform_indices = @transform_1, window_bounds = array<i64: 256, 256>}, {pipeline_mode = #tpu.pipeline_mode<synchronous>, transform_indices = @transform_2, window_bounds = array<i64: 512, 256>}, {pipeline_mode = #tpu.pipeline_mode<synchronous>, transform_indices = @transform_3, window_bounds = array<i64: 256, 256>}, {pipeline_mode = #tpu.pipeline_mode<synchronous>, transform_indices = @transform_4, window_bounds = array<i64: 16, 256>}, {pipeline_mode = #tpu.pipeline_mode<synchronous>, transform_indices = @transform_5, window_bounds = array<i64: 256, 1>}, {pipeline_mode = #tpu.pipeline_mode<synchronous>, transform_indices = @transform_6, window_bounds = array<i64: 512, 1>}, {pipeline_mode = #tpu.pipeline_mode<synchronous>, transform_indices = @transform_7, window_bounds = array<i64: 256, 1>}, {pipeline_mode = #tpu.pipeline_mode<synchronous>, transform_indices = @transform_8, window_bounds = array<i64: 16, 1>}, {transform_indices = @transform_9, window_bounds = array<i64: 1, 16, 256>}]} {
    %c0 = arith.constant 0 : index
    %c0_0 = arith.constant 0 : index
    %c0_1 = arith.constant 0 : index
    %c0_2 = arith.constant 0 : index
    %0 = vector.load %arg3[%c0, %c0_0, %c0_1, %c0_2] : memref<1x5x256x256xbf16, #tpu.memory_space<vmem>>, vector<1x1x256x256xbf16>
    %1 = vector.shape_cast %0 : vector<1x1x256x256xbf16> to vector<256x256xbf16>
    %c0_3 = arith.constant 0 : index
    %c0_4 = arith.constant 0 : index
    %2 = vector.load %arg4[%c0_3, %c0_4] : memref<256x256xbf16, #tpu.memory_space<vmem>>, vector<256x256xbf16>
    %cst = arith.constant dense<0.000000e+00> : vector<256x256xf32>
    %3 = tpu.matmul %2, %1, %cst {dimension_numbers = #tpu.dot_dimension_numbers<[1], [0], [0], [1], [0, 0, 1, 1], [], []>} : vector<256x256xbf16>, vector<256x256xbf16>, vector<256x256xf32> -> vector<256x256xf32>
    %c0_5 = arith.constant 0 : index
    %c0_6 = arith.constant 0 : index
    %4 = vector.load %arg8[%c0_5, %c0_6] : memref<256x1xf32, #tpu.memory_space<vmem>>, vector<256x1xf32>
    %5 = vector.broadcast %4 : vector<256x1xf32> to vector<256x256xf32>
    %6 = arith.addf %3, %5 : vector<256x256xf32>
    %c0_7 = arith.constant 0 : index
    %c0_8 = arith.constant 0 : index
    %7 = vector.load %arg5[%c0_7, %c0_8] : memref<512x256xbf16, #tpu.memory_space<vmem>>, vector<512x256xbf16>
    %c0_9 = arith.constant 0 : index
    %c0_10 = arith.constant 0 : index
    %c0_11 = arith.constant 0 : index
    %c0_12 = arith.constant 0 : index
    %8 = vector.load %arg3[%c0_9, %c0_10, %c0_11, %c0_12] : memref<1x5x256x256xbf16, #tpu.memory_space<vmem>>, vector<1x1x256x256xbf16>
    %9 = vector.shape_cast %8 : vector<1x1x256x256xbf16> to vector<256x256xbf16>
    %cst_13 = arith.constant dense<0.000000e+00> : vector<512x256xf32>
    %10 = tpu.matmul %7, %9, %cst_13 {dimension_numbers = #tpu.dot_dimension_numbers<[1], [0], [0], [1], [0, 0, 1, 1], [], []>} : vector<512x256xbf16>, vector<256x256xbf16>, vector<512x256xf32> -> vector<512x256xf32>
    %c0_14 = arith.constant 0 : index
    %c0_15 = arith.constant 0 : index
    %11 = vector.load %arg9[%c0_14, %c0_15] : memref<512x1xf32, #tpu.memory_space<vmem>>, vector<512x1xf32>
    %12 = vector.broadcast %11 : vector<512x1xf32> to vector<512x256xf32>
    %13 = arith.addf %10, %12 : vector<512x256xf32>
    %c0_16 = arith.constant 0 : index
    %c0_17 = arith.constant 0 : index
    %14 = vector.load %arg5[%c0_16, %c0_17] : memref<512x256xbf16, #tpu.memory_space<vmem>>, vector<512x256xbf16>
    %c0_18 = arith.constant 0 : index
    %c1 = arith.constant 1 : index
    %c0_19 = arith.constant 0 : index
    %c0_20 = arith.constant 0 : index
    %15 = vector.load %arg3[%c0_18, %c1, %c0_19, %c0_20] : memref<1x5x256x256xbf16, #tpu.memory_space<vmem>>, vector<1x1x256x256xbf16>
    %16 = vector.shape_cast %15 : vector<1x1x256x256xbf16> to vector<256x256xbf16>
    %cst_21 = arith.constant dense<0.000000e+00> : vector<512x256xf32>
    %17 = tpu.matmul %14, %16, %cst_21 {dimension_numbers = #tpu.dot_dimension_numbers<[1], [0], [0], [1], [0, 0, 1, 1], [], []>} : vector<512x256xbf16>, vector<256x256xbf16>, vector<512x256xf32> -> vector<512x256xf32>
    %c0_22 = arith.constant 0 : index
    %c0_23 = arith.constant 0 : index
    %18 = vector.load %arg9[%c0_22, %c0_23] : memref<512x1xf32, #tpu.memory_space<vmem>>, vector<512x1xf32>
    %19 = vector.broadcast %18 : vector<512x1xf32> to vector<512x256xf32>
    %20 = arith.addf %17, %19 : vector<512x256xf32>
    %c0_24 = arith.constant 0 : index
    %c0_25 = arith.constant 0 : index
    %21 = vector.load %arg5[%c0_24, %c0_25] : memref<512x256xbf16, #tpu.memory_space<vmem>>, vector<512x256xbf16>
    %c0_26 = arith.constant 0 : index
    %c2 = arith.constant 2 : index
    %c0_27 = arith.constant 0 : index
    %c0_28 = arith.constant 0 : index
    %22 = vector.load %arg3[%c0_26, %c2, %c0_27, %c0_28] : memref<1x5x256x256xbf16, #tpu.memory_space<vmem>>, vector<1x1x256x256xbf16>
    %23 = vector.shape_cast %22 : vector<1x1x256x256xbf16> to vector<256x256xbf16>
    %cst_29 = arith.constant dense<0.000000e+00> : vector<512x256xf32>
    %24 = tpu.matmul %21, %23, %cst_29 {dimension_numbers = #tpu.dot_dimension_numbers<[1], [0], [0], [1], [0, 0, 1, 1], [], []>} : vector<512x256xbf16>, vector<256x256xbf16>, vector<512x256xf32> -> vector<512x256xf32>
    %c0_30 = arith.constant 0 : index
    %c0_31 = arith.constant 0 : index
    %25 = vector.load %arg9[%c0_30, %c0_31] : memref<512x1xf32, #tpu.memory_space<vmem>>, vector<512x1xf32>
    %26 = vector.broadcast %25 : vector<512x1xf32> to vector<512x256xf32>
    %27 = arith.addf %24, %26 : vector<512x256xf32>
    %c0_32 = arith.constant 0 : index
    %c0_33 = arith.constant 0 : index
    %28 = vector.load %arg5[%c0_32, %c0_33] : memref<512x256xbf16, #tpu.memory_space<vmem>>, vector<512x256xbf16>
    %c0_34 = arith.constant 0 : index
    %c3 = arith.constant 3 : index
    %c0_35 = arith.constant 0 : index
    %c0_36 = arith.constant 0 : index
    %29 = vector.load %arg3[%c0_34, %c3, %c0_35, %c0_36] : memref<1x5x256x256xbf16, #tpu.memory_space<vmem>>, vector<1x1x256x256xbf16>
    %30 = vector.shape_cast %29 : vector<1x1x256x256xbf16> to vector<256x256xbf16>
    %cst_37 = arith.constant dense<0.000000e+00> : vector<512x256xf32>
    %31 = tpu.matmul %28, %30, %cst_37 {dimension_numbers = #tpu.dot_dimension_numbers<[1], [0], [0], [1], [0, 0, 1, 1], [], []>} : vector<512x256xbf16>, vector<256x256xbf16>, vector<512x256xf32> -> vector<512x256xf32>
    %c0_38 = arith.constant 0 : index
    %c0_39 = arith.constant 0 : index
    %32 = vector.load %arg9[%c0_38, %c0_39] : memref<512x1xf32, #tpu.memory_space<vmem>>, vector<512x1xf32>
    %33 = vector.broadcast %32 : vector<512x1xf32> to vector<512x256xf32>
    %34 = arith.addf %31, %33 : vector<512x256xf32>
    %c0_40 = arith.constant 0 : index
    %c0_41 = arith.constant 0 : index
    %35 = vector.load %arg5[%c0_40, %c0_41] : memref<512x256xbf16, #tpu.memory_space<vmem>>, vector<512x256xbf16>
    %c0_42 = arith.constant 0 : index
    %c4 = arith.constant 4 : index
    %c0_43 = arith.constant 0 : index
    %c0_44 = arith.constant 0 : index
    %36 = vector.load %arg3[%c0_42, %c4, %c0_43, %c0_44] : memref<1x5x256x256xbf16, #tpu.memory_space<vmem>>, vector<1x1x256x256xbf16>
    %37 = vector.shape_cast %36 : vector<1x1x256x256xbf16> to vector<256x256xbf16>
    %cst_45 = arith.constant dense<0.000000e+00> : vector<512x256xf32>
    %38 = tpu.matmul %35, %37, %cst_45 {dimension_numbers = #tpu.dot_dimension_numbers<[1], [0], [0], [1], [0, 0, 1, 1], [], []>} : vector<512x256xbf16>, vector<256x256xbf16>, vector<512x256xf32> -> vector<512x256xf32>
    %c0_46 = arith.constant 0 : index
    %c0_47 = arith.constant 0 : index
    %39 = vector.load %arg9[%c0_46, %c0_47] : memref<512x1xf32, #tpu.memory_space<vmem>>, vector<512x1xf32>
    %40 = vector.broadcast %39 : vector<512x1xf32> to vector<512x256xf32>
    %41 = arith.addf %38, %40 : vector<512x256xf32>
    %42 = arith.index_cast %arg0 : i32 to index
    %43 = memref.load %arg2[%42] : memref<2xi32, #tpu.memory_space<smem>>
    %44 = tpu.iota {dimensions = array<i32: 0>} : vector<5x256xi32>
    %45 = vector.broadcast %43 : i32 to vector<5x256xi32>
    %46 = arith.cmpi slt, %44, %45 : vector<5x256xi32>
    %47 = vector.extract_strided_slice %6 {offsets = [0, 0], sizes = [128, 256], strides = [1, 1]} : vector<256x256xf32> to vector<128x256xf32>
    %48 = vector.extract_strided_slice %13 {offsets = [0, 0], sizes = [128, 256], strides = [1, 1]} : vector<512x256xf32> to vector<128x256xf32>
    %49 = arith.mulf %47, %48 : vector<128x256xf32>
    %cst_48 = arith.constant dense<0.000000e+00> : vector<256xf32>
    %50 = vector.multi_reduction <add>, %49, %cst_48 [0] : vector<128x256xf32> to vector<256xf32>
    %51 = vector.shape_cast %50 : vector<256xf32> to vector<1x256xf32>
    %52 = vector.extract_strided_slice %20 {offsets = [0, 0], sizes = [128, 256], strides = [1, 1]} : vector<512x256xf32> to vector<128x256xf32>
    %53 = arith.mulf %47, %52 : vector<128x256xf32>
    %cst_49 = arith.constant dense<0.000000e+00> : vector<256xf32>
    %54 = vector.multi_reduction <add>, %53, %cst_49 [0] : vector<128x256xf32> to vector<256xf32>
    %55 = vector.shape_cast %54 : vector<256xf32> to vector<1x256xf32>
    %56 = vector.extract_strided_slice %27 {offsets = [0, 0], sizes = [128, 256], strides = [1, 1]} : vector<512x256xf32> to vector<128x256xf32>
    %57 = arith.mulf %47, %56 : vector<128x256xf32>
    %cst_50 = arith.constant dense<0.000000e+00> : vector<256xf32>
    %58 = vector.multi_reduction <add>, %57, %cst_50 [0] : vector<128x256xf32> to vector<256xf32>
    %59 = vector.shape_cast %58 : vector<256xf32> to vector<1x256xf32>
    %60 = vector.extract_strided_slice %34 {offsets = [0, 0], sizes = [128, 256], strides = [1, 1]} : vector<512x256xf32> to vector<128x256xf32>
    %61 = arith.mulf %47, %60 : vector<128x256xf32>
    %cst_51 = arith.constant dense<0.000000e+00> : vector<256xf32>
    %62 = vector.multi_reduction <add>, %61, %cst_51 [0] : vector<128x256xf32> to vector<256xf32>
    %63 = vector.shape_cast %62 : vector<256xf32> to vector<1x256xf32>
    %64 = vector.extract_strided_slice %41 {offsets = [0, 0], sizes = [128, 256], strides = [1, 1]} : vector<512x256xf32> to vector<128x256xf32>
    %65 = arith.mulf %47, %64 : vector<128x256xf32>
    %cst_52 = arith.constant dense<0.000000e+00> : vector<256xf32>
    %66 = vector.multi_reduction <add>, %65, %cst_52 [0] : vector<128x256xf32> to vector<256xf32>
    %67 = vector.shape_cast %66 : vector<256xf32> to vector<1x256xf32>
    %68 = tpu.concatenate %51, %55, %59, %63, %67 in 0 : vector<1x256xf32>, vector<1x256xf32>, vector<1x256xf32>, vector<1x256xf32>, vector<1x256xf32> -> vector<5x256xf32>
    %cst_53 = arith.constant 0.0883883461 : f32
    %69 = vector.broadcast %cst_53 : f32 to vector<5x256xf32>
    %70 = arith.mulf %68, %69 : vector<5x256xf32>
    %cst_54 = arith.constant -1.000000e+30 : f32
    %71 = vector.broadcast %cst_54 : f32 to vector<5x256xf32>
    %72 = arith.select %46, %70, %71 : vector<5x256xi1>, vector<5x256xf32>
    %cst_55 = arith.constant dense<0xFF800000> : vector<256xf32>
    %73 = vector.multi_reduction <maximumf>, %72, %cst_55 [0] : vector<5x256xf32> to vector<256xf32>
    %74 = vector.shape_cast %73 : vector<256xf32> to vector<1x256xf32>
    %75 = vector.broadcast %74 : vector<1x256xf32> to vector<5x256xf32>
    %76 = arith.subf %72, %75 : vector<5x256xf32>
    %77 = math.exp %76 : vector<5x256xf32>
    %cst_56 = arith.constant dense<0.000000e+00> : vector<256xf32>
    %78 = vector.multi_reduction <add>, %77, %cst_56 [0] : vector<5x256xf32> to vector<256xf32>
    %79 = vector.shape_cast %78 : vector<256xf32> to vector<1x256xf32>
    %80 = tpu.reciprocal %79 {approx = true} : vector<1x256xf32> -> vector<1x256xf32>
    %81 = vector.broadcast %80 : vector<1x256xf32> to vector<5x256xf32>
    %82 = arith.mulf %77, %81 : vector<5x256xf32>
    %cst_57 = arith.constant 0.000000e+00 : f32
    %83 = vector.broadcast %cst_57 : f32 to vector<128x256xf32>
    %84 = vector.extract_strided_slice %13 {offsets = [256, 0], sizes = [128, 256], strides = [1, 1]} : vector<512x256xf32> to vector<128x256xf32>
    %85 = vector.extract_strided_slice %82 {offsets = [0, 0], sizes = [1, 256], strides = [1, 1]} : vector<5x256xf32> to vector<1x256xf32>
    %86 = vector.broadcast %85 : vector<1x256xf32> to vector<128x256xf32>
    %87 = arith.mulf %86, %84 : vector<128x256xf32>
    %88 = arith.addf %83, %87 : vector<128x256xf32>
    %89 = vector.extract_strided_slice %20 {offsets = [256, 0], sizes = [128, 256], strides = [1, 1]} : vector<512x256xf32> to vector<128x256xf32>
    %90 = vector.extract_strided_slice %82 {offsets = [1, 0], sizes = [1, 256], strides = [1, 1]} : vector<5x256xf32> to vector<1x256xf32>
    %91 = vector.broadcast %90 : vector<1x256xf32> to vector<128x256xf32>
    %92 = arith.mulf %91, %89 : vector<128x256xf32>
    %93 = arith.addf %88, %92 : vector<128x256xf32>
    %94 = vector.extract_strided_slice %27 {offsets = [256, 0], sizes = [128, 256], strides = [1, 1]} : vector<512x256xf32> to vector<128x256xf32>
    %95 = vector.extract_strided_slice %82 {offsets = [2, 0], sizes = [1, 256], strides = [1, 1]} : vector<5x256xf32> to vector<1x256xf32>
    %96 = vector.broadcast %95 : vector<1x256xf32> to vector<128x256xf32>
    %97 = arith.mulf %96, %94 : vector<128x256xf32>
    %98 = arith.addf %93, %97 : vector<128x256xf32>
    %99 = vector.extract_strided_slice %34 {offsets = [256, 0], sizes = [128, 256], strides = [1, 1]} : vector<512x256xf32> to vector<128x256xf32>
    %100 = vector.extract_strided_slice %82 {offsets = [3, 0], sizes = [1, 256], strides = [1, 1]} : vector<5x256xf32> to vector<1x256xf32>
    %101 = vector.broadcast %100 : vector<1x256xf32> to vector<128x256xf32>
    %102 = arith.mulf %101, %99 : vector<128x256xf32>
    %103 = arith.addf %98, %102 : vector<128x256xf32>
    %104 = vector.extract_strided_slice %41 {offsets = [256, 0], sizes = [128, 256], strides = [1, 1]} : vector<512x256xf32> to vector<128x256xf32>
    %105 = vector.extract_strided_slice %82 {offsets = [4, 0], sizes = [1, 256], strides = [1, 1]} : vector<5x256xf32> to vector<1x256xf32>
    %106 = vector.broadcast %105 : vector<1x256xf32> to vector<128x256xf32>
    %107 = arith.mulf %106, %104 : vector<128x256xf32>
    %108 = arith.addf %103, %107 : vector<128x256xf32>
    %109 = vector.extract_strided_slice %6 {offsets = [128, 0], sizes = [128, 256], strides = [1, 1]} : vector<256x256xf32> to vector<128x256xf32>
    %110 = vector.extract_strided_slice %13 {offsets = [128, 0], sizes = [128, 256], strides = [1, 1]} : vector<512x256xf32> to vector<128x256xf32>
    %111 = arith.mulf %109, %110 : vector<128x256xf32>
    %cst_58 = arith.constant dense<0.000000e+00> : vector<256xf32>
    %112 = vector.multi_reduction <add>, %111, %cst_58 [0] : vector<128x256xf32> to vector<256xf32>
    %113 = vector.shape_cast %112 : vector<256xf32> to vector<1x256xf32>
    %114 = vector.extract_strided_slice %20 {offsets = [128, 0], sizes = [128, 256], strides = [1, 1]} : vector<512x256xf32> to vector<128x256xf32>
    %115 = arith.mulf %109, %114 : vector<128x256xf32>
    %cst_59 = arith.constant dense<0.000000e+00> : vector<256xf32>
    %116 = vector.multi_reduction <add>, %115, %cst_59 [0] : vector<128x256xf32> to vector<256xf32>
    %117 = vector.shape_cast %116 : vector<256xf32> to vector<1x256xf32>
    %118 = vector.extract_strided_slice %27 {offsets = [128, 0], sizes = [128, 256], strides = [1, 1]} : vector<512x256xf32> to vector<128x256xf32>
    %119 = arith.mulf %109, %118 : vector<128x256xf32>
    %cst_60 = arith.constant dense<0.000000e+00> : vector<256xf32>
    %120 = vector.multi_reduction <add>, %119, %cst_60 [0] : vector<128x256xf32> to vector<256xf32>
    %121 = vector.shape_cast %120 : vector<256xf32> to vector<1x256xf32>
    %122 = vector.extract_strided_slice %34 {offsets = [128, 0], sizes = [128, 256], strides = [1, 1]} : vector<512x256xf32> to vector<128x256xf32>
    %123 = arith.mulf %109, %122 : vector<128x256xf32>
    %cst_61 = arith.constant dense<0.000000e+00> : vector<256xf32>
    %124 = vector.multi_reduction <add>, %123, %cst_61 [0] : vector<128x256xf32> to vector<256xf32>
    %125 = vector.shape_cast %124 : vector<256xf32> to vector<1x256xf32>
    %126 = vector.extract_strided_slice %41 {offsets = [128, 0], sizes = [128, 256], strides = [1, 1]} : vector<512x256xf32> to vector<128x256xf32>
    %127 = arith.mulf %109, %126 : vector<128x256xf32>
    %cst_62 = arith.constant dense<0.000000e+00> : vector<256xf32>
    %128 = vector.multi_reduction <add>, %127, %cst_62 [0] : vector<128x256xf32> to vector<256xf32>
    %129 = vector.shape_cast %128 : vector<256xf32> to vector<1x256xf32>
    %130 = tpu.concatenate %113, %117, %121, %125, %129 in 0 : vector<1x256xf32>, vector<1x256xf32>, vector<1x256xf32>, vector<1x256xf32>, vector<1x256xf32> -> vector<5x256xf32>
    %cst_63 = arith.constant 0.0883883461 : f32
    %131 = vector.broadcast %cst_63 : f32 to vector<5x256xf32>
    %132 = arith.mulf %130, %131 : vector<5x256xf32>
    %cst_64 = arith.constant -1.000000e+30 : f32
    %133 = vector.broadcast %cst_64 : f32 to vector<5x256xf32>
    %134 = arith.select %46, %132, %133 : vector<5x256xi1>, vector<5x256xf32>
    %cst_65 = arith.constant dense<0xFF800000> : vector<256xf32>
    %135 = vector.multi_reduction <maximumf>, %134, %cst_65 [0] : vector<5x256xf32> to vector<256xf32>
    %136 = vector.shape_cast %135 : vector<256xf32> to vector<1x256xf32>
    %137 = vector.broadcast %136 : vector<1x256xf32> to vector<5x256xf32>
    %138 = arith.subf %134, %137 : vector<5x256xf32>
    %139 = math.exp %138 : vector<5x256xf32>
    %cst_66 = arith.constant dense<0.000000e+00> : vector<256xf32>
    %140 = vector.multi_reduction <add>, %139, %cst_66 [0] : vector<5x256xf32> to vector<256xf32>
    %141 = vector.shape_cast %140 : vector<256xf32> to vector<1x256xf32>
    %142 = tpu.reciprocal %141 {approx = true} : vector<1x256xf32> -> vector<1x256xf32>
    %143 = vector.broadcast %142 : vector<1x256xf32> to vector<5x256xf32>
    %144 = arith.mulf %139, %143 : vector<5x256xf32>
    %cst_67 = arith.constant 0.000000e+00 : f32
    %145 = vector.broadcast %cst_67 : f32 to vector<128x256xf32>
    %146 = vector.extract_strided_slice %13 {offsets = [384, 0], sizes = [128, 256], strides = [1, 1]} : vector<512x256xf32> to vector<128x256xf32>
    %147 = vector.extract_strided_slice %144 {offsets = [0, 0], sizes = [1, 256], strides = [1, 1]} : vector<5x256xf32> to vector<1x256xf32>
    %148 = vector.broadcast %147 : vector<1x256xf32> to vector<128x256xf32>
    %149 = arith.mulf %148, %146 : vector<128x256xf32>
    %150 = arith.addf %145, %149 : vector<128x256xf32>
    %151 = vector.extract_strided_slice %20 {offsets = [384, 0], sizes = [128, 256], strides = [1, 1]} : vector<512x256xf32> to vector<128x256xf32>
    %152 = vector.extract_strided_slice %144 {offsets = [1, 0], sizes = [1, 256], strides = [1, 1]} : vector<5x256xf32> to vector<1x256xf32>
    %153 = vector.broadcast %152 : vector<1x256xf32> to vector<128x256xf32>
    %154 = arith.mulf %153, %151 : vector<128x256xf32>
    %155 = arith.addf %150, %154 : vector<128x256xf32>
    %156 = vector.extract_strided_slice %27 {offsets = [384, 0], sizes = [128, 256], strides = [1, 1]} : vector<512x256xf32> to vector<128x256xf32>
    %157 = vector.extract_strided_slice %144 {offsets = [2, 0], sizes = [1, 256], strides = [1, 1]} : vector<5x256xf32> to vector<1x256xf32>
    %158 = vector.broadcast %157 : vector<1x256xf32> to vector<128x256xf32>
    %159 = arith.mulf %158, %156 : vector<128x256xf32>
    %160 = arith.addf %155, %159 : vector<128x256xf32>
    %161 = vector.extract_strided_slice %34 {offsets = [384, 0], sizes = [128, 256], strides = [1, 1]} : vector<512x256xf32> to vector<128x256xf32>
    %162 = vector.extract_strided_slice %144 {offsets = [3, 0], sizes = [1, 256], strides = [1, 1]} : vector<5x256xf32> to vector<1x256xf32>
    %163 = vector.broadcast %162 : vector<1x256xf32> to vector<128x256xf32>
    %164 = arith.mulf %163, %161 : vector<128x256xf32>
    %165 = arith.addf %160, %164 : vector<128x256xf32>
    %166 = vector.extract_strided_slice %41 {offsets = [384, 0], sizes = [128, 256], strides = [1, 1]} : vector<512x256xf32> to vector<128x256xf32>
    %167 = vector.extract_strided_slice %144 {offsets = [4, 0], sizes = [1, 256], strides = [1, 1]} : vector<5x256xf32> to vector<1x256xf32>
    %168 = vector.broadcast %167 : vector<1x256xf32> to vector<128x256xf32>
    %169 = arith.mulf %168, %166 : vector<128x256xf32>
    %170 = arith.addf %165, %169 : vector<128x256xf32>
    %171 = tpu.concatenate %108, %170 in 0 : vector<128x256xf32>, vector<128x256xf32> -> vector<256x256xf32>
    %172 = arith.truncf %171 : vector<256x256xf32> to vector<256x256xbf16>
    %c0_68 = arith.constant 0 : index
    %c0_69 = arith.constant 0 : index
    %173 = vector.load %arg6[%c0_68, %c0_69] : memref<256x256xbf16, #tpu.memory_space<vmem>>, vector<256x256xbf16>
    %cst_70 = arith.constant dense<0.000000e+00> : vector<256x256xf32>
    %174 = tpu.matmul %173, %172, %cst_70 {dimension_numbers = #tpu.dot_dimension_numbers<[1], [0], [0], [1], [0, 0, 1, 1], [], []>} : vector<256x256xbf16>, vector<256x256xbf16>, vector<256x256xf32> -> vector<256x256xf32>
    %c0_71 = arith.constant 0 : index
    %c0_72 = arith.constant 0 : index
    %175 = vector.load %arg10[%c0_71, %c0_72] : memref<256x1xf32, #tpu.memory_space<vmem>>, vector<256x1xf32>
    %176 = vector.broadcast %175 : vector<256x1xf32> to vector<256x256xf32>
    %177 = arith.addf %174, %176 : vector<256x256xf32>
    %c0_73 = arith.constant 0 : index
    %c0_74 = arith.constant 0 : index
    %178 = vector.load %arg7[%c0_73, %c0_74] : memref<16x256xbf16, #tpu.memory_space<vmem>>, vector<16x256xbf16>
    %179 = arith.truncf %177 : vector<256x256xf32> to vector<256x256xbf16>
    %cst_75 = arith.constant dense<0.000000e+00> : vector<16x256xf32>
    %180 = tpu.matmul %178, %179, %cst_75 {dimension_numbers = #tpu.dot_dimension_numbers<[1], [0], [0], [1], [0, 0, 1, 1], [], []>} : vector<16x256xbf16>, vector<256x256xbf16>, vector<16x256xf32> -> vector<16x256xf32>
    %c0_76 = arith.constant 0 : index
    %c0_77 = arith.constant 0 : index
    %181 = vector.load %arg11[%c0_76, %c0_77] : memref<16x1xf32, #tpu.memory_space<vmem>>, vector<16x1xf32>
    %182 = vector.broadcast %181 : vector<16x1xf32> to vector<16x256xf32>
    %183 = arith.addf %180, %182 : vector<16x256xf32>
    %c0_78 = arith.constant 0 : index
    %c0_79 = arith.constant 0 : index
    %c0_80 = arith.constant 0 : index
    %184 = vector.load %arg12[%c0_78, %c0_79, %c0_80] : memref<1x16x256xf32, #tpu.memory_space<vmem>>, vector<1x16x256xf32>
    %185 = vector.shape_cast %184 : vector<1x16x256xf32> to vector<16x256xf32>
    %186 = vector.shape_cast %183 : vector<16x256xf32> to vector<1x16x256xf32>
    tpu.vector_store %arg12[%c0_78, %c0_79, %c0_80], %186 {strides = array<i32>} : memref<1x16x256xf32, #tpu.memory_space<vmem>>, vector<1x16x256xf32>,
    return
  }
  func.func @transform_0(%arg0: i32, %arg1: i32, %arg2: memref<2xi32, #tpu.memory_space<smem>>) -> (i32, i32, i32, i32) {
    %c0_i32 = arith.constant 0 : i32
    %c0_i32_0 = arith.constant 0 : i32
    %c0_i32_1 = arith.constant 0 : i32
    return %arg0, %c0_i32, %c0_i32_0, %arg1 : i32, i32, i32, i32
  }
  func.func @transform_1(%arg0: i32, %arg1: i32, %arg2: memref<2xi32, #tpu.memory_space<smem>>) -> (i32, i32) {
    %c0_i32 = arith.constant 0 : i32
    %c0_i32_0 = arith.constant 0 : i32
    %c0_i32_1 = arith.constant 0 : i32
    return %c0_i32, %c0_i32_0 : i32, i32
  }
  func.func @transform_2(%arg0: i32, %arg1: i32, %arg2: memref<2xi32, #tpu.memory_space<smem>>) -> (i32, i32) {
    %c0_i32 = arith.constant 0 : i32
    %c0_i32_0 = arith.constant 0 : i32
    %c0_i32_1 = arith.constant 0 : i32
    return %c0_i32, %c0_i32_0 : i32, i32
  }
  func.func @transform_3(%arg0: i32, %arg1: i32, %arg2: memref<2xi32, #tpu.memory_space<smem>>) -> (i32, i32) {
    %c0_i32 = arith.constant 0 : i32
    %c0_i32_0 = arith.constant 0 : i32
    %c0_i32_1 = arith.constant 0 : i32
    return %c0_i32, %c0_i32_0 : i32, i32
  }
  func.func @transform_4(%arg0: i32, %arg1: i32, %arg2: memref<2xi32, #tpu.memory_space<smem>>) -> (i32, i32) {
    %c0_i32 = arith.constant 0 : i32
    %c0_i32_0 = arith.constant 0 : i32
    %c0_i32_1 = arith.constant 0 : i32
    return %c0_i32, %c0_i32_0 : i32, i32
  }
  func.func @transform_5(%arg0: i32, %arg1: i32, %arg2: memref<2xi32, #tpu.memory_space<smem>>) -> (i32, i32) {
    %c0_i32 = arith.constant 0 : i32
    %c0_i32_0 = arith.constant 0 : i32
    %c0_i32_1 = arith.constant 0 : i32
    return %c0_i32, %c0_i32_0 : i32, i32
  }
  func.func @transform_6(%arg0: i32, %arg1: i32, %arg2: memref<2xi32, #tpu.memory_space<smem>>) -> (i32, i32) {
    %c0_i32 = arith.constant 0 : i32
    %c0_i32_0 = arith.constant 0 : i32
    %c0_i32_1 = arith.constant 0 : i32
    return %c0_i32, %c0_i32_0 : i32, i32
  }
  func.func @transform_7(%arg0: i32, %arg1: i32, %arg2: memref<2xi32, #tpu.memory_space<smem>>) -> (i32, i32) {
    %c0_i32 = arith.constant 0 : i32
    %c0_i32_0 = arith.constant 0 : i32
    %c0_i32_1 = arith.constant 0 : i32
    return %c0_i32, %c0_i32_0 : i32, i32
  }
  func.func @transform_8(%arg0: i32, %arg1: i32, %arg2: memref<2xi32, #tpu.memory_space<smem>>) -> (i32, i32) {
    %c0_i32 = arith.constant 0 : i32
    %c0_i32_0 = arith.constant 0 : i32
    %c0_i32_1 = arith.constant 0 : i32
    return %c0_i32, %c0_i32_0 : i32, i32
  }
  func.func @transform_9(%arg0: i32, %arg1: i32, %arg2: memref<2xi32, #tpu.memory_space<smem>>) -> (i32, i32, i32) {
    %c0_i32 = arith.constant 0 : i32
    %c0_i32_0 = arith.constant 0 : i32
    return %arg0, %c0_i32, %arg1 : i32, i32, i32
  }
}

</mosaic_0001>

<llo_original>
// kernel: pillarnet_fkd_forward.1
$region0: #{pillarnet_fkd_forward.1}
  #allocation0 [shape = 'u32[]', space=smem, size = 0x4, offset = 0x4, fixed_abs, tag = 'smem constant byte address 0x4 - core index']
  #allocation1 [shape = 'u32[144,128]{1,0:T(1,128)}', space=vmem, size = 0x12000, scoped, tag = 'internal scratch']
  #allocation2 [shape = 's32[1]{0}', space=sflag, size = 0x4, scoped, tag = 'scoped memory for pillarnet_fkd_forward.1']
  #allocation3 [shape = 'u8[512]{0}', space=smem, size = 0x200, scoped, tag = 'prefetched SMEM operand 0']
  %s0 = inlined_call_operand.vmem [shape: s32[2], index: 0, kind: input, shape index: {}]
  %s1 = inlined_call_operand.vmem [shape: bf16[2,5,256,256], index: 1, kind: input, shape index: {}]
  %s2 = inlined_call_operand.vmem [shape: bf16[256,256], index: 2, kind: input, shape index: {}]
  %s3 = inlined_call_operand.vmem [shape: bf16[512,256], index: 3, kind: input, shape index: {}]
  %s4 = inlined_call_operand.vmem [shape: bf16[256,256], index: 4, kind: input, shape index: {}]
  %s5 = inlined_call_operand.vmem [shape: bf16[16,256], index: 5, kind: input, shape index: {}]
  %s6 = inlined_call_operand.vmem [shape: f32[256,1], index: 6, kind: input, shape index: {}]
  %s7 = inlined_call_operand.vmem [shape: f32[512,1], index: 7, kind: input, shape index: {}]
  %s8 = inlined_call_operand.vmem [shape: f32[256,1], index: 8, kind: input, shape index: {}]
  %s9 = inlined_call_operand.vmem [shape: f32[16,1], index: 9, kind: input, shape index: {}]
  %s10 = inlined_call_operand.vmem [shape: f32[2,16,256], index: 10, kind: output, shape index: {}]
  %s11 = sld [smem:[#allocation0]]
  $region69: #{pillarnet_fkd_forward.1} parent=0
    _
  %s13 = ssub.s32 1, %s11
  %s14 = scalar_select 0, %s13, %s11
  %s15 = sshll.u32 %s0, 4
  %s16 = int_to_ptr.vmem [resolvable:$true] %s15
  %18 = dma.vmem_to_smem %s16, 16, [#allocation3], [#allocation2]
  %19 = dma.done [#allocation2], 16
  %20 = sfence
  loop: start=0, step=1, limit=4
  $region2: #{pillarnet_fkd_forward.1} parent=0 // loop_pre_header
    _
  $region3: #{pillarnet_fkd_forward.1} parent=0 // loop_header
    %s22 = sphi 0, %s26
    %p23 = scmp.ge.s32.totalorder %s22, 4
    %s29 = sphi 0, %s41
    %s30 = sphi 0, %s37
    %s31 = sphi 0, %s29
    %s32 = sphi 0, %s30
    %s33 = sphi 0, %s31
    %s34 = sphi 0, %s32
    %s46 = sphi 0, %s48
    %s49 = sphi 0, %s46
    %s50 = sphi 0, %s49
    %s66 = sphi 0, %s50
    %s70 = sphi 0, %s70
    %s72 = sphi 0, %s70
    %s73 = sphi 0, %s72
    %s87 = sphi 0, %s73
    %s91 = sphi 0, %s91
    %s93 = sphi 0, %s91
    %s94 = sphi 0, %s93
    %s108 = sphi 0, %s94
    %s112 = sphi 0, %s112
    %s114 = sphi 0, %s112
    %s115 = sphi 0, %s114
    %s129 = sphi 0, %s115
    %s133 = sphi 0, %s133
    %s135 = sphi 0, %s133
    %s136 = sphi 0, %s135
    %s150 = sphi 0, %s136
    %s154 = sphi 0, %s154
    %s156 = sphi 0, %s154
    %s157 = sphi 0, %s156
    %s171 = sphi 0, %s157
    %s175 = sphi 0, %s175
    %s177 = sphi 0, %s175
    %s178 = sphi 0, %s177
    %s192 = sphi 0, %s178
    %s196 = sphi 0, %s196
    %s198 = sphi 0, %s196
    %s199 = sphi 0, %s198
    %s213 = sphi 0, %s199
    %s217 = sphi 0, %s217
    %s219 = sphi 0, %s217
    %s220 = sphi 0, %s219
    %s234 = sphi 0, %s220
    %s242 = sphi 0, %s244
    %s245 = sphi 0, %s242
    %s246 = sphi 0, %s245
    %s262 = sphi 0, %s246
  $region4: #{pillarnet_fkd_forward.1} parent=0 // loop_header_branch
    %25 = sbr.rel (%p23) target = $region8
  $region5: #{pillarnet_fkd_forward.1} parent=0 // loop_body
    %s27 = ssub.s32 %s22, 1
    %s28 = ssub.s32 %s22, 2
    %s35 = sadd.s32 1, %s30
    %p36 = scmp.ge.s32.totalorder %s35, 1
    %s37 = scalar_select %p36, 0, %s35
    %s38 = sadd.s32 1, %s29
    %s39 = scalar_select %p36, %s38, %s29
    %p40 = scmp.ge.s32.totalorder %s39, 2
    %s41 = scalar_select %p40, 0, %s39
    %s42 = ssub.s32 %s29, %s41
    %s43 = ssub.s32 %s30, %s37
    %s44 = sor.u32 %s42, %s43
    %p45 = scmp.eq.s32.totalorder %s44, 0
    %s47 = sadd.s32 %s46, 1
    %s48 = scalar_select %p45, %s46, %s47
    %p51 = pneg %p45
    %p52 = scmp.eq.s32.totalorder %s22, 1
    %p53 = por %p51, %p52
    %p54 = scmp.ne.s32.totalorder %s46, %s49
    %p55 = scmp.eq.s32.totalorder %s22, 0
    %p56 = por %p54, %p55
    %p57 = scmp.ne.s32.totalorder %s46, %s49
    %p58 = scmp.eq.s32.totalorder %s27, 1
    %p59 = por %p57, %p58
    %p60 = scmp.ne.s32.totalorder %s49, %s50
    %p61 = scmp.eq.s32.totalorder %s27, 0
    %p62 = por %p60, %p61
    %p63 = scmp.ne.s32.totalorder %s49, %s50
    %p64 = scmp.eq.s32.totalorder %s28, 1
    %p65 = por %p63, %p64
    %p67 = scmp.ne.s32.totalorder %s50, %s66
    %p68 = scmp.eq.s32.totalorder %s28, 0
    %p69 = por %p67, %p68
    %s71 = sadd.s32 %s70, 1
    %p74 = scmp.eq.s32.totalorder %s22, 1
    %p75 = scmp.ne.s32.totalorder %s70, %s72
    %p76 = scmp.eq.s32.totalorder %s22, 0
    %p77 = por %p75, %p76
    %p78 = scmp.ne.s32.totalorder %s70, %s72
    %p79 = scmp.eq.s32.totalorder %s27, 1
    %p80 = por %p78, %p79
    %p81 = scmp.ne.s32.totalorder %s72, %s73
    %p82 = scmp.eq.s32.totalorder %s27, 0
    %p83 = por %p81, %p82
    %p84 = scmp.ne.s32.totalorder %s72, %s73
    %p85 = scmp.eq.s32.totalorder %s28, 1
    %p86 = por %p84, %p85
    %p88 = scmp.ne.s32.totalorder %s73, %s87
    %p89 = scmp.eq.s32.totalorder %s28, 0
    %p90 = por %p88, %p89
    %s92 = sadd.s32 %s91, 1
    %p95 = scmp.eq.s32.totalorder %s22, 1
    %p96 = scmp.ne.s32.totalorder %s91, %s93
    %p97 = scmp.eq.s32.totalorder %s22, 0
    %p98 = por %p96, %p97
    %p99 = scmp.ne.s32.totalorder %s91, %s93
    %p100 = scmp.eq.s32.totalorder %s27, 1
    %p101 = por %p99, %p100
    %p102 = scmp.ne.s32.totalorder %s93, %s94
    %p103 = scmp.eq.s32.totalorder %s27, 0
    %p104 = por %p102, %p103
    %p105 = scmp.ne.s32.totalorder %s93, %s94
    %p106 = scmp.eq.s32.totalorder %s28, 1
    %p107 = por %p105, %p106
    %p109 = scmp.ne.s32.totalorder %s94, %s108
    %p110 = scmp.eq.s32.totalorder %s28, 0
    %p111 = por %p109, %p110
    %s113 = sadd.s32 %s112, 1
    %p116 = scmp.eq.s32.totalorder %s22, 1
    %p117 = scmp.ne.s32.totalorder %s112, %s114
    %p118 = scmp.eq.s32.totalorder %s22, 0
    %p119 = por %p117, %p118
    %p120 = scmp.ne.s32.totalorder %s112, %s114
    %p121 = scmp.eq.s32.totalorder %s27, 1
    %p122 = por %p120, %p121
    %p123 = scmp.ne.s32.totalorder %s114, %s115
    %p124 = scmp.eq.s32.totalorder %s27, 0
    %p125 = por %p123, %p124
    %p126 = scmp.ne.s32.totalorder %s114, %s115
    %p127 = scmp.eq.s32.totalorder %s28, 1
    %p128 = por %p126, %p127
    %p130 = scmp.ne.s32.totalorder %s115, %s129
    %p131 = scmp.eq.s32.totalorder %s28, 0
    %p132 = por %p130, %p131
    %s134 = sadd.s32 %s133, 1
    %p137 = scmp.eq.s32.totalorder %s22, 1
    %p138 = scmp.ne.s32.totalorder %s133, %s135
    %p139 = scmp.eq.s32.totalorder %s22, 0
    %p140 = por %p138, %p139
    %p141 = scmp.ne.s32.totalorder %s133, %s135
    %p142 = scmp.eq.s32.totalorder %s27, 1
    %p143 = por %p141, %p142
    %p144 = scmp.ne.s32.totalorder %s135, %s136
    %p145 = scmp.eq.s32.totalorder %s27, 0
    %p146 = por %p144, %p145
    %p147 = scmp.ne.s32.totalorder %s135, %s136
    %p148 = scmp.eq.s32.totalorder %s28, 1
    %p149 = por %p147, %p148
    %p151 = scmp.ne.s32.totalorder %s136, %s150
    %p152 = scmp.eq.s32.totalorder %s28, 0
    %p153 = por %p151, %p152
    %s155 = sadd.s32 %s154, 1
    %p158 = scmp.eq.s32.totalorder %s22, 1
    %p159 = scmp.ne.s32.totalorder %s154, %s156
    %p160 = scmp.eq.s32.totalorder %s22, 0
    %p161 = por %p159, %p160
    %p162 = scmp.ne.s32.totalorder %s154, %s156
    %p163 = scmp.eq.s32.totalorder %s27, 1
    %p164 = por %p162, %p163
    %p165 = scmp.ne.s32.totalorder %s156, %s157
    %p166 = scmp.eq.s32.totalorder %s27, 0
    %p167 = por %p165, %p166
    %p168 = scmp.ne.s32.totalorder %s156, %s157
    %p169 = scmp.eq.s32.totalorder %s28, 1
    %p170 = por %p168, %p169
    %p172 = scmp.ne.s32.totalorder %s157, %s171
    %p173 = scmp.eq.s32.totalorder %s28, 0
    %p174 = por %p172, %p173
    %s176 = sadd.s32 %s175, 1
    %p179 = scmp.eq.s32.totalorder %s22, 1
    %p180 = scmp.ne.s32.totalorder %s175, %s177
    %p181 = scmp.eq.s32.totalorder %s22, 0
    %p182 = por %p180, %p181
    %p183 = scmp.ne.s32.totalorder %s175, %s177
    %p184 = scmp.eq.s32.totalorder %s27, 1
    %p185 = por %p183, %p184
    %p186 = scmp.ne.s32.totalorder %s177, %s178
    %p187 = scmp.eq.s32.totalorder %s27, 0
    %p188 = por %p186, %p187
    %p189 = scmp.ne.s32.totalorder %s177, %s178
    %p190 = scmp.eq.s32.totalorder %s28, 1
    %p191 = por %p189, %p190
    %p193 = scmp.ne.s32.totalorder %s178, %s192
    %p194 = scmp.eq.s32.totalorder %s28, 0
    %p195 = por %p193, %p194
    %s197 = sadd.s32 %s196, 1
    %p200 = scmp.eq.s32.totalorder %s22, 1
    %p201 = scmp.ne.s32.totalorder %s196, %s198
    %p202 = scmp.eq.s32.totalorder %s22, 0
    %p203 = por %p201, %p202
    %p204 = scmp.ne.s32.totalorder %s196, %s198
    %p205 = scmp.eq.s32.totalorder %s27, 1
    %p206 = por %p204, %p205
    %p207 = scmp.ne.s32.totalorder %s198, %s199
    %p208 = scmp.eq.s32.totalorder %s27, 0
    %p209 = por %p207, %p208
    %p210 = scmp.ne.s32.totalorder %s198, %s199
    %p211 = scmp.eq.s32.totalorder %s28, 1
    %p212 = por %p210, %p211
    %p214 = scmp.ne.s32.totalorder %s199, %s213
    %p215 = scmp.eq.s32.totalorder %s28, 0
    %p216 = por %p214, %p215
    %s218 = sadd.s32 %s217, 1
    %p221 = scmp.eq.s32.totalorder %s22, 1
    %p222 = scmp.ne.s32.totalorder %s217, %s219
    %p223 = scmp.eq.s32.totalorder %s22, 0
    %p224 = por %p222, %p223
    %p225 = scmp.ne.s32.totalorder %s217, %s219
    %p226 = scmp.eq.s32.totalorder %s27, 1
    %p227 = por %p225, %p226
    %p228 = scmp.ne.s32.totalorder %s219, %s220
    %p229 = scmp.eq.s32.totalorder %s27, 0
    %p230 = por %p228, %p229
    %p231 = scmp.ne.s32.totalorder %s219, %s220
    %p232 = scmp.eq.s32.totalorder %s28, 1
    %p233 = por %p231, %p232
    %p235 = scmp.ne.s32.totalorder %s220, %s234
    %p236 = scmp.eq.s32.totalorder %s28, 0
    %p237 = por %p235, %p236
    %s238 = ssub.s32 %s29, %s41
    %s239 = ssub.s32 %s30, %s37
    %s240 = sor.u32 %s238, %s239
    %p241 = scmp.eq.s32.totalorder %s240, 0
    %s243 = sadd.s32 %s242, 1
    %s244 = scalar_select %p241, %s242, %s243
    %p247 = pneg %p241
    %p248 = scmp.eq.s32.totalorder %s22, 1
    %p249 = por %p247, %p248
    %p250 = scmp.ne.s32.totalorder %s242, %s245
    %p251 = scmp.eq.s32.totalorder %s22, 0
    %p252 = por %p250, %p251
    %p253 = scmp.ne.s32.totalorder %s242, %s245
    %p254 = scmp.eq.s32.totalorder %s27, 1
    %p255 = por %p253, %p254
    %p256 = scmp.ne.s32.totalorder %s245, %s246
    %p257 = scmp.eq.s32.totalorder %s27, 0
    %p258 = por %p256, %p257
    %p259 = scmp.ne.s32.totalorder %s245, %s246
    %p260 = scmp.eq.s32.totalorder %s28, 1
    %p261 = por %p259, %p260
    %p263 = scmp.ne.s32.totalorder %s246, %s262
    %p264 = scmp.eq.s32.totalorder %s28, 0
    %p265 = por %p263, %p264
    %p266 = scmp.le.s32.totalorder 1, %s22
    %p267 = scmp.lt.s32.totalorder %s22, 3
    %p268 = pnand %p266, %p267
    %p269 = pneg %p268
    // Predicated region
    $region9: #{pillarnet_fkd_forward.1} parent=5 // pred_check
      _
    $region10: #{pillarnet_fkd_forward.1} parent=5 // pred_check_branch
      %271 = sbr.rel (%p268) target = $region12
    $region11: #{pillarnet_fkd_forward.1} parent=5 // pred_region
      %s272 = ssub.s32 %s22, 1
      // Predicated region
      $region13: #{pillarnet_fkd_forward.1} parent=11 // pred_check
        %p273 = pneg %p83
      $region14: #{pillarnet_fkd_forward.1} parent=11 // pred_check_branch
        %275 = sbr.rel (%p273) target = $region16
      $region15: #{pillarnet_fkd_forward.1} parent=11 // pred_region
        _
      $region16: #{pillarnet_fkd_forward.1} parent=11 // pred_fallthru
        _
      // Predicated region
      $region17: #{pillarnet_fkd_forward.1} parent=11 // pred_check
        %p276 = pneg %p104
      $region18: #{pillarnet_fkd_forward.1} parent=11 // pred_check_branch
        %278 = sbr.rel (%p276) target = $region20
      $region19: #{pillarnet_fkd_forward.1} parent=11 // pred_region
        _
      $region20: #{pillarnet_fkd_forward.1} parent=11 // pred_fallthru
        _
      // Predicated region
      $region21: #{pillarnet_fkd_forward.1} parent=11 // pred_check
        %p279 = pneg %p125
      $region22: #{pillarnet_fkd_forward.1} parent=11 // pred_check_branch
        %281 = sbr.rel (%p279) target = $region24
      $region23: #{pillarnet_fkd_forward.1} parent=11 // pred_region
        _
      $region24: #{pillarnet_fkd_forward.1} parent=11 // pred_fallthru
        _
      // Predicated region
      $region25: #{pillarnet_fkd_forward.1} parent=11 // pred_check
        %p282 = pneg %p146
      $region26: #{pillarnet_fkd_forward.1} parent=11 // pred_check_branch
        %284 = sbr.rel (%p282) target = $region28
      $region27: #{pillarnet_fkd_forward.1} parent=11 // pred_region
        _
      $region28: #{pillarnet_fkd_forward.1} parent=11 // pred_fallthru
        _
      // Predicated region
      $region29: #{pillarnet_fkd_forward.1} parent=11 // pred_check
        %p285 = pneg %p167
      $region30: #{pillarnet_fkd_forward.1} parent=11 // pred_check_branch
        %287 = sbr.rel (%p285) target = $region32
      $region31: #{pillarnet_fkd_forward.1} parent=11 // pred_region
        _
      $region32: #{pillarnet_fkd_forward.1} parent=11 // pred_fallthru
        _
      // Predicated region
      $region33: #{pillarnet_fkd_forward.1} parent=11 // pred_check
        %p288 = pneg %p188
      $region34: #{pillarnet_fkd_forward.1} parent=11 // pred_check_branch
        %290 = sbr.rel (%p288) target = $region36
      $region35: #{pillarnet_fkd_forward.1} parent=11 // pred_region
        _
      $region36: #{pillarnet_fkd_forward.1} parent=11 // pred_fallthru
        _
      // Predicated region
      $region37: #{pillarnet_fkd_forward.1} parent=11 // pred_check
        %p291 = pneg %p209
      $region38: #{pillarnet_fkd_forward.1} parent=11 // pred_check_branch
        %293 = sbr.rel (%p291) target = $region40
      $region39: #{pillarnet_fkd_forward.1} parent=11 // pred_region
        _
      $region40: #{pillarnet_fkd_forward.1} parent=11 // pred_fallthru
        _
      // Predicated region
      $region41: #{pillarnet_fkd_forward.1} parent=11 // pred_check
        %p294 = pneg %p230
      $region42: #{pillarnet_fkd_forward.1} parent=11 // pred_check_branch
        %296 = sbr.rel (%p294) target = $region44
      $region43: #{pillarnet_fkd_forward.1} parent=11 // pred_region
        _
      $region44: #{pillarnet_fkd_forward.1} parent=11 // pred_fallthru
        _
    $region12: #{pillarnet_fkd_forward.1} parent=5 // pred_fallthru
      _
    %p297 = scmp.lt.s32.totalorder %s22, 2
    // Predicated region
    $region45: #{pillarnet_fkd_forward.1} parent=5 // pred_check
      %p298 = pneg %p297
    $region46: #{pillarnet_fkd_forward.1} parent=5 // pred_check_branch
      %300 = sbr.rel (%p298) target = $region48
    $region47: #{pillarnet_fkd_forward.1} parent=5 // pred_region
      // Predicated region
      $region49: #{pillarnet_fkd_forward.1} parent=47 // pred_check
        %p301 = pneg %p56
      $region50: #{pillarnet_fkd_forward.1} parent=47 // pred_check_branch
        %303 = sbr.rel (%p301) target = $region52
      $region51: #{pillarnet_fkd_forward.1} parent=47 // pred_region
        %s304 = smul.u32 2, %s30
        %p305 = scmp.lt.s32.totalorder %s29, 1
        %s306 = scalar_select %p305, %s29, 1
        %p307 = scmp.lt.s32.totalorder %s304, 1
        %s308 = scalar_select %p307, %s304, 1
        %s309 = smul.addr %s306, 320
        %s310 = sadd.s32 %s308, %s309
        %s311 = smul.addr %s310, 4
        %s312 = scalar_lea.vmem %s1, %s311
        %s313 = smul.u32 2, %s30
      $region52: #{pillarnet_fkd_forward.1} parent=47 // pred_fallthru
        _
    $region48: #{pillarnet_fkd_forward.1} parent=5 // pred_fallthru
      _
    %p314 = scmp.le.s32.totalorder 1, %s22
    %p315 = scmp.lt.s32.totalorder %s22, 3
    %p316 = pnand %p314, %p315
    %p317 = pneg %p316
    // Predicated region
    $region53: #{pillarnet_fkd_forward.1} parent=5 // pred_check
      _
    $region54: #{pillarnet_fkd_forward.1} parent=5 // pred_check_branch
      %319 = sbr.rel (%p316) target = $region56
    $region55: #{pillarnet_fkd_forward.1} parent=5 // pred_region
      %s320 = ssub.s32 %s22, 1
      %s321 = smul.u32 2, %s32
      %p322 = scmp.lt.s32.totalorder %s31, 1
      %s323 = scalar_select %p322, %s31, 1
      %p324 = scmp.lt.s32.totalorder %s321, 1
      %s325 = scalar_select %p324, %s321, 1
      %s326 = smul.addr %s323, 320
      %s327 = sadd.s32 %s325, %s326
      %s328 = smul.addr %s327, 4
      %s329 = scalar_lea.vmem %s1, %s328
      %p330 = pneg %p62
      %p331 = pneg %p59
      %p332 = pneg %p83
      %p333 = pneg %p80
      %p334 = pneg %p104
      %p335 = pneg %p101
      %p336 = pneg %p125
      %p337 = pneg %p122
      %p338 = pneg %p146
      %p339 = pneg %p143
      %p340 = pneg %p167
      %p341 = pneg %p164
      %p342 = pneg %p188
      %p343 = pneg %p185
      %p344 = pneg %p209
      %p345 = pneg %p206
      %p346 = pneg %p230
      %p347 = pneg %p227
      %p348 = pneg %p258
      %p349 = pneg %p255
      %s350 = smul.u32 2, %s32
      %p351 = scmp.lt.s32.totalorder %s31, 1
      %s352 = scalar_select %p351, %s31, 1
      %p353 = scmp.lt.s32.totalorder %s350, 1
      %s354 = scalar_select %p353, %s350, 1
      %s355 = smul.addr %s352, 4
      %s356 = sadd.s32 %s354, %s355
      %s357 = smul.addr %s356, 8
      %s358 = scalar_lea.vmem %s10, %s357
      %s359 = smul.u32 2, %s32
      %p360 = scmp.lt.s32.totalorder %s31, 1
      %s361 = scalar_select %p360, %s31, 1
      %p362 = scmp.lt.s32.totalorder %s359, 1
      %s363 = scalar_select %p362, %s359, 1
      %s364 = smul.addr %s361, 320
      %s365 = sadd.s32 %s363, %s364
      %s366 = smul.addr %s365, 4
      %s367 = scalar_lea.vmem %s1, %s366
      %s368 = smul.u32 2, %s32
      %s369 = smul.u32 2, %s32
      %p370 = scmp.lt.s32.totalorder %s31, 1
      %s371 = scalar_select %p370, %s31, 1
      %p372 = scmp.lt.s32.totalorder %s369, 1
      %s373 = scalar_select %p372, %s369, 1
      %s374 = smul.addr %s371, 4
      %s375 = sadd.s32 %s373, %s374
      %s376 = smul.addr %s375, 8
      %s377 = scalar_lea.vmem %s10, %s376
      %s378 = smul.u32 2, %s32
      %v379 = vld [vmem:[%s367] sm:$0xff]
      %v380 = vld [vmem:[%s367 + $0x8] sm:$0xff]
      %v381 = vld [vmem:[%s367 + $0x10] sm:$0xff]
      %v382 = vld [vmem:[%s367 + $0x18] sm:$0xff]
      %v383 = vld [vmem:[%s367 + $0x20] sm:$0xff]
      %v384 = vld [vmem:[%s367 + $0x28] sm:$0xff]
      %v385 = vld [vmem:[%s367 + $0x30] sm:$0xff]
      %v386 = vld [vmem:[%s367 + $0x38] sm:$0xff]
      %v387 = vld [vmem:[%s367 + $0x40] sm:$0xff]
      %v388 = vld [vmem:[%s367 + $0x48] sm:$0xff]
      %v389 = vld [vmem:[%s367 + $0x50] sm:$0xff]
      %v390 = vld [vmem:[%s367 + $0x58] sm:$0xff]
      %v391 = vld [vmem:[%s367 + $0x60] sm:$0xff]
      %v392 = vld [vmem:[%s367 + $0x68] sm:$0xff]
      %v393 = vld [vmem:[%s367 + $0x70] sm:$0xff]
      %v394 = vld [vmem:[%s367 + $0x78] sm:$0xff]
      %v395 = vld [vmem:[%s367 + $0x80] sm:$0xff]
      %v396 = vld [vmem:[%s367 + $0x88] sm:$0xff]
      %v397 = vld [vmem:[%s367 + $0x90] sm:$0xff]
      %v398 = vld [vmem:[%s367 + $0x98] sm:$0xff]
      %v399 = vld [vmem:[%s367 + $0xa0] sm:$0xff]
      %v400 = vld [vmem:[%s367 + $0xa8] sm:$0xff]
      %v401 = vld [vmem:[%s367 + $0xb0] sm:$0xff]
      %v402 = vld [vmem:[%s367 + $0xb8] sm:$0xff]
      %v403 = vld [vmem:[%s367 + $0xc0] sm:$0xff]
      %v404 = vld [vmem:[%s367 + $0xc8] sm:$0xff]
      %v405 = vld [vmem:[%s367 + $0xd0] sm:$0xff]
      %v406 = vld [vmem:[%s367 + $0xd8] sm:$0xff]
      %v407 = vld [vmem:[%s367 + $0xe0] sm:$0xff]
      %v408 = vld [vmem:[%s367 + $0xe8] sm:$0xff]
      %v409 = vld [vmem:[%s367 + $0xf0] sm:$0xff]
      %v410 = vld [vmem:[%s367 + $0xf8] sm:$0xff]
      %v411 = vld [vmem:[%s2] sm:$0xff]
      %v412 = vld [vmem:[%s2 + $0x8] sm:$0xff]
      %v413 = vld [vmem:[%s2 + $0x10] sm:$0xff]
      %v414 = vld [vmem:[%s2 + $0x18] sm:$0xff]
      %v415 = vld [vmem:[%s2 + $0x20] sm:$0xff]
      %v416 = vld [vmem:[%s2 + $0x28] sm:$0xff]
      %v417 = vld [vmem:[%s2 + $0x30] sm:$0xff]
      %v418 = vld [vmem:[%s2 + $0x38] sm:$0xff]
      %v419 = vld [vmem:[%s2 + $0x40] sm:$0xff]
      %v420 = vld [vmem:[%s2 + $0x48] sm:$0xff]
      %v421 = vld [vmem:[%s2 + $0x50] sm:$0xff]
      %v422 = vld [vmem:[%s2 + $0x58] sm:$0xff]
      %v423 = vld [vmem:[%s2 + $0x60] sm:$0xff]
      %v424 = vld [vmem:[%s2 + $0x68] sm:$0xff]
      %v425 = vld [vmem:[%s2 + $0x70] sm:$0xff]
      %v426 = vld [vmem:[%s2 + $0x78] sm:$0xff]
      %v427 = vld [vmem:[%s2 + $0x80] sm:$0xff]
      %v428 = vld [vmem:[%s2 + $0x88] sm:$0xff]
      %v429 = vld [vmem:[%s2 + $0x90] sm:$0xff]
      %v430 = vld [vmem:[%s2 + $0x98] sm:$0xff]
      %v431 = vld [vmem:[%s2 + $0xa0] sm:$0xff]
      %v432 = vld [vmem:[%s2 + $0xa8] sm:$0xff]
      %v433 = vld [vmem:[%s2 + $0xb0] sm:$0xff]
      %v434 = vld [vmem:[%s2 + $0xb8] sm:$0xff]
      %v435 = vld [vmem:[%s2 + $0xc0] sm:$0xff]
      %v436 = vld [vmem:[%s2 + $0xc8] sm:$0xff]
      %v437 = vld [vmem:[%s2 + $0xd0] sm:$0xff]
      %v438 = vld [vmem:[%s2 + $0xd8] sm:$0xff]
      %v439 = vld [vmem:[%s2 + $0xe0] sm:$0xff]
      %v440 = vld [vmem:[%s2 + $0xe8] sm:$0xff]
      %v441 = vld [vmem:[%s2 + $0xf0] sm:$0xff]
      %v442 = vld [vmem:[%s2 + $0xf8] sm:$0xff]
      %v443 = vld [vmem:[%s6] sm:$0xff]
      %v444 = vld [vmem:[%s6 + $0x8] sm:$0xff]
      %v445 = vld [vmem:[%s6 + $0x10] sm:$0xff]
      %v446 = vld [vmem:[%s6 + $0x18] sm:$0xff]
      %v447 = vld [vmem:[%s6 + $0x20] sm:$0xff]
      %v448 = vld [vmem:[%s6 + $0x28] sm:$0xff]
      %v449 = vld [vmem:[%s6 + $0x30] sm:$0xff]
      %v450 = vld [vmem:[%s6 + $0x38] sm:$0xff]
      %v451 = vld [vmem:[%s6 + $0x40] sm:$0xff]
      %v452 = vld [vmem:[%s6 + $0x48] sm:$0xff]
      %v453 = vld [vmem:[%s6 + $0x50] sm:$0xff]
      %v454 = vld [vmem:[%s6 + $0x58] sm:$0xff]
      %v455 = vld [vmem:[%s6 + $0x60] sm:$0xff]
      %v456 = vld [vmem:[%s6 + $0x68] sm:$0xff]
      %v457 = vld [vmem:[%s6 + $0x70] sm:$0xff]
      %v458 = vld [vmem:[%s6 + $0x78] sm:$0xff]
      %v459 = vld [vmem:[%s6 + $0x80] sm:$0xff]
      %v460 = vld [vmem:[%s6 + $0x88] sm:$0xff]
      %v461 = vld [vmem:[%s6 + $0x90] sm:$0xff]
      %v462 = vld [vmem:[%s6 + $0x98] sm:$0xff]
      %v463 = vld [vmem:[%s6 + $0xa0] sm:$0xff]
      %v464 = vld [vmem:[%s6 + $0xa8] sm:$0xff]
      %v465 = vld [vmem:[%s6 + $0xb0] sm:$0xff]
      %v466 = vld [vmem:[%s6 + $0xb8] sm:$0xff]
      %v467 = vld [vmem:[%s6 + $0xc0] sm:$0xff]
      %v468 = vld [vmem:[%s6 + $0xc8] sm:$0xff]
      %v469 = vld [vmem:[%s6 + $0xd0] sm:$0xff]
      %v470 = vld [vmem:[%s6 + $0xd8] sm:$0xff]
      %v471 = vld [vmem:[%s6 + $0xe0] sm:$0xff]
      %v472 = vld [vmem:[%s6 + $0xe8] sm:$0xff]
      %v473 = vld [vmem:[%s6 + $0xf0] sm:$0xff]
      %v474 = vld [vmem:[%s6 + $0xf8] sm:$0xff]
      %476 = vset.pattern.permute.xlu0 0
      %477 = vperm.xlu0 %476, %v443
      %v478 = vpop.permute.xlu0 %477
      %481 = vset.pattern.permute.xlu0 0
      %482 = vperm.xlu0 %481, %v444
      %v483 = vpop.permute.xlu0 %482
      %486 = vset.pattern.permute.xlu0 0
      %487 = vperm.xlu0 %486, %v445
      %v488 = vpop.permute.xlu0 %487
      %491 = vset.pattern.permute.xlu0 0
      %492 = vperm.xlu0 %491, %v446
      %v493 = vpop.permute.xlu0 %492
      %496 = vset.pattern.permute.xlu0 0
      %497 = vperm.xlu0 %496, %v447
      %v498 = vpop.permute.xlu0 %497
      %501 = vset.pattern.permute.xlu0 0
      %502 = vperm.xlu0 %501, %v448
      %v503 = vpop.permute.xlu0 %502
      %506 = vset.pattern.permute.xlu0 0
      %507 = vperm.xlu0 %506, %v449
      %v508 = vpop.permute.xlu0 %507
      %511 = vset.pattern.permute.xlu0 0
      %512 = vperm.xlu0 %511, %v450
      %v513 = vpop.permute.xlu0 %512
      %516 = vset.pattern.permute.xlu0 0
      %517 = vperm.xlu0 %516, %v451
      %v518 = vpop.permute.xlu0 %517
      %521 = vset.pattern.permute.xlu0 0
      %522 = vperm.xlu0 %521, %v452
      %v523 = vpop.permute.xlu0 %522
      %526 = vset.pattern.permute.xlu0 0
      %527 = vperm.xlu0 %526, %v453
      %v528 = vpop.permute.xlu0 %527
      %531 = vset.pattern.permute.xlu0 0
      %532 = vperm.xlu0 %531, %v454
      %v533 = vpop.permute.xlu0 %532
      %536 = vset.pattern.permute.xlu0 0
      %537 = vperm.xlu0 %536, %v455
      %v538 = vpop.permute.xlu0 %537
      %541 = vset.pattern.permute.xlu0 0
      %542 = vperm.xlu0 %541, %v456
      %v543 = vpop.permute.xlu0 %542
      %546 = vset.pattern.permute.xlu0 0
      %547 = vperm.xlu0 %546, %v457
      %v548 = vpop.permute.xlu0 %547
      %551 = vset.pattern.permute.xlu0 0
      %552 = vperm.xlu0 %551, %v458
      %v553 = vpop.permute.xlu0 %552
      %556 = vset.pattern.permute.xlu0 0
      %557 = vperm.xlu0 %556, %v459
      %v558 = vpop.permute.xlu0 %557
      %561 = vset.pattern.permute.xlu0 0
      %562 = vperm.xlu0 %561, %v460
      %v563 = vpop.permute.xlu0 %562
      %566 = vset.pattern.permute.xlu0 0
      %567 = vperm.xlu0 %566, %v461
      %v568 = vpop.permute.xlu0 %567
      %571 = vset.pattern.permute.xlu0 0
      %572 = vperm.xlu0 %571, %v462
      %v573 = vpop.permute.xlu0 %572
      %576 = vset.pattern.permute.xlu0 0
      %577 = vperm.xlu0 %576, %v463
      %v578 = vpop.permute.xlu0 %577
      %581 = vset.pattern.permute.xlu0 0
      %582 = vperm.xlu0 %581, %v464
      %v583 = vpop.permute.xlu0 %582
      %586 = vset.pattern.permute.xlu0 0
      %587 = vperm.xlu0 %586, %v465
      %v588 = vpop.permute.xlu0 %587
      %591 = vset.pattern.permute.xlu0 0
      %592 = vperm.xlu0 %591, %v466
      %v593 = vpop.permute.xlu0 %592
      %596 = vset.pattern.permute.xlu0 0
      %597 = vperm.xlu0 %596, %v467
      %v598 = vpop.permute.xlu0 %597
      %601 = vset.pattern.permute.xlu0 0
      %602 = vperm.xlu0 %601, %v468
      %v603 = vpop.permute.xlu0 %602
      %606 = vset.pattern.permute.xlu0 0
      %607 = vperm.xlu0 %606, %v469
      %v608 = vpop.permute.xlu0 %607
      %611 = vset.pattern.permute.xlu0 0
      %612 = vperm.xlu0 %611, %v470
      %v613 = vpop.permute.xlu0 %612
      %616 = vset.pattern.permute.xlu0 0
      %617 = vperm.xlu0 %616, %v471
      %v618 = vpop.permute.xlu0 %617
      %621 = vset.pattern.permute.xlu0 0
      %622 = vperm.xlu0 %621, %v472
      %v623 = vpop.permute.xlu0 %622
      %626 = vset.pattern.permute.xlu0 0
      %627 = vperm.xlu0 %626, %v473
      %v628 = vpop.permute.xlu0 %627
      %631 = vset.pattern.permute.xlu0 0
      %632 = vperm.xlu0 %631, %v474
      %v633 = vpop.permute.xlu0 %632
      %v667 = vunpack.c.l.b16 %v411
      %v668 = vunpack.c.h.b16 %v411
      %v669 = vunpack.c.l.b16 %v412
      %v670 = vunpack.c.h.b16 %v412
      %v671 = vunpack.c.l.b16 %v413
      %v672 = vunpack.c.h.b16 %v413
      %v673 = vunpack.c.l.b16 %v414
      %v674 = vunpack.c.h.b16 %v414
      %v675 = vunpack.c.l.b16 %v415
      %v676 = vunpack.c.h.b16 %v415
      %v677 = vunpack.c.l.b16 %v416
      %v678 = vunpack.c.h.b16 %v416
      %v679 = vunpack.c.l.b16 %v417
      %v680 = vunpack.c.h.b16 %v417
      %v681 = vunpack.c.l.b16 %v418
      %v682 = vunpack.c.h.b16 %v418
      %v683 = vunpack.c.l.b16 %v419
      %v684 = vunpack.c.h.b16 %v419
      %v685 = vunpack.c.l.b16 %v420
      %v686 = vunpack.c.h.b16 %v420
      %v687 = vunpack.c.l.b16 %v421
      %v688 = vunpack.c.h.b16 %v421
      %v689 = vunpack.c.l.b16 %v422
      %v690 = vunpack.c.h.b16 %v422
      %v691 = vunpack.c.l.b16 %v423
      %v692 = vunpack.c.h.b16 %v423
      %v693 = vunpack.c.l.b16 %v424
      %v694 = vunpack.c.h.b16 %v424
      %v695 = vunpack.c.l.b16 %v425
      %v696 = vunpack.c.h.b16 %v425
      %v697 = vunpack.c.l.b16 %v426
      %v698 = vunpack.c.h.b16 %v426
      %v699 = vunpack.c.l.b16 %v427
      %v700 = vunpack.c.h.b16 %v427
      %v701 = vunpack.c.l.b16 %v428
      %v702 = vunpack.c.h.b16 %v428
      %v703 = vunpack.c.l.b16 %v429
      %v704 = vunpack.c.h.b16 %v429
      %v705 = vunpack.c.l.b16 %v430
      %v706 = vunpack.c.h.b16 %v430
      %v707 = vunpack.c.l.b16 %v431
      %v708 = vunpack.c.h.b16 %v431
      %v709 = vunpack.c.l.b16 %v432
      %v710 = vunpack.c.h.b16 %v432
      %v711 = vunpack.c.l.b16 %v433
      %v712 = vunpack.c.h.b16 %v433
      %v713 = vunpack.c.l.b16 %v434
      %v714 = vunpack.c.h.b16 %v434
      %v715 = vunpack.c.l.b16 %v435
      %v716 = vunpack.c.h.b16 %v435
      %v717 = vunpack.c.l.b16 %v436
      %v718 = vunpack.c.h.b16 %v436
      %v719 = vunpack.c.l.b16 %v437
      %v720 = vunpack.c.h.b16 %v437
      %v721 = vunpack.c.l.b16 %v438
      %v722 = vunpack.c.h.b16 %v438
      %v723 = vunpack.c.l.b16 %v439
      %v724 = vunpack.c.h.b16 %v439
      %v725 = vunpack.c.l.b16 %v440
      %v726 = vunpack.c.h.b16 %v440
      %v727 = vunpack.c.l.b16 %v441
      %v728 = vunpack.c.h.b16 %v441
      %v729 = vunpack.c.l.b16 %v442
      %v730 = vunpack.c.h.b16 %v442
      %v731 = vpack.c.b16 %v669, %v667
      %v732 = vpack.c.b16 %v670, %v668
      %v733 = vpack.c.b16 %v673, %v671
      %v734 = vpack.c.b16 %v674, %v672
      %v735 = vpack.c.b16 %v677, %v675
      %v736 = vpack.c.b16 %v678, %v676
      %v737 = vpack.c.b16 %v681, %v679
      %v738 = vpack.c.b16 %v682, %v680
      %v739 = vpack.c.b16 %v685, %v683
      %v740 = vpack.c.b16 %v686, %v684
      %v741 = vpack.c.b16 %v689, %v687
      %v742 = vpack.c.b16 %v690, %v688
      %v743 = vpack.c.b16 %v693, %v691
      %v744 = vpack.c.b16 %v694, %v692
      %v745 = vpack.c.b16 %v697, %v695
      %v746 = vpack.c.b16 %v698, %v696
      %v747 = vpack.c.b16 %v701, %v699
      %v748 = vpack.c.b16 %v702, %v700
      %v749 = vpack.c.b16 %v705, %v703
      %v750 = vpack.c.b16 %v706, %v704
      %v751 = vpack.c.b16 %v709, %v707
      %v752 = vpack.c.b16 %v710, %v708
      %v753 = vpack.c.b16 %v713, %v711
      %v754 = vpack.c.b16 %v714, %v712
      %v755 = vpack.c.b16 %v717, %v715
      %v756 = vpack.c.b16 %v718, %v716
      %v757 = vpack.c.b16 %v721, %v719
      %v758 = vpack.c.b16 %v722, %v720
      %v759 = vpack.c.b16 %v725, %v723
      %v760 = vpack.c.b16 %v726, %v724
      %v761 = vpack.c.b16 %v729, %v727
      %v762 = vpack.c.b16 %v730, %v728
      %v827 = vunpack.c.l.b16 %v379
      %v828 = vunpack.c.h.b16 %v379
      %v829 = vunpack.c.l.b16 %v380
      %v830 = vunpack.c.h.b16 %v380
      %v831 = vunpack.c.l.b16 %v381
      %v832 = vunpack.c.h.b16 %v381
      %v833 = vunpack.c.l.b16 %v382
      %v834 = vunpack.c.h.b16 %v382
      %v835 = vunpack.c.l.b16 %v383
      %v836 = vunpack.c.h.b16 %v383
      %v837 = vunpack.c.l.b16 %v384
      %v838 = vunpack.c.h.b16 %v384
      %v839 = vunpack.c.l.b16 %v385
      %v840 = vunpack.c.h.b16 %v385
      %v841 = vunpack.c.l.b16 %v386
      %v842 = vunpack.c.h.b16 %v386
      %v843 = vunpack.c.l.b16 %v387
      %v844 = vunpack.c.h.b16 %v387
      %v845 = vunpack.c.l.b16 %v388
      %v846 = vunpack.c.h.b16 %v388
      %v847 = vunpack.c.l.b16 %v389
      %v848 = vunpack.c.h.b16 %v389
      %v849 = vunpack.c.l.b16 %v390
      %v850 = vunpack.c.h.b16 %v390
      %v851 = vunpack.c.l.b16 %v391
      %v852 = vunpack.c.h.b16 %v391
      %v853 = vunpack.c.l.b16 %v392
      %v854 = vunpack.c.h.b16 %v392
      %v855 = vunpack.c.l.b16 %v393
      %v856 = vunpack.c.h.b16 %v393
      %v857 = vunpack.c.l.b16 %v394
      %v858 = vunpack.c.h.b16 %v394
      %v859 = vunpack.c.l.b16 %v395
      %v860 = vunpack.c.h.b16 %v395
      %v861 = vunpack.c.l.b16 %v396
      %v862 = vunpack.c.h.b16 %v396
      %v863 = vunpack.c.l.b16 %v397
      %v864 = vunpack.c.h.b16 %v397
      %v865 = vunpack.c.l.b16 %v398
      %v866 = vunpack.c.h.b16 %v398
      %v867 = vunpack.c.l.b16 %v399
      %v868 = vunpack.c.h.b16 %v399
      %v869 = vunpack.c.l.b16 %v400
      %v870 = vunpack.c.h.b16 %v400
      %v871 = vunpack.c.l.b16 %v401
      %v872 = vunpack.c.h.b16 %v401
      %v873 = vunpack.c.l.b16 %v402
      %v874 = vunpack.c.h.b16 %v402
      %v875 = vunpack.c.l.b16 %v403
      %v876 = vunpack.c.h.b16 %v403
      %v877 = vunpack.c.l.b16 %v404
      %v878 = vunpack.c.h.b16 %v404
      %v879 = vunpack.c.l.b16 %v405
      %v880 = vunpack.c.h.b16 %v405
      %v881 = vunpack.c.l.b16 %v406
      %v882 = vunpack.c.h.b16 %v406
      %v883 = vunpack.c.l.b16 %v407
      %v884 = vunpack.c.h.b16 %v407
      %v885 = vunpack.c.l.b16 %v408
      %v886 = vunpack.c.h.b16 %v408
      %v887 = vunpack.c.l.b16 %v409
      %v888 = vunpack.c.h.b16 %v409
      %v889 = vunpack.c.l.b16 %v410
      %v890 = vunpack.c.h.b16 %v410
      %v891 = vpack.c.b16 %v829, %v827
      %v892 = vpack.c.b16 %v830, %v828
      %v893 = vpack.c.b16 %v833, %v831
      %v894 = vpack.c.b16 %v834, %v832
      %v895 = vpack.c.b16 %v837, %v835
      %v896 = vpack.c.b16 %v838, %v836
      %v897 = vpack.c.b16 %v841, %v839
      %v898 = vpack.c.b16 %v842, %v840
      %v899 = vpack.c.b16 %v845, %v843
      %v900 = vpack.c.b16 %v846, %v844
      %v901 = vpack.c.b16 %v849, %v847
      %v902 = vpack.c.b16 %v850, %v848
      %v903 = vpack.c.b16 %v853, %v851
      %v904 = vpack.c.b16 %v854, %v852
      %v905 = vpack.c.b16 %v857, %v855
      %v906 = vpack.c.b16 %v858, %v856
      %v907 = vpack.c.b16 %v861, %v859
      %v908 = vpack.c.b16 %v862, %v860
      %v909 = vpack.c.b16 %v865, %v863
      %v910 = vpack.c.b16 %v866, %v864
      %v911 = vpack.c.b16 %v869, %v867
      %v912 = vpack.c.b16 %v870, %v868
      %v913 = vpack.c.b16 %v873, %v871
      %v914 = vpack.c.b16 %v874, %v872
      %v915 = vpack.c.b16 %v877, %v875
      %v916 = vpack.c.b16 %v878, %v876
      %v917 = vpack.c.b16 %v881, %v879
      %v918 = vpack.c.b16 %v882, %v880
      %v919 = vpack.c.b16 %v885, %v883
      %v920 = vpack.c.b16 %v886, %v884
      %v921 = vpack.c.b16 %v889, %v887
      %v922 = vpack.c.b16 %v890, %v888
      %955 = vmatprep.subr.bf16.mxu0 %v892
      %956 = vmatpush1.bf16.msra.mxu0 %v891
      %957 = vmatprep.subr.bf16.mxu0 %v894
      %958 = vmatpush1.bf16.msra.mxu0 %v893
      %959 = vmatprep.subr.bf16.mxu0 %v896
      %960 = vmatpush1.bf16.msra.mxu0 %v895
      %961 = vmatprep.subr.bf16.mxu0 %v898
      %962 = vmatpush1.bf16.msra.mxu0 %v897
      %963 = vmatprep.subr.bf16.mxu0 %v900
      %964 = vmatpush1.bf16.msra.mxu0 %v899
      %965 = vmatprep.subr.bf16.mxu0 %v902
      %966 = vmatpush1.bf16.msra.mxu0 %v901
      %967 = vmatprep.subr.bf16.mxu0 %v904
      %968 = vmatpush1.bf16.msra.mxu0 %v903
      %969 = vmatprep.subr.bf16.mxu0 %v906
      %970 = vmatpush1.bf16.msra.mxu0 %v905
      %971 = vmatprep.subr.bf16.mxu0 %v908
      %972 = vmatpush1.bf16.msra.mxu0 %v907
      %973 = vmatprep.subr.bf16.mxu0 %v910
      %974 = vmatpush1.bf16.msra.mxu0 %v909
      %975 = vmatprep.subr.bf16.mxu0 %v912
      %976 = vmatpush1.bf16.msra.mxu0 %v911
      %977 = vmatprep.subr.bf16.mxu0 %v914
      %978 = vmatpush1.bf16.msra.mxu0 %v913
      %979 = vmatprep.subr.bf16.mxu0 %v916
      %980 = vmatpush1.bf16.msra.mxu0 %v915
      %981 = vmatprep.subr.bf16.mxu0 %v918
      %982 = vmatpush1.bf16.msra.mxu0 %v917
      %983 = vmatprep.subr.bf16.mxu0 %v920
      %984 = vmatpush1.bf16.msra.mxu0 %v919
      %985 = vmatprep.subr.bf16.mxu0 %v922
      %986 = vmatpush1.bf16.msra.mxu0 %v921
      %987 = vmatprep.mubr.bf16.mxu0 %v732
      %988 = vmatmul.mubr.bf16.gmra.mrb[0].mxu0 %v731
      %v989 = vpop.f32.mrb[0].mxu0
      %v990 = vadd.f32 %v478, %v989
      %v991 = vpop.f32.mrb[0].mxu0
      %v992 = vadd.f32 %v478, %v991
      %v993 = vpop.f32.mrb[0].mxu0
      %v994 = vadd.f32 %v483, %v993
      %v995 = vpop.f32.mrb[0].mxu0
      %v996 = vadd.f32 %v483, %v995
      %997 = vmatprep.mubr.bf16.mxu0 %v734
      %998 = vmatmul.mubr.bf16.gmra.mrb[0].mxu0 %v733
      %v999 = vpop.f32.mrb[0].mxu0
      %v1000 = vadd.f32 %v488, %v999
      %v1001 = vpop.f32.mrb[0].mxu0
      %v1002 = vadd.f32 %v488, %v1001
      %v1003 = vpop.f32.mrb[0].mxu0
      %v1004 = vadd.f32 %v493, %v1003
      %v1005 = vpop.f32.mrb[0].mxu0
      %v1006 = vadd.f32 %v493, %v1005
      %1007 = vmatprep.mubr.bf16.mxu0 %v736
      %1008 = vmatmul.mubr.bf16.gmra.mrb[0].mxu0 %v735
      %v1009 = vpop.f32.mrb[0].mxu0
      %v1010 = vadd.f32 %v498, %v1009
      %v1011 = vpop.f32.mrb[0].mxu0
      %v1012 = vadd.f32 %v498, %v1011
      %v1013 = vpop.f32.mrb[0].mxu0
      %v1014 = vadd.f32 %v503, %v1013
      %v1015 = vpop.f32.mrb[0].mxu0
      %v1016 = vadd.f32 %v503, %v1015
      %1017 = vmatprep.mubr.bf16.mxu0 %v738
      %1018 = vmatmul.mubr.bf16.gmra.mrb[0].mxu0 %v737
      %v1019 = vpop.f32.mrb[0].mxu0
      %v1020 = vadd.f32 %v508, %v1019
      %v1021 = vpop.f32.mrb[0].mxu0
      %v1022 = vadd.f32 %v508, %v1021
      %v1023 = vpop.f32.mrb[0].mxu0
      %v1024 = vadd.f32 %v513, %v1023
      %v1025 = vpop.f32.mrb[0].mxu0
      %v1026 = vadd.f32 %v513, %v1025
      %1027 = vmatprep.mubr.bf16.mxu0 %v740
      %1028 = vmatmul.mubr.bf16.gmra.mrb[0].mxu0 %v739
      %v1029 = vpop.f32.mrb[0].mxu0
      %v1030 = vadd.f32 %v518, %v1029
      %v1031 = vpop.f32.mrb[0].mxu0
      %v1032 = vadd.f32 %v518, %v1031
      %v1033 = vpop.f32.mrb[0].mxu0
      %v1034 = vadd.f32 %v523, %v1033
      %v1035 = vpop.f32.mrb[0].mxu0
      %v1036 = vadd.f32 %v523, %v1035
      %1037 = vmatprep.mubr.bf16.mxu0 %v742
      %1038 = vmatmul.mubr.bf16.gmra.mrb[0].mxu0 %v741
      %v1039 = vpop.f32.mrb[0].mxu0
      %v1040 = vadd.f32 %v528, %v1039
      %v1041 = vpop.f32.mrb[0].mxu0
      %v1042 = vadd.f32 %v528, %v1041
      %v1043 = vpop.f32.mrb[0].mxu0
      %v1044 = vadd.f32 %v533, %v1043
      %v1045 = vpop.f32.mrb[0].mxu0
      %v1046 = vadd.f32 %v533, %v1045
      %1047 = vmatprep.mubr.bf16.mxu0 %v744
      %1048 = vmatmul.mubr.bf16.gmra.mrb[0].mxu0 %v743
      %v1049 = vpop.f32.mrb[0].mxu0
      %v1050 = vadd.f32 %v538, %v1049
      %v1051 = vpop.f32.mrb[0].mxu0
      %v1052 = vadd.f32 %v538, %v1051
      %v1053 = vpop.f32.mrb[0].mxu0
      %v1054 = vadd.f32 %v543, %v1053
      %v1055 = vpop.f32.mrb[0].mxu0
      %v1056 = vadd.f32 %v543, %v1055
      %1057 = vmatprep.mubr.bf16.mxu0 %v746
      %1058 = vmatmul.mubr.bf16.gmra.mrb[0].mxu0 %v745
      %v1059 = vpop.f32.mrb[0].mxu0
      %v1060 = vadd.f32 %v548, %v1059
      %v1061 = vpop.f32.mrb[0].mxu0
      %v1062 = vadd.f32 %v548, %v1061
      %v1063 = vpop.f32.mrb[0].mxu0
      %v1064 = vadd.f32 %v553, %v1063
      %v1065 = vpop.f32.mrb[0].mxu0
      %v1066 = vadd.f32 %v553, %v1065
      %1067 = vmatprep.mubr.bf16.mxu0 %v748
      %1068 = vmatmul.mubr.bf16.gmra.mrb[0].mxu0 %v747
      %v1069 = vpop.f32.mrb[0].mxu0
      %v1070 = vadd.f32 %v558, %v1069
      %v1071 = vpop.f32.mrb[0].mxu0
      %v1072 = vadd.f32 %v558, %v1071
      %v1073 = vpop.f32.mrb[0].mxu0
      %v1074 = vadd.f32 %v563, %v1073
      %v1075 = vpop.f32.mrb[0].mxu0
      %v1076 = vadd.f32 %v563, %v1075
      %1077 = vmatprep.mubr.bf16.mxu0 %v750
      %1078 = vmatmul.mubr.bf16.gmra.mrb[0].mxu0 %v749
      %v1079 = vpop.f32.mrb[0].mxu0
      %v1080 = vadd.f32 %v568, %v1079
      %v1081 = vpop.f32.mrb[0].mxu0
      %v1082 = vadd.f32 %v568, %v1081
      %v1083 = vpop.f32.mrb[0].mxu0
      %v1084 = vadd.f32 %v573, %v1083
      %v1085 = vpop.f32.mrb[0].mxu0
      %v1086 = vadd.f32 %v573, %v1085
      %1087 = vmatprep.mubr.bf16.mxu0 %v752
      %1088 = vmatmul.mubr.bf16.gmra.mrb[0].mxu0 %v751
      %v1089 = vpop.f32.mrb[0].mxu0
      %v1090 = vadd.f32 %v578, %v1089
      %v1091 = vpop.f32.mrb[0].mxu0
      %v1092 = vadd.f32 %v578, %v1091
      %v1093 = vpop.f32.mrb[0].mxu0
      %v1094 = vadd.f32 %v583, %v1093
      %v1095 = vpop.f32.mrb[0].mxu0
      %v1096 = vadd.f32 %v583, %v1095
      %1097 = vmatprep.mubr.bf16.mxu0 %v754
      %1098 = vmatmul.mubr.bf16.gmra.mrb[0].mxu0 %v753
      %v1099 = vpop.f32.mrb[0].mxu0
      %v1100 = vadd.f32 %v588, %v1099
      %v1101 = vpop.f32.mrb[0].mxu0
      %v1102 = vadd.f32 %v588, %v1101
      %v1103 = vpop.f32.mrb[0].mxu0
      %v1104 = vadd.f32 %v593, %v1103
      %v1105 = vpop.f32.mrb[0].mxu0
      %v1106 = vadd.f32 %v593, %v1105
      %1107 = vmatprep.mubr.bf16.mxu0 %v756
      %1108 = vmatmul.mubr.bf16.gmra.mrb[0].mxu0 %v755
      %v1109 = vpop.f32.mrb[0].mxu0
      %v1110 = vadd.f32 %v598, %v1109
      %v1111 = vpop.f32.mrb[0].mxu0
      %v1112 = vadd.f32 %v598, %v1111
      %v1113 = vpop.f32.mrb[0].mxu0
      %v1114 = vadd.f32 %v603, %v1113
      %v1115 = vpop.f32.mrb[0].mxu0
      %v1116 = vadd.f32 %v603, %v1115
      %1117 = vmatprep.mubr.bf16.mxu0 %v758
      %1118 = vmatmul.mubr.bf16.gmra.mrb[0].mxu0 %v757
      %v1119 = vpop.f32.mrb[0].mxu0
      %v1120 = vadd.f32 %v608, %v1119
      %v1121 = vpop.f32.mrb[0].mxu0
      %v1122 = vadd.f32 %v608, %v1121
      %v1123 = vpop.f32.mrb[0].mxu0
      %v1124 = vadd.f32 %v613, %v1123
      %v1125 = vpop.f32.mrb[0].mxu0
      %v1126 = vadd.f32 %v613, %v1125
      %1127 = vmatprep.mubr.bf16.mxu0 %v760
      %1128 = vmatmul.mubr.bf16.gmra.mrb[0].mxu0 %v759
      %v1129 = vpop.f32.mrb[0].mxu0
      %v1130 = vadd.f32 %v618, %v1129
      %v1131 = vpop.f32.mrb[0].mxu0
      %v1132 = vadd.f32 %v618, %v1131
      %v1133 = vpop.f32.mrb[0].mxu0
      %v1134 = vadd.f32 %v623, %v1133
      %v1135 = vpop.f32.mrb[0].mxu0
      %v1136 = vadd.f32 %v623, %v1135
      %1137 = vmatprep.mubr.bf16.mxu0 %v762
      %1138 = vmatmul.mubr.bf16.gmra.mrb[0].mxu0 %v761
      %v1139 = vpop.f32.mrb[0].mxu0
      %v1140 = vadd.f32 %v628, %v1139
      %v1141 = vpop.f32.mrb[0].mxu0
      %v1142 = vadd.f32 %v628, %v1141
      %v1143 = vpop.f32.mrb[0].mxu0
      %v1144 = vadd.f32 %v633, %v1143
      %v1145 = vpop.f32.mrb[0].mxu0
      %v1146 = vadd.f32 %v633, %v1145
      %1147 = vdwg.mxu0
      %v1148 = vld [vmem:[%s3] sm:$0xff]
      %v1149 = vld [vmem:[%s3 + $0x8] sm:$0xff]
      %v1150 = vld [vmem:[%s3 + $0x10] sm:$0xff]
      %v1151 = vld [vmem:[%s3 + $0x18] sm:$0xff]
      %v1152 = vld [vmem:[%s3 + $0x20] sm:$0xff]
      %v1153 = vld [vmem:[%s3 + $0x28] sm:$0xff]
      %v1154 = vld [vmem:[%s3 + $0x30] sm:$0xff]
      %v1155 = vld [vmem:[%s3 + $0x38] sm:$0xff]
      %v1156 = vld [vmem:[%s3 + $0x40] sm:$0xff]
      %v1157 = vld [vmem:[%s3 + $0x48] sm:$0xff]
      %v1158 = vld [vmem:[%s3 + $0x50] sm:$0xff]
      %v1159 = vld [vmem:[%s3 + $0x58] sm:$0xff]
      %v1160 = vld [vmem:[%s3 + $0x60] sm:$0xff]
      %v1161 = vld [vmem:[%s3 + $0x68] sm:$0xff]
      %v1162 = vld [vmem:[%s3 + $0x70] sm:$0xff]
      %v1163 = vld [vmem:[%s3 + $0x78] sm:$0xff]
      %v1164 = vld [vmem:[%s3 + $0x80] sm:$0xff]
      %v1165 = vld [vmem:[%s3 + $0x88] sm:$0xff]
      %v1166 = vld [vmem:[%s3 + $0x90] sm:$0xff]
      %v1167 = vld [vmem:[%s3 + $0x98] sm:$0xff]
      %v1168 = vld [vmem:[%s3 + $0xa0] sm:$0xff]
      %v1169 = vld [vmem:[%s3 + $0xa8] sm:$0xff]
      %v1170 = vld [vmem:[%s3 + $0xb0] sm:$0xff]
      %v1171 = vld [vmem:[%s3 + $0xb8] sm:$0xff]
      %v1172 = vld [vmem:[%s3 + $0xc0] sm:$0xff]
      %v1173 = vld [vmem:[%s3 + $0xc8] sm:$0xff]
      %v1174 = vld [vmem:[%s3 + $0xd0] sm:$0xff]
      %v1175 = vld [vmem:[%s3 + $0xd8] sm:$0xff]
      %v1176 = vld [vmem:[%s3 + $0xe0] sm:$0xff]
      %v1177 = vld [vmem:[%s3 + $0xe8] sm:$0xff]
      %v1178 = vld [vmem:[%s3 + $0xf0] sm:$0xff]
      %v1179 = vld [vmem:[%s3 + $0xf8] sm:$0xff]
      %v1180 = vld [vmem:[%s3 + $0x100] sm:$0xff]
      %v1181 = vld [vmem:[%s3 + $0x108] sm:$0xff]
      %v1182 = vld [vmem:[%s3 + $0x110] sm:$0xff]
      %v1183 = vld [vmem:[%s3 + $0x118] sm:$0xff]
      %v1184 = vld [vmem:[%s3 + $0x120] sm:$0xff]
      %v1185 = vld [vmem:[%s3 + $0x128] sm:$0xff]
      %v1186 = vld [vmem:[%s3 + $0x130] sm:$0xff]
      %v1187 = vld [vmem:[%s3 + $0x138] sm:$0xff]
      %v1188 = vld [vmem:[%s3 + $0x140] sm:$0xff]
      %v1189 = vld [vmem:[%s3 + $0x148] sm:$0xff]
      %v1190 = vld [vmem:[%s3 + $0x150] sm:$0xff]
      %v1191 = vld [vmem:[%s3 + $0x158] sm:$0xff]
      %v1192 = vld [vmem:[%s3 + $0x160] sm:$0xff]
      %v1193 = vld [vmem:[%s3 + $0x168] sm:$0xff]
      %v1194 = vld [vmem:[%s3 + $0x170] sm:$0xff]
      %v1195 = vld [vmem:[%s3 + $0x178] sm:$0xff]
      %v1196 = vld [vmem:[%s3 + $0x180] sm:$0xff]
      %v1197 = vld [vmem:[%s3 + $0x188] sm:$0xff]
      %v1198 = vld [vmem:[%s3 + $0x190] sm:$0xff]
      %v1199 = vld [vmem:[%s3 + $0x198] sm:$0xff]
      %v1200 = vld [vmem:[%s3 + $0x1a0] sm:$0xff]
      %v1201 = vld [vmem:[%s3 + $0x1a8] sm:$0xff]
      %v1202 = vld [vmem:[%s3 + $0x1b0] sm:$0xff]
      %v1203 = vld [vmem:[%s3 + $0x1b8] sm:$0xff]
      %v1204 = vld [vmem:[%s3 + $0x1c0] sm:$0xff]
      %v1205 = vld [vmem:[%s3 + $0x1c8] sm:$0xff]
      %v1206 = vld [vmem:[%s3 + $0x1d0] sm:$0xff]
      %v1207 = vld [vmem:[%s3 + $0x1d8] sm:$0xff]
      %v1208 = vld [vmem:[%s3 + $0x1e0] sm:$0xff]
      %v1209 = vld [vmem:[%s3 + $0x1e8] sm:$0xff]
      %v1210 = vld [vmem:[%s3 + $0x1f0] sm:$0xff]
      %v1211 = vld [vmem:[%s3 + $0x1f8] sm:$0xff]
      %v1212 = vld [vmem:[%s7] sm:$0xff]
      %v1213 = vld [vmem:[%s7 + $0x8] sm:$0xff]
      %v1214 = vld [vmem:[%s7 + $0x10] sm:$0xff]
      %v1215 = vld [vmem:[%s7 + $0x18] sm:$0xff]
      %v1216 = vld [vmem:[%s7 + $0x20] sm:$0xff]
      %v1217 = vld [vmem:[%s7 + $0x28] sm:$0xff]
      %v1218 = vld [vmem:[%s7 + $0x30] sm:$0xff]
      %v1219 = vld [vmem:[%s7 + $0x38] sm:$0xff]
      %v1220 = vld [vmem:[%s7 + $0x40] sm:$0xff]
      %v1221 = vld [vmem:[%s7 + $0x48] sm:$0xff]
      %v1222 = vld [vmem:[%s7 + $0x50] sm:$0xff]
      %v1223 = vld [vmem:[%s7 + $0x58] sm:$0xff]
      %v1224 = vld [vmem:[%s7 + $0x60] sm:$0xff]
      %v1225 = vld [vmem:[%s7 + $0x68] sm:$0xff]
      %v1226 = vld [vmem:[%s7 + $0x70] sm:$0xff]
      %v1227 = vld [vmem:[%s7 + $0x78] sm:$0xff]
      %v1228 = vld [vmem:[%s7 + $0x80] sm:$0xff]
      %v1229 = vld [vmem:[%s7 + $0x88] sm:$0xff]
      %v1230 = vld [vmem:[%s7 + $0x90] sm:$0xff]
      %v1231 = vld [vmem:[%s7 + $0x98] sm:$0xff]
      %v1232 = vld [vmem:[%s7 + $0xa0] sm:$0xff]
      %v1233 = vld [vmem:[%s7 + $0xa8] sm:$0xff]
      %v1234 = vld [vmem:[%s7 + $0xb0] sm:$0xff]
      %v1235 = vld [vmem:[%s7 + $0xb8] sm:$0xff]
      %v1236 = vld [vmem:[%s7 + $0xc0] sm:$0xff]
      %v1237 = vld [vmem:[%s7 + $0xc8] sm:$0xff]
      %v1238 = vld [vmem:[%s7 + $0xd0] sm:$0xff]
      %v1239 = vld [vmem:[%s7 + $0xd8] sm:$0xff]
      %v1240 = vld [vmem:[%s7 + $0xe0] sm:$0xff]
      %v1241 = vld [vmem:[%s7 + $0xe8] sm:$0xff]
      %v1242 = vld [vmem:[%s7 + $0xf0] sm:$0xff]
      %v1243 = vld [vmem:[%s7 + $0xf8] sm:$0xff]
      %v1244 = vld [vmem:[%s7 + $0x100] sm:$0xff]
      %v1245 = vld [vmem:[%s7 + $0x108] sm:$0xff]
      %v1246 = vld [vmem:[%s7 + $0x110] sm:$0xff]
      %v1247 = vld [vmem:[%s7 + $0x118] sm:$0xff]
      %v1248 = vld [vmem:[%s7 + $0x120] sm:$0xff]
      %v1249 = vld [vmem:[%s7 + $0x128] sm:$0xff]
      %v1250 = vld [vmem:[%s7 + $0x130] sm:$0xff]
      %v1251 = vld [vmem:[%s7 + $0x138] sm:$0xff]
      %v1252 = vld [vmem:[%s7 + $0x140] sm:$0xff]
      %v1253 = vld [vmem:[%s7 + $0x148] sm:$0xff]
      %v1254 = vld [vmem:[%s7 + $0x150] sm:$0xff]
      %v1255 = vld [vmem:[%s7 + $0x158] sm:$0xff]
      %v1256 = vld [vmem:[%s7 + $0x160] sm:$0xff]
      %v1257 = vld [vmem:[%s7 + $0x168] sm:$0xff]
      %v1258 = vld [vmem:[%s7 + $0x170] sm:$0xff]
      %v1259 = vld [vmem:[%s7 + $0x178] sm:$0xff]
      %v1260 = vld [vmem:[%s7 + $0x180] sm:$0xff]
      %v1261 = vld [vmem:[%s7 + $0x188] sm:$0xff]
      %v1262 = vld [vmem:[%s7 + $0x190] sm:$0xff]
      %v1263 = vld [vmem:[%s7 + $0x198] sm:$0xff]
      %v1264 = vld [vmem:[%s7 + $0x1a0] sm:$0xff]
      %v1265 = vld [vmem:[%s7 + $0x1a8] sm:$0xff]
      %v1266 = vld [vmem:[%s7 + $0x1b0] sm:$0xff]
      %v1267 = vld [vmem:[%s7 + $0x1b8] sm:$0xff]
      %v1268 = vld [vmem:[%s7 + $0x1c0] sm:$0xff]
      %v1269 = vld [vmem:[%s7 + $0x1c8] sm:$0xff]
      %v1270 = vld [vmem:[%s7 + $0x1d0] sm:$0xff]
      %v1271 = vld [vmem:[%s7 + $0x1d8] sm:$0xff]
      %v1272 = vld [vmem:[%s7 + $0x1e0] sm:$0xff]
      %v1273 = vld [vmem:[%s7 + $0x1e8] sm:$0xff]
      %v1274 = vld [vmem:[%s7 + $0x1f0] sm:$0xff]
      %v1275 = vld [vmem:[%s7 + $0x1f8] sm:$0xff]
      %1277 = vset.pattern.permute.xlu0 0
      %1278 = vperm.xlu0 %1277, %v1212
      %v1279 = vpop.permute.xlu0 %1278
      %1282 = vset.pattern.permute.xlu0 0
      %1283 = vperm.xlu0 %1282, %v1213
      %v1284 = vpop.permute.xlu0 %1283
      %1287 = vset.pattern.permute.xlu0 0
      %1288 = vperm.xlu0 %1287, %v1214
      %v1289 = vpop.permute.xlu0 %1288
      %1292 = vset.pattern.permute.xlu0 0
      %1293 = vperm.xlu0 %1292, %v1215
      %v1294 = vpop.permute.xlu0 %1293
      %1297 = vset.pattern.permute.xlu0 0
      %1298 = vperm.xlu0 %1297, %v1216
      %v1299 = vpop.permute.xlu0 %1298
      %1302 = vset.pattern.permute.xlu0 0
      %1303 = vperm.xlu0 %1302, %v1217
      %v1304 = vpop.permute.xlu0 %1303
      %1307 = vset.pattern.permute.xlu0 0
      %1308 = vperm.xlu0 %1307, %v1218
      %v1309 = vpop.permute.xlu0 %1308
      %1312 = vset.pattern.permute.xlu0 0
      %1313 = vperm.xlu0 %1312, %v1219
      %v1314 = vpop.permute.xlu0 %1313
      %1317 = vset.pattern.permute.xlu0 0
      %1318 = vperm.xlu0 %1317, %v1220
      %v1319 = vpop.permute.xlu0 %1318
      %1322 = vset.pattern.permute.xlu0 0
      %1323 = vperm.xlu0 %1322, %v1221
      %v1324 = vpop.permute.xlu0 %1323
      %1327 = vset.pattern.permute.xlu0 0
      %1328 = vperm.xlu0 %1327, %v1222
      %v1329 = vpop.permute.xlu0 %1328
      %1332 = vset.pattern.permute.xlu0 0
      %1333 = vperm.xlu0 %1332, %v1223
      %v1334 = vpop.permute.xlu0 %1333
      %1337 = vset.pattern.permute.xlu0 0
      %1338 = vperm.xlu0 %1337, %v1224
      %v1339 = vpop.permute.xlu0 %1338
      %1342 = vset.pattern.permute.xlu0 0
      %1343 = vperm.xlu0 %1342, %v1225
      %v1344 = vpop.permute.xlu0 %1343
      %1347 = vset.pattern.permute.xlu0 0
      %1348 = vperm.xlu0 %1347, %v1226
      %v1349 = vpop.permute.xlu0 %1348
      %1352 = vset.pattern.permute.xlu0 0
      %1353 = vperm.xlu0 %1352, %v1227
      %v1354 = vpop.permute.xlu0 %1353
      %1357 = vset.pattern.permute.xlu0 0
      %1358 = vperm.xlu0 %1357, %v1228
      %v1359 = vpop.permute.xlu0 %1358
      %1362 = vset.pattern.permute.xlu0 0
      %1363 = vperm.xlu0 %1362, %v1229
      %v1364 = vpop.permute.xlu0 %1363
      %1367 = vset.pattern.permute.xlu0 0
      %1368 = vperm.xlu0 %1367, %v1230
      %v1369 = vpop.permute.xlu0 %1368
      %1372 = vset.pattern.permute.xlu0 0
      %1373 = vperm.xlu0 %1372, %v1231
      %v1374 = vpop.permute.xlu0 %1373
      %1377 = vset.pattern.permute.xlu0 0
      %1378 = vperm.xlu0 %1377, %v1232
      %v1379 = vpop.permute.xlu0 %1378
      %1382 = vset.pattern.permute.xlu0 0
      %1383 = vperm.xlu0 %1382, %v1233
      %v1384 = vpop.permute.xlu0 %1383
      %1387 = vset.pattern.permute.xlu0 0
      %1388 = vperm.xlu0 %1387, %v1234
      %v1389 = vpop.permute.xlu0 %1388
      %1392 = vset.pattern.permute.xlu0 0
      %1393 = vperm.xlu0 %1392, %v1235
      %v1394 = vpop.permute.xlu0 %1393
      %1397 = vset.pattern.permute.xlu0 0
      %1398 = vperm.xlu0 %1397, %v1236
      %v1399 = vpop.permute.xlu0 %1398
      %1402 = vset.pattern.permute.xlu0 0
      %1403 = vperm.xlu0 %1402, %v1237
      %v1404 = vpop.permute.xlu0 %1403
      %1407 = vset.pattern.permute.xlu0 0
      %1408 = vperm.xlu0 %1407, %v1238
      %v1409 = vpop.permute.xlu0 %1408
      %1412 = vset.pattern.permute.xlu0 0
      %1413 = vperm.xlu0 %1412, %v1239
      %v1414 = vpop.permute.xlu0 %1413
      %1417 = vset.pattern.permute.xlu0 0
      %1418 = vperm.xlu0 %1417, %v1240
      %v1419 = vpop.permute.xlu0 %1418
      %1422 = vset.pattern.permute.xlu0 0
      %1423 = vperm.xlu0 %1422, %v1241
      %v1424 = vpop.permute.xlu0 %1423
      %1427 = vset.pattern.permute.xlu0 0
      %1428 = vperm.xlu0 %1427, %v1242
      %v1429 = vpop.permute.xlu0 %1428
      %1432 = vset.pattern.permute.xlu0 0
      %1433 = vperm.xlu0 %1432, %v1243
      %v1434 = vpop.permute.xlu0 %1433
      %1437 = vset.pattern.permute.xlu0 0
      %1438 = vperm.xlu0 %1437, %v1244
      %v1439 = vpop.permute.xlu0 %1438
      %1442 = vset.pattern.permute.xlu0 0
      %1443 = vperm.xlu0 %1442, %v1245
      %v1444 = vpop.permute.xlu0 %1443
      %1447 = vset.pattern.permute.xlu0 0
      %1448 = vperm.xlu0 %1447, %v1246
      %v1449 = vpop.permute.xlu0 %1448
      %1452 = vset.pattern.permute.xlu0 0
      %1453 = vperm.xlu0 %1452, %v1247
      %v1454 = vpop.permute.xlu0 %1453
      %1457 = vset.pattern.permute.xlu0 0
      %1458 = vperm.xlu0 %1457, %v1248
      %v1459 = vpop.permute.xlu0 %1458
      %1462 = vset.pattern.permute.xlu0 0
      %1463 = vperm.xlu0 %1462, %v1249
      %v1464 = vpop.permute.xlu0 %1463
      %1467 = vset.pattern.permute.xlu0 0
      %1468 = vperm.xlu0 %1467, %v1250
      %v1469 = vpop.permute.xlu0 %1468
      %1472 = vset.pattern.permute.xlu0 0
      %1473 = vperm.xlu0 %1472, %v1251
      %v1474 = vpop.permute.xlu0 %1473
      %1477 = vset.pattern.permute.xlu0 0
      %1478 = vperm.xlu0 %1477, %v1252
      %v1479 = vpop.permute.xlu0 %1478
      %1482 = vset.pattern.permute.xlu0 0
      %1483 = vperm.xlu0 %1482, %v1253
      %v1484 = vpop.permute.xlu0 %1483
      %1487 = vset.pattern.permute.xlu0 0
      %1488 = vperm.xlu0 %1487, %v1254
      %v1489 = vpop.permute.xlu0 %1488
      %1492 = vset.pattern.permute.xlu0 0
      %1493 = vperm.xlu0 %1492, %v1255
      %v1494 = vpop.permute.xlu0 %1493
      %1497 = vset.pattern.permute.xlu0 0
      %1498 = vperm.xlu0 %1497, %v1256
      %v1499 = vpop.permute.xlu0 %1498
      %1502 = vset.pattern.permute.xlu0 0
      %1503 = vperm.xlu0 %1502, %v1257
      %v1504 = vpop.permute.xlu0 %1503
      %1507 = vset.pattern.permute.xlu0 0
      %1508 = vperm.xlu0 %1507, %v1258
      %v1509 = vpop.permute.xlu0 %1508
      %1512 = vset.pattern.permute.xlu0 0
      %1513 = vperm.xlu0 %1512, %v1259
      %v1514 = vpop.permute.xlu0 %1513
      %1517 = vset.pattern.permute.xlu0 0
      %1518 = vperm.xlu0 %1517, %v1260
      %v1519 = vpop.permute.xlu0 %1518
      %1522 = vset.pattern.permute.xlu0 0
      %1523 = vperm.xlu0 %1522, %v1261
      %v1524 = vpop.permute.xlu0 %1523
      %1527 = vset.pattern.permute.xlu0 0
      %1528 = vperm.xlu0 %1527, %v1262
      %v1529 = vpop.permute.xlu0 %1528
      %1532 = vset.pattern.permute.xlu0 0
      %1533 = vperm.xlu0 %1532, %v1263
      %v1534 = vpop.permute.xlu0 %1533
      %1537 = vset.pattern.permute.xlu0 0
      %1538 = vperm.xlu0 %1537, %v1264
      %v1539 = vpop.permute.xlu0 %1538
      %1542 = vset.pattern.permute.xlu0 0
      %1543 = vperm.xlu0 %1542, %v1265
      %v1544 = vpop.permute.xlu0 %1543
      %1547 = vset.pattern.permute.xlu0 0
      %1548 = vperm.xlu0 %1547, %v1266
      %v1549 = vpop.permute.xlu0 %1548
      %1552 = vset.pattern.permute.xlu0 0
      %1553 = vperm.xlu0 %1552, %v1267
      %v1554 = vpop.permute.xlu0 %1553
      %1557 = vset.pattern.permute.xlu0 0
      %1558 = vperm.xlu0 %1557, %v1268
      %v1559 = vpop.permute.xlu0 %1558
      %1562 = vset.pattern.permute.xlu0 0
      %1563 = vperm.xlu0 %1562, %v1269
      %v1564 = vpop.permute.xlu0 %1563
      %1567 = vset.pattern.permute.xlu0 0
      %1568 = vperm.xlu0 %1567, %v1270
      %v1569 = vpop.permute.xlu0 %1568
      %1572 = vset.pattern.permute.xlu0 0
      %1573 = vperm.xlu0 %1572, %v1271
      %v1574 = vpop.permute.xlu0 %1573
      %1577 = vset.pattern.permute.xlu0 0
      %1578 = vperm.xlu0 %1577, %v1272
      %v1579 = vpop.permute.xlu0 %1578
      %1582 = vset.pattern.permute.xlu0 0
      %1583 = vperm.xlu0 %1582, %v1273
      %v1584 = vpop.permute.xlu0 %1583
      %1587 = vset.pattern.permute.xlu0 0
      %1588 = vperm.xlu0 %1587, %v1274
      %v1589 = vpop.permute.xlu0 %1588
      %1592 = vset.pattern.permute.xlu0 0
      %1593 = vperm.xlu0 %1592, %v1275
      %v1594 = vpop.permute.xlu0 %1593
      %v1660 = vunpack.c.l.b16 %v1148
      %v1661 = vunpack.c.h.b16 %v1148
      %v1662 = vunpack.c.l.b16 %v1149
      %v1663 = vunpack.c.h.b16 %v1149
      %v1664 = vunpack.c.l.b16 %v1150
      %v1665 = vunpack.c.h.b16 %v1150
      %v1666 = vunpack.c.l.b16 %v1151
      %v1667 = vunpack.c.h.b16 %v1151
      %v1668 = vunpack.c.l.b16 %v1152
      %v1669 = vunpack.c.h.b16 %v1152
      %v1670 = vunpack.c.l.b16 %v1153
      %v1671 = vunpack.c.h.b16 %v1153
      %v1672 = vunpack.c.l.b16 %v1154
      %v1673 = vunpack.c.h.b16 %v1154
      %v1674 = vunpack.c.l.b16 %v1155
      %v1675 = vunpack.c.h.b16 %v1155
      %v1676 = vunpack.c.l.b16 %v1156
      %v1677 = vunpack.c.h.b16 %v1156
      %v1678 = vunpack.c.l.b16 %v1157
      %v1679 = vunpack.c.h.b16 %v1157
      %v1680 = vunpack.c.l.b16 %v1158
      %v1681 = vunpack.c.h.b16 %v1158
      %v1682 = vunpack.c.l.b16 %v1159
      %v1683 = vunpack.c.h.b16 %v1159
      %v1684 = vunpack.c.l.b16 %v1160
      %v1685 = vunpack.c.h.b16 %v1160
      %v1686 = vunpack.c.l.b16 %v1161
      %v1687 = vunpack.c.h.b16 %v1161
      %v1688 = vunpack.c.l.b16 %v1162
      %v1689 = vunpack.c.h.b16 %v1162
      %v1690 = vunpack.c.l.b16 %v1163
      %v1691 = vunpack.c.h.b16 %v1163
      %v1692 = vunpack.c.l.b16 %v1164
      %v1693 = vunpack.c.h.b16 %v1164
      %v1694 = vunpack.c.l.b16 %v1165
      %v1695 = vunpack.c.h.b16 %v1165
      %v1696 = vunpack.c.l.b16 %v1166
      %v1697 = vunpack.c.h.b16 %v1166
      %v1698 = vunpack.c.l.b16 %v1167
      %v1699 = vunpack.c.h.b16 %v1167
      %v1700 = vunpack.c.l.b16 %v1168
      %v1701 = vunpack.c.h.b16 %v1168
      %v1702 = vunpack.c.l.b16 %v1169
      %v1703 = vunpack.c.h.b16 %v1169
      %v1704 = vunpack.c.l.b16 %v1170
      %v1705 = vunpack.c.h.b16 %v1170
      %v1706 = vunpack.c.l.b16 %v1171
      %v1707 = vunpack.c.h.b16 %v1171
      %v1708 = vunpack.c.l.b16 %v1172
      %v1709 = vunpack.c.h.b16 %v1172
      %v1710 = vunpack.c.l.b16 %v1173
      %v1711 = vunpack.c.h.b16 %v1173
      %v1712 = vunpack.c.l.b16 %v1174
      %v1713 = vunpack.c.h.b16 %v1174
      %v1714 = vunpack.c.l.b16 %v1175
      %v1715 = vunpack.c.h.b16 %v1175
      %v1716 = vunpack.c.l.b16 %v1176
      %v1717 = vunpack.c.h.b16 %v1176
      %v1718 = vunpack.c.l.b16 %v1177
      %v1719 = vunpack.c.h.b16 %v1177
      %v1720 = vunpack.c.l.b16 %v1178
      %v1721 = vunpack.c.h.b16 %v1178
      %v1722 = vunpack.c.l.b16 %v1179
      %v1723 = vunpack.c.h.b16 %v1179
      %v1724 = vunpack.c.l.b16 %v1180
      %v1725 = vunpack.c.h.b16 %v1180
      %v1726 = vunpack.c.l.b16 %v1181
      %v1727 = vunpack.c.h.b16 %v1181
      %v1728 = vunpack.c.l.b16 %v1182
      %v1729 = vunpack.c.h.b16 %v1182
      %v1730 = vunpack.c.l.b16 %v1183
      %v1731 = vunpack.c.h.b16 %v1183
      %v1732 = vunpack.c.l.b16 %v1184
      %v1733 = vunpack.c.h.b16 %v1184
      %v1734 = vunpack.c.l.b16 %v1185
      %v1735 = vunpack.c.h.b16 %v1185
      %v1736 = vunpack.c.l.b16 %v1186
      %v1737 = vunpack.c.h.b16 %v1186
      %v1738 = vunpack.c.l.b16 %v1187
      %v1739 = vunpack.c.h.b16 %v1187
      %v1740 = vunpack.c.l.b16 %v1188
      %v1741 = vunpack.c.h.b16 %v1188
      %v1742 = vunpack.c.l.b16 %v1189
      %v1743 = vunpack.c.h.b16 %v1189
      %v1744 = vunpack.c.l.b16 %v1190
      %v1745 = vunpack.c.h.b16 %v1190
      %v1746 = vunpack.c.l.b16 %v1191
      %v1747 = vunpack.c.h.b16 %v1191
      %v1748 = vunpack.c.l.b16 %v1192
      %v1749 = vunpack.c.h.b16 %v1192
      %v1750 = vunpack.c.l.b16 %v1193
      %v1751 = vunpack.c.h.b16 %v1193
      %v1752 = vunpack.c.l.b16 %v1194
      %v1753 = vunpack.c.h.b16 %v1194
      %v1754 = vunpack.c.l.b16 %v1195
      %v1755 = vunpack.c.h.b16 %v1195
      %v1756 = vunpack.c.l.b16 %v1196
      %v1757 = vunpack.c.h.b16 %v1196
      %v1758 = vunpack.c.l.b16 %v1197
      %v1759 = vunpack.c.h.b16 %v1197
      %v1760 = vunpack.c.l.b16 %v1198
      %v1761 = vunpack.c.h.b16 %v1198
      %v1762 = vunpack.c.l.b16 %v1199
      %v1763 = vunpack.c.h.b16 %v1199
      %v1764 = vunpack.c.l.b16 %v1200
      %v1765 = vunpack.c.h.b16 %v1200
      %v1766 = vunpack.c.l.b16 %v1201
      %v1767 = vunpack.c.h.b16 %v1201
      %v1768 = vunpack.c.l.b16 %v1202
      %v1769 = vunpack.c.h.b16 %v1202
      %v1770 = vunpack.c.l.b16 %v1203
      %v1771 = vunpack.c.h.b16 %v1203
      %v1772 = vunpack.c.l.b16 %v1204
      %v1773 = vunpack.c.h.b16 %v1204
      %v1774 = vunpack.c.l.b16 %v1205
      %v1775 = vunpack.c.h.b16 %v1205
      %v1776 = vunpack.c.l.b16 %v1206
      %v1777 = vunpack.c.h.b16 %v1206
      %v1778 = vunpack.c.l.b16 %v1207
      %v1779 = vunpack.c.h.b16 %v1207
      %v1780 = vunpack.c.l.b16 %v1208
      %v1781 = vunpack.c.h.b16 %v1208
      %v1782 = vunpack.c.l.b16 %v1209
      %v1783 = vunpack.c.h.b16 %v1209
      %v1784 = vunpack.c.l.b16 %v1210
      %v1785 = vunpack.c.h.b16 %v1210
      %v1786 = vunpack.c.l.b16 %v1211
      %v1787 = vunpack.c.h.b16 %v1211
      %v1788 = vpack.c.b16 %v1662, %v1660
      %v1789 = vpack.c.b16 %v1663, %v1661
      %v1790 = vpack.c.b16 %v1666, %v1664
      %v1791 = vpack.c.b16 %v1667, %v1665
      %v1792 = vpack.c.b16 %v1670, %v1668
      %v1793 = vpack.c.b16 %v1671, %v1669
      %v1794 = vpack.c.b16 %v1674, %v1672
      %v1795 = vpack.c.b16 %v1675, %v1673
      %v1796 = vpack.c.b16 %v1678, %v1676
      %v1797 = vpack.c.b16 %v1679, %v1677
      %v1798 = vpack.c.b16 %v1682, %v1680
      %v1799 = vpack.c.b16 %v1683, %v1681
      %v1800 = vpack.c.b16 %v1686, %v1684
      %v1801 = vpack.c.b16 %v1687, %v1685
      %v1802 = vpack.c.b16 %v1690, %v1688
      %v1803 = vpack.c.b16 %v1691, %v1689
      %v1804 = vpack.c.b16 %v1694, %v1692
      %v1805 = vpack.c.b16 %v1695, %v1693
      %v1806 = vpack.c.b16 %v1698, %v1696
      %v1807 = vpack.c.b16 %v1699, %v1697
      %v1808 = vpack.c.b16 %v1702, %v1700
      %v1809 = vpack.c.b16 %v1703, %v1701
      %v1810 = vpack.c.b16 %v1706, %v1704
      %v1811 = vpack.c.b16 %v1707, %v1705
      %v1812 = vpack.c.b16 %v1710, %v1708
      %v1813 = vpack.c.b16 %v1711, %v1709
      %v1814 = vpack.c.b16 %v1714, %v1712
      %v1815 = vpack.c.b16 %v1715, %v1713
      %v1816 = vpack.c.b16 %v1718, %v1716
      %v1817 = vpack.c.b16 %v1719, %v1717
      %v1818 = vpack.c.b16 %v1722, %v1720
      %v1819 = vpack.c.b16 %v1723, %v1721
      %v1820 = vpack.c.b16 %v1726, %v1724
      %v1821 = vpack.c.b16 %v1727, %v1725
      %v1822 = vpack.c.b16 %v1730, %v1728
      %v1823 = vpack.c.b16 %v1731, %v1729
      %v1824 = vpack.c.b16 %v1734, %v1732
      %v1825 = vpack.c.b16 %v1735, %v1733
      %v1826 = vpack.c.b16 %v1738, %v1736
      %v1827 = vpack.c.b16 %v1739, %v1737
      %v1828 = vpack.c.b16 %v1742, %v1740
      %v1829 = vpack.c.b16 %v1743, %v1741
      %v1830 = vpack.c.b16 %v1746, %v1744
      %v1831 = vpack.c.b16 %v1747, %v1745
      %v1832 = vpack.c.b16 %v1750, %v1748
      %v1833 = vpack.c.b16 %v1751, %v1749
      %v1834 = vpack.c.b16 %v1754, %v1752
      %v1835 = vpack.c.b16 %v1755, %v1753
      %v1836 = vpack.c.b16 %v1758, %v1756
      %v1837 = vpack.c.b16 %v1759, %v1757
      %v1838 = vpack.c.b16 %v1762, %v1760
      %v1839 = vpack.c.b16 %v1763, %v1761
      %v1840 = vpack.c.b16 %v1766, %v1764
      %v1841 = vpack.c.b16 %v1767, %v1765
      %v1842 = vpack.c.b16 %v1770, %v1768
      %v1843 = vpack.c.b16 %v1771, %v1769
      %v1844 = vpack.c.b16 %v1774, %v1772
      %v1845 = vpack.c.b16 %v1775, %v1773
      %v1846 = vpack.c.b16 %v1778, %v1776
      %v1847 = vpack.c.b16 %v1779, %v1777
      %v1848 = vpack.c.b16 %v1782, %v1780
      %v1849 = vpack.c.b16 %v1783, %v1781
      %v1850 = vpack.c.b16 %v1786, %v1784
      %v1851 = vpack.c.b16 %v1787, %v1785
      %1916 = vmatprep.subr.bf16.mxu0 %v892
      %1917 = vmatpush1.bf16.msra.mxu0 %v891
      %1918 = vmatprep.subr.bf16.mxu0 %v894
      %1919 = vmatpush1.bf16.msra.mxu0 %v893
      %1920 = vmatprep.subr.bf16.mxu0 %v896
      %1921 = vmatpush1.bf16.msra.mxu0 %v895
      %1922 = vmatprep.subr.bf16.mxu0 %v898
      %1923 = vmatpush1.bf16.msra.mxu0 %v897
      %1924 = vmatprep.subr.bf16.mxu0 %v900
      %1925 = vmatpush1.bf16.msra.mxu0 %v899
      %1926 = vmatprep.subr.bf16.mxu0 %v902
      %1927 = vmatpush1.bf16.msra.mxu0 %v901
      %1928 = vmatprep.subr.bf16.mxu0 %v904
      %1929 = vmatpush1.bf16.msra.mxu0 %v903
      %1930 = vmatprep.subr.bf16.mxu0 %v906
      %1931 = vmatpush1.bf16.msra.mxu0 %v905
      %1932 = vmatprep.subr.bf16.mxu0 %v908
      %1933 = vmatpush1.bf16.msra.mxu0 %v907
      %1934 = vmatprep.subr.bf16.mxu0 %v910
      %1935 = vmatpush1.bf16.msra.mxu0 %v909
      %1936 = vmatprep.subr.bf16.mxu0 %v912
      %1937 = vmatpush1.bf16.msra.mxu0 %v911
      %1938 = vmatprep.subr.bf16.mxu0 %v914
      %1939 = vmatpush1.bf16.msra.mxu0 %v913
      %1940 = vmatprep.subr.bf16.mxu0 %v916
      %1941 = vmatpush1.bf16.msra.mxu0 %v915
      %1942 = vmatprep.subr.bf16.mxu0 %v918
      %1943 = vmatpush1.bf16.msra.mxu0 %v917
      %1944 = vmatprep.subr.bf16.mxu0 %v920
      %1945 = vmatpush1.bf16.msra.mxu0 %v919
      %1946 = vmatprep.subr.bf16.mxu0 %v922
      %1947 = vmatpush1.bf16.msra.mxu0 %v921
      %1948 = vmatprep.mubr.bf16.mxu0 %v1789
      %1949 = vmatmul.mubr.bf16.gmra.mrb[0].mxu0 %v1788
      %v1950 = vpop.f32.mrb[0].mxu0
      %v1951 = vadd.f32 %v1279, %v1950
      %v1952 = vpop.f32.mrb[0].mxu0
      %v1953 = vadd.f32 %v1279, %v1952
      %v1954 = vpop.f32.mrb[0].mxu0
      %v1955 = vadd.f32 %v1284, %v1954
      %v1956 = vpop.f32.mrb[0].mxu0
      %v1957 = vadd.f32 %v1284, %v1956
      %1958 = vmatprep.mubr.bf16.mxu0 %v1791
      %1959 = vmatmul.mubr.bf16.gmra.mrb[0].mxu0 %v1790
      %v1960 = vpop.f32.mrb[0].mxu0
      %v1961 = vadd.f32 %v1289, %v1960
      %v1962 = vpop.f32.mrb[0].mxu0
      %v1963 = vadd.f32 %v1289, %v1962
      %v1964 = vpop.f32.mrb[0].mxu0
      %v1965 = vadd.f32 %v1294, %v1964
      %v1966 = vpop.f32.mrb[0].mxu0
      %v1967 = vadd.f32 %v1294, %v1966
      %1968 = vmatprep.mubr.bf16.mxu0 %v1793
      %1969 = vmatmul.mubr.bf16.gmra.mrb[0].mxu0 %v1792
      %v1970 = vpop.f32.mrb[0].mxu0
      %v1971 = vadd.f32 %v1299, %v1970
      %v1972 = vpop.f32.mrb[0].mxu0
      %v1973 = vadd.f32 %v1299, %v1972
      %v1974 = vpop.f32.mrb[0].mxu0
      %v1975 = vadd.f32 %v1304, %v1974
      %v1976 = vpop.f32.mrb[0].mxu0
      %v1977 = vadd.f32 %v1304, %v1976
      %1978 = vmatprep.mubr.bf16.mxu0 %v1795
      %1979 = vmatmul.mubr.bf16.gmra.mrb[0].mxu0 %v1794
      %v1980 = vpop.f32.mrb[0].mxu0
      %v1981 = vadd.f32 %v1309, %v1980
      %v1982 = vpop.f32.mrb[0].mxu0
      %v1983 = vadd.f32 %v1309, %v1982
      %v1984 = vpop.f32.mrb[0].mxu0
      %v1985 = vadd.f32 %v1314, %v1984
      %v1986 = vpop.f32.mrb[0].mxu0
      %v1987 = vadd.f32 %v1314, %v1986
      %1988 = vmatprep.mubr.bf16.mxu0 %v1797
      %1989 = vmatmul.mubr.bf16.gmra.mrb[0].mxu0 %v1796
      %v1990 = vpop.f32.mrb[0].mxu0
      %v1991 = vadd.f32 %v1319, %v1990
      %v1992 = vpop.f32.mrb[0].mxu0
      %v1993 = vadd.f32 %v1319, %v1992
      %v1994 = vpop.f32.mrb[0].mxu0
      %v1995 = vadd.f32 %v1324, %v1994
      %v1996 = vpop.f32.mrb[0].mxu0
      %v1997 = vadd.f32 %v1324, %v1996
      %1998 = vmatprep.mubr.bf16.mxu0 %v1799
      %1999 = vmatmul.mubr.bf16.gmra.mrb[0].mxu0 %v1798
      %v2000 = vpop.f32.mrb[0].mxu0
      %v2001 = vadd.f32 %v1329, %v2000
      %v2002 = vpop.f32.mrb[0].mxu0
      %v2003 = vadd.f32 %v1329, %v2002
      %v2004 = vpop.f32.mrb[0].mxu0
      %v2005 = vadd.f32 %v1334, %v2004
      %v2006 = vpop.f32.mrb[0].mxu0
      %v2007 = vadd.f32 %v1334, %v2006
      %2008 = vmatprep.mubr.bf16.mxu0 %v1801
      %2009 = vmatmul.mubr.bf16.gmra.mrb[0].mxu0 %v1800
      %v2010 = vpop.f32.mrb[0].mxu0
      %v2011 = vadd.f32 %v1339, %v2010
      %v2012 = vpop.f32.mrb[0].mxu0
      %v2013 = vadd.f32 %v1339, %v2012
      %v2014 = vpop.f32.mrb[0].mxu0
      %v2015 = vadd.f32 %v1344, %v2014
      %v2016 = vpop.f32.mrb[0].mxu0
      %v2017 = vadd.f32 %v1344, %v2016
      %2018 = vmatprep.mubr.bf16.mxu0 %v1803
      %2019 = vmatmul.mubr.bf16.gmra.mrb[0].mxu0 %v1802
      %v2020 = vpop.f32.mrb[0].mxu0
      %v2021 = vadd.f32 %v1349, %v2020
      %v2022 = vpop.f32.mrb[0].mxu0
      %v2023 = vadd.f32 %v1349, %v2022
      %v2024 = vpop.f32.mrb[0].mxu0
      %v2025 = vadd.f32 %v1354, %v2024
      %v2026 = vpop.f32.mrb[0].mxu0
      %v2027 = vadd.f32 %v1354, %v2026
      %2028 = vmatprep.mubr.bf16.mxu0 %v1805
      %2029 = vmatmul.mubr.bf16.gmra.mrb[0].mxu0 %v1804
      %v2030 = vpop.f32.mrb[0].mxu0
      %v2031 = vadd.f32 %v1359, %v2030
      %v2032 = vpop.f32.mrb[0].mxu0
      %v2033 = vadd.f32 %v1359, %v2032
      %v2034 = vpop.f32.mrb[0].mxu0
      %v2035 = vadd.f32 %v1364, %v2034
      %v2036 = vpop.f32.mrb[0].mxu0
      %v2037 = vadd.f32 %v1364, %v2036
      %2038 = vmatprep.mubr.bf16.mxu0 %v1807
      %2039 = vmatmul.mubr.bf16.gmra.mrb[0].mxu0 %v1806
      %v2040 = vpop.f32.mrb[0].mxu0
      %v2041 = vadd.f32 %v1369, %v2040
      %v2042 = vpop.f32.mrb[0].mxu0
      %v2043 = vadd.f32 %v1369, %v2042
      %v2044 = vpop.f32.mrb[0].mxu0
      %v2045 = vadd.f32 %v1374, %v2044
      %v2046 = vpop.f32.mrb[0].mxu0
      %v2047 = vadd.f32 %v1374, %v2046
      %2048 = vmatprep.mubr.bf16.mxu0 %v1809
      %2049 = vmatmul.mubr.bf16.gmra.mrb[0].mxu0 %v1808
      %v2050 = vpop.f32.mrb[0].mxu0
      %v2051 = vadd.f32 %v1379, %v2050
      %v2052 = vpop.f32.mrb[0].mxu0
      %v2053 = vadd.f32 %v1379, %v2052
      %v2054 = vpop.f32.mrb[0].mxu0
      %v2055 = vadd.f32 %v1384, %v2054
      %v2056 = vpop.f32.mrb[0].mxu0
      %v2057 = vadd.f32 %v1384, %v2056
      %2058 = vmatprep.mubr.bf16.mxu0 %v1811
      %2059 = vmatmul.mubr.bf16.gmra.mrb[0].mxu0 %v1810
      %v2060 = vpop.f32.mrb[0].mxu0
      %v2061 = vadd.f32 %v1389, %v2060
      %v2062 = vpop.f32.mrb[0].mxu0
      %v2063 = vadd.f32 %v1389, %v2062
      %v2064 = vpop.f32.mrb[0].mxu0
      %v2065 = vadd.f32 %v1394, %v2064
      %v2066 = vpop.f32.mrb[0].mxu0
      %v2067 = vadd.f32 %v1394, %v2066
      %2068 = vmatprep.mubr.bf16.mxu0 %v1813
      %2069 = vmatmul.mubr.bf16.gmra.mrb[0].mxu0 %v1812
      %v2070 = vpop.f32.mrb[0].mxu0
      %v2071 = vadd.f32 %v1399, %v2070
      %v2072 = vpop.f32.mrb[0].mxu0
      %v2073 = vadd.f32 %v1399, %v2072
      %v2074 = vpop.f32.mrb[0].mxu0
      %v2075 = vadd.f32 %v1404, %v2074
      %v2076 = vpop.f32.mrb[0].mxu0
      %v2077 = vadd.f32 %v1404, %v2076
      %2078 = vmatprep.mubr.bf16.mxu0 %v1815
      %2079 = vmatmul.mubr.bf16.gmra.mrb[0].mxu0 %v1814
      %v2080 = vpop.f32.mrb[0].mxu0
      %v2081 = vadd.f32 %v1409, %v2080
      %v2082 = vpop.f32.mrb[0].mxu0
      %v2083 = vadd.f32 %v1409, %v2082
      %v2084 = vpop.f32.mrb[0].mxu0
      %v2085 = vadd.f32 %v1414, %v2084
      %v2086 = vpop.f32.mrb[0].mxu0
      %v2087 = vadd.f32 %v1414, %v2086
      %2088 = vmatprep.mubr.bf16.mxu0 %v1817
      %2089 = vmatmul.mubr.bf16.gmra.mrb[0].mxu0 %v1816
      %v2090 = vpop.f32.mrb[0].mxu0
      %v2091 = vadd.f32 %v1419, %v2090
      %v2092 = vpop.f32.mrb[0].mxu0
      %v2093 = vadd.f32 %v1419, %v2092
      %v2094 = vpop.f32.mrb[0].mxu0
      %v2095 = vadd.f32 %v1424, %v2094
      %v2096 = vpop.f32.mrb[0].mxu0
      %v2097 = vadd.f32 %v1424, %v2096
      %2098 = vmatprep.mubr.bf16.mxu0 %v1819
      %2099 = vmatmul.mubr.bf16.gmra.mrb[0].mxu0 %v1818
      %v2100 = vpop.f32.mrb[0].mxu0
      %v2101 = vadd.f32 %v1429, %v2100
      %v2102 = vpop.f32.mrb[0].mxu0
      %v2103 = vadd.f32 %v1429, %v2102
      %v2104 = vpop.f32.mrb[0].mxu0
      %v2105 = vadd.f32 %v1434, %v2104
      %v2106 = vpop.f32.mrb[0].mxu0
      %v2107 = vadd.f32 %v1434, %v2106
      %2108 = vmatprep.mubr.bf16.mxu0 %v1821
      %2109 = vmatmul.mubr.bf16.gmra.mrb[0].mxu0 %v1820
      %v2110 = vpop.f32.mrb[0].mxu0
      %v2111 = vadd.f32 %v1439, %v2110
      %v2112 = vpop.f32.mrb[0].mxu0
      %v2113 = vadd.f32 %v1439, %v2112
      %v2114 = vpop.f32.mrb[0].mxu0
      %v2115 = vadd.f32 %v1444, %v2114
      %v2116 = vpop.f32.mrb[0].mxu0
      %v2117 = vadd.f32 %v1444, %v2116
      %2118 = vmatprep.mubr.bf16.mxu0 %v1823
      %2119 = vmatmul.mubr.bf16.gmra.mrb[0].mxu0 %v1822
      %v2120 = vpop.f32.mrb[0].mxu0
      %v2121 = vadd.f32 %v1449, %v2120
      %v2122 = vpop.f32.mrb[0].mxu0
      %v2123 = vadd.f32 %v1449, %v2122
      %v2124 = vpop.f32.mrb[0].mxu0
      %v2125 = vadd.f32 %v1454, %v2124
      %v2126 = vpop.f32.mrb[0].mxu0
      %v2127 = vadd.f32 %v1454, %v2126
      %2128 = vmatprep.mubr.bf16.mxu0 %v1825
      %2129 = vmatmul.mubr.bf16.gmra.mrb[0].mxu0 %v1824
      %v2130 = vpop.f32.mrb[0].mxu0
      %v2131 = vadd.f32 %v1459, %v2130
      %v2132 = vpop.f32.mrb[0].mxu0
      %v2133 = vadd.f32 %v1459, %v2132
      %v2134 = vpop.f32.mrb[0].mxu0
      %v2135 = vadd.f32 %v1464, %v2134
      %v2136 = vpop.f32.mrb[0].mxu0
      %v2137 = vadd.f32 %v1464, %v2136
      %2138 = vmatprep.mubr.bf16.mxu0 %v1827
      %2139 = vmatmul.mubr.bf16.gmra.mrb[0].mxu0 %v1826
      %v2140 = vpop.f32.mrb[0].mxu0
      %v2141 = vadd.f32 %v1469, %v2140
      %v2142 = vpop.f32.mrb[0].mxu0
      %v2143 = vadd.f32 %v1469, %v2142
      %v2144 = vpop.f32.mrb[0].mxu0
      %v2145 = vadd.f32 %v1474, %v2144
      %v2146 = vpop.f32.mrb[0].mxu0
      %v2147 = vadd.f32 %v1474, %v2146
      %2148 = vmatprep.mubr.bf16.mxu0 %v1829
      %2149 = vmatmul.mubr.bf16.gmra.mrb[0].mxu0 %v1828
      %v2150 = vpop.f32.mrb[0].mxu0
      %v2151 = vadd.f32 %v1479, %v2150
      %v2152 = vpop.f32.mrb[0].mxu0
      %v2153 = vadd.f32 %v1479, %v2152
      %v2154 = vpop.f32.mrb[0].mxu0
      %v2155 = vadd.f32 %v1484, %v2154
      %v2156 = vpop.f32.mrb[0].mxu0
      %v2157 = vadd.f32 %v1484, %v2156
      %2158 = vmatprep.mubr.bf16.mxu0 %v1831
      %2159 = vmatmul.mubr.bf16.gmra.mrb[0].mxu0 %v1830
      %v2160 = vpop.f32.mrb[0].mxu0
      %v2161 = vadd.f32 %v1489, %v2160
      %v2162 = vpop.f32.mrb[0].mxu0
      %v2163 = vadd.f32 %v1489, %v2162
      %v2164 = vpop.f32.mrb[0].mxu0
      %v2165 = vadd.f32 %v1494, %v2164
      %v2166 = vpop.f32.mrb[0].mxu0
      %v2167 = vadd.f32 %v1494, %v2166
      %2168 = vmatprep.mubr.bf16.mxu0 %v1833
      %2169 = vmatmul.mubr.bf16.gmra.mrb[0].mxu0 %v1832
      %v2170 = vpop.f32.mrb[0].mxu0
      %v2171 = vadd.f32 %v1499, %v2170
      %v2172 = vpop.f32.mrb[0].mxu0
      %v2173 = vadd.f32 %v1499, %v2172
      %v2174 = vpop.f32.mrb[0].mxu0
      %v2175 = vadd.f32 %v1504, %v2174
      %v2176 = vpop.f32.mrb[0].mxu0
      %v2177 = vadd.f32 %v1504, %v2176
      %2178 = vmatprep.mubr.bf16.mxu0 %v1835
      %2179 = vmatmul.mubr.bf16.gmra.mrb[0].mxu0 %v1834
      %v2180 = vpop.f32.mrb[0].mxu0
      %v2181 = vadd.f32 %v1509, %v2180
      %v2182 = vpop.f32.mrb[0].mxu0
      %v2183 = vadd.f32 %v1509, %v2182
      %v2184 = vpop.f32.mrb[0].mxu0
      %v2185 = vadd.f32 %v1514, %v2184
      %v2186 = vpop.f32.mrb[0].mxu0
      %v2187 = vadd.f32 %v1514, %v2186
      %2188 = vmatprep.mubr.bf16.mxu0 %v1837
      %2189 = vmatmul.mubr.bf16.gmra.mrb[0].mxu0 %v1836
      %v2190 = vpop.f32.mrb[0].mxu0
      %v2191 = vadd.f32 %v1519, %v2190
      %v2192 = vpop.f32.mrb[0].mxu0
      %v2193 = vadd.f32 %v1519, %v2192
      %v2194 = vpop.f32.mrb[0].mxu0
      %v2195 = vadd.f32 %v1524, %v2194
      %v2196 = vpop.f32.mrb[0].mxu0
      %v2197 = vadd.f32 %v1524, %v2196
      %2198 = vmatprep.mubr.bf16.mxu0 %v1839
      %2199 = vmatmul.mubr.bf16.gmra.mrb[0].mxu0 %v1838
      %v2200 = vpop.f32.mrb[0].mxu0
      %v2201 = vadd.f32 %v1529, %v2200
      %v2202 = vpop.f32.mrb[0].mxu0
      %v2203 = vadd.f32 %v1529, %v2202
      %v2204 = vpop.f32.mrb[0].mxu0
      %v2205 = vadd.f32 %v1534, %v2204
      %v2206 = vpop.f32.mrb[0].mxu0
      %v2207 = vadd.f32 %v1534, %v2206
      %2208 = vmatprep.mubr.bf16.mxu0 %v1841
      %2209 = vmatmul.mubr.bf16.gmra.mrb[0].mxu0 %v1840
      %v2210 = vpop.f32.mrb[0].mxu0
      %v2211 = vadd.f32 %v1539, %v2210
      %v2212 = vpop.f32.mrb[0].mxu0
      %v2213 = vadd.f32 %v1539, %v2212
      %v2214 = vpop.f32.mrb[0].mxu0
      %v2215 = vadd.f32 %v1544, %v2214
      %v2216 = vpop.f32.mrb[0].mxu0
      %v2217 = vadd.f32 %v1544, %v2216
      %2218 = vmatprep.mubr.bf16.mxu0 %v1843
      %2219 = vmatmul.mubr.bf16.gmra.mrb[0].mxu0 %v1842
      %v2220 = vpop.f32.mrb[0].mxu0
      %v2221 = vadd.f32 %v1549, %v2220
      %v2222 = vpop.f32.mrb[0].mxu0
      %v2223 = vadd.f32 %v1549, %v2222
      %v2224 = vpop.f32.mrb[0].mxu0
      %v2225 = vadd.f32 %v1554, %v2224
      %v2226 = vpop.f32.mrb[0].mxu0
      %v2227 = vadd.f32 %v1554, %v2226
      %2228 = vmatprep.mubr.bf16.mxu0 %v1845
      %2229 = vmatmul.mubr.bf16.gmra.mrb[0].mxu0 %v1844
      %v2230 = vpop.f32.mrb[0].mxu0
      %v2231 = vadd.f32 %v1559, %v2230
      %v2232 = vpop.f32.mrb[0].mxu0
      %v2233 = vadd.f32 %v1559, %v2232
      %v2234 = vpop.f32.mrb[0].mxu0
      %v2235 = vadd.f32 %v1564, %v2234
      %v2236 = vpop.f32.mrb[0].mxu0
      %v2237 = vadd.f32 %v1564, %v2236
      %2238 = vmatprep.mubr.bf16.mxu0 %v1847
      %2239 = vmatmul.mubr.bf16.gmra.mrb[0].mxu0 %v1846
      %v2240 = vpop.f32.mrb[0].mxu0
      %v2241 = vadd.f32 %v1569, %v2240
      %v2242 = vpop.f32.mrb[0].mxu0
      %v2243 = vadd.f32 %v1569, %v2242
      %v2244 = vpop.f32.mrb[0].mxu0
      %v2245 = vadd.f32 %v1574, %v2244
      %v2246 = vpop.f32.mrb[0].mxu0
      %v2247 = vadd.f32 %v1574, %v2246
      %2248 = vmatprep.mubr.bf16.mxu0 %v1849
      %2249 = vmatmul.mubr.bf16.gmra.mrb[0].mxu0 %v1848
      %v2250 = vpop.f32.mrb[0].mxu0
      %v2251 = vadd.f32 %v1579, %v2250
      %v2252 = vpop.f32.mrb[0].mxu0
      %v2253 = vadd.f32 %v1579, %v2252
      %v2254 = vpop.f32.mrb[0].mxu0
      %v2255 = vadd.f32 %v1584, %v2254
      %v2256 = vpop.f32.mrb[0].mxu0
      %v2257 = vadd.f32 %v1584, %v2256
      %2258 = vmatprep.mubr.bf16.mxu0 %v1851
      %2259 = vmatmul.mubr.bf16.gmra.mrb[0].mxu0 %v1850
      %v2260 = vpop.f32.mrb[0].mxu0
      %v2261 = vadd.f32 %v1589, %v2260
      %v2262 = vpop.f32.mrb[0].mxu0
      %v2263 = vadd.f32 %v1589, %v2262
      %v2264 = vpop.f32.mrb[0].mxu0
      %v2265 = vadd.f32 %v1594, %v2264
      %v2266 = vpop.f32.mrb[0].mxu0
      %v2267 = vadd.f32 %v1594, %v2266
      %2268 = vdwg.mxu0
      %s2269 = scalar_lea.vmem %s367, 256
      %v2270 = vld [vmem:[%s2269] sm:$0xff]
      %v2271 = vld [vmem:[%s2269 + $0x8] sm:$0xff]
      %v2272 = vld [vmem:[%s2269 + $0x10] sm:$0xff]
      %v2273 = vld [vmem:[%s2269 + $0x18] sm:$0xff]
      %v2274 = vld [vmem:[%s2269 + $0x20] sm:$0xff]
      %v2275 = vld [vmem:[%s2269 + $0x28] sm:$0xff]
      %v2276 = vld [vmem:[%s2269 + $0x30] sm:$0xff]
      %v2277 = vld [vmem:[%s2269 + $0x38] sm:$0xff]
      %v2278 = vld [vmem:[%s2269 + $0x40] sm:$0xff]
      %v2279 = vld [vmem:[%s2269 + $0x48] sm:$0xff]
      %v2280 = vld [vmem:[%s2269 + $0x50] sm:$0xff]
      %v2281 = vld [vmem:[%s2269 + $0x58] sm:$0xff]
      %v2282 = vld [vmem:[%s2269 + $0x60] sm:$0xff]
      %v2283 = vld [vmem:[%s2269 + $0x68] sm:$0xff]
      %v2284 = vld [vmem:[%s2269 + $0x70] sm:$0xff]
      %v2285 = vld [vmem:[%s2269 + $0x78] sm:$0xff]
      %v2286 = vld [vmem:[%s2269 + $0x80] sm:$0xff]
      %v2287 = vld [vmem:[%s2269 + $0x88] sm:$0xff]
      %v2288 = vld [vmem:[%s2269 + $0x90] sm:$0xff]
      %v2289 = vld [vmem:[%s2269 + $0x98] sm:$0xff]
      %v2290 = vld [vmem:[%s2269 + $0xa0] sm:$0xff]
      %v2291 = vld [vmem:[%s2269 + $0xa8] sm:$0xff]
      %v2292 = vld [vmem:[%s2269 + $0xb0] sm:$0xff]
      %v2293 = vld [vmem:[%s2269 + $0xb8] sm:$0xff]
      %v2294 = vld [vmem:[%s2269 + $0xc0] sm:$0xff]
      %v2295 = vld [vmem:[%s2269 + $0xc8] sm:$0xff]
      %v2296 = vld [vmem:[%s2269 + $0xd0] sm:$0xff]
      %v2297 = vld [vmem:[%s2269 + $0xd8] sm:$0xff]
      %v2298 = vld [vmem:[%s2269 + $0xe0] sm:$0xff]
      %v2299 = vld [vmem:[%s2269 + $0xe8] sm:$0xff]
      %v2300 = vld [vmem:[%s2269 + $0xf0] sm:$0xff]
      %v2301 = vld [vmem:[%s2269 + $0xf8] sm:$0xff]
      %v2334 = vunpack.c.l.b16 %v2270
      %v2335 = vunpack.c.h.b16 %v2270
      %v2336 = vunpack.c.l.b16 %v2271
      %v2337 = vunpack.c.h.b16 %v2271
      %v2338 = vunpack.c.l.b16 %v2272
      %v2339 = vunpack.c.h.b16 %v2272
      %v2340 = vunpack.c.l.b16 %v2273
      %v2341 = vunpack.c.h.b16 %v2273
      %v2342 = vunpack.c.l.b16 %v2274
      %v2343 = vunpack.c.h.b16 %v2274
      %v2344 = vunpack.c.l.b16 %v2275
      %v2345 = vunpack.c.h.b16 %v2275
      %v2346 = vunpack.c.l.b16 %v2276
      %v2347 = vunpack.c.h.b16 %v2276
      %v2348 = vunpack.c.l.b16 %v2277
      %v2349 = vunpack.c.h.b16 %v2277
      %v2350 = vunpack.c.l.b16 %v2278
      %v2351 = vunpack.c.h.b16 %v2278
      %v2352 = vunpack.c.l.b16 %v2279
      %v2353 = vunpack.c.h.b16 %v2279
      %v2354 = vunpack.c.l.b16 %v2280
      %v2355 = vunpack.c.h.b16 %v2280
      %v2356 = vunpack.c.l.b16 %v2281
      %v2357 = vunpack.c.h.b16 %v2281
      %v2358 = vunpack.c.l.b16 %v2282
      %v2359 = vunpack.c.h.b16 %v2282
      %v2360 = vunpack.c.l.b16 %v2283
      %v2361 = vunpack.c.h.b16 %v2283
      %v2362 = vunpack.c.l.b16 %v2284
      %v2363 = vunpack.c.h.b16 %v2284
      %v2364 = vunpack.c.l.b16 %v2285
      %v2365 = vunpack.c.h.b16 %v2285
      %v2366 = vunpack.c.l.b16 %v2286
      %v2367 = vunpack.c.h.b16 %v2286
      %v2368 = vunpack.c.l.b16 %v2287
      %v2369 = vunpack.c.h.b16 %v2287
      %v2370 = vunpack.c.l.b16 %v2288
      %v2371 = vunpack.c.h.b16 %v2288
      %v2372 = vunpack.c.l.b16 %v2289
      %v2373 = vunpack.c.h.b16 %v2289
      %v2374 = vunpack.c.l.b16 %v2290
      %v2375 = vunpack.c.h.b16 %v2290
      %v2376 = vunpack.c.l.b16 %v2291
      %v2377 = vunpack.c.h.b16 %v2291
      %v2378 = vunpack.c.l.b16 %v2292
      %v2379 = vunpack.c.h.b16 %v2292
      %v2380 = vunpack.c.l.b16 %v2293
      %v2381 = vunpack.c.h.b16 %v2293
      %v2382 = vunpack.c.l.b16 %v2294
      %v2383 = vunpack.c.h.b16 %v2294
      %v2384 = vunpack.c.l.b16 %v2295
      %v2385 = vunpack.c.h.b16 %v2295
      %v2386 = vunpack.c.l.b16 %v2296
      %v2387 = vunpack.c.h.b16 %v2296
      %v2388 = vunpack.c.l.b16 %v2297
      %v2389 = vunpack.c.h.b16 %v2297
      %v2390 = vunpack.c.l.b16 %v2298
      %v2391 = vunpack.c.h.b16 %v2298
      %v2392 = vunpack.c.l.b16 %v2299
      %v2393 = vunpack.c.h.b16 %v2299
      %v2394 = vunpack.c.l.b16 %v2300
      %v2395 = vunpack.c.h.b16 %v2300
      %v2396 = vunpack.c.l.b16 %v2301
      %v2397 = vunpack.c.h.b16 %v2301
      %v2398 = vpack.c.b16 %v2336, %v2334
      %v2399 = vpack.c.b16 %v2337, %v2335
      %v2400 = vpack.c.b16 %v2340, %v2338
      %v2401 = vpack.c.b16 %v2341, %v2339
      %v2402 = vpack.c.b16 %v2344, %v2342
      %v2403 = vpack.c.b16 %v2345, %v2343
      %v2404 = vpack.c.b16 %v2348, %v2346
      %v2405 = vpack.c.b16 %v2349, %v2347
      %v2406 = vpack.c.b16 %v2352, %v2350
      %v2407 = vpack.c.b16 %v2353, %v2351
      %v2408 = vpack.c.b16 %v2356, %v2354
      %v2409 = vpack.c.b16 %v2357, %v2355
      %v2410 = vpack.c.b16 %v2360, %v2358
      %v2411 = vpack.c.b16 %v2361, %v2359
      %v2412 = vpack.c.b16 %v2364, %v2362
      %v2413 = vpack.c.b16 %v2365, %v2363
      %v2414 = vpack.c.b16 %v2368, %v2366
      %v2415 = vpack.c.b16 %v2369, %v2367
      %v2416 = vpack.c.b16 %v2372, %v2370
      %v2417 = vpack.c.b16 %v2373, %v2371
      %v2418 = vpack.c.b16 %v2376, %v2374
      %v2419 = vpack.c.b16 %v2377, %v2375
      %v2420 = vpack.c.b16 %v2380, %v2378
      %v2421 = vpack.c.b16 %v2381, %v2379
      %v2422 = vpack.c.b16 %v2384, %v2382
      %v2423 = vpack.c.b16 %v2385, %v2383
      %v2424 = vpack.c.b16 %v2388, %v2386
      %v2425 = vpack.c.b16 %v2389, %v2387
      %v2426 = vpack.c.b16 %v2392, %v2390
      %v2427 = vpack.c.b16 %v2393, %v2391
      %v2428 = vpack.c.b16 %v2396, %v2394
      %v2429 = vpack.c.b16 %v2397, %v2395
      %2462 = vmatprep.subr.bf16.mxu0 %v2399
      %2463 = vmatpush1.bf16.msra.mxu0 %v2398
      %2464 = vmatprep.subr.bf16.mxu0 %v2401
      %2465 = vmatpush1.bf16.msra.mxu0 %v2400
      %2466 = vmatprep.subr.bf16.mxu0 %v2403
      %2467 = vmatpush1.bf16.msra.mxu0 %v2402
      %2468 = vmatprep.subr.bf16.mxu0 %v2405
      %2469 = vmatpush1.bf16.msra.mxu0 %v2404
      %2470 = vmatprep.subr.bf16.mxu0 %v2407
      %2471 = vmatpush1.bf16.msra.mxu0 %v2406
      %2472 = vmatprep.subr.bf16.mxu0 %v2409
      %2473 = vmatpush1.bf16.msra.mxu0 %v2408
      %2474 = vmatprep.subr.bf16.mxu0 %v2411
      %2475 = vmatpush1.bf16.msra.mxu0 %v2410
      %2476 = vmatprep.subr.bf16.mxu0 %v2413
      %2477 = vmatpush1.bf16.msra.mxu0 %v2412
      %2478 = vmatprep.subr.bf16.mxu0 %v2415
      %2479 = vmatpush1.bf16.msra.mxu0 %v2414
      %2480 = vmatprep.subr.bf16.mxu0 %v2417
      %2481 = vmatpush1.bf16.msra.mxu0 %v2416
      %2482 = vmatprep.subr.bf16.mxu0 %v2419
      %2483 = vmatpush1.bf16.msra.mxu0 %v2418
      %2484 = vmatprep.subr.bf16.mxu0 %v2421
      %2485 = vmatpush1.bf16.msra.mxu0 %v2420
      %2486 = vmatprep.subr.bf16.mxu0 %v2423
      %2487 = vmatpush1.bf16.msra.mxu0 %v2422
      %2488 = vmatprep.subr.bf16.mxu0 %v2425
      %2489 = vmatpush1.bf16.msra.mxu0 %v2424
      %2490 = vmatprep.subr.bf16.mxu0 %v2427
      %2491 = vmatpush1.bf16.msra.mxu0 %v2426
      %2492 = vmatprep.subr.bf16.mxu0 %v2429
      %2493 = vmatpush1.bf16.msra.mxu0 %v2428
      %2494 = vmatprep.mubr.bf16.mxu0 %v1789
      %2495 = vmatmul.mubr.bf16.gmra.mrb[0].mxu0 %v1788
      %v2496 = vpop.f32.mrb[0].mxu0
      %v2497 = vadd.f32 %v1279, %v2496
      %v2498 = vpop.f32.mrb[0].mxu0
      %v2499 = vadd.f32 %v1279, %v2498
      %v2500 = vpop.f32.mrb[0].mxu0
      %v2501 = vadd.f32 %v1284, %v2500
      %v2502 = vpop.f32.mrb[0].mxu0
      %v2503 = vadd.f32 %v1284, %v2502
      %2504 = vmatprep.mubr.bf16.mxu0 %v1791
      %2505 = vmatmul.mubr.bf16.gmra.mrb[0].mxu0 %v1790
      %v2506 = vpop.f32.mrb[0].mxu0
      %v2507 = vadd.f32 %v1289, %v2506
      %v2508 = vpop.f32.mrb[0].mxu0
      %v2509 = vadd.f32 %v1289, %v2508
      %v2510 = vpop.f32.mrb[0].mxu0
      %v2511 = vadd.f32 %v1294, %v2510
      %v2512 = vpop.f32.mrb[0].mxu0
      %v2513 = vadd.f32 %v1294, %v2512
      %2514 = vmatprep.mubr.bf16.mxu0 %v1793
      %2515 = vmatmul.mubr.bf16.gmra.mrb[0].mxu0 %v1792
      %v2516 = vpop.f32.mrb[0].mxu0
      %v2517 = vadd.f32 %v1299, %v2516
      %v2518 = vpop.f32.mrb[0].mxu0
      %v2519 = vadd.f32 %v1299, %v2518
      %v2520 = vpop.f32.mrb[0].mxu0
      %v2521 = vadd.f32 %v1304, %v2520
      %v2522 = vpop.f32.mrb[0].mxu0
      %v2523 = vadd.f32 %v1304, %v2522
      %2524 = vmatprep.mubr.bf16.mxu0 %v1795
      %2525 = vmatmul.mubr.bf16.gmra.mrb[0].mxu0 %v1794
      %v2526 = vpop.f32.mrb[0].mxu0
      %v2527 = vadd.f32 %v1309, %v2526
      %v2528 = vpop.f32.mrb[0].mxu0
      %v2529 = vadd.f32 %v1309, %v2528
      %v2530 = vpop.f32.mrb[0].mxu0
      %v2531 = vadd.f32 %v1314, %v2530
      %v2532 = vpop.f32.mrb[0].mxu0
      %v2533 = vadd.f32 %v1314, %v2532
      %2534 = vmatprep.mubr.bf16.mxu0 %v1797
      %2535 = vmatmul.mubr.bf16.gmra.mrb[0].mxu0 %v1796
      %v2536 = vpop.f32.mrb[0].mxu0
      %v2537 = vadd.f32 %v1319, %v2536
      %v2538 = vpop.f32.mrb[0].mxu0
      %v2539 = vadd.f32 %v1319, %v2538
      %v2540 = vpop.f32.mrb[0].mxu0
      %v2541 = vadd.f32 %v1324, %v2540
      %v2542 = vpop.f32.mrb[0].mxu0
      %v2543 = vadd.f32 %v1324, %v2542
      %2544 = vmatprep.mubr.bf16.mxu0 %v1799
      %2545 = vmatmul.mubr.bf16.gmra.mrb[0].mxu0 %v1798
      %v2546 = vpop.f32.mrb[0].mxu0
      %v2547 = vadd.f32 %v1329, %v2546
      %v2548 = vpop.f32.mrb[0].mxu0
      %v2549 = vadd.f32 %v1329, %v2548
      %v2550 = vpop.f32.mrb[0].mxu0
      %v2551 = vadd.f32 %v1334, %v2550
      %v2552 = vpop.f32.mrb[0].mxu0
      %v2553 = vadd.f32 %v1334, %v2552
      %2554 = vmatprep.mubr.bf16.mxu0 %v1801
      %2555 = vmatmul.mubr.bf16.gmra.mrb[0].mxu0 %v1800
      %v2556 = vpop.f32.mrb[0].mxu0
      %v2557 = vadd.f32 %v1339, %v2556
      %v2558 = vpop.f32.mrb[0].mxu0
      %v2559 = vadd.f32 %v1339, %v2558
      %v2560 = vpop.f32.mrb[0].mxu0
      %v2561 = vadd.f32 %v1344, %v2560
      %v2562 = vpop.f32.mrb[0].mxu0
      %v2563 = vadd.f32 %v1344, %v2562
      %2564 = vmatprep.mubr.bf16.mxu0 %v1803
      %2565 = vmatmul.mubr.bf16.gmra.mrb[0].mxu0 %v1802
      %v2566 = vpop.f32.mrb[0].mxu0
      %v2567 = vadd.f32 %v1349, %v2566
      %v2568 = vpop.f32.mrb[0].mxu0
      %v2569 = vadd.f32 %v1349, %v2568
      %v2570 = vpop.f32.mrb[0].mxu0
      %v2571 = vadd.f32 %v1354, %v2570
      %v2572 = vpop.f32.mrb[0].mxu0
      %v2573 = vadd.f32 %v1354, %v2572
      %2574 = vmatprep.mubr.bf16.mxu0 %v1805
      %2575 = vmatmul.mubr.bf16.gmra.mrb[0].mxu0 %v1804
      %v2576 = vpop.f32.mrb[0].mxu0
      %v2577 = vadd.f32 %v1359, %v2576
      %v2578 = vpop.f32.mrb[0].mxu0
      %v2579 = vadd.f32 %v1359, %v2578
      %v2580 = vpop.f32.mrb[0].mxu0
      %v2581 = vadd.f32 %v1364, %v2580
      %v2582 = vpop.f32.mrb[0].mxu0
      %v2583 = vadd.f32 %v1364, %v2582
      %2584 = vmatprep.mubr.bf16.mxu0 %v1807
      %2585 = vmatmul.mubr.bf16.gmra.mrb[0].mxu0 %v1806
      %v2586 = vpop.f32.mrb[0].mxu0
      %v2587 = vadd.f32 %v1369, %v2586
      %v2588 = vpop.f32.mrb[0].mxu0
      %v2589 = vadd.f32 %v1369, %v2588
      %v2590 = vpop.f32.mrb[0].mxu0
      %v2591 = vadd.f32 %v1374, %v2590
      %v2592 = vpop.f32.mrb[0].mxu0
      %v2593 = vadd.f32 %v1374, %v2592
      %2594 = vmatprep.mubr.bf16.mxu0 %v1809
      %2595 = vmatmul.mubr.bf16.gmra.mrb[0].mxu0 %v1808
      %v2596 = vpop.f32.mrb[0].mxu0
      %v2597 = vadd.f32 %v1379, %v2596
      %v2598 = vpop.f32.mrb[0].mxu0
      %v2599 = vadd.f32 %v1379, %v2598
      %v2600 = vpop.f32.mrb[0].mxu0
      %v2601 = vadd.f32 %v1384, %v2600
      %v2602 = vpop.f32.mrb[0].mxu0
      %v2603 = vadd.f32 %v1384, %v2602
      %2604 = vmatprep.mubr.bf16.mxu0 %v1811
      %2605 = vmatmul.mubr.bf16.gmra.mrb[0].mxu0 %v1810
      %v2606 = vpop.f32.mrb[0].mxu0
      %v2607 = vadd.f32 %v1389, %v2606
      %v2608 = vpop.f32.mrb[0].mxu0
      %v2609 = vadd.f32 %v1389, %v2608
      %v2610 = vpop.f32.mrb[0].mxu0
      %v2611 = vadd.f32 %v1394, %v2610
      %v2612 = vpop.f32.mrb[0].mxu0
      %v2613 = vadd.f32 %v1394, %v2612
      %2614 = vmatprep.mubr.bf16.mxu0 %v1813
      %2615 = vmatmul.mubr.bf16.gmra.mrb[0].mxu0 %v1812
      %v2616 = vpop.f32.mrb[0].mxu0
      %v2617 = vadd.f32 %v1399, %v2616
      %v2618 = vpop.f32.mrb[0].mxu0
      %v2619 = vadd.f32 %v1399, %v2618
      %v2620 = vpop.f32.mrb[0].mxu0
      %v2621 = vadd.f32 %v1404, %v2620
      %v2622 = vpop.f32.mrb[0].mxu0
      %v2623 = vadd.f32 %v1404, %v2622
      %2624 = vmatprep.mubr.bf16.mxu0 %v1815
      %2625 = vmatmul.mubr.bf16.gmra.mrb[0].mxu0 %v1814
      %v2626 = vpop.f32.mrb[0].mxu0
      %v2627 = vadd.f32 %v1409, %v2626
      %v2628 = vpop.f32.mrb[0].mxu0
      %v2629 = vadd.f32 %v1409, %v2628
      %v2630 = vpop.f32.mrb[0].mxu0
      %v2631 = vadd.f32 %v1414, %v2630
      %v2632 = vpop.f32.mrb[0].mxu0
      %v2633 = vadd.f32 %v1414, %v2632
      %2634 = vmatprep.mubr.bf16.mxu0 %v1817
      %2635 = vmatmul.mubr.bf16.gmra.mrb[0].mxu0 %v1816
      %v2636 = vpop.f32.mrb[0].mxu0
      %v2637 = vadd.f32 %v1419, %v2636
      %v2638 = vpop.f32.mrb[0].mxu0
      %v2639 = vadd.f32 %v1419, %v2638
      %v2640 = vpop.f32.mrb[0].mxu0
      %v2641 = vadd.f32 %v1424, %v2640
      %v2642 = vpop.f32.mrb[0].mxu0
      %v2643 = vadd.f32 %v1424, %v2642
      %2644 = vmatprep.mubr.bf16.mxu0 %v1819
      %2645 = vmatmul.mubr.bf16.gmra.mrb[0].mxu0 %v1818
      %v2646 = vpop.f32.mrb[0].mxu0
      %v2647 = vadd.f32 %v1429, %v2646
      %v2648 = vpop.f32.mrb[0].mxu0
      %v2649 = vadd.f32 %v1429, %v2648
      %v2650 = vpop.f32.mrb[0].mxu0
      %v2651 = vadd.f32 %v1434, %v2650
      %v2652 = vpop.f32.mrb[0].mxu0
      %v2653 = vadd.f32 %v1434, %v2652
      %2654 = vmatprep.mubr.bf16.mxu0 %v1821
      %2655 = vmatmul.mubr.bf16.gmra.mrb[0].mxu0 %v1820
      %v2656 = vpop.f32.mrb[0].mxu0
      %v2657 = vadd.f32 %v1439, %v2656
      %v2658 = vpop.f32.mrb[0].mxu0
      %v2659 = vadd.f32 %v1439, %v2658
      %v2660 = vpop.f32.mrb[0].mxu0
      %v2661 = vadd.f32 %v1444, %v2660
      %v2662 = vpop.f32.mrb[0].mxu0
      %v2663 = vadd.f32 %v1444, %v2662
      %2664 = vmatprep.mubr.bf16.mxu0 %v1823
      %2665 = vmatmul.mubr.bf16.gmra.mrb[0].mxu0 %v1822
      %v2666 = vpop.f32.mrb[0].mxu0
      %v2667 = vadd.f32 %v1449, %v2666
      %v2668 = vpop.f32.mrb[0].mxu0
      %v2669 = vadd.f32 %v1449, %v2668
      %v2670 = vpop.f32.mrb[0].mxu0
      %v2671 = vadd.f32 %v1454, %v2670
      %v2672 = vpop.f32.mrb[0].mxu0
      %v2673 = vadd.f32 %v1454, %v2672
      %2674 = vmatprep.mubr.bf16.mxu0 %v1825
      %2675 = vmatmul.mubr.bf16.gmra.mrb[0].mxu0 %v1824
      %v2676 = vpop.f32.mrb[0].mxu0
      %v2677 = vadd.f32 %v1459, %v2676
      %v2678 = vpop.f32.mrb[0].mxu0
      %v2679 = vadd.f32 %v1459, %v2678
      %v2680 = vpop.f32.mrb[0].mxu0
      %v2681 = vadd.f32 %v1464, %v2680
      %v2682 = vpop.f32.mrb[0].mxu0
      %v2683 = vadd.f32 %v1464, %v2682
      %2684 = vmatprep.mubr.bf16.mxu0 %v1827
      %2685 = vmatmul.mubr.bf16.gmra.mrb[0].mxu0 %v1826
      %v2686 = vpop.f32.mrb[0].mxu0
      %v2687 = vadd.f32 %v1469, %v2686
      %v2688 = vpop.f32.mrb[0].mxu0
      %v2689 = vadd.f32 %v1469, %v2688
      %v2690 = vpop.f32.mrb[0].mxu0
      %v2691 = vadd.f32 %v1474, %v2690
      %v2692 = vpop.f32.mrb[0].mxu0
      %v2693 = vadd.f32 %v1474, %v2692
      %2694 = vmatprep.mubr.bf16.mxu0 %v1829
      %2695 = vmatmul.mubr.bf16.gmra.mrb[0].mxu0 %v1828
      %v2696 = vpop.f32.mrb[0].mxu0
      %v2697 = vadd.f32 %v1479, %v2696
      %v2698 = vpop.f32.mrb[0].mxu0
      %v2699 = vadd.f32 %v1479, %v2698
      %v2700 = vpop.f32.mrb[0].mxu0
      %v2701 = vadd.f32 %v1484, %v2700
      %v2702 = vpop.f32.mrb[0].mxu0
      %v2703 = vadd.f32 %v1484, %v2702
      %2704 = vmatprep.mubr.bf16.mxu0 %v1831
      %2705 = vmatmul.mubr.bf16.gmra.mrb[0].mxu0 %v1830
      %v2706 = vpop.f32.mrb[0].mxu0
      %v2707 = vadd.f32 %v1489, %v2706
      %v2708 = vpop.f32.mrb[0].mxu0
      %v2709 = vadd.f32 %v1489, %v2708
      %v2710 = vpop.f32.mrb[0].mxu0
      %v2711 = vadd.f32 %v1494, %v2710
      %v2712 = vpop.f32.mrb[0].mxu0
      %v2713 = vadd.f32 %v1494, %v2712
      %2714 = vmatprep.mubr.bf16.mxu0 %v1833
      %2715 = vmatmul.mubr.bf16.gmra.mrb[0].mxu0 %v1832
      %v2716 = vpop.f32.mrb[0].mxu0
      %v2717 = vadd.f32 %v1499, %v2716
      %v2718 = vpop.f32.mrb[0].mxu0
      %v2719 = vadd.f32 %v1499, %v2718
      %v2720 = vpop.f32.mrb[0].mxu0
      %v2721 = vadd.f32 %v1504, %v2720
      %v2722 = vpop.f32.mrb[0].mxu0
      %v2723 = vadd.f32 %v1504, %v2722
      %2724 = vmatprep.mubr.bf16.mxu0 %v1835
      %2725 = vmatmul.mubr.bf16.gmra.mrb[0].mxu0 %v1834
      %v2726 = vpop.f32.mrb[0].mxu0
      %v2727 = vadd.f32 %v1509, %v2726
      %v2728 = vpop.f32.mrb[0].mxu0
      %v2729 = vadd.f32 %v1509, %v2728
      %v2730 = vpop.f32.mrb[0].mxu0
      %v2731 = vadd.f32 %v1514, %v2730
      %v2732 = vpop.f32.mrb[0].mxu0
      %v2733 = vadd.f32 %v1514, %v2732
      %2734 = vmatprep.mubr.bf16.mxu0 %v1837
      %2735 = vmatmul.mubr.bf16.gmra.mrb[0].mxu0 %v1836
      %v2736 = vpop.f32.mrb[0].mxu0
      %v2737 = vadd.f32 %v1519, %v2736
      %v2738 = vpop.f32.mrb[0].mxu0
      %v2739 = vadd.f32 %v1519, %v2738
      %v2740 = vpop.f32.mrb[0].mxu0
      %v2741 = vadd.f32 %v1524, %v2740
      %v2742 = vpop.f32.mrb[0].mxu0
      %v2743 = vadd.f32 %v1524, %v2742
      %2744 = vmatprep.mubr.bf16.mxu0 %v1839
      %2745 = vmatmul.mubr.bf16.gmra.mrb[0].mxu0 %v1838
      %v2746 = vpop.f32.mrb[0].mxu0
      %v2747 = vadd.f32 %v1529, %v2746
      %v2748 = vpop.f32.mrb[0].mxu0
      %v2749 = vadd.f32 %v1529, %v2748
      %v2750 = vpop.f32.mrb[0].mxu0
      %v2751 = vadd.f32 %v1534, %v2750
      %v2752 = vpop.f32.mrb[0].mxu0
      %v2753 = vadd.f32 %v1534, %v2752
      %2754 = vmatprep.mubr.bf16.mxu0 %v1841
      %2755 = vmatmul.mubr.bf16.gmra.mrb[0].mxu0 %v1840
      %v2756 = vpop.f32.mrb[0].mxu0
      %v2757 = vadd.f32 %v1539, %v2756
      %v2758 = vpop.f32.mrb[0].mxu0
      %v2759 = vadd.f32 %v1539, %v2758
      %v2760 = vpop.f32.mrb[0].mxu0
      %v2761 = vadd.f32 %v1544, %v2760
      %v2762 = vpop.f32.mrb[0].mxu0
      %v2763 = vadd.f32 %v1544, %v2762
      %2764 = vmatprep.mubr.bf16.mxu0 %v1843
      %2765 = vmatmul.mubr.bf16.gmra.mrb[0].mxu0 %v1842
      %v2766 = vpop.f32.mrb[0].mxu0
      %v2767 = vadd.f32 %v1549, %v2766
      %v2768 = vpop.f32.mrb[0].mxu0
      %v2769 = vadd.f32 %v1549, %v2768
      %v2770 = vpop.f32.mrb[0].mxu0
      %v2771 = vadd.f32 %v1554, %v2770
      %v2772 = vpop.f32.mrb[0].mxu0
      %v2773 = vadd.f32 %v1554, %v2772
      %2774 = vmatprep.mubr.bf16.mxu0 %v1845
      %2775 = vmatmul.mubr.bf16.gmra.mrb[0].mxu0 %v1844
      %v2776 = vpop.f32.mrb[0].mxu0
      %v2777 = vadd.f32 %v1559, %v2776
      %v2778 = vpop.f32.mrb[0].mxu0
      %v2779 = vadd.f32 %v1559, %v2778
      %v2780 = vpop.f32.mrb[0].mxu0
      %v2781 = vadd.f32 %v1564, %v2780
      %v2782 = vpop.f32.mrb[0].mxu0
      %v2783 = vadd.f32 %v1564, %v2782
      %2784 = vmatprep.mubr.bf16.mxu0 %v1847
      %2785 = vmatmul.mubr.bf16.gmra.mrb[0].mxu0 %v1846
      %v2786 = vpop.f32.mrb[0].mxu0
      %v2787 = vadd.f32 %v1569, %v2786
      %v2788 = vpop.f32.mrb[0].mxu0
      %v2789 = vadd.f32 %v1569, %v2788
      %v2790 = vpop.f32.mrb[0].mxu0
      %v2791 = vadd.f32 %v1574, %v2790
      %v2792 = vpop.f32.mrb[0].mxu0
      %v2793 = vadd.f32 %v1574, %v2792
      %2794 = vmatprep.mubr.bf16.mxu0 %v1849
      %2795 = vmatmul.mubr.bf16.gmra.mrb[0].mxu0 %v1848
      %v2796 = vpop.f32.mrb[0].mxu0
      %v2797 = vadd.f32 %v1579, %v2796
      %v2798 = vpop.f32.mrb[0].mxu0
      %v2799 = vadd.f32 %v1579, %v2798
      %v2800 = vpop.f32.mrb[0].mxu0
      %v2801 = vadd.f32 %v1584, %v2800
      %v2802 = vpop.f32.mrb[0].mxu0
      %v2803 = vadd.f32 %v1584, %v2802
      %2804 = vmatprep.mubr.bf16.mxu0 %v1851
      %2805 = vmatmul.mubr.bf16.gmra.mrb[0].mxu0 %v1850
      %v2806 = vpop.f32.mrb[0].mxu0
      %v2807 = vadd.f32 %v1589, %v2806
      %v2808 = vpop.f32.mrb[0].mxu0
      %v2809 = vadd.f32 %v1589, %v2808
      %v2810 = vpop.f32.mrb[0].mxu0
      %v2811 = vadd.f32 %v1594, %v2810
      %v2812 = vpop.f32.mrb[0].mxu0
      %v2813 = vadd.f32 %v1594, %v2812
      %2814 = vdwg.mxu0
      %s2815 = scalar_lea.vmem %s367, 512
      %v2816 = vld [vmem:[%s2815] sm:$0xff]
      %v2817 = vld [vmem:[%s2815 + $0x8] sm:$0xff]
      %v2818 = vld [vmem:[%s2815 + $0x10] sm:$0xff]
      %v2819 = vld [vmem:[%s2815 + $0x18] sm:$0xff]
      %v2820 = vld [vmem:[%s2815 + $0x20] sm:$0xff]
      %v2821 = vld [vmem:[%s2815 + $0x28] sm:$0xff]
      %v2822 = vld [vmem:[%s2815 + $0x30] sm:$0xff]
      %v2823 = vld [vmem:[%s2815 + $0x38] sm:$0xff]
      %v2824 = vld [vmem:[%s2815 + $0x40] sm:$0xff]
      %v2825 = vld [vmem:[%s2815 + $0x48] sm:$0xff]
      %v2826 = vld [vmem:[%s2815 + $0x50] sm:$0xff]
      %v2827 = vld [vmem:[%s2815 + $0x58] sm:$0xff]
      %v2828 = vld [vmem:[%s2815 + $0x60] sm:$0xff]
      %v2829 = vld [vmem:[%s2815 + $0x68] sm:$0xff]
      %v2830 = vld [vmem:[%s2815 + $0x70] sm:$0xff]
      %v2831 = vld [vmem:[%s2815 + $0x78] sm:$0xff]
      %v2832 = vld [vmem:[%s2815 + $0x80] sm:$0xff]
      %v2833 = vld [vmem:[%s2815 + $0x88] sm:$0xff]
      %v2834 = vld [vmem:[%s2815 + $0x90] sm:$0xff]
      %v2835 = vld [vmem:[%s2815 + $0x98] sm:$0xff]
      %v2836 = vld [vmem:[%s2815 + $0xa0] sm:$0xff]
      %v2837 = vld [vmem:[%s2815 + $0xa8] sm:$0xff]
      %v2838 = vld [vmem:[%s2815 + $0xb0] sm:$0xff]
      %v2839 = vld [vmem:[%s2815 + $0xb8] sm:$0xff]
      %v2840 = vld [vmem:[%s2815 + $0xc0] sm:$0xff]
      %v2841 = vld [vmem:[%s2815 + $0xc8] sm:$0xff]
      %v2842 = vld [vmem:[%s2815 + $0xd0] sm:$0xff]
      %v2843 = vld [vmem:[%s2815 + $0xd8] sm:$0xff]
      %v2844 = vld [vmem:[%s2815 + $0xe0] sm:$0xff]
      %v2845 = vld [vmem:[%s2815 + $0xe8] sm:$0xff]
      %v2846 = vld [vmem:[%s2815 + $0xf0] sm:$0xff]
      %v2847 = vld [vmem:[%s2815 + $0xf8] sm:$0xff]
      %v2880 = vunpack.c.l.b16 %v2816
      %v2881 = vunpack.c.h.b16 %v2816
      %v2882 = vunpack.c.l.b16 %v2817
      %v2883 = vunpack.c.h.b16 %v2817
      %v2884 = vunpack.c.l.b16 %v2818
      %v2885 = vunpack.c.h.b16 %v2818
      %v2886 = vunpack.c.l.b16 %v2819
      %v2887 = vunpack.c.h.b16 %v2819
      %v2888 = vunpack.c.l.b16 %v2820
      %v2889 = vunpack.c.h.b16 %v2820
      %v2890 = vunpack.c.l.b16 %v2821
      %v2891 = vunpack.c.h.b16 %v2821
      %v2892 = vunpack.c.l.b16 %v2822
      %v2893 = vunpack.c.h.b16 %v2822
      %v2894 = vunpack.c.l.b16 %v2823
      %v2895 = vunpack.c.h.b16 %v2823
      %v2896 = vunpack.c.l.b16 %v2824
      %v2897 = vunpack.c.h.b16 %v2824
      %v2898 = vunpack.c.l.b16 %v2825
      %v2899 = vunpack.c.h.b16 %v2825
      %v2900 = vunpack.c.l.b16 %v2826
      %v2901 = vunpack.c.h.b16 %v2826
      %v2902 = vunpack.c.l.b16 %v2827
      %v2903 = vunpack.c.h.b16 %v2827
      %v2904 = vunpack.c.l.b16 %v2828
      %v2905 = vunpack.c.h.b16 %v2828
      %v2906 = vunpack.c.l.b16 %v2829
      %v2907 = vunpack.c.h.b16 %v2829
      %v2908 = vunpack.c.l.b16 %v2830
      %v2909 = vunpack.c.h.b16 %v2830
      %v2910 = vunpack.c.l.b16 %v2831
      %v2911 = vunpack.c.h.b16 %v2831
      %v2912 = vunpack.c.l.b16 %v2832
      %v2913 = vunpack.c.h.b16 %v2832
      %v2914 = vunpack.c.l.b16 %v2833
      %v2915 = vunpack.c.h.b16 %v2833
      %v2916 = vunpack.c.l.b16 %v2834
      %v2917 = vunpack.c.h.b16 %v2834
      %v2918 = vunpack.c.l.b16 %v2835
      %v2919 = vunpack.c.h.b16 %v2835
      %v2920 = vunpack.c.l.b16 %v2836
      %v2921 = vunpack.c.h.b16 %v2836
      %v2922 = vunpack.c.l.b16 %v2837
      %v2923 = vunpack.c.h.b16 %v2837
      %v2924 = vunpack.c.l.b16 %v2838
      %v2925 = vunpack.c.h.b16 %v2838
      %v2926 = vunpack.c.l.b16 %v2839
      %v2927 = vunpack.c.h.b16 %v2839
      %v2928 = vunpack.c.l.b16 %v2840
      %v2929 = vunpack.c.h.b16 %v2840
      %v2930 = vunpack.c.l.b16 %v2841
      %v2931 = vunpack.c.h.b16 %v2841
      %v2932 = vunpack.c.l.b16 %v2842
      %v2933 = vunpack.c.h.b16 %v2842
      %v2934 = vunpack.c.l.b16 %v2843
      %v2935 = vunpack.c.h.b16 %v2843
      %v2936 = vunpack.c.l.b16 %v2844
      %v2937 = vunpack.c.h.b16 %v2844
      %v2938 = vunpack.c.l.b16 %v2845
      %v2939 = vunpack.c.h.b16 %v2845
      %v2940 = vunpack.c.l.b16 %v2846
      %v2941 = vunpack.c.h.b16 %v2846
      %v2942 = vunpack.c.l.b16 %v2847
      %v2943 = vunpack.c.h.b16 %v2847
      %v2944 = vpack.c.b16 %v2882, %v2880
      %v2945 = vpack.c.b16 %v2883, %v2881
      %v2946 = vpack.c.b16 %v2886, %v2884
      %v2947 = vpack.c.b16 %v2887, %v2885
      %v2948 = vpack.c.b16 %v2890, %v2888
      %v2949 = vpack.c.b16 %v2891, %v2889
      %v2950 = vpack.c.b16 %v2894, %v2892
      %v2951 = vpack.c.b16 %v2895, %v2893
      %v2952 = vpack.c.b16 %v2898, %v2896
      %v2953 = vpack.c.b16 %v2899, %v2897
      %v2954 = vpack.c.b16 %v2902, %v2900
      %v2955 = vpack.c.b16 %v2903, %v2901
      %v2956 = vpack.c.b16 %v2906, %v2904
      %v2957 = vpack.c.b16 %v2907, %v2905
      %v2958 = vpack.c.b16 %v2910, %v2908
      %v2959 = vpack.c.b16 %v2911, %v2909
      %v2960 = vpack.c.b16 %v2914, %v2912
      %v2961 = vpack.c.b16 %v2915, %v2913
      %v2962 = vpack.c.b16 %v2918, %v2916
      %v2963 = vpack.c.b16 %v2919, %v2917
      %v2964 = vpack.c.b16 %v2922, %v2920
      %v2965 = vpack.c.b16 %v2923, %v2921
      %v2966 = vpack.c.b16 %v2926, %v2924
      %v2967 = vpack.c.b16 %v2927, %v2925
      %v2968 = vpack.c.b16 %v2930, %v2928
      %v2969 = vpack.c.b16 %v2931, %v2929
      %v2970 = vpack.c.b16 %v2934, %v2932
      %v2971 = vpack.c.b16 %v2935, %v2933
      %v2972 = vpack.c.b16 %v2938, %v2936
      %v2973 = vpack.c.b16 %v2939, %v2937
      %v2974 = vpack.c.b16 %v2942, %v2940
      %v2975 = vpack.c.b16 %v2943, %v2941
      %3008 = vmatprep.subr.bf16.mxu0 %v2945
      %3009 = vmatpush1.bf16.msra.mxu0 %v2944
      %3010 = vmatprep.subr.bf16.mxu0 %v2947
      %3011 = vmatpush1.bf16.msra.mxu0 %v2946
      %3012 = vmatprep.subr.bf16.mxu0 %v2949
      %3013 = vmatpush1.bf16.msra.mxu0 %v2948
      %3014 = vmatprep.subr.bf16.mxu0 %v2951
      %3015 = vmatpush1.bf16.msra.mxu0 %v2950
      %3016 = vmatprep.subr.bf16.mxu0 %v2953
      %3017 = vmatpush1.bf16.msra.mxu0 %v2952
      %3018 = vmatprep.subr.bf16.mxu0 %v2955
      %3019 = vmatpush1.bf16.msra.mxu0 %v2954
      %3020 = vmatprep.subr.bf16.mxu0 %v2957
      %3021 = vmatpush1.bf16.msra.mxu0 %v2956
      %3022 = vmatprep.subr.bf16.mxu0 %v2959
      %3023 = vmatpush1.bf16.msra.mxu0 %v2958
      %3024 = vmatprep.subr.bf16.mxu0 %v2961
      %3025 = vmatpush1.bf16.msra.mxu0 %v2960
      %3026 = vmatprep.subr.bf16.mxu0 %v2963
      %3027 = vmatpush1.bf16.msra.mxu0 %v2962
      %3028 = vmatprep.subr.bf16.mxu0 %v2965
      %3029 = vmatpush1.bf16.msra.mxu0 %v2964
      %3030 = vmatprep.subr.bf16.mxu0 %v2967
      %3031 = vmatpush1.bf16.msra.mxu0 %v2966
      %3032 = vmatprep.subr.bf16.mxu0 %v2969
      %3033 = vmatpush1.bf16.msra.mxu0 %v2968
      %3034 = vmatprep.subr.bf16.mxu0 %v2971
      %3035 = vmatpush1.bf16.msra.mxu0 %v2970
      %3036 = vmatprep.subr.bf16.mxu0 %v2973
      %3037 = vmatpush1.bf16.msra.mxu0 %v2972
      %3038 = vmatprep.subr.bf16.mxu0 %v2975
      %3039 = vmatpush1.bf16.msra.mxu0 %v2974
      %3040 = vmatprep.mubr.bf16.mxu0 %v1789
      %3041 = vmatmul.mubr.bf16.gmra.mrb[0].mxu0 %v1788
      %v3042 = vpop.f32.mrb[0].mxu0
      %v3043 = vadd.f32 %v1279, %v3042
      %v3044 = vpop.f32.mrb[0].mxu0
      %v3045 = vadd.f32 %v1279, %v3044
      %v3046 = vpop.f32.mrb[0].mxu0
      %v3047 = vadd.f32 %v1284, %v3046
      %v3048 = vpop.f32.mrb[0].mxu0
      %v3049 = vadd.f32 %v1284, %v3048
      %3050 = vmatprep.mubr.bf16.mxu0 %v1791
      %3051 = vmatmul.mubr.bf16.gmra.mrb[0].mxu0 %v1790
      %v3052 = vpop.f32.mrb[0].mxu0
      %v3053 = vadd.f32 %v1289, %v3052
      %v3054 = vpop.f32.mrb[0].mxu0
      %v3055 = vadd.f32 %v1289, %v3054
      %v3056 = vpop.f32.mrb[0].mxu0
      %v3057 = vadd.f32 %v1294, %v3056
      %v3058 = vpop.f32.mrb[0].mxu0
      %v3059 = vadd.f32 %v1294, %v3058
      %3060 = vmatprep.mubr.bf16.mxu0 %v1793
      %3061 = vmatmul.mubr.bf16.gmra.mrb[0].mxu0 %v1792
      %v3062 = vpop.f32.mrb[0].mxu0
      %v3063 = vadd.f32 %v1299, %v3062
      %v3064 = vpop.f32.mrb[0].mxu0
      %v3065 = vadd.f32 %v1299, %v3064
      %v3066 = vpop.f32.mrb[0].mxu0
      %v3067 = vadd.f32 %v1304, %v3066
      %v3068 = vpop.f32.mrb[0].mxu0
      %v3069 = vadd.f32 %v1304, %v3068
      %3070 = vmatprep.mubr.bf16.mxu0 %v1795
      %3071 = vmatmul.mubr.bf16.gmra.mrb[0].mxu0 %v1794
      %v3072 = vpop.f32.mrb[0].mxu0
      %v3073 = vadd.f32 %v1309, %v3072
      %v3074 = vpop.f32.mrb[0].mxu0
      %v3075 = vadd.f32 %v1309, %v3074
      %v3076 = vpop.f32.mrb[0].mxu0
      %v3077 = vadd.f32 %v1314, %v3076
      %v3078 = vpop.f32.mrb[0].mxu0
      %v3079 = vadd.f32 %v1314, %v3078
      %3080 = vmatprep.mubr.bf16.mxu0 %v1797
      %3081 = vmatmul.mubr.bf16.gmra.mrb[0].mxu0 %v1796
      %v3082 = vpop.f32.mrb[0].mxu0
      %v3083 = vadd.f32 %v1319, %v3082
      %v3084 = vpop.f32.mrb[0].mxu0
      %v3085 = vadd.f32 %v1319, %v3084
      %v3086 = vpop.f32.mrb[0].mxu0
      %v3087 = vadd.f32 %v1324, %v3086
      %v3088 = vpop.f32.mrb[0].mxu0
      %v3089 = vadd.f32 %v1324, %v3088
      %3090 = vmatprep.mubr.bf16.mxu0 %v1799
      %3091 = vmatmul.mubr.bf16.gmra.mrb[0].mxu0 %v1798
      %v3092 = vpop.f32.mrb[0].mxu0
      %v3093 = vadd.f32 %v1329, %v3092
      %v3094 = vpop.f32.mrb[0].mxu0
      %v3095 = vadd.f32 %v1329, %v3094
      %v3096 = vpop.f32.mrb[0].mxu0
      %v3097 = vadd.f32 %v1334, %v3096
      %v3098 = vpop.f32.mrb[0].mxu0
      %v3099 = vadd.f32 %v1334, %v3098
      %3100 = vmatprep.mubr.bf16.mxu0 %v1801
      %3101 = vmatmul.mubr.bf16.gmra.mrb[0].mxu0 %v1800
      %v3102 = vpop.f32.mrb[0].mxu0
      %v3103 = vadd.f32 %v1339, %v3102
      %v3104 = vpop.f32.mrb[0].mxu0
      %v3105 = vadd.f32 %v1339, %v3104
      %v3106 = vpop.f32.mrb[0].mxu0
      %v3107 = vadd.f32 %v1344, %v3106
      %v3108 = vpop.f32.mrb[0].mxu0
      %v3109 = vadd.f32 %v1344, %v3108
      %3110 = vmatprep.mubr.bf16.mxu0 %v1803
      %3111 = vmatmul.mubr.bf16.gmra.mrb[0].mxu0 %v1802
      %v3112 = vpop.f32.mrb[0].mxu0
      %v3113 = vadd.f32 %v1349, %v3112
      %v3114 = vpop.f32.mrb[0].mxu0
      %v3115 = vadd.f32 %v1349, %v3114
      %v3116 = vpop.f32.mrb[0].mxu0
      %v3117 = vadd.f32 %v1354, %v3116
      %v3118 = vpop.f32.mrb[0].mxu0
      %v3119 = vadd.f32 %v1354, %v3118
      %3120 = vmatprep.mubr.bf16.mxu0 %v1805
      %3121 = vmatmul.mubr.bf16.gmra.mrb[0].mxu0 %v1804
      %v3122 = vpop.f32.mrb[0].mxu0
      %v3123 = vadd.f32 %v1359, %v3122
      %v3124 = vpop.f32.mrb[0].mxu0
      %v3125 = vadd.f32 %v1359, %v3124
      %v3126 = vpop.f32.mrb[0].mxu0
      %v3127 = vadd.f32 %v1364, %v3126
      %v3128 = vpop.f32.mrb[0].mxu0
      %v3129 = vadd.f32 %v1364, %v3128
      %3130 = vmatprep.mubr.bf16.mxu0 %v1807
      %3131 = vmatmul.mubr.bf16.gmra.mrb[0].mxu0 %v1806
      %v3132 = vpop.f32.mrb[0].mxu0
      %v3133 = vadd.f32 %v1369, %v3132
      %v3134 = vpop.f32.mrb[0].mxu0
      %v3135 = vadd.f32 %v1369, %v3134
      %v3136 = vpop.f32.mrb[0].mxu0
      %v3137 = vadd.f32 %v1374, %v3136
      %v3138 = vpop.f32.mrb[0].mxu0
      %v3139 = vadd.f32 %v1374, %v3138
      %3140 = vmatprep.mubr.bf16.mxu0 %v1809
      %3141 = vmatmul.mubr.bf16.gmra.mrb[0].mxu0 %v1808
      %v3142 = vpop.f32.mrb[0].mxu0
      %v3143 = vadd.f32 %v1379, %v3142
      %v3144 = vpop.f32.mrb[0].mxu0
      %v3145 = vadd.f32 %v1379, %v3144
      %v3146 = vpop.f32.mrb[0].mxu0
      %v3147 = vadd.f32 %v1384, %v3146
      %v3148 = vpop.f32.mrb[0].mxu0
      %v3149 = vadd.f32 %v1384, %v3148
      %3150 = vmatprep.mubr.bf16.mxu0 %v1811
      %3151 = vmatmul.mubr.bf16.gmra.mrb[0].mxu0 %v1810
      %v3152 = vpop.f32.mrb[0].mxu0
      %v3153 = vadd.f32 %v1389, %v3152
      %v3154 = vpop.f32.mrb[0].mxu0
      %v3155 = vadd.f32 %v1389, %v3154
      %v3156 = vpop.f32.mrb[0].mxu0
      %v3157 = vadd.f32 %v1394, %v3156
      %v3158 = vpop.f32.mrb[0].mxu0
      %v3159 = vadd.f32 %v1394, %v3158
      %3160 = vmatprep.mubr.bf16.mxu0 %v1813
      %3161 = vmatmul.mubr.bf16.gmra.mrb[0].mxu0 %v1812
      %v3162 = vpop.f32.mrb[0].mxu0
      %v3163 = vadd.f32 %v1399, %v3162
      %v3164 = vpop.f32.mrb[0].mxu0
      %v3165 = vadd.f32 %v1399, %v3164
      %v3166 = vpop.f32.mrb[0].mxu0
      %v3167 = vadd.f32 %v1404, %v3166
      %v3168 = vpop.f32.mrb[0].mxu0
      %v3169 = vadd.f32 %v1404, %v3168
      %3170 = vmatprep.mubr.bf16.mxu0 %v1815
      %3171 = vmatmul.mubr.bf16.gmra.mrb[0].mxu0 %v1814
      %v3172 = vpop.f32.mrb[0].mxu0
      %v3173 = vadd.f32 %v1409, %v3172
      %v3174 = vpop.f32.mrb[0].mxu0
      %v3175 = vadd.f32 %v1409, %v3174
      %v3176 = vpop.f32.mrb[0].mxu0
      %v3177 = vadd.f32 %v1414, %v3176
      %v3178 = vpop.f32.mrb[0].mxu0
      %v3179 = vadd.f32 %v1414, %v3178
      %3180 = vmatprep.mubr.bf16.mxu0 %v1817
      %3181 = vmatmul.mubr.bf16.gmra.mrb[0].mxu0 %v1816
      %v3182 = vpop.f32.mrb[0].mxu0
      %v3183 = vadd.f32 %v1419, %v3182
      %v3184 = vpop.f32.mrb[0].mxu0
      %v3185 = vadd.f32 %v1419, %v3184
      %v3186 = vpop.f32.mrb[0].mxu0
      %v3187 = vadd.f32 %v1424, %v3186
      %v3188 = vpop.f32.mrb[0].mxu0
      %v3189 = vadd.f32 %v1424, %v3188
      %3190 = vmatprep.mubr.bf16.mxu0 %v1819
      %3191 = vmatmul.mubr.bf16.gmra.mrb[0].mxu0 %v1818
      %v3192 = vpop.f32.mrb[0].mxu0
      %v3193 = vadd.f32 %v1429, %v3192
      %v3194 = vpop.f32.mrb[0].mxu0
      %v3195 = vadd.f32 %v1429, %v3194
      %v3196 = vpop.f32.mrb[0].mxu0
      %v3197 = vadd.f32 %v1434, %v3196
      %v3198 = vpop.f32.mrb[0].mxu0
      %v3199 = vadd.f32 %v1434, %v3198
      %3200 = vmatprep.mubr.bf16.mxu0 %v1821
      %3201 = vmatmul.mubr.bf16.gmra.mrb[0].mxu0 %v1820
      %v3202 = vpop.f32.mrb[0].mxu0
      %v3203 = vadd.f32 %v1439, %v3202
      %v3204 = vpop.f32.mrb[0].mxu0
      %v3205 = vadd.f32 %v1439, %v3204
      %v3206 = vpop.f32.mrb[0].mxu0
      %v3207 = vadd.f32 %v1444, %v3206
      %v3208 = vpop.f32.mrb[0].mxu0
      %v3209 = vadd.f32 %v1444, %v3208
      %3210 = vmatprep.mubr.bf16.mxu0 %v1823
      %3211 = vmatmul.mubr.bf16.gmra.mrb[0].mxu0 %v1822
      %v3212 = vpop.f32.mrb[0].mxu0
      %v3213 = vadd.f32 %v1449, %v3212
      %v3214 = vpop.f32.mrb[0].mxu0
      %v3215 = vadd.f32 %v1449, %v3214
      %v3216 = vpop.f32.mrb[0].mxu0
      %v3217 = vadd.f32 %v1454, %v3216
      %v3218 = vpop.f32.mrb[0].mxu0
      %v3219 = vadd.f32 %v1454, %v3218
      %3220 = vmatprep.mubr.bf16.mxu0 %v1825
      %3221 = vmatmul.mubr.bf16.gmra.mrb[0].mxu0 %v1824
      %v3222 = vpop.f32.mrb[0].mxu0
      %v3223 = vadd.f32 %v1459, %v3222
      %v3224 = vpop.f32.mrb[0].mxu0
      %v3225 = vadd.f32 %v1459, %v3224
      %v3226 = vpop.f32.mrb[0].mxu0
      %v3227 = vadd.f32 %v1464, %v3226
      %v3228 = vpop.f32.mrb[0].mxu0
      %v3229 = vadd.f32 %v1464, %v3228
      %3230 = vmatprep.mubr.bf16.mxu0 %v1827
      %3231 = vmatmul.mubr.bf16.gmra.mrb[0].mxu0 %v1826
      %v3232 = vpop.f32.mrb[0].mxu0
      %v3233 = vadd.f32 %v1469, %v3232
      %v3234 = vpop.f32.mrb[0].mxu0
      %v3235 = vadd.f32 %v1469, %v3234
      %v3236 = vpop.f32.mrb[0].mxu0
      %v3237 = vadd.f32 %v1474, %v3236
      %v3238 = vpop.f32.mrb[0].mxu0
      %v3239 = vadd.f32 %v1474, %v3238
      %3240 = vmatprep.mubr.bf16.mxu0 %v1829
      %3241 = vmatmul.mubr.bf16.gmra.mrb[0].mxu0 %v1828
      %v3242 = vpop.f32.mrb[0].mxu0
      %v3243 = vadd.f32 %v1479, %v3242
      %v3244 = vpop.f32.mrb[0].mxu0
      %v3245 = vadd.f32 %v1479, %v3244
      %v3246 = vpop.f32.mrb[0].mxu0
      %v3247 = vadd.f32 %v1484, %v3246
      %v3248 = vpop.f32.mrb[0].mxu0
      %v3249 = vadd.f32 %v1484, %v3248
      %3250 = vmatprep.mubr.bf16.mxu0 %v1831
      %3251 = vmatmul.mubr.bf16.gmra.mrb[0].mxu0 %v1830
      %v3252 = vpop.f32.mrb[0].mxu0
      %v3253 = vadd.f32 %v1489, %v3252
      %v3254 = vpop.f32.mrb[0].mxu0
      %v3255 = vadd.f32 %v1489, %v3254
      %v3256 = vpop.f32.mrb[0].mxu0
      %v3257 = vadd.f32 %v1494, %v3256
      %v3258 = vpop.f32.mrb[0].mxu0
      %v3259 = vadd.f32 %v1494, %v3258
      %3260 = vmatprep.mubr.bf16.mxu0 %v1833
      %3261 = vmatmul.mubr.bf16.gmra.mrb[0].mxu0 %v1832
      %v3262 = vpop.f32.mrb[0].mxu0
      %v3263 = vadd.f32 %v1499, %v3262
      %v3264 = vpop.f32.mrb[0].mxu0
      %v3265 = vadd.f32 %v1499, %v3264
      %v3266 = vpop.f32.mrb[0].mxu0
      %v3267 = vadd.f32 %v1504, %v3266
      %v3268 = vpop.f32.mrb[0].mxu0
      %v3269 = vadd.f32 %v1504, %v3268
      %3270 = vmatprep.mubr.bf16.mxu0 %v1835
      %3271 = vmatmul.mubr.bf16.gmra.mrb[0].mxu0 %v1834
      %v3272 = vpop.f32.mrb[0].mxu0
      %v3273 = vadd.f32 %v1509, %v3272
      %v3274 = vpop.f32.mrb[0].mxu0
      %v3275 = vadd.f32 %v1509, %v3274
      %v3276 = vpop.f32.mrb[0].mxu0
      %v3277 = vadd.f32 %v1514, %v3276
      %v3278 = vpop.f32.mrb[0].mxu0
      %v3279 = vadd.f32 %v1514, %v3278
      %3280 = vmatprep.mubr.bf16.mxu0 %v1837
      %3281 = vmatmul.mubr.bf16.gmra.mrb[0].mxu0 %v1836
      %v3282 = vpop.f32.mrb[0].mxu0
      %v3283 = vadd.f32 %v1519, %v3282
      %v3284 = vpop.f32.mrb[0].mxu0
      %v3285 = vadd.f32 %v1519, %v3284
      %v3286 = vpop.f32.mrb[0].mxu0
      %v3287 = vadd.f32 %v1524, %v3286
      %v3288 = vpop.f32.mrb[0].mxu0
      %v3289 = vadd.f32 %v1524, %v3288
      %3290 = vmatprep.mubr.bf16.mxu0 %v1839
      %3291 = vmatmul.mubr.bf16.gmra.mrb[0].mxu0 %v1838
      %v3292 = vpop.f32.mrb[0].mxu0
      %v3293 = vadd.f32 %v1529, %v3292
      %v3294 = vpop.f32.mrb[0].mxu0
      %v3295 = vadd.f32 %v1529, %v3294
      %v3296 = vpop.f32.mrb[0].mxu0
      %v3297 = vadd.f32 %v1534, %v3296
      %v3298 = vpop.f32.mrb[0].mxu0
      %v3299 = vadd.f32 %v1534, %v3298
      %3300 = vmatprep.mubr.bf16.mxu0 %v1841
      %3301 = vmatmul.mubr.bf16.gmra.mrb[0].mxu0 %v1840
      %v3302 = vpop.f32.mrb[0].mxu0
      %v3303 = vadd.f32 %v1539, %v3302
      %v3304 = vpop.f32.mrb[0].mxu0
      %v3305 = vadd.f32 %v1539, %v3304
      %v3306 = vpop.f32.mrb[0].mxu0
      %v3307 = vadd.f32 %v1544, %v3306
      %v3308 = vpop.f32.mrb[0].mxu0
      %v3309 = vadd.f32 %v1544, %v3308
      %3310 = vmatprep.mubr.bf16.mxu0 %v1843
      %3311 = vmatmul.mubr.bf16.gmra.mrb[0].mxu0 %v1842
      %v3312 = vpop.f32.mrb[0].mxu0
      %v3313 = vadd.f32 %v1549, %v3312
      %v3314 = vpop.f32.mrb[0].mxu0
      %v3315 = vadd.f32 %v1549, %v3314
      %v3316 = vpop.f32.mrb[0].mxu0
      %v3317 = vadd.f32 %v1554, %v3316
      %v3318 = vpop.f32.mrb[0].mxu0
      %v3319 = vadd.f32 %v1554, %v3318
      %3320 = vmatprep.mubr.bf16.mxu0 %v1845
      %3321 = vmatmul.mubr.bf16.gmra.mrb[0].mxu0 %v1844
      %v3322 = vpop.f32.mrb[0].mxu0
      %v3323 = vadd.f32 %v1559, %v3322
      %v3324 = vpop.f32.mrb[0].mxu0
      %v3325 = vadd.f32 %v1559, %v3324
      %v3326 = vpop.f32.mrb[0].mxu0
      %v3327 = vadd.f32 %v1564, %v3326
      %v3328 = vpop.f32.mrb[0].mxu0
      %v3329 = vadd.f32 %v1564, %v3328
      %3330 = vmatprep.mubr.bf16.mxu0 %v1847
      %3331 = vmatmul.mubr.bf16.gmra.mrb[0].mxu0 %v1846
      %v3332 = vpop.f32.mrb[0].mxu0
      %v3333 = vadd.f32 %v1569, %v3332
      %v3334 = vpop.f32.mrb[0].mxu0
      %v3335 = vadd.f32 %v1569, %v3334
      %v3336 = vpop.f32.mrb[0].mxu0
      %v3337 = vadd.f32 %v1574, %v3336
      %v3338 = vpop.f32.mrb[0].mxu0
      %v3339 = vadd.f32 %v1574, %v3338
      %3340 = vmatprep.mubr.bf16.mxu0 %v1849
      %3341 = vmatmul.mubr.bf16.gmra.mrb[0].mxu0 %v1848
      %v3342 = vpop.f32.mrb[0].mxu0
      %v3343 = vadd.f32 %v1579, %v3342
      %v3344 = vpop.f32.mrb[0].mxu0
      %v3345 = vadd.f32 %v1579, %v3344
      %v3346 = vpop.f32.mrb[0].mxu0
      %v3347 = vadd.f32 %v1584, %v3346
      %v3348 = vpop.f32.mrb[0].mxu0
      %v3349 = vadd.f32 %v1584, %v3348
      %3350 = vmatprep.mubr.bf16.mxu0 %v1851
      %3351 = vmatmul.mubr.bf16.gmra.mrb[0].mxu0 %v1850
      %v3352 = vpop.f32.mrb[0].mxu0
      %v3353 = vadd.f32 %v1589, %v3352
      %v3354 = vpop.f32.mrb[0].mxu0
      %v3355 = vadd.f32 %v1589, %v3354
      %v3356 = vpop.f32.mrb[0].mxu0
      %v3357 = vadd.f32 %v1594, %v3356
      %v3358 = vpop.f32.mrb[0].mxu0
      %v3359 = vadd.f32 %v1594, %v3358
      %3360 = vdwg.mxu0
      %s3361 = scalar_lea.vmem %s367, 768
      %v3362 = vld [vmem:[%s3361] sm:$0xff]
      %v3363 = vld [vmem:[%s3361 + $0x8] sm:$0xff]
      %v3364 = vld [vmem:[%s3361 + $0x10] sm:$0xff]
      %v3365 = vld [vmem:[%s3361 + $0x18] sm:$0xff]
      %v3366 = vld [vmem:[%s3361 + $0x20] sm:$0xff]
      %v3367 = vld [vmem:[%s3361 + $0x28] sm:$0xff]
      %v3368 = vld [vmem:[%s3361 + $0x30] sm:$0xff]
      %v3369 = vld [vmem:[%s3361 + $0x38] sm:$0xff]
      %v3370 = vld [vmem:[%s3361 + $0x40] sm:$0xff]
      %v3371 = vld [vmem:[%s3361 + $0x48] sm:$0xff]
      %v3372 = vld [vmem:[%s3361 + $0x50] sm:$0xff]
      %v3373 = vld [vmem:[%s3361 + $0x58] sm:$0xff]
      %v3374 = vld [vmem:[%s3361 + $0x60] sm:$0xff]
      %v3375 = vld [vmem:[%s3361 + $0x68] sm:$0xff]
      %v3376 = vld [vmem:[%s3361 + $0x70] sm:$0xff]
      %v3377 = vld [vmem:[%s3361 + $0x78] sm:$0xff]
      %v3378 = vld [vmem:[%s3361 + $0x80] sm:$0xff]
      %v3379 = vld [vmem:[%s3361 + $0x88] sm:$0xff]
      %v3380 = vld [vmem:[%s3361 + $0x90] sm:$0xff]
      %v3381 = vld [vmem:[%s3361 + $0x98] sm:$0xff]
      %v3382 = vld [vmem:[%s3361 + $0xa0] sm:$0xff]
      %v3383 = vld [vmem:[%s3361 + $0xa8] sm:$0xff]
      %v3384 = vld [vmem:[%s3361 + $0xb0] sm:$0xff]
      %v3385 = vld [vmem:[%s3361 + $0xb8] sm:$0xff]
      %v3386 = vld [vmem:[%s3361 + $0xc0] sm:$0xff]
      %v3387 = vld [vmem:[%s3361 + $0xc8] sm:$0xff]
      %v3388 = vld [vmem:[%s3361 + $0xd0] sm:$0xff]
      %v3389 = vld [vmem:[%s3361 + $0xd8] sm:$0xff]
      %v3390 = vld [vmem:[%s3361 + $0xe0] sm:$0xff]
      %v3391 = vld [vmem:[%s3361 + $0xe8] sm:$0xff]
      %v3392 = vld [vmem:[%s3361 + $0xf0] sm:$0xff]
      %v3393 = vld [vmem:[%s3361 + $0xf8] sm:$0xff]
      %v3426 = vunpack.c.l.b16 %v3362
      %v3427 = vunpack.c.h.b16 %v3362
      %v3428 = vunpack.c.l.b16 %v3363
      %v3429 = vunpack.c.h.b16 %v3363
      %v3430 = vunpack.c.l.b16 %v3364
      %v3431 = vunpack.c.h.b16 %v3364
      %v3432 = vunpack.c.l.b16 %v3365
      %v3433 = vunpack.c.h.b16 %v3365
      %v3434 = vunpack.c.l.b16 %v3366
      %v3435 = vunpack.c.h.b16 %v3366
      %v3436 = vunpack.c.l.b16 %v3367
      %v3437 = vunpack.c.h.b16 %v3367
      %v3438 = vunpack.c.l.b16 %v3368
      %v3439 = vunpack.c.h.b16 %v3368
      %v3440 = vunpack.c.l.b16 %v3369
      %v3441 = vunpack.c.h.b16 %v3369
      %v3442 = vunpack.c.l.b16 %v3370
      %v3443 = vunpack.c.h.b16 %v3370
      %v3444 = vunpack.c.l.b16 %v3371
      %v3445 = vunpack.c.h.b16 %v3371
      %v3446 = vunpack.c.l.b16 %v3372
      %v3447 = vunpack.c.h.b16 %v3372
      %v3448 = vunpack.c.l.b16 %v3373
      %v3449 = vunpack.c.h.b16 %v3373
      %v3450 = vunpack.c.l.b16 %v3374
      %v3451 = vunpack.c.h.b16 %v3374
      %v3452 = vunpack.c.l.b16 %v3375
      %v3453 = vunpack.c.h.b16 %v3375
      %v3454 = vunpack.c.l.b16 %v3376
      %v3455 = vunpack.c.h.b16 %v3376
      %v3456 = vunpack.c.l.b16 %v3377
      %v3457 = vunpack.c.h.b16 %v3377
      %v3458 = vunpack.c.l.b16 %v3378
      %v3459 = vunpack.c.h.b16 %v3378
      %v3460 = vunpack.c.l.b16 %v3379
      %v3461 = vunpack.c.h.b16 %v3379
      %v3462 = vunpack.c.l.b16 %v3380
      %v3463 = vunpack.c.h.b16 %v3380
      %v3464 = vunpack.c.l.b16 %v3381
      %v3465 = vunpack.c.h.b16 %v3381
      %v3466 = vunpack.c.l.b16 %v3382
      %v3467 = vunpack.c.h.b16 %v3382
      %v3468 = vunpack.c.l.b16 %v3383
      %v3469 = vunpack.c.h.b16 %v3383
      %v3470 = vunpack.c.l.b16 %v3384
      %v3471 = vunpack.c.h.b16 %v3384
      %v3472 = vunpack.c.l.b16 %v3385
      %v3473 = vunpack.c.h.b16 %v3385
      %v3474 = vunpack.c.l.b16 %v3386
      %v3475 = vunpack.c.h.b16 %v3386
      %v3476 = vunpack.c.l.b16 %v3387
      %v3477 = vunpack.c.h.b16 %v3387
      %v3478 = vunpack.c.l.b16 %v3388
      %v3479 = vunpack.c.h.b16 %v3388
      %v3480 = vunpack.c.l.b16 %v3389
      %v3481 = vunpack.c.h.b16 %v3389
      %v3482 = vunpack.c.l.b16 %v3390
      %v3483 = vunpack.c.h.b16 %v3390
      %v3484 = vunpack.c.l.b16 %v3391
      %v3485 = vunpack.c.h.b16 %v3391
      %v3486 = vunpack.c.l.b16 %v3392
      %v3487 = vunpack.c.h.b16 %v3392
      %v3488 = vunpack.c.l.b16 %v3393
      %v3489 = vunpack.c.h.b16 %v3393
      %v3490 = vpack.c.b16 %v3428, %v3426
      %v3491 = vpack.c.b16 %v3429, %v3427
      %v3492 = vpack.c.b16 %v3432, %v3430
      %v3493 = vpack.c.b16 %v3433, %v3431
      %v3494 = vpack.c.b16 %v3436, %v3434
      %v3495 = vpack.c.b16 %v3437, %v3435
      %v3496 = vpack.c.b16 %v3440, %v3438
      %v3497 = vpack.c.b16 %v3441, %v3439
      %v3498 = vpack.c.b16 %v3444, %v3442
      %v3499 = vpack.c.b16 %v3445, %v3443
      %v3500 = vpack.c.b16 %v3448, %v3446
      %v3501 = vpack.c.b16 %v3449, %v3447
      %v3502 = vpack.c.b16 %v3452, %v3450
      %v3503 = vpack.c.b16 %v3453, %v3451
      %v3504 = vpack.c.b16 %v3456, %v3454
      %v3505 = vpack.c.b16 %v3457, %v3455
      %v3506 = vpack.c.b16 %v3460, %v3458
      %v3507 = vpack.c.b16 %v3461, %v3459
      %v3508 = vpack.c.b16 %v3464, %v3462
      %v3509 = vpack.c.b16 %v3465, %v3463
      %v3510 = vpack.c.b16 %v3468, %v3466
      %v3511 = vpack.c.b16 %v3469, %v3467
      %v3512 = vpack.c.b16 %v3472, %v3470
      %v3513 = vpack.c.b16 %v3473, %v3471
      %v3514 = vpack.c.b16 %v3476, %v3474
      %v3515 = vpack.c.b16 %v3477, %v3475
      %v3516 = vpack.c.b16 %v3480, %v3478
      %v3517 = vpack.c.b16 %v3481, %v3479
      %v3518 = vpack.c.b16 %v3484, %v3482
      %v3519 = vpack.c.b16 %v3485, %v3483
      %v3520 = vpack.c.b16 %v3488, %v3486
      %v3521 = vpack.c.b16 %v3489, %v3487
      %3554 = vmatprep.subr.bf16.mxu0 %v3491
      %3555 = vmatpush1.bf16.msra.mxu0 %v3490
      %3556 = vmatprep.subr.bf16.mxu0 %v3493
      %3557 = vmatpush1.bf16.msra.mxu0 %v3492
      %3558 = vmatprep.subr.bf16.mxu0 %v3495
      %3559 = vmatpush1.bf16.msra.mxu0 %v3494
      %3560 = vmatprep.subr.bf16.mxu0 %v3497
      %3561 = vmatpush1.bf16.msra.mxu0 %v3496
      %3562 = vmatprep.subr.bf16.mxu0 %v3499
      %3563 = vmatpush1.bf16.msra.mxu0 %v3498
      %3564 = vmatprep.subr.bf16.mxu0 %v3501
      %3565 = vmatpush1.bf16.msra.mxu0 %v3500
      %3566 = vmatprep.subr.bf16.mxu0 %v3503
      %3567 = vmatpush1.bf16.msra.mxu0 %v3502
      %3568 = vmatprep.subr.bf16.mxu0 %v3505
      %3569 = vmatpush1.bf16.msra.mxu0 %v3504
      %3570 = vmatprep.subr.bf16.mxu0 %v3507
      %3571 = vmatpush1.bf16.msra.mxu0 %v3506
      %3572 = vmatprep.subr.bf16.mxu0 %v3509
      %3573 = vmatpush1.bf16.msra.mxu0 %v3508
      %3574 = vmatprep.subr.bf16.mxu0 %v3511
      %3575 = vmatpush1.bf16.msra.mxu0 %v3510
      %3576 = vmatprep.subr.bf16.mxu0 %v3513
      %3577 = vmatpush1.bf16.msra.mxu0 %v3512
      %3578 = vmatprep.subr.bf16.mxu0 %v3515
      %3579 = vmatpush1.bf16.msra.mxu0 %v3514
      %3580 = vmatprep.subr.bf16.mxu0 %v3517
      %3581 = vmatpush1.bf16.msra.mxu0 %v3516
      %3582 = vmatprep.subr.bf16.mxu0 %v3519
      %3583 = vmatpush1.bf16.msra.mxu0 %v3518
      %3584 = vmatprep.subr.bf16.mxu0 %v3521
      %3585 = vmatpush1.bf16.msra.mxu0 %v3520
      %3586 = vmatprep.mubr.bf16.mxu0 %v1789
      %3587 = vmatmul.mubr.bf16.gmra.mrb[0].mxu0 %v1788
      %v3588 = vpop.f32.mrb[0].mxu0
      %v3589 = vadd.f32 %v1279, %v3588
      %v3590 = vpop.f32.mrb[0].mxu0
      %v3591 = vadd.f32 %v1279, %v3590
      %v3592 = vpop.f32.mrb[0].mxu0
      %v3593 = vadd.f32 %v1284, %v3592
      %v3594 = vpop.f32.mrb[0].mxu0
      %v3595 = vadd.f32 %v1284, %v3594
      %3596 = vmatprep.mubr.bf16.mxu0 %v1791
      %3597 = vmatmul.mubr.bf16.gmra.mrb[0].mxu0 %v1790
      %v3598 = vpop.f32.mrb[0].mxu0
      %v3599 = vadd.f32 %v1289, %v3598
      %v3600 = vpop.f32.mrb[0].mxu0
      %v3601 = vadd.f32 %v1289, %v3600
      %v3602 = vpop.f32.mrb[0].mxu0
      %v3603 = vadd.f32 %v1294, %v3602
      %v3604 = vpop.f32.mrb[0].mxu0
      %v3605 = vadd.f32 %v1294, %v3604
      %3606 = vmatprep.mubr.bf16.mxu0 %v1793
      %3607 = vmatmul.mubr.bf16.gmra.mrb[0].mxu0 %v1792
      %v3608 = vpop.f32.mrb[0].mxu0
      %v3609 = vadd.f32 %v1299, %v3608
      %v3610 = vpop.f32.mrb[0].mxu0
      %v3611 = vadd.f32 %v1299, %v3610
      %v3612 = vpop.f32.mrb[0].mxu0
      %v3613 = vadd.f32 %v1304, %v3612
      %v3614 = vpop.f32.mrb[0].mxu0
      %v3615 = vadd.f32 %v1304, %v3614
      %3616 = vmatprep.mubr.bf16.mxu0 %v1795
      %3617 = vmatmul.mubr.bf16.gmra.mrb[0].mxu0 %v1794
      %v3618 = vpop.f32.mrb[0].mxu0
      %v3619 = vadd.f32 %v1309, %v3618
      %v3620 = vpop.f32.mrb[0].mxu0
      %v3621 = vadd.f32 %v1309, %v3620
      %v3622 = vpop.f32.mrb[0].mxu0
      %v3623 = vadd.f32 %v1314, %v3622
      %v3624 = vpop.f32.mrb[0].mxu0
      %v3625 = vadd.f32 %v1314, %v3624
      %3626 = vmatprep.mubr.bf16.mxu0 %v1797
      %3627 = vmatmul.mubr.bf16.gmra.mrb[0].mxu0 %v1796
      %v3628 = vpop.f32.mrb[0].mxu0
      %v3629 = vadd.f32 %v1319, %v3628
      %v3630 = vpop.f32.mrb[0].mxu0
      %v3631 = vadd.f32 %v1319, %v3630
      %v3632 = vpop.f32.mrb[0].mxu0
      %v3633 = vadd.f32 %v1324, %v3632
      %v3634 = vpop.f32.mrb[0].mxu0
      %v3635 = vadd.f32 %v1324, %v3634
      %3636 = vmatprep.mubr.bf16.mxu0 %v1799
      %3637 = vmatmul.mubr.bf16.gmra.mrb[0].mxu0 %v1798
      %v3638 = vpop.f32.mrb[0].mxu0
      %v3639 = vadd.f32 %v1329, %v3638
      %v3640 = vpop.f32.mrb[0].mxu0
      %v3641 = vadd.f32 %v1329, %v3640
      %v3642 = vpop.f32.mrb[0].mxu0
      %v3643 = vadd.f32 %v1334, %v3642
      %v3644 = vpop.f32.mrb[0].mxu0
      %v3645 = vadd.f32 %v1334, %v3644
      %3646 = vmatprep.mubr.bf16.mxu0 %v1801
      %3647 = vmatmul.mubr.bf16.gmra.mrb[0].mxu0 %v1800
      %v3648 = vpop.f32.mrb[0].mxu0
      %v3649 = vadd.f32 %v1339, %v3648
      %v3650 = vpop.f32.mrb[0].mxu0
      %v3651 = vadd.f32 %v1339, %v3650
      %v3652 = vpop.f32.mrb[0].mxu0
      %v3653 = vadd.f32 %v1344, %v3652
      %v3654 = vpop.f32.mrb[0].mxu0
      %v3655 = vadd.f32 %v1344, %v3654
      %3656 = vmatprep.mubr.bf16.mxu0 %v1803
      %3657 = vmatmul.mubr.bf16.gmra.mrb[0].mxu0 %v1802
      %v3658 = vpop.f32.mrb[0].mxu0
      %v3659 = vadd.f32 %v1349, %v3658
      %v3660 = vpop.f32.mrb[0].mxu0
      %v3661 = vadd.f32 %v1349, %v3660
      %v3662 = vpop.f32.mrb[0].mxu0
      %v3663 = vadd.f32 %v1354, %v3662
      %v3664 = vpop.f32.mrb[0].mxu0
      %v3665 = vadd.f32 %v1354, %v3664
      %3666 = vmatprep.mubr.bf16.mxu0 %v1805
      %3667 = vmatmul.mubr.bf16.gmra.mrb[0].mxu0 %v1804
      %v3668 = vpop.f32.mrb[0].mxu0
      %v3669 = vadd.f32 %v1359, %v3668
      %v3670 = vpop.f32.mrb[0].mxu0
      %v3671 = vadd.f32 %v1359, %v3670
      %v3672 = vpop.f32.mrb[0].mxu0
      %v3673 = vadd.f32 %v1364, %v3672
      %v3674 = vpop.f32.mrb[0].mxu0
      %v3675 = vadd.f32 %v1364, %v3674
      %3676 = vmatprep.mubr.bf16.mxu0 %v1807
      %3677 = vmatmul.mubr.bf16.gmra.mrb[0].mxu0 %v1806
      %v3678 = vpop.f32.mrb[0].mxu0
      %v3679 = vadd.f32 %v1369, %v3678
      %v3680 = vpop.f32.mrb[0].mxu0
      %v3681 = vadd.f32 %v1369, %v3680
      %v3682 = vpop.f32.mrb[0].mxu0
      %v3683 = vadd.f32 %v1374, %v3682
      %v3684 = vpop.f32.mrb[0].mxu0
      %v3685 = vadd.f32 %v1374, %v3684
      %3686 = vmatprep.mubr.bf16.mxu0 %v1809
      %3687 = vmatmul.mubr.bf16.gmra.mrb[0].mxu0 %v1808
      %v3688 = vpop.f32.mrb[0].mxu0
      %v3689 = vadd.f32 %v1379, %v3688
      %v3690 = vpop.f32.mrb[0].mxu0
      %v3691 = vadd.f32 %v1379, %v3690
      %v3692 = vpop.f32.mrb[0].mxu0
      %v3693 = vadd.f32 %v1384, %v3692
      %v3694 = vpop.f32.mrb[0].mxu0
      %v3695 = vadd.f32 %v1384, %v3694
      %3696 = vmatprep.mubr.bf16.mxu0 %v1811
      %3697 = vmatmul.mubr.bf16.gmra.mrb[0].mxu0 %v1810
      %v3698 = vpop.f32.mrb[0].mxu0
      %v3699 = vadd.f32 %v1389, %v3698
      %v3700 = vpop.f32.mrb[0].mxu0
      %v3701 = vadd.f32 %v1389, %v3700
      %v3702 = vpop.f32.mrb[0].mxu0
      %v3703 = vadd.f32 %v1394, %v3702
      %v3704 = vpop.f32.mrb[0].mxu0
      %v3705 = vadd.f32 %v1394, %v3704
      %3706 = vmatprep.mubr.bf16.mxu0 %v1813
      %3707 = vmatmul.mubr.bf16.gmra.mrb[0].mxu0 %v1812
      %v3708 = vpop.f32.mrb[0].mxu0
      %v3709 = vadd.f32 %v1399, %v3708
      %v3710 = vpop.f32.mrb[0].mxu0
      %v3711 = vadd.f32 %v1399, %v3710
      %v3712 = vpop.f32.mrb[0].mxu0
      %v3713 = vadd.f32 %v1404, %v3712
      %v3714 = vpop.f32.mrb[0].mxu0
      %v3715 = vadd.f32 %v1404, %v3714
      %3716 = vmatprep.mubr.bf16.mxu0 %v1815
      %3717 = vmatmul.mubr.bf16.gmra.mrb[0].mxu0 %v1814
      %v3718 = vpop.f32.mrb[0].mxu0
      %v3719 = vadd.f32 %v1409, %v3718
      %v3720 = vpop.f32.mrb[0].mxu0
      %v3721 = vadd.f32 %v1409, %v3720
      %v3722 = vpop.f32.mrb[0].mxu0
      %v3723 = vadd.f32 %v1414, %v3722
      %v3724 = vpop.f32.mrb[0].mxu0
      %v3725 = vadd.f32 %v1414, %v3724
      %3726 = vmatprep.mubr.bf16.mxu0 %v1817
      %3727 = vmatmul.mubr.bf16.gmra.mrb[0].mxu0 %v1816
      %v3728 = vpop.f32.mrb[0].mxu0
      %v3729 = vadd.f32 %v1419, %v3728
      %v3730 = vpop.f32.mrb[0].mxu0
      %v3731 = vadd.f32 %v1419, %v3730
      %v3732 = vpop.f32.mrb[0].mxu0
      %v3733 = vadd.f32 %v1424, %v3732
      %v3734 = vpop.f32.mrb[0].mxu0
      %v3735 = vadd.f32 %v1424, %v3734
      %3736 = vmatprep.mubr.bf16.mxu0 %v1819
      %3737 = vmatmul.mubr.bf16.gmra.mrb[0].mxu0 %v1818
      %v3738 = vpop.f32.mrb[0].mxu0
      %v3739 = vadd.f32 %v1429, %v3738
      %v3740 = vpop.f32.mrb[0].mxu0
      %v3741 = vadd.f32 %v1429, %v3740
      %v3742 = vpop.f32.mrb[0].mxu0
      %v3743 = vadd.f32 %v1434, %v3742
      %v3744 = vpop.f32.mrb[0].mxu0
      %v3745 = vadd.f32 %v1434, %v3744
      %3746 = vmatprep.mubr.bf16.mxu0 %v1821
      %3747 = vmatmul.mubr.bf16.gmra.mrb[0].mxu0 %v1820
      %v3748 = vpop.f32.mrb[0].mxu0
      %v3749 = vadd.f32 %v1439, %v3748
      %v3750 = vpop.f32.mrb[0].mxu0
      %v3751 = vadd.f32 %v1439, %v3750
      %v3752 = vpop.f32.mrb[0].mxu0
      %v3753 = vadd.f32 %v1444, %v3752
      %v3754 = vpop.f32.mrb[0].mxu0
      %v3755 = vadd.f32 %v1444, %v3754
      %3756 = vmatprep.mubr.bf16.mxu0 %v1823
      %3757 = vmatmul.mubr.bf16.gmra.mrb[0].mxu0 %v1822
      %v3758 = vpop.f32.mrb[0].mxu0
      %v3759 = vadd.f32 %v1449, %v3758
      %v3760 = vpop.f32.mrb[0].mxu0
      %v3761 = vadd.f32 %v1449, %v3760
      %v3762 = vpop.f32.mrb[0].mxu0
      %v3763 = vadd.f32 %v1454, %v3762
      %v3764 = vpop.f32.mrb[0].mxu0
      %v3765 = vadd.f32 %v1454, %v3764
      %3766 = vmatprep.mubr.bf16.mxu0 %v1825
      %3767 = vmatmul.mubr.bf16.gmra.mrb[0].mxu0 %v1824
      %v3768 = vpop.f32.mrb[0].mxu0
      %v3769 = vadd.f32 %v1459, %v3768
      %v3770 = vpop.f32.mrb[0].mxu0
      %v3771 = vadd.f32 %v1459, %v3770
      %v3772 = vpop.f32.mrb[0].mxu0
      %v3773 = vadd.f32 %v1464, %v3772
      %v3774 = vpop.f32.mrb[0].mxu0
      %v3775 = vadd.f32 %v1464, %v3774
      %3776 = vmatprep.mubr.bf16.mxu0 %v1827
      %3777 = vmatmul.mubr.bf16.gmra.mrb[0].mxu0 %v1826
      %v3778 = vpop.f32.mrb[0].mxu0
      %v3779 = vadd.f32 %v1469, %v3778
      %v3780 = vpop.f32.mrb[0].mxu0
      %v3781 = vadd.f32 %v1469, %v3780
      %v3782 = vpop.f32.mrb[0].mxu0
      %v3783 = vadd.f32 %v1474, %v3782
      %v3784 = vpop.f32.mrb[0].mxu0
      %v3785 = vadd.f32 %v1474, %v3784
      %3786 = vmatprep.mubr.bf16.mxu0 %v1829
      %3787 = vmatmul.mubr.bf16.gmra.mrb[0].mxu0 %v1828
      %v3788 = vpop.f32.mrb[0].mxu0
      %v3789 = vadd.f32 %v1479, %v3788
      %v3790 = vpop.f32.mrb[0].mxu0
      %v3791 = vadd.f32 %v1479, %v3790
      %v3792 = vpop.f32.mrb[0].mxu0
      %v3793 = vadd.f32 %v1484, %v3792
      %v3794 = vpop.f32.mrb[0].mxu0
      %v3795 = vadd.f32 %v1484, %v3794
      %3796 = vmatprep.mubr.bf16.mxu0 %v1831
      %3797 = vmatmul.mubr.bf16.gmra.mrb[0].mxu0 %v1830
      %v3798 = vpop.f32.mrb[0].mxu0
      %v3799 = vadd.f32 %v1489, %v3798
      %v3800 = vpop.f32.mrb[0].mxu0
      %v3801 = vadd.f32 %v1489, %v3800
      %v3802 = vpop.f32.mrb[0].mxu0
      %v3803 = vadd.f32 %v1494, %v3802
      %v3804 = vpop.f32.mrb[0].mxu0
      %v3805 = vadd.f32 %v1494, %v3804
      %3806 = vmatprep.mubr.bf16.mxu0 %v1833
      %3807 = vmatmul.mubr.bf16.gmra.mrb[0].mxu0 %v1832
      %v3808 = vpop.f32.mrb[0].mxu0
      %v3809 = vadd.f32 %v1499, %v3808
      %v3810 = vpop.f32.mrb[0].mxu0
      %v3811 = vadd.f32 %v1499, %v3810
      %v3812 = vpop.f32.mrb[0].mxu0
      %v3813 = vadd.f32 %v1504, %v3812
      %v3814 = vpop.f32.mrb[0].mxu0
      %v3815 = vadd.f32 %v1504, %v3814
      %3816 = vmatprep.mubr.bf16.mxu0 %v1835
      %3817 = vmatmul.mubr.bf16.gmra.mrb[0].mxu0 %v1834
      %v3818 = vpop.f32.mrb[0].mxu0
      %v3819 = vadd.f32 %v1509, %v3818
      %v3820 = vpop.f32.mrb[0].mxu0
      %v3821 = vadd.f32 %v1509, %v3820
      %v3822 = vpop.f32.mrb[0].mxu0
      %v3823 = vadd.f32 %v1514, %v3822
      %v3824 = vpop.f32.mrb[0].mxu0
      %v3825 = vadd.f32 %v1514, %v3824
      %3826 = vmatprep.mubr.bf16.mxu0 %v1837
      %3827 = vmatmul.mubr.bf16.gmra.mrb[0].mxu0 %v1836
      %v3828 = vpop.f32.mrb[0].mxu0
      %v3829 = vadd.f32 %v1519, %v3828
      %v3830 = vpop.f32.mrb[0].mxu0
      %v3831 = vadd.f32 %v1519, %v3830
      %v3832 = vpop.f32.mrb[0].mxu0
      %v3833 = vadd.f32 %v1524, %v3832
      %v3834 = vpop.f32.mrb[0].mxu0
      %v3835 = vadd.f32 %v1524, %v3834
      %3836 = vmatprep.mubr.bf16.mxu0 %v1839
      %3837 = vmatmul.mubr.bf16.gmra.mrb[0].mxu0 %v1838
      %v3838 = vpop.f32.mrb[0].mxu0
      %v3839 = vadd.f32 %v1529, %v3838
      %v3840 = vpop.f32.mrb[0].mxu0
      %v3841 = vadd.f32 %v1529, %v3840
      %v3842 = vpop.f32.mrb[0].mxu0
      %v3843 = vadd.f32 %v1534, %v3842
      %v3844 = vpop.f32.mrb[0].mxu0
      %v3845 = vadd.f32 %v1534, %v3844
      %3846 = vmatprep.mubr.bf16.mxu0 %v1841
      %3847 = vmatmul.mubr.bf16.gmra.mrb[0].mxu0 %v1840
      %v3848 = vpop.f32.mrb[0].mxu0
      %v3849 = vadd.f32 %v1539, %v3848
      %v3850 = vpop.f32.mrb[0].mxu0
      %v3851 = vadd.f32 %v1539, %v3850
      %v3852 = vpop.f32.mrb[0].mxu0
      %v3853 = vadd.f32 %v1544, %v3852
      %v3854 = vpop.f32.mrb[0].mxu0
      %v3855 = vadd.f32 %v1544, %v3854
      %3856 = vmatprep.mubr.bf16.mxu0 %v1843
      %3857 = vmatmul.mubr.bf16.gmra.mrb[0].mxu0 %v1842
      %v3858 = vpop.f32.mrb[0].mxu0
      %v3859 = vadd.f32 %v1549, %v3858
      %v3860 = vpop.f32.mrb[0].mxu0
      %v3861 = vadd.f32 %v1549, %v3860
      %v3862 = vpop.f32.mrb[0].mxu0
      %v3863 = vadd.f32 %v1554, %v3862
      %v3864 = vpop.f32.mrb[0].mxu0
      %v3865 = vadd.f32 %v1554, %v3864
      %3866 = vmatprep.mubr.bf16.mxu0 %v1845
      %3867 = vmatmul.mubr.bf16.gmra.mrb[0].mxu0 %v1844
      %v3868 = vpop.f32.mrb[0].mxu0
      %v3869 = vadd.f32 %v1559, %v3868
      %v3870 = vpop.f32.mrb[0].mxu0
      %v3871 = vadd.f32 %v1559, %v3870
      %v3872 = vpop.f32.mrb[0].mxu0
      %v3873 = vadd.f32 %v1564, %v3872
      %v3874 = vpop.f32.mrb[0].mxu0
      %v3875 = vadd.f32 %v1564, %v3874
      %3876 = vmatprep.mubr.bf16.mxu0 %v1847
      %3877 = vmatmul.mubr.bf16.gmra.mrb[0].mxu0 %v1846
      %v3878 = vpop.f32.mrb[0].mxu0
      %v3879 = vadd.f32 %v1569, %v3878
      %v3880 = vpop.f32.mrb[0].mxu0
      %v3881 = vadd.f32 %v1569, %v3880
      %v3882 = vpop.f32.mrb[0].mxu0
      %v3883 = vadd.f32 %v1574, %v3882
      %v3884 = vpop.f32.mrb[0].mxu0
      %v3885 = vadd.f32 %v1574, %v3884
      %3886 = vmatprep.mubr.bf16.mxu0 %v1849
      %3887 = vmatmul.mubr.bf16.gmra.mrb[0].mxu0 %v1848
      %v3888 = vpop.f32.mrb[0].mxu0
      %v3889 = vadd.f32 %v1579, %v3888
      %v3890 = vpop.f32.mrb[0].mxu0
      %v3891 = vadd.f32 %v1579, %v3890
      %v3892 = vpop.f32.mrb[0].mxu0
      %v3893 = vadd.f32 %v1584, %v3892
      %v3894 = vpop.f32.mrb[0].mxu0
      %v3895 = vadd.f32 %v1584, %v3894
      %3896 = vmatprep.mubr.bf16.mxu0 %v1851
      %3897 = vmatmul.mubr.bf16.gmra.mrb[0].mxu0 %v1850
      %v3898 = vpop.f32.mrb[0].mxu0
      %v3899 = vadd.f32 %v1589, %v3898
      %v3900 = vpop.f32.mrb[0].mxu0
      %v3901 = vadd.f32 %v1589, %v3900
      %v3902 = vpop.f32.mrb[0].mxu0
      %v3903 = vadd.f32 %v1594, %v3902
      %v3904 = vpop.f32.mrb[0].mxu0
      %v3905 = vadd.f32 %v1594, %v3904
      %3906 = vdwg.mxu0
      %s3907 = scalar_lea.vmem %s367, 1024
      %v3908 = vld [vmem:[%s3907] sm:$0xff]
      %v3909 = vld [vmem:[%s3907 + $0x8] sm:$0xff]
      %v3910 = vld [vmem:[%s3907 + $0x10] sm:$0xff]
      %v3911 = vld [vmem:[%s3907 + $0x18] sm:$0xff]
      %v3912 = vld [vmem:[%s3907 + $0x20] sm:$0xff]
      %v3913 = vld [vmem:[%s3907 + $0x28] sm:$0xff]
      %v3914 = vld [vmem:[%s3907 + $0x30] sm:$0xff]
      %v3915 = vld [vmem:[%s3907 + $0x38] sm:$0xff]
      %v3916 = vld [vmem:[%s3907 + $0x40] sm:$0xff]
      %v3917 = vld [vmem:[%s3907 + $0x48] sm:$0xff]
      %v3918 = vld [vmem:[%s3907 + $0x50] sm:$0xff]
      %v3919 = vld [vmem:[%s3907 + $0x58] sm:$0xff]
      %v3920 = vld [vmem:[%s3907 + $0x60] sm:$0xff]
      %v3921 = vld [vmem:[%s3907 + $0x68] sm:$0xff]
      %v3922 = vld [vmem:[%s3907 + $0x70] sm:$0xff]
      %v3923 = vld [vmem:[%s3907 + $0x78] sm:$0xff]
      %v3924 = vld [vmem:[%s3907 + $0x80] sm:$0xff]
      %v3925 = vld [vmem:[%s3907 + $0x88] sm:$0xff]
      %v3926 = vld [vmem:[%s3907 + $0x90] sm:$0xff]
      %v3927 = vld [vmem:[%s3907 + $0x98] sm:$0xff]
      %v3928 = vld [vmem:[%s3907 + $0xa0] sm:$0xff]
      %v3929 = vld [vmem:[%s3907 + $0xa8] sm:$0xff]
      %v3930 = vld [vmem:[%s3907 + $0xb0] sm:$0xff]
      %v3931 = vld [vmem:[%s3907 + $0xb8] sm:$0xff]
      %v3932 = vld [vmem:[%s3907 + $0xc0] sm:$0xff]
      %v3933 = vld [vmem:[%s3907 + $0xc8] sm:$0xff]
      %v3934 = vld [vmem:[%s3907 + $0xd0] sm:$0xff]
      %v3935 = vld [vmem:[%s3907 + $0xd8] sm:$0xff]
      %v3936 = vld [vmem:[%s3907 + $0xe0] sm:$0xff]
      %v3937 = vld [vmem:[%s3907 + $0xe8] sm:$0xff]
      %v3938 = vld [vmem:[%s3907 + $0xf0] sm:$0xff]
      %v3939 = vld [vmem:[%s3907 + $0xf8] sm:$0xff]
      %v3972 = vunpack.c.l.b16 %v3908
      %v3973 = vunpack.c.h.b16 %v3908
      %v3974 = vunpack.c.l.b16 %v3909
      %v3975 = vunpack.c.h.b16 %v3909
      %v3976 = vunpack.c.l.b16 %v3910
      %v3977 = vunpack.c.h.b16 %v3910
      %v3978 = vunpack.c.l.b16 %v3911
      %v3979 = vunpack.c.h.b16 %v3911
      %v3980 = vunpack.c.l.b16 %v3912
      %v3981 = vunpack.c.h.b16 %v3912
      %v3982 = vunpack.c.l.b16 %v3913
      %v3983 = vunpack.c.h.b16 %v3913
      %v3984 = vunpack.c.l.b16 %v3914
      %v3985 = vunpack.c.h.b16 %v3914
      %v3986 = vunpack.c.l.b16 %v3915
      %v3987 = vunpack.c.h.b16 %v3915
      %v3988 = vunpack.c.l.b16 %v3916
      %v3989 = vunpack.c.h.b16 %v3916
      %v3990 = vunpack.c.l.b16 %v3917
      %v3991 = vunpack.c.h.b16 %v3917
      %v3992 = vunpack.c.l.b16 %v3918
      %v3993 = vunpack.c.h.b16 %v3918
      %v3994 = vunpack.c.l.b16 %v3919
      %v3995 = vunpack.c.h.b16 %v3919
      %v3996 = vunpack.c.l.b16 %v3920
      %v3997 = vunpack.c.h.b16 %v3920
      %v3998 = vunpack.c.l.b16 %v3921
      %v3999 = vunpack.c.h.b16 %v3921
      %v4000 = vunpack.c.l.b16 %v3922
      %v4001 = vunpack.c.h.b16 %v3922
      %v4002 = vunpack.c.l.b16 %v3923
      %v4003 = vunpack.c.h.b16 %v3923
      %v4004 = vunpack.c.l.b16 %v3924
      %v4005 = vunpack.c.h.b16 %v3924
      %v4006 = vunpack.c.l.b16 %v3925
      %v4007 = vunpack.c.h.b16 %v3925
      %v4008 = vunpack.c.l.b16 %v3926
      %v4009 = vunpack.c.h.b16 %v3926
      %v4010 = vunpack.c.l.b16 %v3927
      %v4011 = vunpack.c.h.b16 %v3927
      %v4012 = vunpack.c.l.b16 %v3928
      %v4013 = vunpack.c.h.b16 %v3928
      %v4014 = vunpack.c.l.b16 %v3929
      %v4015 = vunpack.c.h.b16 %v3929
      %v4016 = vunpack.c.l.b16 %v3930
      %v4017 = vunpack.c.h.b16 %v3930
      %v4018 = vunpack.c.l.b16 %v3931
      %v4019 = vunpack.c.h.b16 %v3931
      %v4020 = vunpack.c.l.b16 %v3932
      %v4021 = vunpack.c.h.b16 %v3932
      %v4022 = vunpack.c.l.b16 %v3933
      %v4023 = vunpack.c.h.b16 %v3933
      %v4024 = vunpack.c.l.b16 %v3934
      %v4025 = vunpack.c.h.b16 %v3934
      %v4026 = vunpack.c.l.b16 %v3935
      %v4027 = vunpack.c.h.b16 %v3935
      %v4028 = vunpack.c.l.b16 %v3936
      %v4029 = vunpack.c.h.b16 %v3936
      %v4030 = vunpack.c.l.b16 %v3937
      %v4031 = vunpack.c.h.b16 %v3937
      %v4032 = vunpack.c.l.b16 %v3938
      %v4033 = vunpack.c.h.b16 %v3938
      %v4034 = vunpack.c.l.b16 %v3939
      %v4035 = vunpack.c.h.b16 %v3939
      %v4036 = vpack.c.b16 %v3974, %v3972
      %v4037 = vpack.c.b16 %v3975, %v3973
      %v4038 = vpack.c.b16 %v3978, %v3976
      %v4039 = vpack.c.b16 %v3979, %v3977
      %v4040 = vpack.c.b16 %v3982, %v3980
      %v4041 = vpack.c.b16 %v3983, %v3981
      %v4042 = vpack.c.b16 %v3986, %v3984
      %v4043 = vpack.c.b16 %v3987, %v3985
      %v4044 = vpack.c.b16 %v3990, %v3988
      %v4045 = vpack.c.b16 %v3991, %v3989
      %v4046 = vpack.c.b16 %v3994, %v3992
      %v4047 = vpack.c.b16 %v3995, %v3993
      %v4048 = vpack.c.b16 %v3998, %v3996
      %v4049 = vpack.c.b16 %v3999, %v3997
      %v4050 = vpack.c.b16 %v4002, %v4000
      %v4051 = vpack.c.b16 %v4003, %v4001
      %v4052 = vpack.c.b16 %v4006, %v4004
      %v4053 = vpack.c.b16 %v4007, %v4005
      %v4054 = vpack.c.b16 %v4010, %v4008
      %v4055 = vpack.c.b16 %v4011, %v4009
      %v4056 = vpack.c.b16 %v4014, %v4012
      %v4057 = vpack.c.b16 %v4015, %v4013
      %v4058 = vpack.c.b16 %v4018, %v4016
      %v4059 = vpack.c.b16 %v4019, %v4017
      %v4060 = vpack.c.b16 %v4022, %v4020
      %v4061 = vpack.c.b16 %v4023, %v4021
      %v4062 = vpack.c.b16 %v4026, %v4024
      %v4063 = vpack.c.b16 %v4027, %v4025
      %v4064 = vpack.c.b16 %v4030, %v4028
      %v4065 = vpack.c.b16 %v4031, %v4029
      %v4066 = vpack.c.b16 %v4034, %v4032
      %v4067 = vpack.c.b16 %v4035, %v4033
      %4100 = vmatprep.subr.bf16.mxu0 %v4037
      %4101 = vmatpush1.bf16.msra.mxu0 %v4036
      %4102 = vmatprep.subr.bf16.mxu0 %v4039
      %4103 = vmatpush1.bf16.msra.mxu0 %v4038
      %4104 = vmatprep.subr.bf16.mxu0 %v4041
      %4105 = vmatpush1.bf16.msra.mxu0 %v4040
      %4106 = vmatprep.subr.bf16.mxu0 %v4043
      %4107 = vmatpush1.bf16.msra.mxu0 %v4042
      %4108 = vmatprep.subr.bf16.mxu0 %v4045
      %4109 = vmatpush1.bf16.msra.mxu0 %v4044
      %4110 = vmatprep.subr.bf16.mxu0 %v4047
      %4111 = vmatpush1.bf16.msra.mxu0 %v4046
      %4112 = vmatprep.subr.bf16.mxu0 %v4049
      %4113 = vmatpush1.bf16.msra.mxu0 %v4048
      %4114 = vmatprep.subr.bf16.mxu0 %v4051
      %4115 = vmatpush1.bf16.msra.mxu0 %v4050
      %4116 = vmatprep.subr.bf16.mxu0 %v4053
      %4117 = vmatpush1.bf16.msra.mxu0 %v4052
      %4118 = vmatprep.subr.bf16.mxu0 %v4055
      %4119 = vmatpush1.bf16.msra.mxu0 %v4054
      %4120 = vmatprep.subr.bf16.mxu0 %v4057
      %4121 = vmatpush1.bf16.msra.mxu0 %v4056
      %4122 = vmatprep.subr.bf16.mxu0 %v4059
      %4123 = vmatpush1.bf16.msra.mxu0 %v4058
      %4124 = vmatprep.subr.bf16.mxu0 %v4061
      %4125 = vmatpush1.bf16.msra.mxu0 %v4060
      %4126 = vmatprep.subr.bf16.mxu0 %v4063
      %4127 = vmatpush1.bf16.msra.mxu0 %v4062
      %4128 = vmatprep.subr.bf16.mxu0 %v4065
      %4129 = vmatpush1.bf16.msra.mxu0 %v4064
      %4130 = vmatprep.subr.bf16.mxu0 %v4067
      %4131 = vmatpush1.bf16.msra.mxu0 %v4066
      %4132 = vmatprep.mubr.bf16.mxu0 %v1789
      %4133 = vmatmul.mubr.bf16.gmra.mrb[0].mxu0 %v1788
      %v4134 = vpop.f32.mrb[0].mxu0
      %v4135 = vadd.f32 %v1279, %v4134
      %v4136 = vpop.f32.mrb[0].mxu0
      %v4137 = vadd.f32 %v1279, %v4136
      %v4138 = vpop.f32.mrb[0].mxu0
      %v4139 = vadd.f32 %v1284, %v4138
      %v4140 = vpop.f32.mrb[0].mxu0
      %v4141 = vadd.f32 %v1284, %v4140
      %4142 = vmatprep.mubr.bf16.mxu0 %v1791
      %4143 = vmatmul.mubr.bf16.gmra.mrb[0].mxu0 %v1790
      %v4144 = vpop.f32.mrb[0].mxu0
      %v4145 = vadd.f32 %v1289, %v4144
      %v4146 = vpop.f32.mrb[0].mxu0
      %v4147 = vadd.f32 %v1289, %v4146
      %v4148 = vpop.f32.mrb[0].mxu0
      %v4149 = vadd.f32 %v1294, %v4148
      %v4150 = vpop.f32.mrb[0].mxu0
      %v4151 = vadd.f32 %v1294, %v4150
      %4152 = vmatprep.mubr.bf16.mxu0 %v1793
      %4153 = vmatmul.mubr.bf16.gmra.mrb[0].mxu0 %v1792
      %v4154 = vpop.f32.mrb[0].mxu0
      %v4155 = vadd.f32 %v1299, %v4154
      %v4156 = vpop.f32.mrb[0].mxu0
      %v4157 = vadd.f32 %v1299, %v4156
      %v4158 = vpop.f32.mrb[0].mxu0
      %v4159 = vadd.f32 %v1304, %v4158
      %v4160 = vpop.f32.mrb[0].mxu0
      %v4161 = vadd.f32 %v1304, %v4160
      %4162 = vmatprep.mubr.bf16.mxu0 %v1795
      %4163 = vmatmul.mubr.bf16.gmra.mrb[0].mxu0 %v1794
      %v4164 = vpop.f32.mrb[0].mxu0
      %v4165 = vadd.f32 %v1309, %v4164
      %v4166 = vpop.f32.mrb[0].mxu0
      %v4167 = vadd.f32 %v1309, %v4166
      %v4168 = vpop.f32.mrb[0].mxu0
      %v4169 = vadd.f32 %v1314, %v4168
      %v4170 = vpop.f32.mrb[0].mxu0
      %v4171 = vadd.f32 %v1314, %v4170
      %4172 = vmatprep.mubr.bf16.mxu0 %v1797
      %4173 = vmatmul.mubr.bf16.gmra.mrb[0].mxu0 %v1796
      %v4174 = vpop.f32.mrb[0].mxu0
      %v4175 = vadd.f32 %v1319, %v4174
      %v4176 = vpop.f32.mrb[0].mxu0
      %v4177 = vadd.f32 %v1319, %v4176
      %v4178 = vpop.f32.mrb[0].mxu0
      %v4179 = vadd.f32 %v1324, %v4178
      %v4180 = vpop.f32.mrb[0].mxu0
      %v4181 = vadd.f32 %v1324, %v4180
      %4182 = vmatprep.mubr.bf16.mxu0 %v1799
      %4183 = vmatmul.mubr.bf16.gmra.mrb[0].mxu0 %v1798
      %v4184 = vpop.f32.mrb[0].mxu0
      %v4185 = vadd.f32 %v1329, %v4184
      %v4186 = vpop.f32.mrb[0].mxu0
      %v4187 = vadd.f32 %v1329, %v4186
      %v4188 = vpop.f32.mrb[0].mxu0
      %v4189 = vadd.f32 %v1334, %v4188
      %v4190 = vpop.f32.mrb[0].mxu0
      %v4191 = vadd.f32 %v1334, %v4190
      %4192 = vmatprep.mubr.bf16.mxu0 %v1801
      %4193 = vmatmul.mubr.bf16.gmra.mrb[0].mxu0 %v1800
      %v4194 = vpop.f32.mrb[0].mxu0
      %v4195 = vadd.f32 %v1339, %v4194
      %v4196 = vpop.f32.mrb[0].mxu0
      %v4197 = vadd.f32 %v1339, %v4196
      %v4198 = vpop.f32.mrb[0].mxu0
      %v4199 = vadd.f32 %v1344, %v4198
      %v4200 = vpop.f32.mrb[0].mxu0
      %v4201 = vadd.f32 %v1344, %v4200
      %4202 = vmatprep.mubr.bf16.mxu0 %v1803
      %4203 = vmatmul.mubr.bf16.gmra.mrb[0].mxu0 %v1802
      %v4204 = vpop.f32.mrb[0].mxu0
      %v4205 = vadd.f32 %v1349, %v4204
      %v4206 = vpop.f32.mrb[0].mxu0
      %v4207 = vadd.f32 %v1349, %v4206
      %v4208 = vpop.f32.mrb[0].mxu0
      %v4209 = vadd.f32 %v1354, %v4208
      %v4210 = vpop.f32.mrb[0].mxu0
      %v4211 = vadd.f32 %v1354, %v4210
      %4212 = vmatprep.mubr.bf16.mxu0 %v1805
      %4213 = vmatmul.mubr.bf16.gmra.mrb[0].mxu0 %v1804
      %v4214 = vpop.f32.mrb[0].mxu0
      %v4215 = vadd.f32 %v1359, %v4214
      %v4216 = vpop.f32.mrb[0].mxu0
      %v4217 = vadd.f32 %v1359, %v4216
      %v4218 = vpop.f32.mrb[0].mxu0
      %v4219 = vadd.f32 %v1364, %v4218
      %v4220 = vpop.f32.mrb[0].mxu0
      %v4221 = vadd.f32 %v1364, %v4220
      %4222 = vmatprep.mubr.bf16.mxu0 %v1807
      %4223 = vmatmul.mubr.bf16.gmra.mrb[0].mxu0 %v1806
      %v4224 = vpop.f32.mrb[0].mxu0
      %v4225 = vadd.f32 %v1369, %v4224
      %v4226 = vpop.f32.mrb[0].mxu0
      %v4227 = vadd.f32 %v1369, %v4226
      %v4228 = vpop.f32.mrb[0].mxu0
      %v4229 = vadd.f32 %v1374, %v4228
      %v4230 = vpop.f32.mrb[0].mxu0
      %v4231 = vadd.f32 %v1374, %v4230
      %4232 = vmatprep.mubr.bf16.mxu0 %v1809
      %4233 = vmatmul.mubr.bf16.gmra.mrb[0].mxu0 %v1808
      %v4234 = vpop.f32.mrb[0].mxu0
      %v4235 = vadd.f32 %v1379, %v4234
      %v4236 = vpop.f32.mrb[0].mxu0
      %v4237 = vadd.f32 %v1379, %v4236
      %v4238 = vpop.f32.mrb[0].mxu0
      %v4239 = vadd.f32 %v1384, %v4238
      %v4240 = vpop.f32.mrb[0].mxu0
      %v4241 = vadd.f32 %v1384, %v4240
      %4242 = vmatprep.mubr.bf16.mxu0 %v1811
      %4243 = vmatmul.mubr.bf16.gmra.mrb[0].mxu0 %v1810
      %v4244 = vpop.f32.mrb[0].mxu0
      %v4245 = vadd.f32 %v1389, %v4244
      %v4246 = vpop.f32.mrb[0].mxu0
      %v4247 = vadd.f32 %v1389, %v4246
      %v4248 = vpop.f32.mrb[0].mxu0
      %v4249 = vadd.f32 %v1394, %v4248
      %v4250 = vpop.f32.mrb[0].mxu0
      %v4251 = vadd.f32 %v1394, %v4250
      %4252 = vmatprep.mubr.bf16.mxu0 %v1813
      %4253 = vmatmul.mubr.bf16.gmra.mrb[0].mxu0 %v1812
      %v4254 = vpop.f32.mrb[0].mxu0
      %v4255 = vadd.f32 %v1399, %v4254
      %v4256 = vpop.f32.mrb[0].mxu0
      %v4257 = vadd.f32 %v1399, %v4256
      %v4258 = vpop.f32.mrb[0].mxu0
      %v4259 = vadd.f32 %v1404, %v4258
      %v4260 = vpop.f32.mrb[0].mxu0
      %v4261 = vadd.f32 %v1404, %v4260
      %4262 = vmatprep.mubr.bf16.mxu0 %v1815
      %4263 = vmatmul.mubr.bf16.gmra.mrb[0].mxu0 %v1814
      %v4264 = vpop.f32.mrb[0].mxu0
      %v4265 = vadd.f32 %v1409, %v4264
      %v4266 = vpop.f32.mrb[0].mxu0
      %v4267 = vadd.f32 %v1409, %v4266
      %v4268 = vpop.f32.mrb[0].mxu0
      %v4269 = vadd.f32 %v1414, %v4268
      %v4270 = vpop.f32.mrb[0].mxu0
      %v4271 = vadd.f32 %v1414, %v4270
      %4272 = vmatprep.mubr.bf16.mxu0 %v1817
      %4273 = vmatmul.mubr.bf16.gmra.mrb[0].mxu0 %v1816
      %v4274 = vpop.f32.mrb[0].mxu0
      %v4275 = vadd.f32 %v1419, %v4274
      %v4276 = vpop.f32.mrb[0].mxu0
      %v4277 = vadd.f32 %v1419, %v4276
      %v4278 = vpop.f32.mrb[0].mxu0
      %v4279 = vadd.f32 %v1424, %v4278
      %v4280 = vpop.f32.mrb[0].mxu0
      %v4281 = vadd.f32 %v1424, %v4280
      %4282 = vmatprep.mubr.bf16.mxu0 %v1819
      %4283 = vmatmul.mubr.bf16.gmra.mrb[0].mxu0 %v1818
      %v4284 = vpop.f32.mrb[0].mxu0
      %v4285 = vadd.f32 %v1429, %v4284
      %v4286 = vpop.f32.mrb[0].mxu0
      %v4287 = vadd.f32 %v1429, %v4286
      %v4288 = vpop.f32.mrb[0].mxu0
      %v4289 = vadd.f32 %v1434, %v4288
      %v4290 = vpop.f32.mrb[0].mxu0
      %v4291 = vadd.f32 %v1434, %v4290
      %4292 = vmatprep.mubr.bf16.mxu0 %v1821
      %4293 = vmatmul.mubr.bf16.gmra.mrb[0].mxu0 %v1820
      %v4294 = vpop.f32.mrb[0].mxu0
      %v4295 = vadd.f32 %v1439, %v4294
      %v4296 = vpop.f32.mrb[0].mxu0
      %v4297 = vadd.f32 %v1439, %v4296
      %v4298 = vpop.f32.mrb[0].mxu0
      %v4299 = vadd.f32 %v1444, %v4298
      %v4300 = vpop.f32.mrb[0].mxu0
      %v4301 = vadd.f32 %v1444, %v4300
      %4302 = vmatprep.mubr.bf16.mxu0 %v1823
      %4303 = vmatmul.mubr.bf16.gmra.mrb[0].mxu0 %v1822
      %v4304 = vpop.f32.mrb[0].mxu0
      %v4305 = vadd.f32 %v1449, %v4304
      %v4306 = vpop.f32.mrb[0].mxu0
      %v4307 = vadd.f32 %v1449, %v4306
      %v4308 = vpop.f32.mrb[0].mxu0
      %v4309 = vadd.f32 %v1454, %v4308
      %v4310 = vpop.f32.mrb[0].mxu0
      %v4311 = vadd.f32 %v1454, %v4310
      %4312 = vmatprep.mubr.bf16.mxu0 %v1825
      %4313 = vmatmul.mubr.bf16.gmra.mrb[0].mxu0 %v1824
      %v4314 = vpop.f32.mrb[0].mxu0
      %v4315 = vadd.f32 %v1459, %v4314
      %v4316 = vpop.f32.mrb[0].mxu0
      %v4317 = vadd.f32 %v1459, %v4316
      %v4318 = vpop.f32.mrb[0].mxu0
      %v4319 = vadd.f32 %v1464, %v4318
      %v4320 = vpop.f32.mrb[0].mxu0
      %v4321 = vadd.f32 %v1464, %v4320
      %4322 = vmatprep.mubr.bf16.mxu0 %v1827
      %4323 = vmatmul.mubr.bf16.gmra.mrb[0].mxu0 %v1826
      %v4324 = vpop.f32.mrb[0].mxu0
      %v4325 = vadd.f32 %v1469, %v4324
      %v4326 = vpop.f32.mrb[0].mxu0
      %v4327 = vadd.f32 %v1469, %v4326
      %v4328 = vpop.f32.mrb[0].mxu0
      %v4329 = vadd.f32 %v1474, %v4328
      %v4330 = vpop.f32.mrb[0].mxu0
      %v4331 = vadd.f32 %v1474, %v4330
      %4332 = vmatprep.mubr.bf16.mxu0 %v1829
      %4333 = vmatmul.mubr.bf16.gmra.mrb[0].mxu0 %v1828
      %v4334 = vpop.f32.mrb[0].mxu0
      %v4335 = vadd.f32 %v1479, %v4334
      %v4336 = vpop.f32.mrb[0].mxu0
      %v4337 = vadd.f32 %v1479, %v4336
      %v4338 = vpop.f32.mrb[0].mxu0
      %v4339 = vadd.f32 %v1484, %v4338
      %v4340 = vpop.f32.mrb[0].mxu0
      %v4341 = vadd.f32 %v1484, %v4340
      %4342 = vmatprep.mubr.bf16.mxu0 %v1831
      %4343 = vmatmul.mubr.bf16.gmra.mrb[0].mxu0 %v1830
      %v4344 = vpop.f32.mrb[0].mxu0
      %v4345 = vadd.f32 %v1489, %v4344
      %v4346 = vpop.f32.mrb[0].mxu0
      %v4347 = vadd.f32 %v1489, %v4346
      %v4348 = vpop.f32.mrb[0].mxu0
      %v4349 = vadd.f32 %v1494, %v4348
      %v4350 = vpop.f32.mrb[0].mxu0
      %v4351 = vadd.f32 %v1494, %v4350
      %4352 = vmatprep.mubr.bf16.mxu0 %v1833
      %4353 = vmatmul.mubr.bf16.gmra.mrb[0].mxu0 %v1832
      %v4354 = vpop.f32.mrb[0].mxu0
      %v4355 = vadd.f32 %v1499, %v4354
      %v4356 = vpop.f32.mrb[0].mxu0
      %v4357 = vadd.f32 %v1499, %v4356
      %v4358 = vpop.f32.mrb[0].mxu0
      %v4359 = vadd.f32 %v1504, %v4358
      %v4360 = vpop.f32.mrb[0].mxu0
      %v4361 = vadd.f32 %v1504, %v4360
      %4362 = vmatprep.mubr.bf16.mxu0 %v1835
      %4363 = vmatmul.mubr.bf16.gmra.mrb[0].mxu0 %v1834
      %v4364 = vpop.f32.mrb[0].mxu0
      %v4365 = vadd.f32 %v1509, %v4364
      %v4366 = vpop.f32.mrb[0].mxu0
      %v4367 = vadd.f32 %v1509, %v4366
      %v4368 = vpop.f32.mrb[0].mxu0
      %v4369 = vadd.f32 %v1514, %v4368
      %v4370 = vpop.f32.mrb[0].mxu0
      %v4371 = vadd.f32 %v1514, %v4370
      %4372 = vmatprep.mubr.bf16.mxu0 %v1837
      %4373 = vmatmul.mubr.bf16.gmra.mrb[0].mxu0 %v1836
      %v4374 = vpop.f32.mrb[0].mxu0
      %v4375 = vadd.f32 %v1519, %v4374
      %v4376 = vpop.f32.mrb[0].mxu0
      %v4377 = vadd.f32 %v1519, %v4376
      %v4378 = vpop.f32.mrb[0].mxu0
      %v4379 = vadd.f32 %v1524, %v4378
      %v4380 = vpop.f32.mrb[0].mxu0
      %v4381 = vadd.f32 %v1524, %v4380
      %4382 = vmatprep.mubr.bf16.mxu0 %v1839
      %4383 = vmatmul.mubr.bf16.gmra.mrb[0].mxu0 %v1838
      %v4384 = vpop.f32.mrb[0].mxu0
      %v4385 = vadd.f32 %v1529, %v4384
      %v4386 = vpop.f32.mrb[0].mxu0
      %v4387 = vadd.f32 %v1529, %v4386
      %v4388 = vpop.f32.mrb[0].mxu0
      %v4389 = vadd.f32 %v1534, %v4388
      %v4390 = vpop.f32.mrb[0].mxu0
      %v4391 = vadd.f32 %v1534, %v4390
      %4392 = vmatprep.mubr.bf16.mxu0 %v1841
      %4393 = vmatmul.mubr.bf16.gmra.mrb[0].mxu0 %v1840
      %v4394 = vpop.f32.mrb[0].mxu0
      %v4395 = vadd.f32 %v1539, %v4394
      %v4396 = vpop.f32.mrb[0].mxu0
      %v4397 = vadd.f32 %v1539, %v4396
      %v4398 = vpop.f32.mrb[0].mxu0
      %v4399 = vadd.f32 %v1544, %v4398
      %v4400 = vpop.f32.mrb[0].mxu0
      %v4401 = vadd.f32 %v1544, %v4400
      %4402 = vmatprep.mubr.bf16.mxu0 %v1843
      %4403 = vmatmul.mubr.bf16.gmra.mrb[0].mxu0 %v1842
      %v4404 = vpop.f32.mrb[0].mxu0
      %v4405 = vadd.f32 %v1549, %v4404
      %v4406 = vpop.f32.mrb[0].mxu0
      %v4407 = vadd.f32 %v1549, %v4406
      %v4408 = vpop.f32.mrb[0].mxu0
      %v4409 = vadd.f32 %v1554, %v4408
      %v4410 = vpop.f32.mrb[0].mxu0
      %v4411 = vadd.f32 %v1554, %v4410
      %4412 = vmatprep.mubr.bf16.mxu0 %v1845
      %4413 = vmatmul.mubr.bf16.gmra.mrb[0].mxu0 %v1844
      %v4414 = vpop.f32.mrb[0].mxu0
      %v4415 = vadd.f32 %v1559, %v4414
      %v4416 = vpop.f32.mrb[0].mxu0
      %v4417 = vadd.f32 %v1559, %v4416
      %v4418 = vpop.f32.mrb[0].mxu0
      %v4419 = vadd.f32 %v1564, %v4418
      %v4420 = vpop.f32.mrb[0].mxu0
      %v4421 = vadd.f32 %v1564, %v4420
      %4422 = vmatprep.mubr.bf16.mxu0 %v1847
      %4423 = vmatmul.mubr.bf16.gmra.mrb[0].mxu0 %v1846
      %v4424 = vpop.f32.mrb[0].mxu0
      %v4425 = vadd.f32 %v1569, %v4424
      %v4426 = vpop.f32.mrb[0].mxu0
      %v4427 = vadd.f32 %v1569, %v4426
      %v4428 = vpop.f32.mrb[0].mxu0
      %v4429 = vadd.f32 %v1574, %v4428
      %v4430 = vpop.f32.mrb[0].mxu0
      %v4431 = vadd.f32 %v1574, %v4430
      %4432 = vmatprep.mubr.bf16.mxu0 %v1849
      %4433 = vmatmul.mubr.bf16.gmra.mrb[0].mxu0 %v1848
      %v4434 = vpop.f32.mrb[0].mxu0
      %v4435 = vadd.f32 %v1579, %v4434
      %v4436 = vpop.f32.mrb[0].mxu0
      %v4437 = vadd.f32 %v1579, %v4436
      %v4438 = vpop.f32.mrb[0].mxu0
      %v4439 = vadd.f32 %v1584, %v4438
      %v4440 = vpop.f32.mrb[0].mxu0
      %v4441 = vadd.f32 %v1584, %v4440
      %4442 = vmatprep.mubr.bf16.mxu0 %v1851
      %4443 = vmatmul.mubr.bf16.gmra.mrb[0].mxu0 %v1850
      %v4444 = vpop.f32.mrb[0].mxu0
      %v4445 = vadd.f32 %v1589, %v4444
      %v4446 = vpop.f32.mrb[0].mxu0
      %v4447 = vadd.f32 %v1589, %v4446
      %v4448 = vpop.f32.mrb[0].mxu0
      %v4449 = vadd.f32 %v1594, %v4448
      %v4450 = vpop.f32.mrb[0].mxu0
      %v4451 = vadd.f32 %v1594, %v4450
      %4452 = vdwg.mxu0
      %s4453 = sld [smem:[#allocation3 + %s31]]
      %v4454 = vlaneseq
      %v4455 = vshrl.u32 %v4454, 7
      %v4456 = vstv %s4453
      %vm4457 = vcmp.lt.s32.totalorder %v4455, %v4456
      %v4458 = vmul.f32 %v990, %v1951
      %v4459 = vmul.f32 %v992, %v1953
      %v4460 = vmul.f32 %v994, %v1955
      %v4461 = vmul.f32 %v996, %v1957
      %v4462 = vmul.f32 %v1000, %v1961
      %v4463 = vmul.f32 %v1002, %v1963
      %v4464 = vmul.f32 %v1004, %v1965
      %v4465 = vmul.f32 %v1006, %v1967
      %v4466 = vmul.f32 %v1010, %v1971
      %v4467 = vmul.f32 %v1012, %v1973
      %v4468 = vmul.f32 %v1014, %v1975
      %v4469 = vmul.f32 %v1016, %v1977
      %v4470 = vmul.f32 %v1020, %v1981
      %v4471 = vmul.f32 %v1022, %v1983
      %v4472 = vmul.f32 %v1024, %v1985
      %v4473 = vmul.f32 %v1026, %v1987
      %v4474 = vmul.f32 %v1030, %v1991
      %v4475 = vmul.f32 %v1032, %v1993
      %v4476 = vmul.f32 %v1034, %v1995
      %v4477 = vmul.f32 %v1036, %v1997
      %v4478 = vmul.f32 %v1040, %v2001
      %v4479 = vmul.f32 %v1042, %v2003
      %v4480 = vmul.f32 %v1044, %v2005
      %v4481 = vmul.f32 %v1046, %v2007
      %v4482 = vmul.f32 %v1050, %v2011
      %v4483 = vmul.f32 %v1052, %v2013
      %v4484 = vmul.f32 %v1054, %v2015
      %v4485 = vmul.f32 %v1056, %v2017
      %v4486 = vmul.f32 %v1060, %v2021
      %v4487 = vmul.f32 %v1062, %v2023
      %v4488 = vmul.f32 %v1064, %v2025
      %v4489 = vmul.f32 %v1066, %v2027
      %v4490 = vadd.f32 %v4458, %v4460
      %v4491 = vadd.f32 %v4490, %v4462
      %v4492 = vadd.f32 %v4491, %v4464
      %v4493 = vadd.f32 %v4492, %v4466
      %v4494 = vadd.f32 %v4493, %v4468
      %v4495 = vadd.f32 %v4494, %v4470
      %v4496 = vadd.f32 %v4495, %v4472
      %v4497 = vadd.f32 %v4496, %v4474
      %v4498 = vadd.f32 %v4497, %v4476
      %v4499 = vadd.f32 %v4498, %v4478
      %v4500 = vadd.f32 %v4499, %v4480
      %v4501 = vadd.f32 %v4500, %v4482
      %v4502 = vadd.f32 %v4501, %v4484
      %v4503 = vadd.f32 %v4502, %v4486
      %v4504 = vadd.f32 %v4503, %v4488
      %v4505 = vrot.slane %v4504, 4
      %v4506 = vadd.f32 %v4504, %v4505
      %v4507 = vrot.slane %v4506, 2
      %v4508 = vadd.f32 %v4506, %v4507
      %v4509 = vrot.slane %v4508, 1
      %v4510 = vadd.f32 %v4508, %v4509
      %v4511 = vadd.f32 %v4459, %v4461
      %v4512 = vadd.f32 %v4511, %v4463
      %v4513 = vadd.f32 %v4512, %v4465
      %v4514 = vadd.f32 %v4513, %v4467
      %v4515 = vadd.f32 %v4514, %v4469
      %v4516 = vadd.f32 %v4515, %v4471
      %v4517 = vadd.f32 %v4516, %v4473
      %v4518 = vadd.f32 %v4517, %v4475
      %v4519 = vadd.f32 %v4518, %v4477
      %v4520 = vadd.f32 %v4519, %v4479
      %v4521 = vadd.f32 %v4520, %v4481
      %v4522 = vadd.f32 %v4521, %v4483
      %v4523 = vadd.f32 %v4522, %v4485
      %v4524 = vadd.f32 %v4523, %v4487
      %v4525 = vadd.f32 %v4524, %v4489
      %v4526 = vrot.slane %v4525, 4
      %v4527 = vadd.f32 %v4525, %v4526
      %v4528 = vrot.slane %v4527, 2
      %v4529 = vadd.f32 %v4527, %v4528
      %v4530 = vrot.slane %v4529, 1
      %v4531 = vadd.f32 %v4529, %v4530
      %v4532 = vmul.f32 %v990, %v2497
      %v4533 = vmul.f32 %v992, %v2499
      %v4534 = vmul.f32 %v994, %v2501
      %v4535 = vmul.f32 %v996, %v2503
      %v4536 = vmul.f32 %v1000, %v2507
      %v4537 = vmul.f32 %v1002, %v2509
      %v4538 = vmul.f32 %v1004, %v2511
      %v4539 = vmul.f32 %v1006, %v2513
      %v4540 = vmul.f32 %v1010, %v2517
      %v4541 = vmul.f32 %v1012, %v2519
      %v4542 = vmul.f32 %v1014, %v2521
      %v4543 = vmul.f32 %v1016, %v2523
      %v4544 = vmul.f32 %v1020, %v2527
      %v4545 = vmul.f32 %v1022, %v2529
      %v4546 = vmul.f32 %v1024, %v2531
      %v4547 = vmul.f32 %v1026, %v2533
      %v4548 = vmul.f32 %v1030, %v2537
      %v4549 = vmul.f32 %v1032, %v2539
      %v4550 = vmul.f32 %v1034, %v2541
      %v4551 = vmul.f32 %v1036, %v2543
      %v4552 = vmul.f32 %v1040, %v2547
      %v4553 = vmul.f32 %v1042, %v2549
      %v4554 = vmul.f32 %v1044, %v2551
      %v4555 = vmul.f32 %v1046, %v2553
      %v4556 = vmul.f32 %v1050, %v2557
      %v4557 = vmul.f32 %v1052, %v2559
      %v4558 = vmul.f32 %v1054, %v2561
      %v4559 = vmul.f32 %v1056, %v2563
      %v4560 = vmul.f32 %v1060, %v2567
      %v4561 = vmul.f32 %v1062, %v2569
      %v4562 = vmul.f32 %v1064, %v2571
      %v4563 = vmul.f32 %v1066, %v2573
      %v4564 = vadd.f32 %v4532, %v4534
      %v4565 = vadd.f32 %v4564, %v4536
      %v4566 = vadd.f32 %v4565, %v4538
      %v4567 = vadd.f32 %v4566, %v4540
      %v4568 = vadd.f32 %v4567, %v4542
      %v4569 = vadd.f32 %v4568, %v4544
      %v4570 = vadd.f32 %v4569, %v4546
      %v4571 = vadd.f32 %v4570, %v4548
      %v4572 = vadd.f32 %v4571, %v4550
      %v4573 = vadd.f32 %v4572, %v4552
      %v4574 = vadd.f32 %v4573, %v4554
      %v4575 = vadd.f32 %v4574, %v4556
      %v4576 = vadd.f32 %v4575, %v4558
      %v4577 = vadd.f32 %v4576, %v4560
      %v4578 = vadd.f32 %v4577, %v4562
      %v4579 = vrot.slane %v4578, 4
      %v4580 = vadd.f32 %v4578, %v4579
      %v4581 = vrot.slane %v4580, 2
      %v4582 = vadd.f32 %v4580, %v4581
      %v4583 = vrot.slane %v4582, 1
      %v4584 = vadd.f32 %v4582, %v4583
      %v4585 = vadd.f32 %v4533, %v4535
      %v4586 = vadd.f32 %v4585, %v4537
      %v4587 = vadd.f32 %v4586, %v4539
      %v4588 = vadd.f32 %v4587, %v4541
      %v4589 = vadd.f32 %v4588, %v4543
      %v4590 = vadd.f32 %v4589, %v4545
      %v4591 = vadd.f32 %v4590, %v4547
      %v4592 = vadd.f32 %v4591, %v4549
      %v4593 = vadd.f32 %v4592, %v4551
      %v4594 = vadd.f32 %v4593, %v4553
      %v4595 = vadd.f32 %v4594, %v4555
      %v4596 = vadd.f32 %v4595, %v4557
      %v4597 = vadd.f32 %v4596, %v4559
      %v4598 = vadd.f32 %v4597, %v4561
      %v4599 = vadd.f32 %v4598, %v4563
      %v4600 = vrot.slane %v4599, 4
      %v4601 = vadd.f32 %v4599, %v4600
      %v4602 = vrot.slane %v4601, 2
      %v4603 = vadd.f32 %v4601, %v4602
      %v4604 = vrot.slane %v4603, 1
      %v4605 = vadd.f32 %v4603, %v4604
      %v4606 = vmul.f32 %v990, %v3043
      %v4607 = vmul.f32 %v992, %v3045
      %v4608 = vmul.f32 %v994, %v3047
      %v4609 = vmul.f32 %v996, %v3049
      %v4610 = vmul.f32 %v1000, %v3053
      %v4611 = vmul.f32 %v1002, %v3055
      %v4612 = vmul.f32 %v1004, %v3057
      %v4613 = vmul.f32 %v1006, %v3059
      %v4614 = vmul.f32 %v1010, %v3063
      %v4615 = vmul.f32 %v1012, %v3065
      %v4616 = vmul.f32 %v1014, %v3067
      %v4617 = vmul.f32 %v1016, %v3069
      %v4618 = vmul.f32 %v1020, %v3073
      %v4619 = vmul.f32 %v1022, %v3075
      %v4620 = vmul.f32 %v1024, %v3077
      %v4621 = vmul.f32 %v1026, %v3079
      %v4622 = vmul.f32 %v1030, %v3083
      %v4623 = vmul.f32 %v1032, %v3085
      %v4624 = vmul.f32 %v1034, %v3087
      %v4625 = vmul.f32 %v1036, %v3089
      %v4626 = vmul.f32 %v1040, %v3093
      %v4627 = vmul.f32 %v1042, %v3095
      %v4628 = vmul.f32 %v1044, %v3097
      %v4629 = vmul.f32 %v1046, %v3099
      %v4630 = vmul.f32 %v1050, %v3103
      %v4631 = vmul.f32 %v1052, %v3105
      %v4632 = vmul.f32 %v1054, %v3107
      %v4633 = vmul.f32 %v1056, %v3109
      %v4634 = vmul.f32 %v1060, %v3113
      %v4635 = vmul.f32 %v1062, %v3115
      %v4636 = vmul.f32 %v1064, %v3117
      %v4637 = vmul.f32 %v1066, %v3119
      %v4638 = vadd.f32 %v4606, %v4608
      %v4639 = vadd.f32 %v4638, %v4610
      %v4640 = vadd.f32 %v4639, %v4612
      %v4641 = vadd.f32 %v4640, %v4614
      %v4642 = vadd.f32 %v4641, %v4616
      %v4643 = vadd.f32 %v4642, %v4618
      %v4644 = vadd.f32 %v4643, %v4620
      %v4645 = vadd.f32 %v4644, %v4622
      %v4646 = vadd.f32 %v4645, %v4624
      %v4647 = vadd.f32 %v4646, %v4626
      %v4648 = vadd.f32 %v4647, %v4628
      %v4649 = vadd.f32 %v4648, %v4630
      %v4650 = vadd.f32 %v4649, %v4632
      %v4651 = vadd.f32 %v4650, %v4634
      %v4652 = vadd.f32 %v4651, %v4636
      %v4653 = vrot.slane %v4652, 4
      %v4654 = vadd.f32 %v4652, %v4653
      %v4655 = vrot.slane %v4654, 2
      %v4656 = vadd.f32 %v4654, %v4655
      %v4657 = vrot.slane %v4656, 1
      %v4658 = vadd.f32 %v4656, %v4657
      %v4659 = vadd.f32 %v4607, %v4609
      %v4660 = vadd.f32 %v4659, %v4611
      %v4661 = vadd.f32 %v4660, %v4613
      %v4662 = vadd.f32 %v4661, %v4615
      %v4663 = vadd.f32 %v4662, %v4617
      %v4664 = vadd.f32 %v4663, %v4619
      %v4665 = vadd.f32 %v4664, %v4621
      %v4666 = vadd.f32 %v4665, %v4623
      %v4667 = vadd.f32 %v4666, %v4625
      %v4668 = vadd.f32 %v4667, %v4627
      %v4669 = vadd.f32 %v4668, %v4629
      %v4670 = vadd.f32 %v4669, %v4631
      %v4671 = vadd.f32 %v4670, %v4633
      %v4672 = vadd.f32 %v4671, %v4635
      %v4673 = vadd.f32 %v4672, %v4637
      %v4674 = vrot.slane %v4673, 4
      %v4675 = vadd.f32 %v4673, %v4674
      %v4676 = vrot.slane %v4675, 2
      %v4677 = vadd.f32 %v4675, %v4676
      %v4678 = vrot.slane %v4677, 1
      %v4679 = vadd.f32 %v4677, %v4678
      %v4680 = vmul.f32 %v990, %v3589
      %v4681 = vmul.f32 %v992, %v3591
      %v4682 = vmul.f32 %v994, %v3593
      %v4683 = vmul.f32 %v996, %v3595
      %v4684 = vmul.f32 %v1000, %v3599
      %v4685 = vmul.f32 %v1002, %v3601
      %v4686 = vmul.f32 %v1004, %v3603
      %v4687 = vmul.f32 %v1006, %v3605
      %v4688 = vmul.f32 %v1010, %v3609
      %v4689 = vmul.f32 %v1012, %v3611
      %v4690 = vmul.f32 %v1014, %v3613
      %v4691 = vmul.f32 %v1016, %v3615
      %v4692 = vmul.f32 %v1020, %v3619
      %v4693 = vmul.f32 %v1022, %v3621
      %v4694 = vmul.f32 %v1024, %v3623
      %v4695 = vmul.f32 %v1026, %v3625
      %v4696 = vmul.f32 %v1030, %v3629
      %v4697 = vmul.f32 %v1032, %v3631
      %v4698 = vmul.f32 %v1034, %v3633
      %v4699 = vmul.f32 %v1036, %v3635
      %v4700 = vmul.f32 %v1040, %v3639
      %v4701 = vmul.f32 %v1042, %v3641
      %v4702 = vmul.f32 %v1044, %v3643
      %v4703 = vmul.f32 %v1046, %v3645
      %v4704 = vmul.f32 %v1050, %v3649
      %v4705 = vmul.f32 %v1052, %v3651
      %v4706 = vmul.f32 %v1054, %v3653
      %v4707 = vmul.f32 %v1056, %v3655
      %v4708 = vmul.f32 %v1060, %v3659
      %v4709 = vmul.f32 %v1062, %v3661
      %v4710 = vmul.f32 %v1064, %v3663
      %v4711 = vmul.f32 %v1066, %v3665
      %v4712 = vadd.f32 %v4680, %v4682
      %v4713 = vadd.f32 %v4712, %v4684
      %v4714 = vadd.f32 %v4713, %v4686
      %v4715 = vadd.f32 %v4714, %v4688
      %v4716 = vadd.f32 %v4715, %v4690
      %v4717 = vadd.f32 %v4716, %v4692
      %v4718 = vadd.f32 %v4717, %v4694
      %v4719 = vadd.f32 %v4718, %v4696
      %v4720 = vadd.f32 %v4719, %v4698
      %v4721 = vadd.f32 %v4720, %v4700
      %v4722 = vadd.f32 %v4721, %v4702
      %v4723 = vadd.f32 %v4722, %v4704
      %v4724 = vadd.f32 %v4723, %v4706
      %v4725 = vadd.f32 %v4724, %v4708
      %v4726 = vadd.f32 %v4725, %v4710
      %v4727 = vrot.slane %v4726, 4
      %v4728 = vadd.f32 %v4726, %v4727
      %v4729 = vrot.slane %v4728, 2
      %v4730 = vadd.f32 %v4728, %v4729
      %v4731 = vrot.slane %v4730, 1
      %v4732 = vadd.f32 %v4730, %v4731
      %v4733 = vadd.f32 %v4681, %v4683
      %v4734 = vadd.f32 %v4733, %v4685
      %v4735 = vadd.f32 %v4734, %v4687
      %v4736 = vadd.f32 %v4735, %v4689
      %v4737 = vadd.f32 %v4736, %v4691
      %v4738 = vadd.f32 %v4737, %v4693
      %v4739 = vadd.f32 %v4738, %v4695
      %v4740 = vadd.f32 %v4739, %v4697
      %v4741 = vadd.f32 %v4740, %v4699
      %v4742 = vadd.f32 %v4741, %v4701
      %v4743 = vadd.f32 %v4742, %v4703
      %v4744 = vadd.f32 %v4743, %v4705
      %v4745 = vadd.f32 %v4744, %v4707
      %v4746 = vadd.f32 %v4745, %v4709
      %v4747 = vadd.f32 %v4746, %v4711
      %v4748 = vrot.slane %v4747, 4
      %v4749 = vadd.f32 %v4747, %v4748
      %v4750 = vrot.slane %v4749, 2
      %v4751 = vadd.f32 %v4749, %v4750
      %v4752 = vrot.slane %v4751, 1
      %v4753 = vadd.f32 %v4751, %v4752
      %v4754 = vmul.f32 %v990, %v4135
      %v4755 = vmul.f32 %v992, %v4137
      %v4756 = vmul.f32 %v994, %v4139
      %v4757 = vmul.f32 %v996, %v4141
      %v4758 = vmul.f32 %v1000, %v4145
      %v4759 = vmul.f32 %v1002, %v4147
      %v4760 = vmul.f32 %v1004, %v4149
      %v4761 = vmul.f32 %v1006, %v4151
      %v4762 = vmul.f32 %v1010, %v4155
      %v4763 = vmul.f32 %v1012, %v4157
      %v4764 = vmul.f32 %v1014, %v4159
      %v4765 = vmul.f32 %v1016, %v4161
      %v4766 = vmul.f32 %v1020, %v4165
      %v4767 = vmul.f32 %v1022, %v4167
      %v4768 = vmul.f32 %v1024, %v4169
      %v4769 = vmul.f32 %v1026, %v4171
      %v4770 = vmul.f32 %v1030, %v4175
      %v4771 = vmul.f32 %v1032, %v4177
      %v4772 = vmul.f32 %v1034, %v4179
      %v4773 = vmul.f32 %v1036, %v4181
      %v4774 = vmul.f32 %v1040, %v4185
      %v4775 = vmul.f32 %v1042, %v4187
      %v4776 = vmul.f32 %v1044, %v4189
      %v4777 = vmul.f32 %v1046, %v4191
      %v4778 = vmul.f32 %v1050, %v4195
      %v4779 = vmul.f32 %v1052, %v4197
      %v4780 = vmul.f32 %v1054, %v4199
      %v4781 = vmul.f32 %v1056, %v4201
      %v4782 = vmul.f32 %v1060, %v4205
      %v4783 = vmul.f32 %v1062, %v4207
      %v4784 = vmul.f32 %v1064, %v4209
      %v4785 = vmul.f32 %v1066, %v4211
      %v4786 = vadd.f32 %v4754, %v4756
      %v4787 = vadd.f32 %v4786, %v4758
      %v4788 = vadd.f32 %v4787, %v4760
      %v4789 = vadd.f32 %v4788, %v4762
      %v4790 = vadd.f32 %v4789, %v4764
      %v4791 = vadd.f32 %v4790, %v4766
      %v4792 = vadd.f32 %v4791, %v4768
      %v4793 = vadd.f32 %v4792, %v4770
      %v4794 = vadd.f32 %v4793, %v4772
      %v4795 = vadd.f32 %v4794, %v4774
      %v4796 = vadd.f32 %v4795, %v4776
      %v4797 = vadd.f32 %v4796, %v4778
      %v4798 = vadd.f32 %v4797, %v4780
      %v4799 = vadd.f32 %v4798, %v4782
      %v4800 = vadd.f32 %v4799, %v4784
      %v4801 = vrot.slane %v4800, 4
      %v4802 = vadd.f32 %v4800, %v4801
      %v4803 = vrot.slane %v4802, 2
      %v4804 = vadd.f32 %v4802, %v4803
      %v4805 = vrot.slane %v4804, 1
      %v4806 = vadd.f32 %v4804, %v4805
      %v4807 = vadd.f32 %v4755, %v4757
      %v4808 = vadd.f32 %v4807, %v4759
      %v4809 = vadd.f32 %v4808, %v4761
      %v4810 = vadd.f32 %v4809, %v4763
      %v4811 = vadd.f32 %v4810, %v4765
      %v4812 = vadd.f32 %v4811, %v4767
      %v4813 = vadd.f32 %v4812, %v4769
      %v4814 = vadd.f32 %v4813, %v4771
      %v4815 = vadd.f32 %v4814, %v4773
      %v4816 = vadd.f32 %v4815, %v4775
      %v4817 = vadd.f32 %v4816, %v4777
      %v4818 = vadd.f32 %v4817, %v4779
      %v4819 = vadd.f32 %v4818, %v4781
      %v4820 = vadd.f32 %v4819, %v4783
      %v4821 = vadd.f32 %v4820, %v4785
      %v4822 = vrot.slane %v4821, 4
      %v4823 = vadd.f32 %v4821, %v4822
      %v4824 = vrot.slane %v4823, 2
      %v4825 = vadd.f32 %v4823, %v4824
      %v4826 = vrot.slane %v4825, 1
      %v4827 = vadd.f32 %v4825, %v4826
      %vm4828 = vcmask 1040384
      %v4829 = vsel %vm4828, %v4510, %v4584
      %v4830 = vsel %vm4828, %v4531, %v4605
      %vm4831 = vcmask 1041408
      %v4832 = vsel %vm4831, %v4829, %v4658
      %v4833 = vsel %vm4831, %v4830, %v4679
      %vm4834 = vcmask 1042432
      %v4835 = vsel %vm4834, %v4832, %v4732
      %v4836 = vsel %vm4834, %v4833, %v4753
      %vm4837 = vcmask 1043456
      %v4838 = vsel %vm4837, %v4835, %v4806
      %v4839 = vsel %vm4837, %v4836, %v4827
      %v4840 = vmul.f32 %v4838, 0.088388346
      %v4841 = vmul.f32 %v4839, 0.088388346
      %v4842 = vsel %vm4457, %v4840, -1e+30
      %v4843 = vsel %vm4457, %v4841, -1e+30
      %vm4844 = vcmask 1044480
      %v4845 = vsel %vm4844, %v4842, -inf
      %v4846 = vrot.slane %v4845, 4
      %v4847 = vmax.f32 %v4845, %v4846
      %v4848 = vrot.slane %v4847, 2
      %v4849 = vmax.f32 %v4847, %v4848
      %v4850 = vrot.slane %v4849, 1
      %v4851 = vmax.f32 %v4849, %v4850
      %v4852 = vsel %vm4844, %v4843, -inf
      %v4853 = vrot.slane %v4852, 4
      %v4854 = vmax.f32 %v4852, %v4853
      %v4855 = vrot.slane %v4854, 2
      %v4856 = vmax.f32 %v4854, %v4855
      %v4857 = vrot.slane %v4856, 1
      %v4858 = vmax.f32 %v4856, %v4857
      %v4859 = vsub.f32 %v4842, %v4851
      %v4860 = vsub.f32 %v4843, %v4858
      %v4861 = vmul.f32 %v4859, 1.442695
      %v4862 = vpow.pop %v4861
      %v4863 = vmul.f32 %v4860, 1.442695
      %v4864 = vpow.pop %v4863
      %v4865 = vsel %vm4844, %v4862, 0.0
      %v4866 = vrot.slane %v4865, 4
      %v4867 = vadd.f32 %v4865, %v4866
      %v4868 = vrot.slane %v4867, 2
      %v4869 = vadd.f32 %v4867, %v4868
      %v4870 = vrot.slane %v4869, 1
      %v4871 = vadd.f32 %v4869, %v4870
      %v4872 = vsel %vm4844, %v4864, 0.0
      %v4873 = vrot.slane %v4872, 4
      %v4874 = vadd.f32 %v4872, %v4873
      %v4875 = vrot.slane %v4874, 2
      %v4876 = vadd.f32 %v4874, %v4875
      %v4877 = vrot.slane %v4876, 1
      %v4878 = vadd.f32 %v4876, %v4877
      %v4879 = vrcp.pop %v4871
      %v4880 = vrcp.pop %v4878
      %v4881 = vmul.f32 %v4862, %v4879
      %v4882 = vmul.f32 %v4864, %v4880
      %v4883 = vlaneseq
      %v4884 = vshrl.u32 %v4883, 7
      %v4885 = vsub.s32 0, %v4884
      %v4886 = vrot.slane %v4881, %v4885
      %v4887 = vlaneseq
      %v4888 = vshrl.u32 %v4887, 7
      %v4889 = vsub.s32 0, %v4888
      %v4890 = vrot.slane %v4882, %v4889
      %v4891 = vmul.f32 %v4886, %v2111
      %v4892 = vmul.f32 %v4890, %v2113
      %v4893 = vmul.f32 %v4886, %v2115
      %v4894 = vmul.f32 %v4890, %v2117
      %v4895 = vmul.f32 %v4886, %v2121
      %v4896 = vmul.f32 %v4890, %v2123
      %v4897 = vmul.f32 %v4886, %v2125
      %v4898 = vmul.f32 %v4890, %v2127
      %v4899 = vmul.f32 %v4886, %v2131
      %v4900 = vmul.f32 %v4890, %v2133
      %v4901 = vmul.f32 %v4886, %v2135
      %v4902 = vmul.f32 %v4890, %v2137
      %v4903 = vmul.f32 %v4886, %v2141
      %v4904 = vmul.f32 %v4890, %v2143
      %v4905 = vmul.f32 %v4886, %v2145
      %v4906 = vmul.f32 %v4890, %v2147
      %v4907 = vmul.f32 %v4886, %v2151
      %v4908 = vmul.f32 %v4890, %v2153
      %v4909 = vmul.f32 %v4886, %v2155
      %v4910 = vmul.f32 %v4890, %v2157
      %v4911 = vmul.f32 %v4886, %v2161
      %v4912 = vmul.f32 %v4890, %v2163
      %v4913 = vmul.f32 %v4886, %v2165
      %v4914 = vmul.f32 %v4890, %v2167
      %v4915 = vmul.f32 %v4886, %v2171
      %v4916 = vmul.f32 %v4890, %v2173
      %v4917 = vmul.f32 %v4886, %v2175
      %v4918 = vmul.f32 %v4890, %v2177
      %v4919 = vmul.f32 %v4886, %v2181
      %v4920 = vmul.f32 %v4890, %v2183
      %v4921 = vmul.f32 %v4886, %v2185
      %v4922 = vmul.f32 %v4890, %v2187
      %v4923 = vadd.f32 %v4891, 0.0
      %v4924 = vadd.f32 %v4892, 0.0
      %v4925 = vadd.f32 %v4893, 0.0
      %v4926 = vadd.f32 %v4894, 0.0
      %v4927 = vadd.f32 %v4895, 0.0
      %v4928 = vadd.f32 %v4896, 0.0
      %v4929 = vadd.f32 %v4897, 0.0
      %v4930 = vadd.f32 %v4898, 0.0
      %v4931 = vadd.f32 %v4899, 0.0
      %v4932 = vadd.f32 %v4900, 0.0
      %v4933 = vadd.f32 %v4901, 0.0
      %v4934 = vadd.f32 %v4902, 0.0
      %v4935 = vadd.f32 %v4903, 0.0
      %v4936 = vadd.f32 %v4904, 0.0
      %v4937 = vadd.f32 %v4905, 0.0
      %v4938 = vadd.f32 %v4906, 0.0
      %v4939 = vadd.f32 %v4907, 0.0
      %v4940 = vadd.f32 %v4908, 0.0
      %v4941 = vadd.f32 %v4909, 0.0
      %v4942 = vadd.f32 %v4910, 0.0
      %v4943 = vadd.f32 %v4911, 0.0
      %v4944 = vadd.f32 %v4912, 0.0
      %v4945 = vadd.f32 %v4913, 0.0
      %v4946 = vadd.f32 %v4914, 0.0
      %v4947 = vadd.f32 %v4915, 0.0
      %v4948 = vadd.f32 %v4916, 0.0
      %v4949 = vadd.f32 %v4917, 0.0
      %v4950 = vadd.f32 %v4918, 0.0
      %v4951 = vadd.f32 %v4919, 0.0
      %v4952 = vadd.f32 %v4920, 0.0
      %v4953 = vadd.f32 %v4921, 0.0
      %v4954 = vadd.f32 %v4922, 0.0
      %v4955 = vlaneseq
      %v4956 = vshrl.u32 %v4955, 7
      %v4957 = vsub.s32 1, %v4956
      %v4958 = vrot.slane %v4881, %v4957
      %v4959 = vlaneseq
      %v4960 = vshrl.u32 %v4959, 7
      %v4961 = vsub.s32 1, %v4960
      %v4962 = vrot.slane %v4882, %v4961
      %v4963 = vmul.f32 %v4958, %v2657
      %v4964 = vmul.f32 %v4962, %v2659
      %v4965 = vmul.f32 %v4958, %v2661
      %v4966 = vmul.f32 %v4962, %v2663
      %v4967 = vmul.f32 %v4958, %v2667
      %v4968 = vmul.f32 %v4962, %v2669
      %v4969 = vmul.f32 %v4958, %v2671
      %v4970 = vmul.f32 %v4962, %v2673
      %v4971 = vmul.f32 %v4958, %v2677
      %v4972 = vmul.f32 %v4962, %v2679
      %v4973 = vmul.f32 %v4958, %v2681
      %v4974 = vmul.f32 %v4962, %v2683
      %v4975 = vmul.f32 %v4958, %v2687
      %v4976 = vmul.f32 %v4962, %v2689
      %v4977 = vmul.f32 %v4958, %v2691
      %v4978 = vmul.f32 %v4962, %v2693
      %v4979 = vmul.f32 %v4958, %v2697
      %v4980 = vmul.f32 %v4962, %v2699
      %v4981 = vmul.f32 %v4958, %v2701
      %v4982 = vmul.f32 %v4962, %v2703
      %v4983 = vmul.f32 %v4958, %v2707
      %v4984 = vmul.f32 %v4962, %v2709
      %v4985 = vmul.f32 %v4958, %v2711
      %v4986 = vmul.f32 %v4962, %v2713
      %v4987 = vmul.f32 %v4958, %v2717
      %v4988 = vmul.f32 %v4962, %v2719
      %v4989 = vmul.f32 %v4958, %v2721
      %v4990 = vmul.f32 %v4962, %v2723
      %v4991 = vmul.f32 %v4958, %v2727
      %v4992 = vmul.f32 %v4962, %v2729
      %v4993 = vmul.f32 %v4958, %v2731
      %v4994 = vmul.f32 %v4962, %v2733
      %v4995 = vadd.f32 %v4923, %v4963
      %v4996 = vadd.f32 %v4924, %v4964
      %v4997 = vadd.f32 %v4925, %v4965
      %v4998 = vadd.f32 %v4926, %v4966
      %v4999 = vadd.f32 %v4927, %v4967
      %v5000 = vadd.f32 %v4928, %v4968
      %v5001 = vadd.f32 %v4929, %v4969
      %v5002 = vadd.f32 %v4930, %v4970
      %v5003 = vadd.f32 %v4931, %v4971
      %v5004 = vadd.f32 %v4932, %v4972
      %v5005 = vadd.f32 %v4933, %v4973
      %v5006 = vadd.f32 %v4934, %v4974
      %v5007 = vadd.f32 %v4935, %v4975
      %v5008 = vadd.f32 %v4936, %v4976
      %v5009 = vadd.f32 %v4937, %v4977
      %v5010 = vadd.f32 %v4938, %v4978
      %v5011 = vadd.f32 %v4939, %v4979
      %v5012 = vadd.f32 %v4940, %v4980
      %v5013 = vadd.f32 %v4941, %v4981
      %v5014 = vadd.f32 %v4942, %v4982
      %v5015 = vadd.f32 %v4943, %v4983
      %v5016 = vadd.f32 %v4944, %v4984
      %v5017 = vadd.f32 %v4945, %v4985
      %v5018 = vadd.f32 %v4946, %v4986
      %v5019 = vadd.f32 %v4947, %v4987
      %v5020 = vadd.f32 %v4948, %v4988
      %v5021 = vadd.f32 %v4949, %v4989
      %v5022 = vadd.f32 %v4950, %v4990
      %v5023 = vadd.f32 %v4951, %v4991
      %v5024 = vadd.f32 %v4952, %v4992
      %v5025 = vadd.f32 %v4953, %v4993
      %v5026 = vadd.f32 %v4954, %v4994
      %v5027 = vlaneseq
      %v5028 = vshrl.u32 %v5027, 7
      %v5029 = vsub.s32 2, %v5028
      %v5030 = vrot.slane %v4881, %v5029
      %v5031 = vlaneseq
      %v5032 = vshrl.u32 %v5031, 7
      %v5033 = vsub.s32 2, %v5032
      %v5034 = vrot.slane %v4882, %v5033
      %v5035 = vmul.f32 %v5030, %v3203
      %v5036 = vmul.f32 %v5034, %v3205
      %v5037 = vmul.f32 %v5030, %v3207
      %v5038 = vmul.f32 %v5034, %v3209
      %v5039 = vmul.f32 %v5030, %v3213
      %v5040 = vmul.f32 %v5034, %v3215
      %v5041 = vmul.f32 %v5030, %v3217
      %v5042 = vmul.f32 %v5034, %v3219
      %v5043 = vmul.f32 %v5030, %v3223
      %v5044 = vmul.f32 %v5034, %v3225
      %v5045 = vmul.f32 %v5030, %v3227
      %v5046 = vmul.f32 %v5034, %v3229
      %v5047 = vmul.f32 %v5030, %v3233
      %v5048 = vmul.f32 %v5034, %v3235
      %v5049 = vmul.f32 %v5030, %v3237
      %v5050 = vmul.f32 %v5034, %v3239
      %v5051 = vmul.f32 %v5030, %v3243
      %v5052 = vmul.f32 %v5034, %v3245
      %v5053 = vmul.f32 %v5030, %v3247
      %v5054 = vmul.f32 %v5034, %v3249
      %v5055 = vmul.f32 %v5030, %v3253
      %v5056 = vmul.f32 %v5034, %v3255
      %v5057 = vmul.f32 %v5030, %v3257
      %v5058 = vmul.f32 %v5034, %v3259
      %v5059 = vmul.f32 %v5030, %v3263
      %v5060 = vmul.f32 %v5034, %v3265
      %v5061 = vmul.f32 %v5030, %v3267
      %v5062 = vmul.f32 %v5034, %v3269
      %v5063 = vmul.f32 %v5030, %v3273
      %v5064 = vmul.f32 %v5034, %v3275
      %v5065 = vmul.f32 %v5030, %v3277
      %v5066 = vmul.f32 %v5034, %v3279
      %v5067 = vadd.f32 %v4995, %v5035
      %v5068 = vadd.f32 %v4996, %v5036
      %v5069 = vadd.f32 %v4997, %v5037
      %v5070 = vadd.f32 %v4998, %v5038
      %v5071 = vadd.f32 %v4999, %v5039
      %v5072 = vadd.f32 %v5000, %v5040
      %v5073 = vadd.f32 %v5001, %v5041
      %v5074 = vadd.f32 %v5002, %v5042
      %v5075 = vadd.f32 %v5003, %v5043
      %v5076 = vadd.f32 %v5004, %v5044
      %v5077 = vadd.f32 %v5005, %v5045
      %v5078 = vadd.f32 %v5006, %v5046
      %v5079 = vadd.f32 %v5007, %v5047
      %v5080 = vadd.f32 %v5008, %v5048
      %v5081 = vadd.f32 %v5009, %v5049
      %v5082 = vadd.f32 %v5010, %v5050
      %v5083 = vadd.f32 %v5011, %v5051
      %v5084 = vadd.f32 %v5012, %v5052
      %v5085 = vadd.f32 %v5013, %v5053
      %v5086 = vadd.f32 %v5014, %v5054
      %v5087 = vadd.f32 %v5015, %v5055
      %v5088 = vadd.f32 %v5016, %v5056
      %v5089 = vadd.f32 %v5017, %v5057
      %v5090 = vadd.f32 %v5018, %v5058
      %v5091 = vadd.f32 %v5019, %v5059
      %v5092 = vadd.f32 %v5020, %v5060
      %v5093 = vadd.f32 %v5021, %v5061
      %v5094 = vadd.f32 %v5022, %v5062
      %v5095 = vadd.f32 %v5023, %v5063
      %v5096 = vadd.f32 %v5024, %v5064
      %v5097 = vadd.f32 %v5025, %v5065
      %v5098 = vadd.f32 %v5026, %v5066
      %v5099 = vlaneseq
      %v5100 = vshrl.u32 %v5099, 7
      %v5101 = vsub.s32 3, %v5100
      %v5102 = vrot.slane %v4881, %v5101
      %v5103 = vlaneseq
      %v5104 = vshrl.u32 %v5103, 7
      %v5105 = vsub.s32 3, %v5104
      %v5106 = vrot.slane %v4882, %v5105
      %v5107 = vmul.f32 %v5102, %v3749
      %v5108 = vmul.f32 %v5106, %v3751
      %v5109 = vmul.f32 %v5102, %v3753
      %v5110 = vmul.f32 %v5106, %v3755
      %v5111 = vmul.f32 %v5102, %v3759
      %v5112 = vmul.f32 %v5106, %v3761
      %v5113 = vmul.f32 %v5102, %v3763
      %v5114 = vmul.f32 %v5106, %v3765
      %v5115 = vmul.f32 %v5102, %v3769
      %v5116 = vmul.f32 %v5106, %v3771
      %v5117 = vmul.f32 %v5102, %v3773
      %v5118 = vmul.f32 %v5106, %v3775
      %v5119 = vmul.f32 %v5102, %v3779
      %v5120 = vmul.f32 %v5106, %v3781
      %v5121 = vmul.f32 %v5102, %v3783
      %v5122 = vmul.f32 %v5106, %v3785
      %v5123 = vmul.f32 %v5102, %v3789
      %v5124 = vmul.f32 %v5106, %v3791
      %v5125 = vmul.f32 %v5102, %v3793
      %v5126 = vmul.f32 %v5106, %v3795
      %v5127 = vmul.f32 %v5102, %v3799
      %v5128 = vmul.f32 %v5106, %v3801
      %v5129 = vmul.f32 %v5102, %v3803
      %v5130 = vmul.f32 %v5106, %v3805
      %v5131 = vmul.f32 %v5102, %v3809
      %v5132 = vmul.f32 %v5106, %v3811
      %v5133 = vmul.f32 %v5102, %v3813
      %v5134 = vmul.f32 %v5106, %v3815
      %v5135 = vmul.f32 %v5102, %v3819
      %v5136 = vmul.f32 %v5106, %v3821
      %v5137 = vmul.f32 %v5102, %v3823
      %v5138 = vmul.f32 %v5106, %v3825
      %v5139 = vadd.f32 %v5067, %v5107
      %v5140 = vadd.f32 %v5068, %v5108
      %v5141 = vadd.f32 %v5069, %v5109
      %v5142 = vadd.f32 %v5070, %v5110
      %v5143 = vadd.f32 %v5071, %v5111
      %v5144 = vadd.f32 %v5072, %v5112
      %v5145 = vadd.f32 %v5073, %v5113
      %v5146 = vadd.f32 %v5074, %v5114
      %v5147 = vadd.f32 %v5075, %v5115
      %v5148 = vadd.f32 %v5076, %v5116
      %v5149 = vadd.f32 %v5077, %v5117
      %v5150 = vadd.f32 %v5078, %v5118
      %v5151 = vadd.f32 %v5079, %v5119
      %v5152 = vadd.f32 %v5080, %v5120
      %v5153 = vadd.f32 %v5081, %v5121
      %v5154 = vadd.f32 %v5082, %v5122
      %v5155 = vadd.f32 %v5083, %v5123
      %v5156 = vadd.f32 %v5084, %v5124
      %v5157 = vadd.f32 %v5085, %v5125
      %v5158 = vadd.f32 %v5086, %v5126
      %v5159 = vadd.f32 %v5087, %v5127
      %v5160 = vadd.f32 %v5088, %v5128
      %v5161 = vadd.f32 %v5089, %v5129
      %v5162 = vadd.f32 %v5090, %v5130
      %v5163 = vadd.f32 %v5091, %v5131
      %v5164 = vadd.f32 %v5092, %v5132
      %v5165 = vadd.f32 %v5093, %v5133
      %v5166 = vadd.f32 %v5094, %v5134
      %v5167 = vadd.f32 %v5095, %v5135
      %v5168 = vadd.f32 %v5096, %v5136
      %v5169 = vadd.f32 %v5097, %v5137
      %v5170 = vadd.f32 %v5098, %v5138
      %v5171 = vlaneseq
      %v5172 = vshrl.u32 %v5171, 7
      %v5173 = vsub.s32 4, %v5172
      %v5174 = vrot.slane %v4881, %v5173
      %v5175 = vlaneseq
      %v5176 = vshrl.u32 %v5175, 7
      %v5177 = vsub.s32 4, %v5176
      %v5178 = vrot.slane %v4882, %v5177
      %v5179 = vmul.f32 %v5174, %v4295
      %v5180 = vmul.f32 %v5178, %v4297
      %v5181 = vmul.f32 %v5174, %v4299
      %v5182 = vmul.f32 %v5178, %v4301
      %v5183 = vmul.f32 %v5174, %v4305
      %v5184 = vmul.f32 %v5178, %v4307
      %v5185 = vmul.f32 %v5174, %v4309
      %v5186 = vmul.f32 %v5178, %v4311
      %v5187 = vmul.f32 %v5174, %v4315
      %v5188 = vmul.f32 %v5178, %v4317
      %v5189 = vmul.f32 %v5174, %v4319
      %v5190 = vmul.f32 %v5178, %v4321
      %v5191 = vmul.f32 %v5174, %v4325
      %v5192 = vmul.f32 %v5178, %v4327
      %v5193 = vmul.f32 %v5174, %v4329
      %v5194 = vmul.f32 %v5178, %v4331
      %v5195 = vmul.f32 %v5174, %v4335
      %v5196 = vmul.f32 %v5178, %v4337
      %v5197 = vmul.f32 %v5174, %v4339
      %v5198 = vmul.f32 %v5178, %v4341
      %v5199 = vmul.f32 %v5174, %v4345
      %v5200 = vmul.f32 %v5178, %v4347
      %v5201 = vmul.f32 %v5174, %v4349
      %v5202 = vmul.f32 %v5178, %v4351
      %v5203 = vmul.f32 %v5174, %v4355
      %v5204 = vmul.f32 %v5178, %v4357
      %v5205 = vmul.f32 %v5174, %v4359
      %v5206 = vmul.f32 %v5178, %v4361
      %v5207 = vmul.f32 %v5174, %v4365
      %v5208 = vmul.f32 %v5178, %v4367
      %v5209 = vmul.f32 %v5174, %v4369
      %v5210 = vmul.f32 %v5178, %v4371
      %v5211 = vadd.f32 %v5139, %v5179
      %v5212 = vadd.f32 %v5140, %v5180
      %v5213 = vadd.f32 %v5141, %v5181
      %v5214 = vadd.f32 %v5142, %v5182
      %v5215 = vadd.f32 %v5143, %v5183
      %v5216 = vadd.f32 %v5144, %v5184
      %v5217 = vadd.f32 %v5145, %v5185
      %v5218 = vadd.f32 %v5146, %v5186
      %v5219 = vadd.f32 %v5147, %v5187
      %v5220 = vadd.f32 %v5148, %v5188
      %v5221 = vadd.f32 %v5149, %v5189
      %v5222 = vadd.f32 %v5150, %v5190
      %v5223 = vadd.f32 %v5151, %v5191
      %v5224 = vadd.f32 %v5152, %v5192
      %v5225 = vadd.f32 %v5153, %v5193
      %v5226 = vadd.f32 %v5154, %v5194
      %v5227 = vadd.f32 %v5155, %v5195
      %v5228 = vadd.f32 %v5156, %v5196
      %v5229 = vadd.f32 %v5157, %v5197
      %v5230 = vadd.f32 %v5158, %v5198
      %v5231 = vadd.f32 %v5159, %v5199
      %v5232 = vadd.f32 %v5160, %v5200
      %v5233 = vadd.f32 %v5161, %v5201
      %v5234 = vadd.f32 %v5162, %v5202
      %v5235 = vadd.f32 %v5163, %v5203
      %v5236 = vadd.f32 %v5164, %v5204
      %v5237 = vadd.f32 %v5165, %v5205
      %v5238 = vadd.f32 %v5166, %v5206
      %v5239 = vadd.f32 %v5167, %v5207
      %v5240 = vadd.f32 %v5168, %v5208
      %v5241 = vadd.f32 %v5169, %v5209
      %v5242 = vadd.f32 %v5170, %v5210
      %v5243 = vmul.f32 %v1070, %v2031
      %v5244 = vmul.f32 %v1072, %v2033
      %v5245 = vmul.f32 %v1074, %v2035
      %v5246 = vmul.f32 %v1076, %v2037
      %v5247 = vmul.f32 %v1080, %v2041
      %v5248 = vmul.f32 %v1082, %v2043
      %v5249 = vmul.f32 %v1084, %v2045
      %v5250 = vmul.f32 %v1086, %v2047
      %v5251 = vmul.f32 %v1090, %v2051
      %v5252 = vmul.f32 %v1092, %v2053
      %v5253 = vmul.f32 %v1094, %v2055
      %v5254 = vmul.f32 %v1096, %v2057
      %v5255 = vmul.f32 %v1100, %v2061
      %v5256 = vmul.f32 %v1102, %v2063
      %v5257 = vmul.f32 %v1104, %v2065
      %v5258 = vmul.f32 %v1106, %v2067
      %v5259 = vmul.f32 %v1110, %v2071
      %v5260 = vmul.f32 %v1112, %v2073
      %v5261 = vmul.f32 %v1114, %v2075
      %v5262 = vmul.f32 %v1116, %v2077
      %v5263 = vmul.f32 %v1120, %v2081
      %v5264 = vmul.f32 %v1122, %v2083
      %v5265 = vmul.f32 %v1124, %v2085
      %v5266 = vmul.f32 %v1126, %v2087
      %v5267 = vmul.f32 %v1130, %v2091
      %v5268 = vmul.f32 %v1132, %v2093
      %v5269 = vmul.f32 %v1134, %v2095
      %v5270 = vmul.f32 %v1136, %v2097
      %v5271 = vmul.f32 %v1140, %v2101
      %v5272 = vmul.f32 %v1142, %v2103
      %v5273 = vmul.f32 %v1144, %v2105
      %v5274 = vmul.f32 %v1146, %v2107
      %v5275 = vadd.f32 %v5243, %v5245
      %v5276 = vadd.f32 %v5275, %v5247
      %v5277 = vadd.f32 %v5276, %v5249
      %v5278 = vadd.f32 %v5277, %v5251
      %v5279 = vadd.f32 %v5278, %v5253
      %v5280 = vadd.f32 %v5279, %v5255
      %v5281 = vadd.f32 %v5280, %v5257
      %v5282 = vadd.f32 %v5281, %v5259
      %v5283 = vadd.f32 %v5282, %v5261
      %v5284 = vadd.f32 %v5283, %v5263
      %v5285 = vadd.f32 %v5284, %v5265
      %v5286 = vadd.f32 %v5285, %v5267
      %v5287 = vadd.f32 %v5286, %v5269
      %v5288 = vadd.f32 %v5287, %v5271
      %v5289 = vadd.f32 %v5288, %v5273
      %v5290 = vrot.slane %v5289, 4
      %v5291 = vadd.f32 %v5289, %v5290
      %v5292 = vrot.slane %v5291, 2
      %v5293 = vadd.f32 %v5291, %v5292
      %v5294 = vrot.slane %v5293, 1
      %v5295 = vadd.f32 %v5293, %v5294
      %v5296 = vadd.f32 %v5244, %v5246
      %v5297 = vadd.f32 %v5296, %v5248
      %v5298 = vadd.f32 %v5297, %v5250
      %v5299 = vadd.f32 %v5298, %v5252
      %v5300 = vadd.f32 %v5299, %v5254
      %v5301 = vadd.f32 %v5300, %v5256
      %v5302 = vadd.f32 %v5301, %v5258
      %v5303 = vadd.f32 %v5302, %v5260
      %v5304 = vadd.f32 %v5303, %v5262
      %v5305 = vadd.f32 %v5304, %v5264
      %v5306 = vadd.f32 %v5305, %v5266
      %v5307 = vadd.f32 %v5306, %v5268
      %v5308 = vadd.f32 %v5307, %v5270
      %v5309 = vadd.f32 %v5308, %v5272
      %v5310 = vadd.f32 %v5309, %v5274
      %v5311 = vrot.slane %v5310, 4
      %v5312 = vadd.f32 %v5310, %v5311
      %v5313 = vrot.slane %v5312, 2
      %v5314 = vadd.f32 %v5312, %v5313
      %v5315 = vrot.slane %v5314, 1
      %v5316 = vadd.f32 %v5314, %v5315
      %v5317 = vmul.f32 %v1070, %v2577
      %v5318 = vmul.f32 %v1072, %v2579
      %v5319 = vmul.f32 %v1074, %v2581
      %v5320 = vmul.f32 %v1076, %v2583
      %v5321 = vmul.f32 %v1080, %v2587
      %v5322 = vmul.f32 %v1082, %v2589
      %v5323 = vmul.f32 %v1084, %v2591
      %v5324 = vmul.f32 %v1086, %v2593
      %v5325 = vmul.f32 %v1090, %v2597
      %v5326 = vmul.f32 %v1092, %v2599
      %v5327 = vmul.f32 %v1094, %v2601
      %v5328 = vmul.f32 %v1096, %v2603
      %v5329 = vmul.f32 %v1100, %v2607
      %v5330 = vmul.f32 %v1102, %v2609
      %v5331 = vmul.f32 %v1104, %v2611
      %v5332 = vmul.f32 %v1106, %v2613
      %v5333 = vmul.f32 %v1110, %v2617
      %v5334 = vmul.f32 %v1112, %v2619
      %v5335 = vmul.f32 %v1114, %v2621
      %v5336 = vmul.f32 %v1116, %v2623
      %v5337 = vmul.f32 %v1120, %v2627
      %v5338 = vmul.f32 %v1122, %v2629
      %v5339 = vmul.f32 %v1124, %v2631
      %v5340 = vmul.f32 %v1126, %v2633
      %v5341 = vmul.f32 %v1130, %v2637
      %v5342 = vmul.f32 %v1132, %v2639
      %v5343 = vmul.f32 %v1134, %v2641
      %v5344 = vmul.f32 %v1136, %v2643
      %v5345 = vmul.f32 %v1140, %v2647
      %v5346 = vmul.f32 %v1142, %v2649
      %v5347 = vmul.f32 %v1144, %v2651
      %v5348 = vmul.f32 %v1146, %v2653
      %v5349 = vadd.f32 %v5317, %v5319
      %v5350 = vadd.f32 %v5349, %v5321
      %v5351 = vadd.f32 %v5350, %v5323
      %v5352 = vadd.f32 %v5351, %v5325
      %v5353 = vadd.f32 %v5352, %v5327
      %v5354 = vadd.f32 %v5353, %v5329
      %v5355 = vadd.f32 %v5354, %v5331
      %v5356 = vadd.f32 %v5355, %v5333
      %v5357 = vadd.f32 %v5356, %v5335
      %v5358 = vadd.f32 %v5357, %v5337
      %v5359 = vadd.f32 %v5358, %v5339
      %v5360 = vadd.f32 %v5359, %v5341
      %v5361 = vadd.f32 %v5360, %v5343
      %v5362 = vadd.f32 %v5361, %v5345
      %v5363 = vadd.f32 %v5362, %v5347
      %v5364 = vrot.slane %v5363, 4
      %v5365 = vadd.f32 %v5363, %v5364
      %v5366 = vrot.slane %v5365, 2
      %v5367 = vadd.f32 %v5365, %v5366
      %v5368 = vrot.slane %v5367, 1
      %v5369 = vadd.f32 %v5367, %v5368
      %v5370 = vadd.f32 %v5318, %v5320
      %v5371 = vadd.f32 %v5370, %v5322
      %v5372 = vadd.f32 %v5371, %v5324
      %v5373 = vadd.f32 %v5372, %v5326
      %v5374 = vadd.f32 %v5373, %v5328
      %v5375 = vadd.f32 %v5374, %v5330
      %v5376 = vadd.f32 %v5375, %v5332
      %v5377 = vadd.f32 %v5376, %v5334
      %v5378 = vadd.f32 %v5377, %v5336
      %v5379 = vadd.f32 %v5378, %v5338
      %v5380 = vadd.f32 %v5379, %v5340
      %v5381 = vadd.f32 %v5380, %v5342
      %v5382 = vadd.f32 %v5381, %v5344
      %v5383 = vadd.f32 %v5382, %v5346
      %v5384 = vadd.f32 %v5383, %v5348
      %v5385 = vrot.slane %v5384, 4
      %v5386 = vadd.f32 %v5384, %v5385
      %v5387 = vrot.slane %v5386, 2
      %v5388 = vadd.f32 %v5386, %v5387
      %v5389 = vrot.slane %v5388, 1
      %v5390 = vadd.f32 %v5388, %v5389
      %v5391 = vmul.f32 %v1070, %v3123
      %v5392 = vmul.f32 %v1072, %v3125
      %v5393 = vmul.f32 %v1074, %v3127
      %v5394 = vmul.f32 %v1076, %v3129
      %v5395 = vmul.f32 %v1080, %v3133
      %v5396 = vmul.f32 %v1082, %v3135
      %v5397 = vmul.f32 %v1084, %v3137
      %v5398 = vmul.f32 %v1086, %v3139
      %v5399 = vmul.f32 %v1090, %v3143
      %v5400 = vmul.f32 %v1092, %v3145
      %v5401 = vmul.f32 %v1094, %v3147
      %v5402 = vmul.f32 %v1096, %v3149
      %v5403 = vmul.f32 %v1100, %v3153
      %v5404 = vmul.f32 %v1102, %v3155
      %v5405 = vmul.f32 %v1104, %v3157
      %v5406 = vmul.f32 %v1106, %v3159
      %v5407 = vmul.f32 %v1110, %v3163
      %v5408 = vmul.f32 %v1112, %v3165
      %v5409 = vmul.f32 %v1114, %v3167
      %v5410 = vmul.f32 %v1116, %v3169
      %v5411 = vmul.f32 %v1120, %v3173
      %v5412 = vmul.f32 %v1122, %v3175
      %v5413 = vmul.f32 %v1124, %v3177
      %v5414 = vmul.f32 %v1126, %v3179
      %v5415 = vmul.f32 %v1130, %v3183
      %v5416 = vmul.f32 %v1132, %v3185
      %v5417 = vmul.f32 %v1134, %v3187
      %v5418 = vmul.f32 %v1136, %v3189
      %v5419 = vmul.f32 %v1140, %v3193
      %v5420 = vmul.f32 %v1142, %v3195
      %v5421 = vmul.f32 %v1144, %v3197
      %v5422 = vmul.f32 %v1146, %v3199
      %v5423 = vadd.f32 %v5391, %v5393
      %v5424 = vadd.f32 %v5423, %v5395
      %v5425 = vadd.f32 %v5424, %v5397
      %v5426 = vadd.f32 %v5425, %v5399
      %v5427 = vadd.f32 %v5426, %v5401
      %v5428 = vadd.f32 %v5427, %v5403
      %v5429 = vadd.f32 %v5428, %v5405
      %v5430 = vadd.f32 %v5429, %v5407
      %v5431 = vadd.f32 %v5430, %v5409
      %v5432 = vadd.f32 %v5431, %v5411
      %v5433 = vadd.f32 %v5432, %v5413
      %v5434 = vadd.f32 %v5433, %v5415
      %v5435 = vadd.f32 %v5434, %v5417
      %v5436 = vadd.f32 %v5435, %v5419
      %v5437 = vadd.f32 %v5436, %v5421
      %v5438 = vrot.slane %v5437, 4
      %v5439 = vadd.f32 %v5437, %v5438
      %v5440 = vrot.slane %v5439, 2
      %v5441 = vadd.f32 %v5439, %v5440
      %v5442 = vrot.slane %v5441, 1
      %v5443 = vadd.f32 %v5441, %v5442
      %v5444 = vadd.f32 %v5392, %v5394
      %v5445 = vadd.f32 %v5444, %v5396
      %v5446 = vadd.f32 %v5445, %v5398
      %v5447 = vadd.f32 %v5446, %v5400
      %v5448 = vadd.f32 %v5447, %v5402
      %v5449 = vadd.f32 %v5448, %v5404
      %v5450 = vadd.f32 %v5449, %v5406
      %v5451 = vadd.f32 %v5450, %v5408
      %v5452 = vadd.f32 %v5451, %v5410
      %v5453 = vadd.f32 %v5452, %v5412
      %v5454 = vadd.f32 %v5453, %v5414
      %v5455 = vadd.f32 %v5454, %v5416
      %v5456 = vadd.f32 %v5455, %v5418
      %v5457 = vadd.f32 %v5456, %v5420
      %v5458 = vadd.f32 %v5457, %v5422
      %v5459 = vrot.slane %v5458, 4
      %v5460 = vadd.f32 %v5458, %v5459
      %v5461 = vrot.slane %v5460, 2
      %v5462 = vadd.f32 %v5460, %v5461
      %v5463 = vrot.slane %v5462, 1
      %v5464 = vadd.f32 %v5462, %v5463
      %v5465 = vmul.f32 %v1070, %v3669
      %v5466 = vmul.f32 %v1072, %v3671
      %v5467 = vmul.f32 %v1074, %v3673
      %v5468 = vmul.f32 %v1076, %v3675
      %v5469 = vmul.f32 %v1080, %v3679
      %v5470 = vmul.f32 %v1082, %v3681
      %v5471 = vmul.f32 %v1084, %v3683
      %v5472 = vmul.f32 %v1086, %v3685
      %v5473 = vmul.f32 %v1090, %v3689
      %v5474 = vmul.f32 %v1092, %v3691
      %v5475 = vmul.f32 %v1094, %v3693
      %v5476 = vmul.f32 %v1096, %v3695
      %v5477 = vmul.f32 %v1100, %v3699
      %v5478 = vmul.f32 %v1102, %v3701
      %v5479 = vmul.f32 %v1104, %v3703
      %v5480 = vmul.f32 %v1106, %v3705
      %v5481 = vmul.f32 %v1110, %v3709
      %v5482 = vmul.f32 %v1112, %v3711
      %v5483 = vmul.f32 %v1114, %v3713
      %v5484 = vmul.f32 %v1116, %v3715
      %v5485 = vmul.f32 %v1120, %v3719
      %v5486 = vmul.f32 %v1122, %v3721
      %v5487 = vmul.f32 %v1124, %v3723
      %v5488 = vmul.f32 %v1126, %v3725
      %v5489 = vmul.f32 %v1130, %v3729
      %v5490 = vmul.f32 %v1132, %v3731
      %v5491 = vmul.f32 %v1134, %v3733
      %v5492 = vmul.f32 %v1136, %v3735
      %v5493 = vmul.f32 %v1140, %v3739
      %v5494 = vmul.f32 %v1142, %v3741
      %v5495 = vmul.f32 %v1144, %v3743
      %v5496 = vmul.f32 %v1146, %v3745
      %v5497 = vadd.f32 %v5465, %v5467
      %v5498 = vadd.f32 %v5497, %v5469
      %v5499 = vadd.f32 %v5498, %v5471
      %v5500 = vadd.f32 %v5499, %v5473
      %v5501 = vadd.f32 %v5500, %v5475
      %v5502 = vadd.f32 %v5501, %v5477
      %v5503 = vadd.f32 %v5502, %v5479
      %v5504 = vadd.f32 %v5503, %v5481
      %v5505 = vadd.f32 %v5504, %v5483
      %v5506 = vadd.f32 %v5505, %v5485
      %v5507 = vadd.f32 %v5506, %v5487
      %v5508 = vadd.f32 %v5507, %v5489
      %v5509 = vadd.f32 %v5508, %v5491
      %v5510 = vadd.f32 %v5509, %v5493
      %v5511 = vadd.f32 %v5510, %v5495
      %v5512 = vrot.slane %v5511, 4
      %v5513 = vadd.f32 %v5511, %v5512
      %v5514 = vrot.slane %v5513, 2
      %v5515 = vadd.f32 %v5513, %v5514
      %v5516 = vrot.slane %v5515, 1
      %v5517 = vadd.f32 %v5515, %v5516
      %v5518 = vadd.f32 %v5466, %v5468
      %v5519 = vadd.f32 %v5518, %v5470
      %v5520 = vadd.f32 %v5519, %v5472
      %v5521 = vadd.f32 %v5520, %v5474
      %v5522 = vadd.f32 %v5521, %v5476
      %v5523 = vadd.f32 %v5522, %v5478
      %v5524 = vadd.f32 %v5523, %v5480
      %v5525 = vadd.f32 %v5524, %v5482
      %v5526 = vadd.f32 %v5525, %v5484
      %v5527 = vadd.f32 %v5526, %v5486
      %v5528 = vadd.f32 %v5527, %v5488
      %v5529 = vadd.f32 %v5528, %v5490
      %v5530 = vadd.f32 %v5529, %v5492
      %v5531 = vadd.f32 %v5530, %v5494
      %v5532 = vadd.f32 %v5531, %v5496
      %v5533 = vrot.slane %v5532, 4
      %v5534 = vadd.f32 %v5532, %v5533
      %v5535 = vrot.slane %v5534, 2
      %v5536 = vadd.f32 %v5534, %v5535
      %v5537 = vrot.slane %v5536, 1
      %v5538 = vadd.f32 %v5536, %v5537
      %v5539 = vmul.f32 %v1070, %v4215
      %v5540 = vmul.f32 %v1072, %v4217
      %v5541 = vmul.f32 %v1074, %v4219
      %v5542 = vmul.f32 %v1076, %v4221
      %v5543 = vmul.f32 %v1080, %v4225
      %v5544 = vmul.f32 %v1082, %v4227
      %v5545 = vmul.f32 %v1084, %v4229
      %v5546 = vmul.f32 %v1086, %v4231
      %v5547 = vmul.f32 %v1090, %v4235
      %v5548 = vmul.f32 %v1092, %v4237
      %v5549 = vmul.f32 %v1094, %v4239
      %v5550 = vmul.f32 %v1096, %v4241
      %v5551 = vmul.f32 %v1100, %v4245
      %v5552 = vmul.f32 %v1102, %v4247
      %v5553 = vmul.f32 %v1104, %v4249
      %v5554 = vmul.f32 %v1106, %v4251
      %v5555 = vmul.f32 %v1110, %v4255
      %v5556 = vmul.f32 %v1112, %v4257
      %v5557 = vmul.f32 %v1114, %v4259
      %v5558 = vmul.f32 %v1116, %v4261
      %v5559 = vmul.f32 %v1120, %v4265
      %v5560 = vmul.f32 %v1122, %v4267
      %v5561 = vmul.f32 %v1124, %v4269
      %v5562 = vmul.f32 %v1126, %v4271
      %v5563 = vmul.f32 %v1130, %v4275
      %v5564 = vmul.f32 %v1132, %v4277
      %v5565 = vmul.f32 %v1134, %v4279
      %v5566 = vmul.f32 %v1136, %v4281
      %v5567 = vmul.f32 %v1140, %v4285
      %v5568 = vmul.f32 %v1142, %v4287
      %v5569 = vmul.f32 %v1144, %v4289
      %v5570 = vmul.f32 %v1146, %v4291
      %v5571 = vadd.f32 %v5539, %v5541
      %v5572 = vadd.f32 %v5571, %v5543
      %v5573 = vadd.f32 %v5572, %v5545
      %v5574 = vadd.f32 %v5573, %v5547
      %v5575 = vadd.f32 %v5574, %v5549
      %v5576 = vadd.f32 %v5575, %v5551
      %v5577 = vadd.f32 %v5576, %v5553
      %v5578 = vadd.f32 %v5577, %v5555
      %v5579 = vadd.f32 %v5578, %v5557
      %v5580 = vadd.f32 %v5579, %v5559
      %v5581 = vadd.f32 %v5580, %v5561
      %v5582 = vadd.f32 %v5581, %v5563
      %v5583 = vadd.f32 %v5582, %v5565
      %v5584 = vadd.f32 %v5583, %v5567
      %v5585 = vadd.f32 %v5584, %v5569
      %v5586 = vrot.slane %v5585, 4
      %v5587 = vadd.f32 %v5585, %v5586
      %v5588 = vrot.slane %v5587, 2
      %v5589 = vadd.f32 %v5587, %v5588
      %v5590 = vrot.slane %v5589, 1
      %v5591 = vadd.f32 %v5589, %v5590
      %v5592 = vadd.f32 %v5540, %v5542
      %v5593 = vadd.f32 %v5592, %v5544
      %v5594 = vadd.f32 %v5593, %v5546
      %v5595 = vadd.f32 %v5594, %v5548
      %v5596 = vadd.f32 %v5595, %v5550
      %v5597 = vadd.f32 %v5596, %v5552
      %v5598 = vadd.f32 %v5597, %v5554
      %v5599 = vadd.f32 %v5598, %v5556
      %v5600 = vadd.f32 %v5599, %v5558
      %v5601 = vadd.f32 %v5600, %v5560
      %v5602 = vadd.f32 %v5601, %v5562
      %v5603 = vadd.f32 %v5602, %v5564
      %v5604 = vadd.f32 %v5603, %v5566
      %v5605 = vadd.f32 %v5604, %v5568
      %v5606 = vadd.f32 %v5605, %v5570
      %v5607 = vrot.slane %v5606, 4
      %v5608 = vadd.f32 %v5606, %v5607
      %v5609 = vrot.slane %v5608, 2
      %v5610 = vadd.f32 %v5608, %v5609
      %v5611 = vrot.slane %v5610, 1
      %v5612 = vadd.f32 %v5610, %v5611
      %v5613 = vsel %vm4828, %v5295, %v5369
      %v5614 = vsel %vm4828, %v5316, %v5390
      %v5615 = vsel %vm4831, %v5613, %v5443
      %v5616 = vsel %vm4831, %v5614, %v5464
      %v5617 = vsel %vm4834, %v5615, %v5517
      %v5618 = vsel %vm4834, %v5616, %v5538
      %v5619 = vsel %vm4837, %v5617, %v5591
      %v5620 = vsel %vm4837, %v5618, %v5612
      %v5621 = vmul.f32 %v5619, 0.088388346
      %v5622 = vmul.f32 %v5620, 0.088388346
      %v5623 = vsel %vm4457, %v5621, -1e+30
      %v5624 = vsel %vm4457, %v5622, -1e+30
      %v5625 = vsel %vm4844, %v5623, -inf
      %v5626 = vrot.slane %v5625, 4
      %v5627 = vmax.f32 %v5625, %v5626
      %v5628 = vrot.slane %v5627, 2
      %v5629 = vmax.f32 %v5627, %v5628
      %v5630 = vrot.slane %v5629, 1
      %v5631 = vmax.f32 %v5629, %v5630
      %v5632 = vsel %vm4844, %v5624, -inf
      %v5633 = vrot.slane %v5632, 4
      %v5634 = vmax.f32 %v5632, %v5633
      %v5635 = vrot.slane %v5634, 2
      %v5636 = vmax.f32 %v5634, %v5635
      %v5637 = vrot.slane %v5636, 1
      %v5638 = vmax.f32 %v5636, %v5637
      %v5639 = vsub.f32 %v5623, %v5631
      %v5640 = vsub.f32 %v5624, %v5638
      %v5641 = vmul.f32 %v5639, 1.442695
      %v5642 = vpow.pop %v5641
      %v5643 = vmul.f32 %v5640, 1.442695
      %v5644 = vpow.pop %v5643
      %v5645 = vsel %vm4844, %v5642, 0.0
      %v5646 = vrot.slane %v5645, 4
      %v5647 = vadd.f32 %v5645, %v5646
      %v5648 = vrot.slane %v5647, 2
      %v5649 = vadd.f32 %v5647, %v5648
      %v5650 = vrot.slane %v5649, 1
      %v5651 = vadd.f32 %v5649, %v5650
      %v5652 = vsel %vm4844, %v5644, 0.0
      %v5653 = vrot.slane %v5652, 4
      %v5654 = vadd.f32 %v5652, %v5653
      %v5655 = vrot.slane %v5654, 2
      %v5656 = vadd.f32 %v5654, %v5655
      %v5657 = vrot.slane %v5656, 1
      %v5658 = vadd.f32 %v5656, %v5657
      %v5659 = vrcp.pop %v5651
      %v5660 = vrcp.pop %v5658
      %v5661 = vmul.f32 %v5642, %v5659
      %v5662 = vmul.f32 %v5644, %v5660
      %v5663 = vlaneseq
      %v5664 = vshrl.u32 %v5663, 7
      %v5665 = vsub.s32 0, %v5664
      %v5666 = vrot.slane %v5661, %v5665
      %v5667 = vlaneseq
      %v5668 = vshrl.u32 %v5667, 7
      %v5669 = vsub.s32 0, %v5668
      %v5670 = vrot.slane %v5662, %v5669
      %v5671 = vmul.f32 %v5666, %v2191
      %v5672 = vmul.f32 %v5670, %v2193
      %v5673 = vmul.f32 %v5666, %v2195
      %v5674 = vmul.f32 %v5670, %v2197
      %v5675 = vmul.f32 %v5666, %v2201
      %v5676 = vmul.f32 %v5670, %v2203
      %v5677 = vmul.f32 %v5666, %v2205
      %v5678 = vmul.f32 %v5670, %v2207
      %v5679 = vmul.f32 %v5666, %v2211
      %v5680 = vmul.f32 %v5670, %v2213
      %v5681 = vmul.f32 %v5666, %v2215
      %v5682 = vmul.f32 %v5670, %v2217
      %v5683 = vmul.f32 %v5666, %v2221
      %v5684 = vmul.f32 %v5670, %v2223
      %v5685 = vmul.f32 %v5666, %v2225
      %v5686 = vmul.f32 %v5670, %v2227
      %v5687 = vmul.f32 %v5666, %v2231
      %v5688 = vmul.f32 %v5670, %v2233
      %v5689 = vmul.f32 %v5666, %v2235
      %v5690 = vmul.f32 %v5670, %v2237
      %v5691 = vmul.f32 %v5666, %v2241
      %v5692 = vmul.f32 %v5670, %v2243
      %v5693 = vmul.f32 %v5666, %v2245
      %v5694 = vmul.f32 %v5670, %v2247
      %v5695 = vmul.f32 %v5666, %v2251
      %v5696 = vmul.f32 %v5670, %v2253
      %v5697 = vmul.f32 %v5666, %v2255
      %v5698 = vmul.f32 %v5670, %v2257
      %v5699 = vmul.f32 %v5666, %v2261
      %v5700 = vmul.f32 %v5670, %v2263
      %v5701 = vmul.f32 %v5666, %v2265
      %v5702 = vmul.f32 %v5670, %v2267
      %v5703 = vadd.f32 %v5671, 0.0
      %v5704 = vadd.f32 %v5672, 0.0
      %v5705 = vadd.f32 %v5673, 0.0
      %v5706 = vadd.f32 %v5674, 0.0
      %v5707 = vadd.f32 %v5675, 0.0
      %v5708 = vadd.f32 %v5676, 0.0
      %v5709 = vadd.f32 %v5677, 0.0
      %v5710 = vadd.f32 %v5678, 0.0
      %v5711 = vadd.f32 %v5679, 0.0
      %v5712 = vadd.f32 %v5680, 0.0
      %v5713 = vadd.f32 %v5681, 0.0
      %v5714 = vadd.f32 %v5682, 0.0
      %v5715 = vadd.f32 %v5683, 0.0
      %v5716 = vadd.f32 %v5684, 0.0
      %v5717 = vadd.f32 %v5685, 0.0
      %v5718 = vadd.f32 %v5686, 0.0
      %v5719 = vadd.f32 %v5687, 0.0
      %v5720 = vadd.f32 %v5688, 0.0
      %v5721 = vadd.f32 %v5689, 0.0
      %v5722 = vadd.f32 %v5690, 0.0
      %v5723 = vadd.f32 %v5691, 0.0
      %v5724 = vadd.f32 %v5692, 0.0
      %v5725 = vadd.f32 %v5693, 0.0
      %v5726 = vadd.f32 %v5694, 0.0
      %v5727 = vadd.f32 %v5695, 0.0
      %v5728 = vadd.f32 %v5696, 0.0
      %v5729 = vadd.f32 %v5697, 0.0
      %v5730 = vadd.f32 %v5698, 0.0
      %v5731 = vadd.f32 %v5699, 0.0
      %v5732 = vadd.f32 %v5700, 0.0
      %v5733 = vadd.f32 %v5701, 0.0
      %v5734 = vadd.f32 %v5702, 0.0
      %v5735 = vlaneseq
      %v5736 = vshrl.u32 %v5735, 7
      %v5737 = vsub.s32 1, %v5736
      %v5738 = vrot.slane %v5661, %v5737
      %v5739 = vlaneseq
      %v5740 = vshrl.u32 %v5739, 7
      %v5741 = vsub.s32 1, %v5740
      %v5742 = vrot.slane %v5662, %v5741
      %v5743 = vmul.f32 %v5738, %v2737
      %v5744 = vmul.f32 %v5742, %v2739
      %v5745 = vmul.f32 %v5738, %v2741
      %v5746 = vmul.f32 %v5742, %v2743
      %v5747 = vmul.f32 %v5738, %v2747
      %v5748 = vmul.f32 %v5742, %v2749
      %v5749 = vmul.f32 %v5738, %v2751
      %v5750 = vmul.f32 %v5742, %v2753
      %v5751 = vmul.f32 %v5738, %v2757
      %v5752 = vmul.f32 %v5742, %v2759
      %v5753 = vmul.f32 %v5738, %v2761
      %v5754 = vmul.f32 %v5742, %v2763
      %v5755 = vmul.f32 %v5738, %v2767
      %v5756 = vmul.f32 %v5742, %v2769
      %v5757 = vmul.f32 %v5738, %v2771
      %v5758 = vmul.f32 %v5742, %v2773
      %v5759 = vmul.f32 %v5738, %v2777
      %v5760 = vmul.f32 %v5742, %v2779
      %v5761 = vmul.f32 %v5738, %v2781
      %v5762 = vmul.f32 %v5742, %v2783
      %v5763 = vmul.f32 %v5738, %v2787
      %v5764 = vmul.f32 %v5742, %v2789
      %v5765 = vmul.f32 %v5738, %v2791
      %v5766 = vmul.f32 %v5742, %v2793
      %v5767 = vmul.f32 %v5738, %v2797
      %v5768 = vmul.f32 %v5742, %v2799
      %v5769 = vmul.f32 %v5738, %v2801
      %v5770 = vmul.f32 %v5742, %v2803
      %v5771 = vmul.f32 %v5738, %v2807
      %v5772 = vmul.f32 %v5742, %v2809
      %v5773 = vmul.f32 %v5738, %v2811
      %v5774 = vmul.f32 %v5742, %v2813
      %v5775 = vadd.f32 %v5703, %v5743
      %v5776 = vadd.f32 %v5704, %v5744
      %v5777 = vadd.f32 %v5705, %v5745
      %v5778 = vadd.f32 %v5706, %v5746
      %v5779 = vadd.f32 %v5707, %v5747
      %v5780 = vadd.f32 %v5708, %v5748
      %v5781 = vadd.f32 %v5709, %v5749
      %v5782 = vadd.f32 %v5710, %v5750
      %v5783 = vadd.f32 %v5711, %v5751
      %v5784 = vadd.f32 %v5712, %v5752
      %v5785 = vadd.f32 %v5713, %v5753
      %v5786 = vadd.f32 %v5714, %v5754
      %v5787 = vadd.f32 %v5715, %v5755
      %v5788 = vadd.f32 %v5716, %v5756
      %v5789 = vadd.f32 %v5717, %v5757
      %v5790 = vadd.f32 %v5718, %v5758
      %v5791 = vadd.f32 %v5719, %v5759
      %v5792 = vadd.f32 %v5720, %v5760
      %v5793 = vadd.f32 %v5721, %v5761
      %v5794 = vadd.f32 %v5722, %v5762
      %v5795 = vadd.f32 %v5723, %v5763
      %v5796 = vadd.f32 %v5724, %v5764
      %v5797 = vadd.f32 %v5725, %v5765
      %v5798 = vadd.f32 %v5726, %v5766
      %v5799 = vadd.f32 %v5727, %v5767
      %v5800 = vadd.f32 %v5728, %v5768
      %v5801 = vadd.f32 %v5729, %v5769
      %v5802 = vadd.f32 %v5730, %v5770
      %v5803 = vadd.f32 %v5731, %v5771
      %v5804 = vadd.f32 %v5732, %v5772
      %v5805 = vadd.f32 %v5733, %v5773
      %v5806 = vadd.f32 %v5734, %v5774
      %v5807 = vlaneseq
      %v5808 = vshrl.u32 %v5807, 7
      %v5809 = vsub.s32 2, %v5808
      %v5810 = vrot.slane %v5661, %v5809
      %v5811 = vlaneseq
      %v5812 = vshrl.u32 %v5811, 7
      %v5813 = vsub.s32 2, %v5812
      %v5814 = vrot.slane %v5662, %v5813
      %v5815 = vmul.f32 %v5810, %v3283
      %v5816 = vmul.f32 %v5814, %v3285
      %v5817 = vmul.f32 %v5810, %v3287
      %v5818 = vmul.f32 %v5814, %v3289
      %v5819 = vmul.f32 %v5810, %v3293
      %v5820 = vmul.f32 %v5814, %v3295
      %v5821 = vmul.f32 %v5810, %v3297
      %v5822 = vmul.f32 %v5814, %v3299
      %v5823 = vmul.f32 %v5810, %v3303
      %v5824 = vmul.f32 %v5814, %v3305
      %v5825 = vmul.f32 %v5810, %v3307
      %v5826 = vmul.f32 %v5814, %v3309
      %v5827 = vmul.f32 %v5810, %v3313
      %v5828 = vmul.f32 %v5814, %v3315
      %v5829 = vmul.f32 %v5810, %v3317
      %v5830 = vmul.f32 %v5814, %v3319
      %v5831 = vmul.f32 %v5810, %v3323
      %v5832 = vmul.f32 %v5814, %v3325
      %v5833 = vmul.f32 %v5810, %v3327
      %v5834 = vmul.f32 %v5814, %v3329
      %v5835 = vmul.f32 %v5810, %v3333
      %v5836 = vmul.f32 %v5814, %v3335
      %v5837 = vmul.f32 %v5810, %v3337
      %v5838 = vmul.f32 %v5814, %v3339
      %v5839 = vmul.f32 %v5810, %v3343
      %v5840 = vmul.f32 %v5814, %v3345
      %v5841 = vmul.f32 %v5810, %v3347
      %v5842 = vmul.f32 %v5814, %v3349
      %v5843 = vmul.f32 %v5810, %v3353
      %v5844 = vmul.f32 %v5814, %v3355
      %v5845 = vmul.f32 %v5810, %v3357
      %v5846 = vmul.f32 %v5814, %v3359
      %v5847 = vadd.f32 %v5775, %v5815
      %v5848 = vadd.f32 %v5776, %v5816
      %v5849 = vadd.f32 %v5777, %v5817
      %v5850 = vadd.f32 %v5778, %v5818
      %v5851 = vadd.f32 %v5779, %v5819
      %v5852 = vadd.f32 %v5780, %v5820
      %v5853 = vadd.f32 %v5781, %v5821
      %v5854 = vadd.f32 %v5782, %v5822
      %v5855 = vadd.f32 %v5783, %v5823
      %v5856 = vadd.f32 %v5784, %v5824
      %v5857 = vadd.f32 %v5785, %v5825
      %v5858 = vadd.f32 %v5786, %v5826
      %v5859 = vadd.f32 %v5787, %v5827
      %v5860 = vadd.f32 %v5788, %v5828
      %v5861 = vadd.f32 %v5789, %v5829
      %v5862 = vadd.f32 %v5790, %v5830
      %v5863 = vadd.f32 %v5791, %v5831
      %v5864 = vadd.f32 %v5792, %v5832
      %v5865 = vadd.f32 %v5793, %v5833
      %v5866 = vadd.f32 %v5794, %v5834
      %v5867 = vadd.f32 %v5795, %v5835
      %v5868 = vadd.f32 %v5796, %v5836
      %v5869 = vadd.f32 %v5797, %v5837
      %v5870 = vadd.f32 %v5798, %v5838
      %v5871 = vadd.f32 %v5799, %v5839
      %v5872 = vadd.f32 %v5800, %v5840
      %v5873 = vadd.f32 %v5801, %v5841
      %v5874 = vadd.f32 %v5802, %v5842
      %v5875 = vadd.f32 %v5803, %v5843
      %v5876 = vadd.f32 %v5804, %v5844
      %v5877 = vadd.f32 %v5805, %v5845
      %v5878 = vadd.f32 %v5806, %v5846
      %v5879 = vlaneseq
      %v5880 = vshrl.u32 %v5879, 7
      %v5881 = vsub.s32 3, %v5880
      %v5882 = vrot.slane %v5661, %v5881
      %v5883 = vlaneseq
      %v5884 = vshrl.u32 %v5883, 7
      %v5885 = vsub.s32 3, %v5884
      %v5886 = vrot.slane %v5662, %v5885
      %v5887 = vmul.f32 %v5882, %v3829
      %v5888 = vmul.f32 %v5886, %v3831
      %v5889 = vmul.f32 %v5882, %v3833
      %v5890 = vmul.f32 %v5886, %v3835
      %v5891 = vmul.f32 %v5882, %v3839
      %v5892 = vmul.f32 %v5886, %v3841
      %v5893 = vmul.f32 %v5882, %v3843
      %v5894 = vmul.f32 %v5886, %v3845
      %v5895 = vmul.f32 %v5882, %v3849
      %v5896 = vmul.f32 %v5886, %v3851
      %v5897 = vmul.f32 %v5882, %v3853
      %v5898 = vmul.f32 %v5886, %v3855
      %v5899 = vmul.f32 %v5882, %v3859
      %v5900 = vmul.f32 %v5886, %v3861
      %v5901 = vmul.f32 %v5882, %v3863
      %v5902 = vmul.f32 %v5886, %v3865
      %v5903 = vmul.f32 %v5882, %v3869
      %v5904 = vmul.f32 %v5886, %v3871
      %v5905 = vmul.f32 %v5882, %v3873
      %v5906 = vmul.f32 %v5886, %v3875
      %v5907 = vmul.f32 %v5882, %v3879
      %v5908 = vmul.f32 %v5886, %v3881
      %v5909 = vmul.f32 %v5882, %v3883
      %v5910 = vmul.f32 %v5886, %v3885
      %v5911 = vmul.f32 %v5882, %v3889
      %v5912 = vmul.f32 %v5886, %v3891
      %v5913 = vmul.f32 %v5882, %v3893
      %v5914 = vmul.f32 %v5886, %v3895
      %v5915 = vmul.f32 %v5882, %v3899
      %v5916 = vmul.f32 %v5886, %v3901
      %v5917 = vmul.f32 %v5882, %v3903
      %v5918 = vmul.f32 %v5886, %v3905
      %v5919 = vadd.f32 %v5847, %v5887
      %v5920 = vadd.f32 %v5848, %v5888
      %v5921 = vadd.f32 %v5849, %v5889
      %v5922 = vadd.f32 %v5850, %v5890
      %v5923 = vadd.f32 %v5851, %v5891
      %v5924 = vadd.f32 %v5852, %v5892
      %v5925 = vadd.f32 %v5853, %v5893
      %v5926 = vadd.f32 %v5854, %v5894
      %v5927 = vadd.f32 %v5855, %v5895
      %v5928 = vadd.f32 %v5856, %v5896
      %v5929 = vadd.f32 %v5857, %v5897
      %v5930 = vadd.f32 %v5858, %v5898
      %v5931 = vadd.f32 %v5859, %v5899
      %v5932 = vadd.f32 %v5860, %v5900
      %v5933 = vadd.f32 %v5861, %v5901
      %v5934 = vadd.f32 %v5862, %v5902
      %v5935 = vadd.f32 %v5863, %v5903
      %v5936 = vadd.f32 %v5864, %v5904
      %v5937 = vadd.f32 %v5865, %v5905
      %v5938 = vadd.f32 %v5866, %v5906
      %v5939 = vadd.f32 %v5867, %v5907
      %v5940 = vadd.f32 %v5868, %v5908
      %v5941 = vadd.f32 %v5869, %v5909
      %v5942 = vadd.f32 %v5870, %v5910
      %v5943 = vadd.f32 %v5871, %v5911
      %v5944 = vadd.f32 %v5872, %v5912
      %v5945 = vadd.f32 %v5873, %v5913
      %v5946 = vadd.f32 %v5874, %v5914
      %v5947 = vadd.f32 %v5875, %v5915
      %v5948 = vadd.f32 %v5876, %v5916
      %v5949 = vadd.f32 %v5877, %v5917
      %v5950 = vadd.f32 %v5878, %v5918
      %v5951 = vlaneseq
      %v5952 = vshrl.u32 %v5951, 7
      %v5953 = vsub.s32 4, %v5952
      %v5954 = vrot.slane %v5661, %v5953
      %v5955 = vlaneseq
      %v5956 = vshrl.u32 %v5955, 7
      %v5957 = vsub.s32 4, %v5956
      %v5958 = vrot.slane %v5662, %v5957
      %v5959 = vmul.f32 %v5954, %v4375
      %v5960 = vmul.f32 %v5958, %v4377
      %v5961 = vmul.f32 %v5954, %v4379
      %v5962 = vmul.f32 %v5958, %v4381
      %v5963 = vmul.f32 %v5954, %v4385
      %v5964 = vmul.f32 %v5958, %v4387
      %v5965 = vmul.f32 %v5954, %v4389
      %v5966 = vmul.f32 %v5958, %v4391
      %v5967 = vmul.f32 %v5954, %v4395
      %v5968 = vmul.f32 %v5958, %v4397
      %v5969 = vmul.f32 %v5954, %v4399
      %v5970 = vmul.f32 %v5958, %v4401
      %v5971 = vmul.f32 %v5954, %v4405
      %v5972 = vmul.f32 %v5958, %v4407
      %v5973 = vmul.f32 %v5954, %v4409
      %v5974 = vmul.f32 %v5958, %v4411
      %v5975 = vmul.f32 %v5954, %v4415
      %v5976 = vmul.f32 %v5958, %v4417
      %v5977 = vmul.f32 %v5954, %v4419
      %v5978 = vmul.f32 %v5958, %v4421
      %v5979 = vmul.f32 %v5954, %v4425
      %v5980 = vmul.f32 %v5958, %v4427
      %v5981 = vmul.f32 %v5954, %v4429
      %v5982 = vmul.f32 %v5958, %v4431
      %v5983 = vmul.f32 %v5954, %v4435
      %v5984 = vmul.f32 %v5958, %v4437
      %v5985 = vmul.f32 %v5954, %v4439
      %v5986 = vmul.f32 %v5958, %v4441
      %v5987 = vmul.f32 %v5954, %v4445
      %v5988 = vmul.f32 %v5958, %v4447
      %v5989 = vmul.f32 %v5954, %v4449
      %v5990 = vmul.f32 %v5958, %v4451
      %v5991 = vadd.f32 %v5919, %v5959
      %v5992 = vadd.f32 %v5920, %v5960
      %v5993 = vadd.f32 %v5921, %v5961
      %v5994 = vadd.f32 %v5922, %v5962
      %v5995 = vadd.f32 %v5923, %v5963
      %v5996 = vadd.f32 %v5924, %v5964
      %v5997 = vadd.f32 %v5925, %v5965
      %v5998 = vadd.f32 %v5926, %v5966
      %v5999 = vadd.f32 %v5927, %v5967
      %v6000 = vadd.f32 %v5928, %v5968
      %v6001 = vadd.f32 %v5929, %v5969
      %v6002 = vadd.f32 %v5930, %v5970
      %v6003 = vadd.f32 %v5931, %v5971
      %v6004 = vadd.f32 %v5932, %v5972
      %v6005 = vadd.f32 %v5933, %v5973
      %v6006 = vadd.f32 %v5934, %v5974
      %v6007 = vadd.f32 %v5935, %v5975
      %v6008 = vadd.f32 %v5936, %v5976
      %v6009 = vadd.f32 %v5937, %v5977
      %v6010 = vadd.f32 %v5938, %v5978
      %v6011 = vadd.f32 %v5939, %v5979
      %v6012 = vadd.f32 %v5940, %v5980
      %v6013 = vadd.f32 %v5941, %v5981
      %v6014 = vadd.f32 %v5942, %v5982
      %v6015 = vadd.f32 %v5943, %v5983
      %v6016 = vadd.f32 %v5944, %v5984
      %v6017 = vadd.f32 %v5945, %v5985
      %v6018 = vadd.f32 %v5946, %v5986
      %v6019 = vadd.f32 %v5947, %v5987
      %v6020 = vadd.f32 %v5948, %v5988
      %v6021 = vadd.f32 %v5949, %v5989
      %v6022 = vadd.f32 %v5950, %v5990
      %v6023 = vpack.c.bf16 %v5213, %v5211
      %v6024 = vpack.c.bf16 %v5214, %v5212
      %v6025 = vpack.c.bf16 %v5217, %v5215
      %v6026 = vpack.c.bf16 %v5218, %v5216
      %v6027 = vpack.c.bf16 %v5221, %v5219
      %v6028 = vpack.c.bf16 %v5222, %v5220
      %v6029 = vpack.c.bf16 %v5225, %v5223
      %v6030 = vpack.c.bf16 %v5226, %v5224
      %v6031 = vpack.c.bf16 %v5229, %v5227
      %v6032 = vpack.c.bf16 %v5230, %v5228
      %v6033 = vpack.c.bf16 %v5233, %v5231
      %v6034 = vpack.c.bf16 %v5234, %v5232
      %v6035 = vpack.c.bf16 %v5237, %v5235
      %v6036 = vpack.c.bf16 %v5238, %v5236
      %v6037 = vpack.c.bf16 %v5241, %v5239
      %v6038 = vpack.c.bf16 %v5242, %v5240
      %v6039 = vpack.c.bf16 %v5993, %v5991
      %v6040 = vpack.c.bf16 %v5994, %v5992
      %v6041 = vpack.c.bf16 %v5997, %v5995
      %v6042 = vpack.c.bf16 %v5998, %v5996
      %v6043 = vpack.c.bf16 %v6001, %v5999
      %v6044 = vpack.c.bf16 %v6002, %v6000
      %v6045 = vpack.c.bf16 %v6005, %v6003
      %v6046 = vpack.c.bf16 %v6006, %v6004
      %v6047 = vpack.c.bf16 %v6009, %v6007
      %v6048 = vpack.c.bf16 %v6010, %v6008
      %v6049 = vpack.c.bf16 %v6013, %v6011
      %v6050 = vpack.c.bf16 %v6014, %v6012
      %v6051 = vpack.c.bf16 %v6017, %v6015
      %v6052 = vpack.c.bf16 %v6018, %v6016
      %v6053 = vpack.c.bf16 %v6021, %v6019
      %v6054 = vpack.c.bf16 %v6022, %v6020
      %v6055 = vld [vmem:[%s4] sm:$0xff]
      %v6056 = vld [vmem:[%s4 + $0x8] sm:$0xff]
      %v6057 = vld [vmem:[%s4 + $0x10] sm:$0xff]
      %v6058 = vld [vmem:[%s4 + $0x18] sm:$0xff]
      %v6059 = vld [vmem:[%s4 + $0x20] sm:$0xff]
      %v6060 = vld [vmem:[%s4 + $0x28] sm:$0xff]
      %v6061 = vld [vmem:[%s4 + $0x30] sm:$0xff]
      %v6062 = vld [vmem:[%s4 + $0x38] sm:$0xff]
      %v6063 = vld [vmem:[%s4 + $0x40] sm:$0xff]
      %v6064 = vld [vmem:[%s4 + $0x48] sm:$0xff]
      %v6065 = vld [vmem:[%s4 + $0x50] sm:$0xff]
      %v6066 = vld [vmem:[%s4 + $0x58] sm:$0xff]
      %v6067 = vld [vmem:[%s4 + $0x60] sm:$0xff]
      %v6068 = vld [vmem:[%s4 + $0x68] sm:$0xff]
      %v6069 = vld [vmem:[%s4 + $0x70] sm:$0xff]
      %v6070 = vld [vmem:[%s4 + $0x78] sm:$0xff]
      %v6071 = vld [vmem:[%s4 + $0x80] sm:$0xff]
      %v6072 = vld [vmem:[%s4 + $0x88] sm:$0xff]
      %v6073 = vld [vmem:[%s4 + $0x90] sm:$0xff]
      %v6074 = vld [vmem:[%s4 + $0x98] sm:$0xff]
      %v6075 = vld [vmem:[%s4 + $0xa0] sm:$0xff]
      %v6076 = vld [vmem:[%s4 + $0xa8] sm:$0xff]
      %v6077 = vld [vmem:[%s4 + $0xb0] sm:$0xff]
      %v6078 = vld [vmem:[%s4 + $0xb8] sm:$0xff]
      %v6079 = vld [vmem:[%s4 + $0xc0] sm:$0xff]
      %v6080 = vld [vmem:[%s4 + $0xc8] sm:$0xff]
      %v6081 = vld [vmem:[%s4 + $0xd0] sm:$0xff]
      %v6082 = vld [vmem:[%s4 + $0xd8] sm:$0xff]
      %v6083 = vld [vmem:[%s4 + $0xe0] sm:$0xff]
      %v6084 = vld [vmem:[%s4 + $0xe8] sm:$0xff]
      %v6085 = vld [vmem:[%s4 + $0xf0] sm:$0xff]
      %v6086 = vld [vmem:[%s4 + $0xf8] sm:$0xff]
      %v6087 = vld [vmem:[%s8] sm:$0xff]
      %v6088 = vld [vmem:[%s8 + $0x8] sm:$0xff]
      %v6089 = vld [vmem:[%s8 + $0x10] sm:$0xff]
      %v6090 = vld [vmem:[%s8 + $0x18] sm:$0xff]
      %v6091 = vld [vmem:[%s8 + $0x20] sm:$0xff]
      %v6092 = vld [vmem:[%s8 + $0x28] sm:$0xff]
      %v6093 = vld [vmem:[%s8 + $0x30] sm:$0xff]
      %v6094 = vld [vmem:[%s8 + $0x38] sm:$0xff]
      %v6095 = vld [vmem:[%s8 + $0x40] sm:$0xff]
      %v6096 = vld [vmem:[%s8 + $0x48] sm:$0xff]
      %v6097 = vld [vmem:[%s8 + $0x50] sm:$0xff]
      %v6098 = vld [vmem:[%s8 + $0x58] sm:$0xff]
      %v6099 = vld [vmem:[%s8 + $0x60] sm:$0xff]
      %v6100 = vld [vmem:[%s8 + $0x68] sm:$0xff]
      %v6101 = vld [vmem:[%s8 + $0x70] sm:$0xff]
      %v6102 = vld [vmem:[%s8 + $0x78] sm:$0xff]
      %v6103 = vld [vmem:[%s8 + $0x80] sm:$0xff]
      %v6104 = vld [vmem:[%s8 + $0x88] sm:$0xff]
      %v6105 = vld [vmem:[%s8 + $0x90] sm:$0xff]
      %v6106 = vld [vmem:[%s8 + $0x98] sm:$0xff]
      %v6107 = vld [vmem:[%s8 + $0xa0] sm:$0xff]
      %v6108 = vld [vmem:[%s8 + $0xa8] sm:$0xff]
      %v6109 = vld [vmem:[%s8 + $0xb0] sm:$0xff]
      %v6110 = vld [vmem:[%s8 + $0xb8] sm:$0xff]
      %v6111 = vld [vmem:[%s8 + $0xc0] sm:$0xff]
      %v6112 = vld [vmem:[%s8 + $0xc8] sm:$0xff]
      %v6113 = vld [vmem:[%s8 + $0xd0] sm:$0xff]
      %v6114 = vld [vmem:[%s8 + $0xd8] sm:$0xff]
      %v6115 = vld [vmem:[%s8 + $0xe0] sm:$0xff]
      %v6116 = vld [vmem:[%s8 + $0xe8] sm:$0xff]
      %v6117 = vld [vmem:[%s8 + $0xf0] sm:$0xff]
      %v6118 = vld [vmem:[%s8 + $0xf8] sm:$0xff]
      %6120 = vset.pattern.permute.xlu0 0
      %6121 = vperm.xlu0 %6120, %v6087
      %v6122 = vpop.permute.xlu0 %6121
      %6125 = vset.pattern.permute.xlu0 0
      %6126 = vperm.xlu0 %6125, %v6088
      %v6127 = vpop.permute.xlu0 %6126
      %6130 = vset.pattern.permute.xlu0 0
      %6131 = vperm.xlu0 %6130, %v6089
      %v6132 = vpop.permute.xlu0 %6131
      %6135 = vset.pattern.permute.xlu0 0
      %6136 = vperm.xlu0 %6135, %v6090
      %v6137 = vpop.permute.xlu0 %6136
      %6140 = vset.pattern.permute.xlu0 0
      %6141 = vperm.xlu0 %6140, %v6091
      %v6142 = vpop.permute.xlu0 %6141
      %6145 = vset.pattern.permute.xlu0 0
      %6146 = vperm.xlu0 %6145, %v6092
      %v6147 = vpop.permute.xlu0 %6146
      %6150 = vset.pattern.permute.xlu0 0
      %6151 = vperm.xlu0 %6150, %v6093
      %v6152 = vpop.permute.xlu0 %6151
      %6155 = vset.pattern.permute.xlu0 0
      %6156 = vperm.xlu0 %6155, %v6094
      %v6157 = vpop.permute.xlu0 %6156
      %6160 = vset.pattern.permute.xlu0 0
      %6161 = vperm.xlu0 %6160, %v6095
      %v6162 = vpop.permute.xlu0 %6161
      %6165 = vset.pattern.permute.xlu0 0
      %6166 = vperm.xlu0 %6165, %v6096
      %v6167 = vpop.permute.xlu0 %6166
      %6170 = vset.pattern.permute.xlu0 0
      %6171 = vperm.xlu0 %6170, %v6097
      %v6172 = vpop.permute.xlu0 %6171
      %6175 = vset.pattern.permute.xlu0 0
      %6176 = vperm.xlu0 %6175, %v6098
      %v6177 = vpop.permute.xlu0 %6176
      %6180 = vset.pattern.permute.xlu0 0
      %6181 = vperm.xlu0 %6180, %v6099
      %v6182 = vpop.permute.xlu0 %6181
      %6185 = vset.pattern.permute.xlu0 0
      %6186 = vperm.xlu0 %6185, %v6100
      %v6187 = vpop.permute.xlu0 %6186
      %6190 = vset.pattern.permute.xlu0 0
      %6191 = vperm.xlu0 %6190, %v6101
      %v6192 = vpop.permute.xlu0 %6191
      %6195 = vset.pattern.permute.xlu0 0
      %6196 = vperm.xlu0 %6195, %v6102
      %v6197 = vpop.permute.xlu0 %6196
      %6200 = vset.pattern.permute.xlu0 0
      %6201 = vperm.xlu0 %6200, %v6103
      %v6202 = vpop.permute.xlu0 %6201
      %6205 = vset.pattern.permute.xlu0 0
      %6206 = vperm.xlu0 %6205, %v6104
      %v6207 = vpop.permute.xlu0 %6206
      %6210 = vset.pattern.permute.xlu0 0
      %6211 = vperm.xlu0 %6210, %v6105
      %v6212 = vpop.permute.xlu0 %6211
      %6215 = vset.pattern.permute.xlu0 0
      %6216 = vperm.xlu0 %6215, %v6106
      %v6217 = vpop.permute.xlu0 %6216
      %6220 = vset.pattern.permute.xlu0 0
      %6221 = vperm.xlu0 %6220, %v6107
      %v6222 = vpop.permute.xlu0 %6221
      %6225 = vset.pattern.permute.xlu0 0
      %6226 = vperm.xlu0 %6225, %v6108
      %v6227 = vpop.permute.xlu0 %6226
      %6230 = vset.pattern.permute.xlu0 0
      %6231 = vperm.xlu0 %6230, %v6109
      %v6232 = vpop.permute.xlu0 %6231
      %6235 = vset.pattern.permute.xlu0 0
      %6236 = vperm.xlu0 %6235, %v6110
      %v6237 = vpop.permute.xlu0 %6236
      %6240 = vset.pattern.permute.xlu0 0
      %6241 = vperm.xlu0 %6240, %v6111
      %v6242 = vpop.permute.xlu0 %6241
      %6245 = vset.pattern.permute.xlu0 0
      %6246 = vperm.xlu0 %6245, %v6112
      %v6247 = vpop.permute.xlu0 %6246
      %6250 = vset.pattern.permute.xlu0 0
      %6251 = vperm.xlu0 %6250, %v6113
      %v6252 = vpop.permute.xlu0 %6251
      %6255 = vset.pattern.permute.xlu0 0
      %6256 = vperm.xlu0 %6255, %v6114
      %v6257 = vpop.permute.xlu0 %6256
      %6260 = vset.pattern.permute.xlu0 0
      %6261 = vperm.xlu0 %6260, %v6115
      %v6262 = vpop.permute.xlu0 %6261
      %6265 = vset.pattern.permute.xlu0 0
      %6266 = vperm.xlu0 %6265, %v6116
      %v6267 = vpop.permute.xlu0 %6266
      %6270 = vset.pattern.permute.xlu0 0
      %6271 = vperm.xlu0 %6270, %v6117
      %v6272 = vpop.permute.xlu0 %6271
      %6275 = vset.pattern.permute.xlu0 0
      %6276 = vperm.xlu0 %6275, %v6118
      %v6277 = vpop.permute.xlu0 %6276
      %v6311 = vunpack.c.l.b16 %v6055
      %v6312 = vunpack.c.h.b16 %v6055
      %v6313 = vunpack.c.l.b16 %v6056
      %v6314 = vunpack.c.h.b16 %v6056
      %v6315 = vunpack.c.l.b16 %v6057
      %v6316 = vunpack.c.h.b16 %v6057
      %v6317 = vunpack.c.l.b16 %v6058
      %v6318 = vunpack.c.h.b16 %v6058
      %v6319 = vunpack.c.l.b16 %v6059
      %v6320 = vunpack.c.h.b16 %v6059
      %v6321 = vunpack.c.l.b16 %v6060
      %v6322 = vunpack.c.h.b16 %v6060
      %v6323 = vunpack.c.l.b16 %v6061
      %v6324 = vunpack.c.h.b16 %v6061
      %v6325 = vunpack.c.l.b16 %v6062
      %v6326 = vunpack.c.h.b16 %v6062
      %v6327 = vunpack.c.l.b16 %v6063
      %v6328 = vunpack.c.h.b16 %v6063
      %v6329 = vunpack.c.l.b16 %v6064
      %v6330 = vunpack.c.h.b16 %v6064
      %v6331 = vunpack.c.l.b16 %v6065
      %v6332 = vunpack.c.h.b16 %v6065
      %v6333 = vunpack.c.l.b16 %v6066
      %v6334 = vunpack.c.h.b16 %v6066
      %v6335 = vunpack.c.l.b16 %v6067
      %v6336 = vunpack.c.h.b16 %v6067
      %v6337 = vunpack.c.l.b16 %v6068
      %v6338 = vunpack.c.h.b16 %v6068
      %v6339 = vunpack.c.l.b16 %v6069
      %v6340 = vunpack.c.h.b16 %v6069
      %v6341 = vunpack.c.l.b16 %v6070
      %v6342 = vunpack.c.h.b16 %v6070
      %v6343 = vunpack.c.l.b16 %v6071
      %v6344 = vunpack.c.h.b16 %v6071
      %v6345 = vunpack.c.l.b16 %v6072
      %v6346 = vunpack.c.h.b16 %v6072
      %v6347 = vunpack.c.l.b16 %v6073
      %v6348 = vunpack.c.h.b16 %v6073
      %v6349 = vunpack.c.l.b16 %v6074
      %v6350 = vunpack.c.h.b16 %v6074
      %v6351 = vunpack.c.l.b16 %v6075
      %v6352 = vunpack.c.h.b16 %v6075
      %v6353 = vunpack.c.l.b16 %v6076
      %v6354 = vunpack.c.h.b16 %v6076
      %v6355 = vunpack.c.l.b16 %v6077
      %v6356 = vunpack.c.h.b16 %v6077
      %v6357 = vunpack.c.l.b16 %v6078
      %v6358 = vunpack.c.h.b16 %v6078
      %v6359 = vunpack.c.l.b16 %v6079
      %v6360 = vunpack.c.h.b16 %v6079
      %v6361 = vunpack.c.l.b16 %v6080
      %v6362 = vunpack.c.h.b16 %v6080
      %v6363 = vunpack.c.l.b16 %v6081
      %v6364 = vunpack.c.h.b16 %v6081
      %v6365 = vunpack.c.l.b16 %v6082
      %v6366 = vunpack.c.h.b16 %v6082
      %v6367 = vunpack.c.l.b16 %v6083
      %v6368 = vunpack.c.h.b16 %v6083
      %v6369 = vunpack.c.l.b16 %v6084
      %v6370 = vunpack.c.h.b16 %v6084
      %v6371 = vunpack.c.l.b16 %v6085
      %v6372 = vunpack.c.h.b16 %v6085
      %v6373 = vunpack.c.l.b16 %v6086
      %v6374 = vunpack.c.h.b16 %v6086
      %v6375 = vpack.c.b16 %v6313, %v6311
      %v6376 = vpack.c.b16 %v6314, %v6312
      %v6377 = vpack.c.b16 %v6317, %v6315
      %v6378 = vpack.c.b16 %v6318, %v6316
      %v6379 = vpack.c.b16 %v6321, %v6319
      %v6380 = vpack.c.b16 %v6322, %v6320
      %v6381 = vpack.c.b16 %v6325, %v6323
      %v6382 = vpack.c.b16 %v6326, %v6324
      %v6383 = vpack.c.b16 %v6329, %v6327
      %v6384 = vpack.c.b16 %v6330, %v6328
      %v6385 = vpack.c.b16 %v6333, %v6331
      %v6386 = vpack.c.b16 %v6334, %v6332
      %v6387 = vpack.c.b16 %v6337, %v6335
      %v6388 = vpack.c.b16 %v6338, %v6336
      %v6389 = vpack.c.b16 %v6341, %v6339
      %v6390 = vpack.c.b16 %v6342, %v6340
      %v6391 = vpack.c.b16 %v6345, %v6343
      %v6392 = vpack.c.b16 %v6346, %v6344
      %v6393 = vpack.c.b16 %v6349, %v6347
      %v6394 = vpack.c.b16 %v6350, %v6348
      %v6395 = vpack.c.b16 %v6353, %v6351
      %v6396 = vpack.c.b16 %v6354, %v6352
      %v6397 = vpack.c.b16 %v6357, %v6355
      %v6398 = vpack.c.b16 %v6358, %v6356
      %v6399 = vpack.c.b16 %v6361, %v6359
      %v6400 = vpack.c.b16 %v6362, %v6360
      %v6401 = vpack.c.b16 %v6365, %v6363
      %v6402 = vpack.c.b16 %v6366, %v6364
      %v6403 = vpack.c.b16 %v6369, %v6367
      %v6404 = vpack.c.b16 %v6370, %v6368
      %v6405 = vpack.c.b16 %v6373, %v6371
      %v6406 = vpack.c.b16 %v6374, %v6372
      %6439 = vmatprep.subr.bf16.mxu0 %v6024
      %6440 = vmatpush1.bf16.msra.mxu0 %v6023
      %6441 = vmatprep.subr.bf16.mxu0 %v6026
      %6442 = vmatpush1.bf16.msra.mxu0 %v6025
      %6443 = vmatprep.subr.bf16.mxu0 %v6028
      %6444 = vmatpush1.bf16.msra.mxu0 %v6027
      %6445 = vmatprep.subr.bf16.mxu0 %v6030
      %6446 = vmatpush1.bf16.msra.mxu0 %v6029
      %6447 = vmatprep.subr.bf16.mxu0 %v6032
      %6448 = vmatpush1.bf16.msra.mxu0 %v6031
      %6449 = vmatprep.subr.bf16.mxu0 %v6034
      %6450 = vmatpush1.bf16.msra.mxu0 %v6033
      %6451 = vmatprep.subr.bf16.mxu0 %v6036
      %6452 = vmatpush1.bf16.msra.mxu0 %v6035
      %6453 = vmatprep.subr.bf16.mxu0 %v6038
      %6454 = vmatpush1.bf16.msra.mxu0 %v6037
      %6455 = vmatprep.subr.bf16.mxu0 %v6040
      %6456 = vmatpush1.bf16.msra.mxu0 %v6039
      %6457 = vmatprep.subr.bf16.mxu0 %v6042
      %6458 = vmatpush1.bf16.msra.mxu0 %v6041
      %6459 = vmatprep.subr.bf16.mxu0 %v6044
      %6460 = vmatpush1.bf16.msra.mxu0 %v6043
      %6461 = vmatprep.subr.bf16.mxu0 %v6046
      %6462 = vmatpush1.bf16.msra.mxu0 %v6045
      %6463 = vmatprep.subr.bf16.mxu0 %v6048
      %6464 = vmatpush1.bf16.msra.mxu0 %v6047
      %6465 = vmatprep.subr.bf16.mxu0 %v6050
      %6466 = vmatpush1.bf16.msra.mxu0 %v6049
      %6467 = vmatprep.subr.bf16.mxu0 %v6052
      %6468 = vmatpush1.bf16.msra.mxu0 %v6051
      %6469 = vmatprep.subr.bf16.mxu0 %v6054
      %6470 = vmatpush1.bf16.msra.mxu0 %v6053
      %6471 = vmatprep.mubr.bf16.mxu0 %v6376
      %6472 = vmatmul.mubr.bf16.gmra.mrb[0].mxu0 %v6375
      %v6473 = vpop.f32.mrb[0].mxu0
      %v6474 = vadd.f32 %v6122, %v6473
      %v6475 = vpop.f32.mrb[0].mxu0
      %v6476 = vadd.f32 %v6122, %v6475
      %v6477 = vpop.f32.mrb[0].mxu0
      %v6478 = vadd.f32 %v6127, %v6477
      %v6479 = vpop.f32.mrb[0].mxu0
      %v6480 = vadd.f32 %v6127, %v6479
      %6481 = vmatprep.mubr.bf16.mxu0 %v6378
      %6482 = vmatmul.mubr.bf16.gmra.mrb[0].mxu0 %v6377
      %v6483 = vpop.f32.mrb[0].mxu0
      %v6484 = vadd.f32 %v6132, %v6483
      %v6485 = vpop.f32.mrb[0].mxu0
      %v6486 = vadd.f32 %v6132, %v6485
      %v6487 = vpop.f32.mrb[0].mxu0
      %v6488 = vadd.f32 %v6137, %v6487
      %v6489 = vpop.f32.mrb[0].mxu0
      %v6490 = vadd.f32 %v6137, %v6489
      %6491 = vmatprep.mubr.bf16.mxu0 %v6380
      %6492 = vmatmul.mubr.bf16.gmra.mrb[0].mxu0 %v6379
      %v6493 = vpop.f32.mrb[0].mxu0
      %v6494 = vadd.f32 %v6142, %v6493
      %v6495 = vpop.f32.mrb[0].mxu0
      %v6496 = vadd.f32 %v6142, %v6495
      %v6497 = vpop.f32.mrb[0].mxu0
      %v6498 = vadd.f32 %v6147, %v6497
      %v6499 = vpop.f32.mrb[0].mxu0
      %v6500 = vadd.f32 %v6147, %v6499
      %6501 = vmatprep.mubr.bf16.mxu0 %v6382
      %6502 = vmatmul.mubr.bf16.gmra.mrb[0].mxu0 %v6381
      %v6503 = vpop.f32.mrb[0].mxu0
      %v6504 = vadd.f32 %v6152, %v6503
      %v6505 = vpop.f32.mrb[0].mxu0
      %v6506 = vadd.f32 %v6152, %v6505
      %v6507 = vpop.f32.mrb[0].mxu0
      %v6508 = vadd.f32 %v6157, %v6507
      %v6509 = vpop.f32.mrb[0].mxu0
      %v6510 = vadd.f32 %v6157, %v6509
      %6511 = vmatprep.mubr.bf16.mxu0 %v6384
      %6512 = vmatmul.mubr.bf16.gmra.mrb[0].mxu0 %v6383
      %v6513 = vpop.f32.mrb[0].mxu0
      %v6514 = vadd.f32 %v6162, %v6513
      %v6515 = vpop.f32.mrb[0].mxu0
      %v6516 = vadd.f32 %v6162, %v6515
      %v6517 = vpop.f32.mrb[0].mxu0
      %v6518 = vadd.f32 %v6167, %v6517
      %v6519 = vpop.f32.mrb[0].mxu0
      %v6520 = vadd.f32 %v6167, %v6519
      %6521 = vmatprep.mubr.bf16.mxu0 %v6386
      %6522 = vmatmul.mubr.bf16.gmra.mrb[0].mxu0 %v6385
      %v6523 = vpop.f32.mrb[0].mxu0
      %v6524 = vadd.f32 %v6172, %v6523
      %v6525 = vpop.f32.mrb[0].mxu0
      %v6526 = vadd.f32 %v6172, %v6525
      %v6527 = vpop.f32.mrb[0].mxu0
      %v6528 = vadd.f32 %v6177, %v6527
      %v6529 = vpop.f32.mrb[0].mxu0
      %v6530 = vadd.f32 %v6177, %v6529
      %6531 = vmatprep.mubr.bf16.mxu0 %v6388
      %6532 = vmatmul.mubr.bf16.gmra.mrb[0].mxu0 %v6387
      %v6533 = vpop.f32.mrb[0].mxu0
      %v6534 = vadd.f32 %v6182, %v6533
      %v6535 = vpop.f32.mrb[0].mxu0
      %v6536 = vadd.f32 %v6182, %v6535
      %v6537 = vpop.f32.mrb[0].mxu0
      %v6538 = vadd.f32 %v6187, %v6537
      %v6539 = vpop.f32.mrb[0].mxu0
      %v6540 = vadd.f32 %v6187, %v6539
      %6541 = vmatprep.mubr.bf16.mxu0 %v6390
      %6542 = vmatmul.mubr.bf16.gmra.mrb[0].mxu0 %v6389
      %v6543 = vpop.f32.mrb[0].mxu0
      %v6544 = vadd.f32 %v6192, %v6543
      %v6545 = vpop.f32.mrb[0].mxu0
      %v6546 = vadd.f32 %v6192, %v6545
      %v6547 = vpop.f32.mrb[0].mxu0
      %v6548 = vadd.f32 %v6197, %v6547
      %v6549 = vpop.f32.mrb[0].mxu0
      %v6550 = vadd.f32 %v6197, %v6549
      %6551 = vmatprep.mubr.bf16.mxu0 %v6392
      %6552 = vmatmul.mubr.bf16.gmra.mrb[0].mxu0 %v6391
      %v6553 = vpop.f32.mrb[0].mxu0
      %v6554 = vadd.f32 %v6202, %v6553
      %v6555 = vpop.f32.mrb[0].mxu0
      %v6556 = vadd.f32 %v6202, %v6555
      %v6557 = vpop.f32.mrb[0].mxu0
      %v6558 = vadd.f32 %v6207, %v6557
      %v6559 = vpop.f32.mrb[0].mxu0
      %v6560 = vadd.f32 %v6207, %v6559
      %6561 = vmatprep.mubr.bf16.mxu0 %v6394
      %6562 = vmatmul.mubr.bf16.gmra.mrb[0].mxu0 %v6393
      %v6563 = vpop.f32.mrb[0].mxu0
      %v6564 = vadd.f32 %v6212, %v6563
      %v6565 = vpop.f32.mrb[0].mxu0
      %v6566 = vadd.f32 %v6212, %v6565
      %v6567 = vpop.f32.mrb[0].mxu0
      %v6568 = vadd.f32 %v6217, %v6567
      %v6569 = vpop.f32.mrb[0].mxu0
      %v6570 = vadd.f32 %v6217, %v6569
      %6571 = vmatprep.mubr.bf16.mxu0 %v6396
      %6572 = vmatmul.mubr.bf16.gmra.mrb[0].mxu0 %v6395
      %v6573 = vpop.f32.mrb[0].mxu0
      %v6574 = vadd.f32 %v6222, %v6573
      %v6575 = vpop.f32.mrb[0].mxu0
      %v6576 = vadd.f32 %v6222, %v6575
      %v6577 = vpop.f32.mrb[0].mxu0
      %v6578 = vadd.f32 %v6227, %v6577
      %v6579 = vpop.f32.mrb[0].mxu0
      %v6580 = vadd.f32 %v6227, %v6579
      %6581 = vmatprep.mubr.bf16.mxu0 %v6398
      %6582 = vmatmul.mubr.bf16.gmra.mrb[0].mxu0 %v6397
      %v6583 = vpop.f32.mrb[0].mxu0
      %v6584 = vadd.f32 %v6232, %v6583
      %v6585 = vpop.f32.mrb[0].mxu0
      %v6586 = vadd.f32 %v6232, %v6585
      %v6587 = vpop.f32.mrb[0].mxu0
      %v6588 = vadd.f32 %v6237, %v6587
      %v6589 = vpop.f32.mrb[0].mxu0
      %v6590 = vadd.f32 %v6237, %v6589
      %6591 = vmatprep.mubr.bf16.mxu0 %v6400
      %6592 = vmatmul.mubr.bf16.gmra.mrb[0].mxu0 %v6399
      %v6593 = vpop.f32.mrb[0].mxu0
      %v6594 = vadd.f32 %v6242, %v6593
      %v6595 = vpop.f32.mrb[0].mxu0
      %v6596 = vadd.f32 %v6242, %v6595
      %v6597 = vpop.f32.mrb[0].mxu0
      %v6598 = vadd.f32 %v6247, %v6597
      %v6599 = vpop.f32.mrb[0].mxu0
      %v6600 = vadd.f32 %v6247, %v6599
      %6601 = vmatprep.mubr.bf16.mxu0 %v6402
      %6602 = vmatmul.mubr.bf16.gmra.mrb[0].mxu0 %v6401
      %v6603 = vpop.f32.mrb[0].mxu0
      %v6604 = vadd.f32 %v6252, %v6603
      %v6605 = vpop.f32.mrb[0].mxu0
      %v6606 = vadd.f32 %v6252, %v6605
      %v6607 = vpop.f32.mrb[0].mxu0
      %v6608 = vadd.f32 %v6257, %v6607
      %v6609 = vpop.f32.mrb[0].mxu0
      %v6610 = vadd.f32 %v6257, %v6609
      %6611 = vmatprep.mubr.bf16.mxu0 %v6404
      %6612 = vmatmul.mubr.bf16.gmra.mrb[0].mxu0 %v6403
      %v6613 = vpop.f32.mrb[0].mxu0
      %v6614 = vadd.f32 %v6262, %v6613
      %v6615 = vpop.f32.mrb[0].mxu0
      %v6616 = vadd.f32 %v6262, %v6615
      %v6617 = vpop.f32.mrb[0].mxu0
      %v6618 = vadd.f32 %v6267, %v6617
      %v6619 = vpop.f32.mrb[0].mxu0
      %v6620 = vadd.f32 %v6267, %v6619
      %6621 = vmatprep.mubr.bf16.mxu0 %v6406
      %6622 = vmatmul.mubr.bf16.gmra.mrb[0].mxu0 %v6405
      %v6623 = vpop.f32.mrb[0].mxu0
      %v6624 = vadd.f32 %v6272, %v6623
      %v6625 = vpop.f32.mrb[0].mxu0
      %v6626 = vadd.f32 %v6272, %v6625
      %v6627 = vpop.f32.mrb[0].mxu0
      %v6628 = vadd.f32 %v6277, %v6627
      %v6629 = vpop.f32.mrb[0].mxu0
      %v6630 = vadd.f32 %v6277, %v6629
      %6631 = vdwg.mxu0
      %v6632 = vld [vmem:[%s5] sm:$0xff]
      %v6633 = vld [vmem:[%s5 + $0x8] sm:$0xff]
      %v6634 = vpack.c.bf16 %v6478, %v6474
      %v6635 = vpack.c.bf16 %v6480, %v6476
      %v6636 = vpack.c.bf16 %v6488, %v6484
      %v6637 = vpack.c.bf16 %v6490, %v6486
      %v6638 = vpack.c.bf16 %v6498, %v6494
      %v6639 = vpack.c.bf16 %v6500, %v6496
      %v6640 = vpack.c.bf16 %v6508, %v6504
      %v6641 = vpack.c.bf16 %v6510, %v6506
      %v6642 = vpack.c.bf16 %v6518, %v6514
      %v6643 = vpack.c.bf16 %v6520, %v6516
      %v6644 = vpack.c.bf16 %v6528, %v6524
      %v6645 = vpack.c.bf16 %v6530, %v6526
      %v6646 = vpack.c.bf16 %v6538, %v6534
      %v6647 = vpack.c.bf16 %v6540, %v6536
      %v6648 = vpack.c.bf16 %v6548, %v6544
      %v6649 = vpack.c.bf16 %v6550, %v6546
      %v6650 = vpack.c.bf16 %v6558, %v6554
      %v6651 = vpack.c.bf16 %v6560, %v6556
      %v6652 = vpack.c.bf16 %v6568, %v6564
      %v6653 = vpack.c.bf16 %v6570, %v6566
      %v6654 = vpack.c.bf16 %v6578, %v6574
      %v6655 = vpack.c.bf16 %v6580, %v6576
      %v6656 = vpack.c.bf16 %v6588, %v6584
      %v6657 = vpack.c.bf16 %v6590, %v6586
      %v6658 = vpack.c.bf16 %v6598, %v6594
      %v6659 = vpack.c.bf16 %v6600, %v6596
      %v6660 = vpack.c.bf16 %v6608, %v6604
      %v6661 = vpack.c.bf16 %v6610, %v6606
      %v6662 = vpack.c.bf16 %v6618, %v6614
      %v6663 = vpack.c.bf16 %v6620, %v6616
      %v6664 = vpack.c.bf16 %v6628, %v6624
      %v6665 = vpack.c.bf16 %v6630, %v6626
      %v6666 = vld [vmem:[%s9] sm:$0xff]
      %v6667 = vld [vmem:[%s9 + $0x8] sm:$0xff]
      %6669 = vset.pattern.permute.xlu0 0
      %6670 = vperm.xlu0 %6669, %v6666
      %v6671 = vpop.permute.xlu0 %6670
      %6674 = vset.pattern.permute.xlu0 0
      %6675 = vperm.xlu0 %6674, %v6667
      %v6676 = vpop.permute.xlu0 %6675
      %v6680 = vunpack.c.l.b16 %v6632
      %v6681 = vunpack.c.h.b16 %v6632
      %v6682 = vunpack.c.l.b16 %v6633
      %v6683 = vunpack.c.h.b16 %v6633
      %v6684 = vpack.c.b16 %v6682, %v6680
      %v6685 = vpack.c.b16 %v6683, %v6681
      %6688 = vmatprep.subr.bf16.mxu0 %v6635
      %6689 = vmatpush1.bf16.msra.mxu0 %v6634
      %6690 = vmatprep.subr.bf16.mxu0 %v6637
      %6691 = vmatpush1.bf16.msra.mxu0 %v6636
      %6692 = vmatprep.subr.bf16.mxu0 %v6639
      %6693 = vmatpush1.bf16.msra.mxu0 %v6638
      %6694 = vmatprep.subr.bf16.mxu0 %v6641
      %6695 = vmatpush1.bf16.msra.mxu0 %v6640
      %6696 = vmatprep.subr.bf16.mxu0 %v6643
      %6697 = vmatpush1.bf16.msra.mxu0 %v6642
      %6698 = vmatprep.subr.bf16.mxu0 %v6645
      %6699 = vmatpush1.bf16.msra.mxu0 %v6644
      %6700 = vmatprep.subr.bf16.mxu0 %v6647
      %6701 = vmatpush1.bf16.msra.mxu0 %v6646
      %6702 = vmatprep.subr.bf16.mxu0 %v6649
      %6703 = vmatpush1.bf16.msra.mxu0 %v6648
      %6704 = vmatprep.subr.bf16.mxu0 %v6651
      %6705 = vmatpush1.bf16.msra.mxu0 %v6650
      %6706 = vmatprep.subr.bf16.mxu0 %v6653
      %6707 = vmatpush1.bf16.msra.mxu0 %v6652
      %6708 = vmatprep.subr.bf16.mxu0 %v6655
      %6709 = vmatpush1.bf16.msra.mxu0 %v6654
      %6710 = vmatprep.subr.bf16.mxu0 %v6657
      %6711 = vmatpush1.bf16.msra.mxu0 %v6656
      %6712 = vmatprep.subr.bf16.mxu0 %v6659
      %6713 = vmatpush1.bf16.msra.mxu0 %v6658
      %6714 = vmatprep.subr.bf16.mxu0 %v6661
      %6715 = vmatpush1.bf16.msra.mxu0 %v6660
      %6716 = vmatprep.subr.bf16.mxu0 %v6663
      %6717 = vmatpush1.bf16.msra.mxu0 %v6662
      %6718 = vmatprep.subr.bf16.mxu0 %v6665
      %6719 = vmatpush1.bf16.msra.mxu0 %v6664
      %6720 = vmatprep.mubr.bf16.mxu0 %v6685
      %6721 = vmatmul.mubr.bf16.gmra.mrb[0].mxu0 %v6684
      %v6722 = vpop.f32.mrb[0].mxu0
      %v6723 = vadd.f32 %v6671, %v6722
      %v6724 = vpop.f32.mrb[0].mxu0
      %v6725 = vadd.f32 %v6671, %v6724
      %v6726 = vpop.f32.mrb[0].mxu0
      %v6727 = vadd.f32 %v6676, %v6726
      %v6728 = vpop.f32.mrb[0].mxu0
      %v6729 = vadd.f32 %v6676, %v6728
      %6730 = vdwg.mxu0
      %6731 = vst [vmem:[%s377] sm:$0xff] %v6723
      %6732 = vst [vmem:[%s377 + $0x8] sm:$0xff] %v6725
      %6733 = vst [vmem:[%s377 + $0x10] sm:$0xff] %v6727
      %6734 = vst [vmem:[%s377 + $0x18] sm:$0xff] %v6729
      %s6735 = smul.u32 2, %s32
      %p6736 = scmp.lt.s32.totalorder %s31, 1
      %s6737 = scalar_select %p6736, %s31, 1
      %p6738 = scmp.lt.s32.totalorder %s6735, 1
      %s6739 = scalar_select %p6738, %s6735, 1
      %s6740 = smul.addr %s6737, 4
      %s6741 = sadd.s32 %s6739, %s6740
      %s6742 = smul.addr %s6741, 8
      %s6743 = scalar_lea.vmem %s10, %s6742
      // Predicated region
      $region57: #{pillarnet_fkd_forward.1} parent=55 // pred_check
        %p6744 = pneg %p255
      $region58: #{pillarnet_fkd_forward.1} parent=55 // pred_check_branch
        %6746 = sbr.rel (%p6744) target = $region60
      $region59: #{pillarnet_fkd_forward.1} parent=55 // pred_region
        %s6747 = smul.u32 2, %s32
      $region60: #{pillarnet_fkd_forward.1} parent=55 // pred_fallthru
        _
    $region56: #{pillarnet_fkd_forward.1} parent=5 // pred_fallthru
      _
    %p6748 = scmp.le.s32.totalorder 2, %s22
    // Predicated region
    $region61: #{pillarnet_fkd_forward.1} parent=5 // pred_check
      %p6749 = pneg %p6748
    $region62: #{pillarnet_fkd_forward.1} parent=5 // pred_check_branch
      %6751 = sbr.rel (%p6749) target = $region64
    $region63: #{pillarnet_fkd_forward.1} parent=5 // pred_region
      %s6752 = ssub.s32 %s22, 2
      // Predicated region
      $region65: #{pillarnet_fkd_forward.1} parent=63 // pred_check
        %p6753 = pneg %p261
      $region66: #{pillarnet_fkd_forward.1} parent=63 // pred_check_branch
        %6755 = sbr.rel (%p6753) target = $region68
      $region67: #{pillarnet_fkd_forward.1} parent=63 // pred_region
        %s6756 = smul.u32 2, %s34
        %p6757 = scmp.lt.s32.totalorder %s33, 1
        %s6758 = scalar_select %p6757, %s33, 1
        %p6759 = scmp.lt.s32.totalorder %s6756, 1
        %s6760 = scalar_select %p6759, %s6756, 1
        %s6761 = smul.addr %s6758, 4
        %s6762 = sadd.s32 %s6760, %s6761
        %s6763 = smul.addr %s6762, 8
        %s6764 = scalar_lea.vmem %s10, %s6763
      $region68: #{pillarnet_fkd_forward.1} parent=63 // pred_fallthru
        _
    $region64: #{pillarnet_fkd_forward.1} parent=5 // pred_fallthru
      _
  $region6: #{pillarnet_fkd_forward.1} parent=0 // loop_footer
    %s26 = sadd.s32 1, %s22
  $region7: #{pillarnet_fkd_forward.1} parent=0 // loop_footer_branch
    %21 = sbr.rel target = $region3
  $region8: #{pillarnet_fkd_forward.1} parent=0 // loop_exit
    _

</llo_original>
